<compile_context>
chip_gen: v7x
topology: tpu7x:2x2x1
jax: 0.10.0
libtpu: 0.0.40
codegen_flags: <defaults>
</compile_context>

<pallas_src>
import numpy as np
import jax
import jax.numpy as jnp
from jax import lax
from jax.experimental import pallas as pl
from jax.experimental.pallas import tpu as pltpu


# ------------------------------ Pallas kernel ------------------------------ #

def _lenet5_kernel(x_ref, w1_ref, b1_ref, s1t_ref, w2m_ref, b2_ref,
                   wd1e_ref, bd1_ref, wd2_ref, bd2_ref, wd3_ref, bd3_ref,
                   o_ref, y1s_ref, y1ps_ref, y2s_ref):
    f32 = jnp.float32
    bf16 = jnp.bfloat16
    TB = x_ref.shape[0]          # images per grid step

    # ---- Stage 1 (per image): Conv2d(1,6,5)+ReLU on the MXU via in-register
    #      im2col.  Wide layout: lane p = oh*32 + ow; junk columns (ow >= 28)
    #      are zero-weighted by the pool1 matrix.  Dropout(0.2) = identity.
    def conv1_body(i, carry):
        xb = x_ref[pl.ds(i, 1), :]                                    # [1, 1024]
        rows = jnp.concatenate(
            [xb[:, kh * 32: kh * 32 + 896] for kh in range(5)], axis=0)  # [5, 896]
        p1 = jnp.concatenate(
            [rows[:, kw: kw + 892] for kw in range(5)], axis=0)          # [25, 892]
        y1 = jnp.dot(w1_ref[...], p1.astype(bf16),
                     preferred_element_type=f32)                         # [8, 892]
        y1 = jnp.maximum(y1 + b1_ref[...], 0.0)
        r0 = pl.multiple_of(i * 8, 8)
        y1s_ref[pl.ds(r0, 8), :] = y1
        return carry

    lax.fori_loop(0, TB, conv1_body, 0)

    # ---- AvgPool2d(2) #1: one BATCHED lane-compaction matmul, M = TB*8
    #      (channel rows of all images stacked), 892-row RHS pushed once.
    y1ps_ref[...] = jnp.dot(y1s_ref[...].astype(bf16), s1t_ref[...],
                            preferred_element_type=f32)                  # [TB*8, 256]

    # ---- Stage 2 (per image): Conv2d(6,16,5)+ReLU as ONE K=200 MXU matmul
    #      (25 taps x 8 in-channel rows folded into the contraction dim).
    #      Wide layout: lane p = oh*14 + ow; junk lanes zero-weighted by wd1e.
    def conv2_body(i, carry):
        r0 = pl.multiple_of(i * 8, 8)
        yp = y1ps_ref[pl.ds(r0, 8), :]                                # [8, 256]
        rows = jnp.concatenate(
            [yp[:, kh * 14: kh * 14 + 144] for kh in range(5)], axis=0)  # [40, 144]
        p2 = jnp.concatenate(
            [rows[:, kw: kw + 140] for kw in range(5)], axis=0)          # [200, 140]
        y2 = jnp.dot(w2m_ref[...], p2.astype(bf16),
                     preferred_element_type=f32)                         # [16, 140]
        y2s_ref[i] = jnp.maximum(y2 + b2_ref[...], 0.0)
        return carry

    lax.fori_loop(0, TB, conv2_body, 0)

    # ---- AvgPool2d(2) #2 + torch.flatten + Linear(400,120): pooling/flatten
    #      folded into wd1e at init; contract per conv2 channel with M = TB.
    h = jnp.zeros((TB, 128), f32)
    for c in range(16):
        h = h + jnp.dot(y2s_ref[:, c, :].astype(bf16), wd1e_ref[c],
                        preferred_element_type=f32)
    h = jnp.maximum(h + bd1_ref[...], 0.0)                            # [TB, 128]

    # ---- Linear(120,84)+ReLU and Linear(84,nc): batched, 128-lane padded.
    h = jnp.maximum(jnp.dot(h.astype(bf16), wd2_ref[...],
                            preferred_element_type=f32) + bd2_ref[...], 0.0)
    o_ref[...] = (jnp.dot(h.astype(bf16), wd3_ref[...],
                          preferred_element_type=f32) + bd3_ref[...])


def lenet5_forward(x_nchw, kparams, num_classes, tb=8):
    B = x_nchw.shape[0]
    tb = max(1, min(tb, B))
    Bp = -(-B // tb) * tb                              # pad batch to a tile multiple
    x_rows = x_nchw.reshape(B, 32 * 32).astype(jnp.float32)
    if Bp != B:
        x_rows = jnp.pad(x_rows, ((0, Bp - B), (0, 0)))

    out = pl.pallas_call(
        _lenet5_kernel,
        out_shape=jax.ShapeDtypeStruct((Bp, 128), jnp.float32),
        grid=(Bp // tb,),
        in_specs=[
            pl.BlockSpec((tb, 1024), lambda i: (i, 0)),          # TB images
            pl.BlockSpec((8, 25), lambda i: (0, 0)),             # conv1 weights
            pl.BlockSpec((8, 1), lambda i: (0, 0)),              # conv1 bias
            pl.BlockSpec((892, 256), lambda i: (0, 0)),          # pool1 matrix
            pl.BlockSpec((16, 200), lambda i: (0, 0)),           # conv2 weights (K=200)
            pl.BlockSpec((16, 1), lambda i: (0, 0)),             # conv2 bias
            pl.BlockSpec((16, 140, 128), lambda i: (0, 0, 0)),   # pool2+flatten+fc1
            pl.BlockSpec((1, 128), lambda i: (0, 0)),            # fc1 bias
            pl.BlockSpec((128, 128), lambda i: (0, 0)),          # fc2 weight
            pl.BlockSpec((1, 128), lambda i: (0, 0)),            # fc2 bias
            pl.BlockSpec((128, 128), lambda i: (0, 0)),          # fc3 weight
            pl.BlockSpec((1, 128), lambda i: (0, 0)),            # fc3 bias
        ],
        out_specs=pl.BlockSpec((tb, 128), lambda i: (i, 0)),
        scratch_shapes=[
            pltpu.VMEM((tb * 8, 892), jnp.float32),   # conv1+ReLU outputs (wide)
            pltpu.VMEM((tb * 8, 256), jnp.float32),   # pool1 outputs
            pltpu.VMEM((tb, 16, 140), jnp.float32),   # conv2+ReLU outputs (wide)
        ],
        compiler_params=pltpu.CompilerParams(
            dimension_semantics=("parallel",)),
    )(x_rows, kparams['w1'], kparams['b1'], kparams['s1t'], kparams['w2m'],
      kparams['b2'], kparams['wd1e'], kparams['bd1'], kparams['wd2'],
      kparams['bd2'], kparams['wd3'], kparams['bd3'])
    return out[:B, :num_classes]


# ----------------------- host-side constant preparation --------------------- #

def _pool1_matrix():
    """[892, 256]: maps wide conv1 lanes (p = oh*32+ow) to 14x14 pooled lanes
    q = ph*14+pw with 0.25 over each 2x2 block; junk / pad entries are zero."""
    S = np.zeros((892, 256), np.float32)
    for ph in range(14):
        for pw in range(14):
            q = ph * 14 + pw
            for dh in range(2):
                for dw in range(2):
                    p = (2 * ph + dh) * 32 + (2 * pw + dw)
                    S[p, q] = 0.25
    return S


def _fold_pool2_flatten_fc1(wd1):
    """wd1: [400, 120]. Returns [16, 140, 128]: AvgPool2d(2), torch.flatten's
    (c,h,w) order and the 128-lane padding folded into the fc1 weights, indexed
    by conv2 output channel c and wide lane p = oh*14+ow (junk lanes -> 0)."""
    wd1 = np.asarray(wd1, np.float32).reshape(16, 5, 5, 120)
    W = np.zeros((16, 140, 128), np.float32)
    for oh in range(10):
        for ow in range(10):
            W[:, oh * 14 + ow, :120] = 0.25 * wd1[:, oh // 2, ow // 2, :]
    return W


def init_params(key, num_classes):
    ks = jax.random.split(key, 10)

    def rand(k, shape, fan_in):
        return jax.random.normal(k, shape, jnp.float32) * np.float32(
            np.sqrt(2.0 / fan_in))

    def bf16_round(a):  # MXU weights live in bf16; keep rounded values canonical
        return a.astype(jnp.bfloat16).astype(jnp.float32)

    w1_oihw = bf16_round(rand(ks[0], (6, 1, 5, 5), 25))
    w2_oihw = bf16_round(rand(ks[1], (16, 6, 5, 5), 150))
    b1 = rand(ks[2], (6,), 25) * 0.1
    b2 = rand(ks[3], (16,), 150) * 0.1
    wd1 = bf16_round(rand(ks[4], (400, 120), 400))
    bd1 = rand(ks[5], (120,), 400) * 0.1
    wd2 = bf16_round(rand(ks[6], (120, 84), 120))
    bd2 = rand(ks[7], (84,), 120) * 0.1
    wd3 = bf16_round(rand(ks[8], (84, num_classes), 84))
    bd3 = rand(ks[9], (num_classes,), 84) * 0.1

    # Kernel-layout params (padding / tap ordering / pool-folding done at init).
    # conv1: [8, 25], column order kw*5 + kh (matches the in-kernel im2col).
    w1m = (jnp.zeros((8, 25), jnp.float32)
           .at[:6].set(jnp.transpose(w1_oihw[:, 0, :, :], (0, 2, 1)).reshape(6, 25))
           .astype(jnp.bfloat16))
    b1p = jnp.zeros((8, 1), jnp.float32).at[:6, 0].set(b1)
    s1t = jnp.asarray(_pool1_matrix(), jnp.bfloat16)
    # conv2: [16, 200], column order kw*40 + kh*8 + cin (cin padded 6 -> 8).
    w2m = (jnp.zeros((16, 5, 5, 8), jnp.float32)
           .at[:, :, :, :6].set(jnp.transpose(w2_oihw, (0, 3, 2, 1)))
           .reshape(16, 200).astype(jnp.bfloat16))
    b2p = b2.reshape(16, 1)
    wd1e = jnp.asarray(_fold_pool2_flatten_fc1(wd1), jnp.bfloat16)
    bd1p = jnp.zeros((1, 128), jnp.float32).at[0, :120].set(bd1)
    wd2p = (jnp.zeros((128, 128), jnp.float32)
            .at[:120, :84].set(wd2).astype(jnp.bfloat16))
    bd2p = jnp.zeros((1, 128), jnp.float32).at[0, :84].set(bd2)
    wd3p = (jnp.zeros((128, 128), jnp.float32)
            .at[:84, :num_classes].set(wd3).astype(jnp.bfloat16))
    bd3p = jnp.zeros((1, 128), jnp.float32).at[0, :num_classes].set(bd3)

    kparams = dict(w1=w1m, b1=b1p, s1t=s1t, w2m=w2m, b2=b2p, wd1e=wd1e,
                   bd1=bd1p, wd2=wd2p, bd2=bd2p, wd3=wd3p, bd3=bd3p)
    rparams = dict(w1_oihw=w1_oihw, b1=b1, w2_oihw=w2_oihw, b2=b2,
                   wd1=wd1, bd1=bd1, wd2=wd2, bd2=bd2, wd3=wd3, bd3=bd3)
    return kparams, rparams


# ------------------------------ pure-JAX reference -------------------------- #

def ref_forward(x, rp):
    def conv(xx, w, b):
        y = lax.conv_general_dilated(
            xx, w, (1, 1), 'VALID',
            dimension_numbers=('NCHW', 'OIHW', 'NCHW'))
        return y + b.reshape(1, -1, 1, 1)

    def avgpool2(xx):
        Bq, C, H, W = xx.shape
        return xx.reshape(Bq, C, H // 2, 2, W // 2, 2).mean(axis=(3, 5))

    y = avgpool2(jnp.maximum(conv(x, rp['w1_oihw'], rp['b1']), 0.0))
    y = avgpool2(jnp.maximum(conv(y, rp['w2_oihw'], rp['b2']), 0.0))
    f = y.reshape(y.shape[0], -1)                     # torch.flatten(x, 1)
    h = jnp.maximum(f @ rp['wd1'] + rp['bd1'], 0.0)
    h = jnp.maximum(h @ rp['wd2'] + rp['bd2'], 0.0)
    return h @ rp['wd3'] + rp['bd3']


# ----------------------------------- main ----------------------------------- #

if __name__ == "__main__":
    num_classes = 10
    # LeNet-5 feature stack implies a 1x32x32 input (32->28->14->10->5).
    # B=16 with TB=8 -> grid length 2 ("parallel"): even, so both v7x TCs work.
    B = 16
    key = jax.random.PRNGKey(0)
    kx, kp = jax.random.split(key)
    x = jax.random.normal(kx, (B, 1, 32, 32), jnp.float32)
    kparams, rparams = init_params(kp, num_classes)

    out = jax.block_until_ready(lenet5_forward(x, kparams, num_classes, tb=8))
    assert out.shape == (B, num_classes) and out.dtype == jnp.float32

    ref = ref_forward(x, rparams)
    max_diff = float(jnp.max(jnp.abs(out - ref)))
    # Tolerance accommodates the bf16 MXU operands (f32 accumulation).
    assert jnp.allclose(out, ref, atol=1e-1, rtol=1e-1), (
        f"max abs diff {max_diff}")

    print("KERNEL_OK")
</pallas_src>

<mosaic_0001>
module attributes {stable_mosaic.version = 11 : i64} {
  func.func @_lenet5_kernel(%arg0: i32, %arg1: memref<8x1024xf32, #tpu.memory_space<vmem>>, %arg2: memref<8x25xbf16, #tpu.memory_space<vmem>>, %arg3: memref<8x1xf32, #tpu.memory_space<vmem>>, %arg4: memref<892x256xbf16, #tpu.memory_space<vmem>>, %arg5: memref<16x200xbf16, #tpu.memory_space<vmem>>, %arg6: memref<16x1xf32, #tpu.memory_space<vmem>>, %arg7: memref<16x140x128xbf16, #tpu.memory_space<vmem>>, %arg8: memref<1x128xf32, #tpu.memory_space<vmem>>, %arg9: memref<128x128xbf16, #tpu.memory_space<vmem>>, %arg10: memref<1x128xf32, #tpu.memory_space<vmem>>, %arg11: memref<128x128xbf16, #tpu.memory_space<vmem>>, %arg12: memref<1x128xf32, #tpu.memory_space<vmem>>, %arg13: memref<8x128xf32, #tpu.memory_space<vmem>>, %arg14: memref<64x892xf32, #tpu.memory_space<vmem>>, %arg15: memref<64x256xf32, #tpu.memory_space<vmem>>, %arg16: memref<8x16x140xf32, #tpu.memory_space<vmem>>) attributes {dimension_semantics = [#tpu.dimension_semantics<parallel>], iteration_bounds = array<i64: 2>, scalar_prefetch = 0 : i64, scratch_operands = 3 : i64, tpu.core_type = #tpu.core_type<tc>, window_params = [{transform_indices = @transform_0, window_bounds = array<i64: 8, 1024>}, {pipeline_mode = #tpu.pipeline_mode<synchronous>, transform_indices = @transform_1, window_bounds = array<i64: 8, 25>}, {pipeline_mode = #tpu.pipeline_mode<synchronous>, transform_indices = @transform_2, window_bounds = array<i64: 8, 1>}, {pipeline_mode = #tpu.pipeline_mode<synchronous>, transform_indices = @transform_3, window_bounds = array<i64: 892, 256>}, {pipeline_mode = #tpu.pipeline_mode<synchronous>, transform_indices = @transform_4, window_bounds = array<i64: 16, 200>}, {pipeline_mode = #tpu.pipeline_mode<synchronous>, transform_indices = @transform_5, window_bounds = array<i64: 16, 1>}, {pipeline_mode = #tpu.pipeline_mode<synchronous>, transform_indices = @transform_6, window_bounds = array<i64: 16, 140, 128>}, {pipeline_mode = #tpu.pipeline_mode<synchronous>, transform_indices = @transform_7, window_bounds = array<i64: 1, 128>}, {pipeline_mode = #tpu.pipeline_mode<synchronous>, transform_indices = @transform_8, window_bounds = array<i64: 128, 128>}, {pipeline_mode = #tpu.pipeline_mode<synchronous>, transform_indices = @transform_9, window_bounds = array<i64: 1, 128>}, {pipeline_mode = #tpu.pipeline_mode<synchronous>, transform_indices = @transform_10, window_bounds = array<i64: 128, 128>}, {pipeline_mode = #tpu.pipeline_mode<synchronous>, transform_indices = @transform_11, window_bounds = array<i64: 1, 128>}, {transform_indices = @transform_12, window_bounds = array<i64: 8, 128>}]} {
    %c0_i32 = arith.constant 0 : i32
    %c8_i32 = arith.constant 8 : i32
    %0 = arith.addi %c0_i32, %c8_i32 : i32
    %c1_i32 = arith.constant 1 : i32
    scf.for %arg17 = %c0_i32 to %0 step %c1_i32  : i32 {
      %140 = arith.index_cast %arg17 : i32 to index
      %c0_124 = arith.constant 0 : index
      %141 = vector.load %arg1[%140, %c0_124] : memref<8x1024xf32, #tpu.memory_space<vmem>>, vector<1x1024xf32>
      %142 = vector.extract_strided_slice %141 {offsets = [0, 0], sizes = [1, 896], strides = [1, 1]} : vector<1x1024xf32> to vector<1x896xf32>
      %143 = vector.extract_strided_slice %141 {offsets = [0, 32], sizes = [1, 896], strides = [1, 1]} : vector<1x1024xf32> to vector<1x896xf32>
      %144 = vector.extract_strided_slice %141 {offsets = [0, 64], sizes = [1, 896], strides = [1, 1]} : vector<1x1024xf32> to vector<1x896xf32>
      %145 = vector.extract_strided_slice %141 {offsets = [0, 96], sizes = [1, 896], strides = [1, 1]} : vector<1x1024xf32> to vector<1x896xf32>
      %146 = vector.extract_strided_slice %141 {offsets = [0, 128], sizes = [1, 896], strides = [1, 1]} : vector<1x1024xf32> to vector<1x896xf32>
      %147 = tpu.concatenate %142, %143, %144, %145, %146 in 0 : vector<1x896xf32>, vector<1x896xf32>, vector<1x896xf32>, vector<1x896xf32>, vector<1x896xf32> -> vector<5x896xf32>
      %148 = vector.extract_strided_slice %147 {offsets = [0, 0], sizes = [5, 892], strides = [1, 1]} : vector<5x896xf32> to vector<5x892xf32>
      %149 = vector.extract_strided_slice %147 {offsets = [0, 1], sizes = [5, 892], strides = [1, 1]} : vector<5x896xf32> to vector<5x892xf32>
      %150 = vector.extract_strided_slice %147 {offsets = [0, 2], sizes = [5, 892], strides = [1, 1]} : vector<5x896xf32> to vector<5x892xf32>
      %151 = vector.extract_strided_slice %147 {offsets = [0, 3], sizes = [5, 892], strides = [1, 1]} : vector<5x896xf32> to vector<5x892xf32>
      %152 = vector.extract_strided_slice %147 {offsets = [0, 4], sizes = [5, 892], strides = [1, 1]} : vector<5x896xf32> to vector<5x892xf32>
      %153 = tpu.concatenate %148, %149, %150, %151, %152 in 0 : vector<5x892xf32>, vector<5x892xf32>, vector<5x892xf32>, vector<5x892xf32>, vector<5x892xf32> -> vector<25x892xf32>
      %c0_125 = arith.constant 0 : index
      %c0_126 = arith.constant 0 : index
      %154 = vector.load %arg2[%c0_125, %c0_126] : memref<8x25xbf16, #tpu.memory_space<vmem>>, vector<8x25xbf16>
      %155 = arith.truncf %153 : vector<25x892xf32> to vector<25x892xbf16>
      %cst_127 = arith.constant dense<0.000000e+00> : vector<8x892xf32>
      %156 = tpu.matmul %154, %155, %cst_127 {dimension_numbers = #tpu.dot_dimension_numbers<[1], [0], [0], [1], [0, 0, 1, 1], [], []>} : vector<8x25xbf16>, vector<25x892xbf16>, vector<8x892xf32> -> vector<8x892xf32>
      %c0_128 = arith.constant 0 : index
      %c0_129 = arith.constant 0 : index
      %157 = vector.load %arg3[%c0_128, %c0_129] : memref<8x1xf32, #tpu.memory_space<vmem>>, vector<8x1xf32>
      %158 = vector.broadcast %157 : vector<8x1xf32> to vector<8x892xf32>
      %159 = arith.addf %156, %158 : vector<8x892xf32>
      %cst_130 = arith.constant 0.000000e+00 : f32
      %160 = vector.broadcast %cst_130 : f32 to vector<8x892xf32>
      %161 = arith.maximumf %159, %160 : vector<8x892xf32>
      %c8_i32_131 = arith.constant 8 : i32
      %162 = arith.muli %arg17, %c8_i32_131 : i32
      %163 = tpu.assume_multiple %162, 8 : i32
      %164 = arith.index_cast %163 : i32 to index
      %c0_132 = arith.constant 0 : index
      %165 = vector.load %arg14[%164, %c0_132] : memref<64x892xf32, #tpu.memory_space<vmem>>, vector<8x892xf32>
      tpu.vector_store %arg14[%164, %c0_132], %161 {strides = array<i32>} : memref<64x892xf32, #tpu.memory_space<vmem>>, vector<8x892xf32>,
    }
    %c8_i32_0 = arith.constant 8 : i32
    %c0 = arith.constant 0 : index
    %c0_1 = arith.constant 0 : index
    %1 = vector.load %arg14[%c0, %c0_1] : memref<64x892xf32, #tpu.memory_space<vmem>>, vector<64x892xf32>
    %2 = arith.truncf %1 : vector<64x892xf32> to vector<64x892xbf16>
    %c0_2 = arith.constant 0 : index
    %c0_3 = arith.constant 0 : index
    %3 = vector.load %arg4[%c0_2, %c0_3] : memref<892x256xbf16, #tpu.memory_space<vmem>>, vector<892x256xbf16>
    %cst = arith.constant dense<0.000000e+00> : vector<64x256xf32>
    %4 = tpu.matmul %2, %3, %cst {dimension_numbers = #tpu.dot_dimension_numbers<[1], [0], [0], [1], [0, 0, 1, 1], [], []>} : vector<64x892xbf16>, vector<892x256xbf16>, vector<64x256xf32> -> vector<64x256xf32>
    %c0_4 = arith.constant 0 : index
    %c0_5 = arith.constant 0 : index
    %5 = vector.load %arg15[%c0_4, %c0_5] : memref<64x256xf32, #tpu.memory_space<vmem>>, vector<64x256xf32>
    tpu.vector_store %arg15[%c0_4, %c0_5], %4 {strides = array<i32>} : memref<64x256xf32, #tpu.memory_space<vmem>>, vector<64x256xf32>,
    %c0_i32_6 = arith.constant 0 : i32
    %c8_i32_7 = arith.constant 8 : i32
    %6 = arith.addi %c0_i32_6, %c8_i32_7 : i32
    %c1_i32_8 = arith.constant 1 : i32
    scf.for %arg17 = %c0_i32_6 to %6 step %c1_i32_8  : i32 {
      %c8_i32_124 = arith.constant 8 : i32
      %140 = arith.muli %arg17, %c8_i32_124 : i32
      %141 = tpu.assume_multiple %140, 8 : i32
      %142 = arith.index_cast %141 : i32 to index
      %c0_125 = arith.constant 0 : index
      %143 = vector.load %arg15[%142, %c0_125] : memref<64x256xf32, #tpu.memory_space<vmem>>, vector<8x256xf32>
      %144 = vector.extract_strided_slice %143 {offsets = [0, 0], sizes = [8, 144], strides = [1, 1]} : vector<8x256xf32> to vector<8x144xf32>
      %145 = vector.extract_strided_slice %143 {offsets = [0, 14], sizes = [8, 144], strides = [1, 1]} : vector<8x256xf32> to vector<8x144xf32>
      %146 = vector.extract_strided_slice %143 {offsets = [0, 28], sizes = [8, 144], strides = [1, 1]} : vector<8x256xf32> to vector<8x144xf32>
      %147 = vector.extract_strided_slice %143 {offsets = [0, 42], sizes = [8, 144], strides = [1, 1]} : vector<8x256xf32> to vector<8x144xf32>
      %148 = vector.extract_strided_slice %143 {offsets = [0, 56], sizes = [8, 144], strides = [1, 1]} : vector<8x256xf32> to vector<8x144xf32>
      %149 = tpu.concatenate %144, %145, %146, %147, %148 in 0 : vector<8x144xf32>, vector<8x144xf32>, vector<8x144xf32>, vector<8x144xf32>, vector<8x144xf32> -> vector<40x144xf32>
      %150 = vector.extract_strided_slice %149 {offsets = [0, 0], sizes = [40, 140], strides = [1, 1]} : vector<40x144xf32> to vector<40x140xf32>
      %151 = vector.extract_strided_slice %149 {offsets = [0, 1], sizes = [40, 140], strides = [1, 1]} : vector<40x144xf32> to vector<40x140xf32>
      %152 = vector.extract_strided_slice %149 {offsets = [0, 2], sizes = [40, 140], strides = [1, 1]} : vector<40x144xf32> to vector<40x140xf32>
      %153 = vector.extract_strided_slice %149 {offsets = [0, 3], sizes = [40, 140], strides = [1, 1]} : vector<40x144xf32> to vector<40x140xf32>
      %154 = vector.extract_strided_slice %149 {offsets = [0, 4], sizes = [40, 140], strides = [1, 1]} : vector<40x144xf32> to vector<40x140xf32>
      %155 = tpu.concatenate %150, %151, %152, %153, %154 in 0 : vector<40x140xf32>, vector<40x140xf32>, vector<40x140xf32>, vector<40x140xf32>, vector<40x140xf32> -> vector<200x140xf32>
      %c0_126 = arith.constant 0 : index
      %c0_127 = arith.constant 0 : index
      %156 = vector.load %arg5[%c0_126, %c0_127] : memref<16x200xbf16, #tpu.memory_space<vmem>>, vector<16x200xbf16>
      %157 = arith.truncf %155 : vector<200x140xf32> to vector<200x140xbf16>
      %cst_128 = arith.constant dense<0.000000e+00> : vector<16x140xf32>
      %158 = tpu.matmul %156, %157, %cst_128 {dimension_numbers = #tpu.dot_dimension_numbers<[1], [0], [0], [1], [0, 0, 1, 1], [], []>} : vector<16x200xbf16>, vector<200x140xbf16>, vector<16x140xf32> -> vector<16x140xf32>
      %c0_129 = arith.constant 0 : index
      %c0_130 = arith.constant 0 : index
      %159 = vector.load %arg6[%c0_129, %c0_130] : memref<16x1xf32, #tpu.memory_space<vmem>>, vector<16x1xf32>
      %160 = vector.broadcast %159 : vector<16x1xf32> to vector<16x140xf32>
      %161 = arith.addf %158, %160 : vector<16x140xf32>
      %cst_131 = arith.constant 0.000000e+00 : f32
      %162 = vector.broadcast %cst_131 : f32 to vector<16x140xf32>
      %163 = arith.maximumf %161, %162 : vector<16x140xf32>
      %164 = arith.index_cast %arg17 : i32 to index
      %c0_132 = arith.constant 0 : index
      %c0_133 = arith.constant 0 : index
      %165 = vector.load %arg16[%164, %c0_132, %c0_133] : memref<8x16x140xf32, #tpu.memory_space<vmem>>, vector<1x16x140xf32>
      %166 = vector.shape_cast %165 : vector<1x16x140xf32> to vector<16x140xf32>
      %167 = vector.shape_cast %163 : vector<16x140xf32> to vector<1x16x140xf32>
      tpu.vector_store %arg16[%164, %c0_132, %c0_133], %167 {strides = array<i32>} : memref<8x16x140xf32, #tpu.memory_space<vmem>>, vector<1x16x140xf32>,
    }
    %c8_i32_9 = arith.constant 8 : i32
    %cst_10 = arith.constant 0.000000e+00 : f32
    %7 = vector.broadcast %cst_10 : f32 to vector<8x128xf32>
    %c0_11 = arith.constant 0 : index
    %c0_12 = arith.constant 0 : index
    %c0_13 = arith.constant 0 : index
    %8 = vector.load %arg16[%c0_11, %c0_12, %c0_13] : memref<8x16x140xf32, #tpu.memory_space<vmem>>, vector<8x1x140xf32>
    %9 = vector.shape_cast %8 : vector<8x1x140xf32> to vector<8x140xf32>
    %10 = arith.truncf %9 : vector<8x140xf32> to vector<8x140xbf16>
    %c0_14 = arith.constant 0 : index
    %c0_15 = arith.constant 0 : index
    %c0_16 = arith.constant 0 : index
    %11 = vector.load %arg7[%c0_14, %c0_15, %c0_16] : memref<16x140x128xbf16, #tpu.memory_space<vmem>>, vector<1x140x128xbf16>
    %12 = vector.shape_cast %11 : vector<1x140x128xbf16> to vector<140x128xbf16>
    %cst_17 = arith.constant dense<0.000000e+00> : vector<8x128xf32>
    %13 = tpu.matmul %10, %12, %cst_17 {dimension_numbers = #tpu.dot_dimension_numbers<[1], [0], [0], [1], [0, 0, 1, 1], [], []>} : vector<8x140xbf16>, vector<140x128xbf16>, vector<8x128xf32> -> vector<8x128xf32>
    %14 = arith.addf %7, %13 : vector<8x128xf32>
    %c0_18 = arith.constant 0 : index
    %c1 = arith.constant 1 : index
    %c0_19 = arith.constant 0 : index
    %15 = vector.load %arg16[%c0_18, %c1, %c0_19] : memref<8x16x140xf32, #tpu.memory_space<vmem>>, vector<8x1x140xf32>
    %16 = vector.shape_cast %15 : vector<8x1x140xf32> to vector<8x140xf32>
    %17 = arith.truncf %16 : vector<8x140xf32> to vector<8x140xbf16>
    %c1_20 = arith.constant 1 : index
    %c0_21 = arith.constant 0 : index
    %c0_22 = arith.constant 0 : index
    %18 = vector.load %arg7[%c1_20, %c0_21, %c0_22] : memref<16x140x128xbf16, #tpu.memory_space<vmem>>, vector<1x140x128xbf16>
    %19 = vector.shape_cast %18 : vector<1x140x128xbf16> to vector<140x128xbf16>
    %cst_23 = arith.constant dense<0.000000e+00> : vector<8x128xf32>
    %20 = tpu.matmul %17, %19, %cst_23 {dimension_numbers = #tpu.dot_dimension_numbers<[1], [0], [0], [1], [0, 0, 1, 1], [], []>} : vector<8x140xbf16>, vector<140x128xbf16>, vector<8x128xf32> -> vector<8x128xf32>
    %21 = arith.addf %14, %20 : vector<8x128xf32>
    %c0_24 = arith.constant 0 : index
    %c2 = arith.constant 2 : index
    %c0_25 = arith.constant 0 : index
    %22 = vector.load %arg16[%c0_24, %c2, %c0_25] : memref<8x16x140xf32, #tpu.memory_space<vmem>>, vector<8x1x140xf32>
    %23 = vector.shape_cast %22 : vector<8x1x140xf32> to vector<8x140xf32>
    %24 = arith.truncf %23 : vector<8x140xf32> to vector<8x140xbf16>
    %c2_26 = arith.constant 2 : index
    %c0_27 = arith.constant 0 : index
    %c0_28 = arith.constant 0 : index
    %25 = vector.load %arg7[%c2_26, %c0_27, %c0_28] : memref<16x140x128xbf16, #tpu.memory_space<vmem>>, vector<1x140x128xbf16>
    %26 = vector.shape_cast %25 : vector<1x140x128xbf16> to vector<140x128xbf16>
    %cst_29 = arith.constant dense<0.000000e+00> : vector<8x128xf32>
    %27 = tpu.matmul %24, %26, %cst_29 {dimension_numbers = #tpu.dot_dimension_numbers<[1], [0], [0], [1], [0, 0, 1, 1], [], []>} : vector<8x140xbf16>, vector<140x128xbf16>, vector<8x128xf32> -> vector<8x128xf32>
    %28 = arith.addf %21, %27 : vector<8x128xf32>
    %c0_30 = arith.constant 0 : index
    %c3 = arith.constant 3 : index
    %c0_31 = arith.constant 0 : index
    %29 = vector.load %arg16[%c0_30, %c3, %c0_31] : memref<8x16x140xf32, #tpu.memory_space<vmem>>, vector<8x1x140xf32>
    %30 = vector.shape_cast %29 : vector<8x1x140xf32> to vector<8x140xf32>
    %31 = arith.truncf %30 : vector<8x140xf32> to vector<8x140xbf16>
    %c3_32 = arith.constant 3 : index
    %c0_33 = arith.constant 0 : index
    %c0_34 = arith.constant 0 : index
    %32 = vector.load %arg7[%c3_32, %c0_33, %c0_34] : memref<16x140x128xbf16, #tpu.memory_space<vmem>>, vector<1x140x128xbf16>
    %33 = vector.shape_cast %32 : vector<1x140x128xbf16> to vector<140x128xbf16>
    %cst_35 = arith.constant dense<0.000000e+00> : vector<8x128xf32>
    %34 = tpu.matmul %31, %33, %cst_35 {dimension_numbers = #tpu.dot_dimension_numbers<[1], [0], [0], [1], [0, 0, 1, 1], [], []>} : vector<8x140xbf16>, vector<140x128xbf16>, vector<8x128xf32> -> vector<8x128xf32>
    %35 = arith.addf %28, %34 : vector<8x128xf32>
    %c0_36 = arith.constant 0 : index
    %c4 = arith.constant 4 : index
    %c0_37 = arith.constant 0 : index
    %36 = vector.load %arg16[%c0_36, %c4, %c0_37] : memref<8x16x140xf32, #tpu.memory_space<vmem>>, vector<8x1x140xf32>
    %37 = vector.shape_cast %36 : vector<8x1x140xf32> to vector<8x140xf32>
    %38 = arith.truncf %37 : vector<8x140xf32> to vector<8x140xbf16>
    %c4_38 = arith.constant 4 : index
    %c0_39 = arith.constant 0 : index
    %c0_40 = arith.constant 0 : index
    %39 = vector.load %arg7[%c4_38, %c0_39, %c0_40] : memref<16x140x128xbf16, #tpu.memory_space<vmem>>, vector<1x140x128xbf16>
    %40 = vector.shape_cast %39 : vector<1x140x128xbf16> to vector<140x128xbf16>
    %cst_41 = arith.constant dense<0.000000e+00> : vector<8x128xf32>
    %41 = tpu.matmul %38, %40, %cst_41 {dimension_numbers = #tpu.dot_dimension_numbers<[1], [0], [0], [1], [0, 0, 1, 1], [], []>} : vector<8x140xbf16>, vector<140x128xbf16>, vector<8x128xf32> -> vector<8x128xf32>
    %42 = arith.addf %35, %41 : vector<8x128xf32>
    %c0_42 = arith.constant 0 : index
    %c5 = arith.constant 5 : index
    %c0_43 = arith.constant 0 : index
    %43 = vector.load %arg16[%c0_42, %c5, %c0_43] : memref<8x16x140xf32, #tpu.memory_space<vmem>>, vector<8x1x140xf32>
    %44 = vector.shape_cast %43 : vector<8x1x140xf32> to vector<8x140xf32>
    %45 = arith.truncf %44 : vector<8x140xf32> to vector<8x140xbf16>
    %c5_44 = arith.constant 5 : index
    %c0_45 = arith.constant 0 : index
    %c0_46 = arith.constant 0 : index
    %46 = vector.load %arg7[%c5_44, %c0_45, %c0_46] : memref<16x140x128xbf16, #tpu.memory_space<vmem>>, vector<1x140x128xbf16>
    %47 = vector.shape_cast %46 : vector<1x140x128xbf16> to vector<140x128xbf16>
    %cst_47 = arith.constant dense<0.000000e+00> : vector<8x128xf32>
    %48 = tpu.matmul %45, %47, %cst_47 {dimension_numbers = #tpu.dot_dimension_numbers<[1], [0], [0], [1], [0, 0, 1, 1], [], []>} : vector<8x140xbf16>, vector<140x128xbf16>, vector<8x128xf32> -> vector<8x128xf32>
    %49 = arith.addf %42, %48 : vector<8x128xf32>
    %c0_48 = arith.constant 0 : index
    %c6 = arith.constant 6 : index
    %c0_49 = arith.constant 0 : index
    %50 = vector.load %arg16[%c0_48, %c6, %c0_49] : memref<8x16x140xf32, #tpu.memory_space<vmem>>, vector<8x1x140xf32>
    %51 = vector.shape_cast %50 : vector<8x1x140xf32> to vector<8x140xf32>
    %52 = arith.truncf %51 : vector<8x140xf32> to vector<8x140xbf16>
    %c6_50 = arith.constant 6 : index
    %c0_51 = arith.constant 0 : index
    %c0_52 = arith.constant 0 : index
    %53 = vector.load %arg7[%c6_50, %c0_51, %c0_52] : memref<16x140x128xbf16, #tpu.memory_space<vmem>>, vector<1x140x128xbf16>
    %54 = vector.shape_cast %53 : vector<1x140x128xbf16> to vector<140x128xbf16>
    %cst_53 = arith.constant dense<0.000000e+00> : vector<8x128xf32>
    %55 = tpu.matmul %52, %54, %cst_53 {dimension_numbers = #tpu.dot_dimension_numbers<[1], [0], [0], [1], [0, 0, 1, 1], [], []>} : vector<8x140xbf16>, vector<140x128xbf16>, vector<8x128xf32> -> vector<8x128xf32>
    %56 = arith.addf %49, %55 : vector<8x128xf32>
    %c0_54 = arith.constant 0 : index
    %c7 = arith.constant 7 : index
    %c0_55 = arith.constant 0 : index
    %57 = vector.load %arg16[%c0_54, %c7, %c0_55] : memref<8x16x140xf32, #tpu.memory_space<vmem>>, vector<8x1x140xf32>
    %58 = vector.shape_cast %57 : vector<8x1x140xf32> to vector<8x140xf32>
    %59 = arith.truncf %58 : vector<8x140xf32> to vector<8x140xbf16>
    %c7_56 = arith.constant 7 : index
    %c0_57 = arith.constant 0 : index
    %c0_58 = arith.constant 0 : index
    %60 = vector.load %arg7[%c7_56, %c0_57, %c0_58] : memref<16x140x128xbf16, #tpu.memory_space<vmem>>, vector<1x140x128xbf16>
    %61 = vector.shape_cast %60 : vector<1x140x128xbf16> to vector<140x128xbf16>
    %cst_59 = arith.constant dense<0.000000e+00> : vector<8x128xf32>
    %62 = tpu.matmul %59, %61, %cst_59 {dimension_numbers = #tpu.dot_dimension_numbers<[1], [0], [0], [1], [0, 0, 1, 1], [], []>} : vector<8x140xbf16>, vector<140x128xbf16>, vector<8x128xf32> -> vector<8x128xf32>
    %63 = arith.addf %56, %62 : vector<8x128xf32>
    %c0_60 = arith.constant 0 : index
    %c8 = arith.constant 8 : index
    %c0_61 = arith.constant 0 : index
    %64 = vector.load %arg16[%c0_60, %c8, %c0_61] : memref<8x16x140xf32, #tpu.memory_space<vmem>>, vector<8x1x140xf32>
    %65 = vector.shape_cast %64 : vector<8x1x140xf32> to vector<8x140xf32>
    %66 = arith.truncf %65 : vector<8x140xf32> to vector<8x140xbf16>
    %c8_62 = arith.constant 8 : index
    %c0_63 = arith.constant 0 : index
    %c0_64 = arith.constant 0 : index
    %67 = vector.load %arg7[%c8_62, %c0_63, %c0_64] : memref<16x140x128xbf16, #tpu.memory_space<vmem>>, vector<1x140x128xbf16>
    %68 = vector.shape_cast %67 : vector<1x140x128xbf16> to vector<140x128xbf16>
    %cst_65 = arith.constant dense<0.000000e+00> : vector<8x128xf32>
    %69 = tpu.matmul %66, %68, %cst_65 {dimension_numbers = #tpu.dot_dimension_numbers<[1], [0], [0], [1], [0, 0, 1, 1], [], []>} : vector<8x140xbf16>, vector<140x128xbf16>, vector<8x128xf32> -> vector<8x128xf32>
    %70 = arith.addf %63, %69 : vector<8x128xf32>
    %c0_66 = arith.constant 0 : index
    %c9 = arith.constant 9 : index
    %c0_67 = arith.constant 0 : index
    %71 = vector.load %arg16[%c0_66, %c9, %c0_67] : memref<8x16x140xf32, #tpu.memory_space<vmem>>, vector<8x1x140xf32>
    %72 = vector.shape_cast %71 : vector<8x1x140xf32> to vector<8x140xf32>
    %73 = arith.truncf %72 : vector<8x140xf32> to vector<8x140xbf16>
    %c9_68 = arith.constant 9 : index
    %c0_69 = arith.constant 0 : index
    %c0_70 = arith.constant 0 : index
    %74 = vector.load %arg7[%c9_68, %c0_69, %c0_70] : memref<16x140x128xbf16, #tpu.memory_space<vmem>>, vector<1x140x128xbf16>
    %75 = vector.shape_cast %74 : vector<1x140x128xbf16> to vector<140x128xbf16>
    %cst_71 = arith.constant dense<0.000000e+00> : vector<8x128xf32>
    %76 = tpu.matmul %73, %75, %cst_71 {dimension_numbers = #tpu.dot_dimension_numbers<[1], [0], [0], [1], [0, 0, 1, 1], [], []>} : vector<8x140xbf16>, vector<140x128xbf16>, vector<8x128xf32> -> vector<8x128xf32>
    %77 = arith.addf %70, %76 : vector<8x128xf32>
    %c0_72 = arith.constant 0 : index
    %c10 = arith.constant 10 : index
    %c0_73 = arith.constant 0 : index
    %78 = vector.load %arg16[%c0_72, %c10, %c0_73] : memref<8x16x140xf32, #tpu.memory_space<vmem>>, vector<8x1x140xf32>
    %79 = vector.shape_cast %78 : vector<8x1x140xf32> to vector<8x140xf32>
    %80 = arith.truncf %79 : vector<8x140xf32> to vector<8x140xbf16>
    %c10_74 = arith.constant 10 : index
    %c0_75 = arith.constant 0 : index
    %c0_76 = arith.constant 0 : index
    %81 = vector.load %arg7[%c10_74, %c0_75, %c0_76] : memref<16x140x128xbf16, #tpu.memory_space<vmem>>, vector<1x140x128xbf16>
    %82 = vector.shape_cast %81 : vector<1x140x128xbf16> to vector<140x128xbf16>
    %cst_77 = arith.constant dense<0.000000e+00> : vector<8x128xf32>
    %83 = tpu.matmul %80, %82, %cst_77 {dimension_numbers = #tpu.dot_dimension_numbers<[1], [0], [0], [1], [0, 0, 1, 1], [], []>} : vector<8x140xbf16>, vector<140x128xbf16>, vector<8x128xf32> -> vector<8x128xf32>
    %84 = arith.addf %77, %83 : vector<8x128xf32>
    %c0_78 = arith.constant 0 : index
    %c11 = arith.constant 11 : index
    %c0_79 = arith.constant 0 : index
    %85 = vector.load %arg16[%c0_78, %c11, %c0_79] : memref<8x16x140xf32, #tpu.memory_space<vmem>>, vector<8x1x140xf32>
    %86 = vector.shape_cast %85 : vector<8x1x140xf32> to vector<8x140xf32>
    %87 = arith.truncf %86 : vector<8x140xf32> to vector<8x140xbf16>
    %c11_80 = arith.constant 11 : index
    %c0_81 = arith.constant 0 : index
    %c0_82 = arith.constant 0 : index
    %88 = vector.load %arg7[%c11_80, %c0_81, %c0_82] : memref<16x140x128xbf16, #tpu.memory_space<vmem>>, vector<1x140x128xbf16>
    %89 = vector.shape_cast %88 : vector<1x140x128xbf16> to vector<140x128xbf16>
    %cst_83 = arith.constant dense<0.000000e+00> : vector<8x128xf32>
    %90 = tpu.matmul %87, %89, %cst_83 {dimension_numbers = #tpu.dot_dimension_numbers<[1], [0], [0], [1], [0, 0, 1, 1], [], []>} : vector<8x140xbf16>, vector<140x128xbf16>, vector<8x128xf32> -> vector<8x128xf32>
    %91 = arith.addf %84, %90 : vector<8x128xf32>
    %c0_84 = arith.constant 0 : index
    %c12 = arith.constant 12 : index
    %c0_85 = arith.constant 0 : index
    %92 = vector.load %arg16[%c0_84, %c12, %c0_85] : memref<8x16x140xf32, #tpu.memory_space<vmem>>, vector<8x1x140xf32>
    %93 = vector.shape_cast %92 : vector<8x1x140xf32> to vector<8x140xf32>
    %94 = arith.truncf %93 : vector<8x140xf32> to vector<8x140xbf16>
    %c12_86 = arith.constant 12 : index
    %c0_87 = arith.constant 0 : index
    %c0_88 = arith.constant 0 : index
    %95 = vector.load %arg7[%c12_86, %c0_87, %c0_88] : memref<16x140x128xbf16, #tpu.memory_space<vmem>>, vector<1x140x128xbf16>
    %96 = vector.shape_cast %95 : vector<1x140x128xbf16> to vector<140x128xbf16>
    %cst_89 = arith.constant dense<0.000000e+00> : vector<8x128xf32>
    %97 = tpu.matmul %94, %96, %cst_89 {dimension_numbers = #tpu.dot_dimension_numbers<[1], [0], [0], [1], [0, 0, 1, 1], [], []>} : vector<8x140xbf16>, vector<140x128xbf16>, vector<8x128xf32> -> vector<8x128xf32>
    %98 = arith.addf %91, %97 : vector<8x128xf32>
    %c0_90 = arith.constant 0 : index
    %c13 = arith.constant 13 : index
    %c0_91 = arith.constant 0 : index
    %99 = vector.load %arg16[%c0_90, %c13, %c0_91] : memref<8x16x140xf32, #tpu.memory_space<vmem>>, vector<8x1x140xf32>
    %100 = vector.shape_cast %99 : vector<8x1x140xf32> to vector<8x140xf32>
    %101 = arith.truncf %100 : vector<8x140xf32> to vector<8x140xbf16>
    %c13_92 = arith.constant 13 : index
    %c0_93 = arith.constant 0 : index
    %c0_94 = arith.constant 0 : index
    %102 = vector.load %arg7[%c13_92, %c0_93, %c0_94] : memref<16x140x128xbf16, #tpu.memory_space<vmem>>, vector<1x140x128xbf16>
    %103 = vector.shape_cast %102 : vector<1x140x128xbf16> to vector<140x128xbf16>
    %cst_95 = arith.constant dense<0.000000e+00> : vector<8x128xf32>
    %104 = tpu.matmul %101, %103, %cst_95 {dimension_numbers = #tpu.dot_dimension_numbers<[1], [0], [0], [1], [0, 0, 1, 1], [], []>} : vector<8x140xbf16>, vector<140x128xbf16>, vector<8x128xf32> -> vector<8x128xf32>
    %105 = arith.addf %98, %104 : vector<8x128xf32>
    %c0_96 = arith.constant 0 : index
    %c14 = arith.constant 14 : index
    %c0_97 = arith.constant 0 : index
    %106 = vector.load %arg16[%c0_96, %c14, %c0_97] : memref<8x16x140xf32, #tpu.memory_space<vmem>>, vector<8x1x140xf32>
    %107 = vector.shape_cast %106 : vector<8x1x140xf32> to vector<8x140xf32>
    %108 = arith.truncf %107 : vector<8x140xf32> to vector<8x140xbf16>
    %c14_98 = arith.constant 14 : index
    %c0_99 = arith.constant 0 : index
    %c0_100 = arith.constant 0 : index
    %109 = vector.load %arg7[%c14_98, %c0_99, %c0_100] : memref<16x140x128xbf16, #tpu.memory_space<vmem>>, vector<1x140x128xbf16>
    %110 = vector.shape_cast %109 : vector<1x140x128xbf16> to vector<140x128xbf16>
    %cst_101 = arith.constant dense<0.000000e+00> : vector<8x128xf32>
    %111 = tpu.matmul %108, %110, %cst_101 {dimension_numbers = #tpu.dot_dimension_numbers<[1], [0], [0], [1], [0, 0, 1, 1], [], []>} : vector<8x140xbf16>, vector<140x128xbf16>, vector<8x128xf32> -> vector<8x128xf32>
    %112 = arith.addf %105, %111 : vector<8x128xf32>
    %c0_102 = arith.constant 0 : index
    %c15 = arith.constant 15 : index
    %c0_103 = arith.constant 0 : index
    %113 = vector.load %arg16[%c0_102, %c15, %c0_103] : memref<8x16x140xf32, #tpu.memory_space<vmem>>, vector<8x1x140xf32>
    %114 = vector.shape_cast %113 : vector<8x1x140xf32> to vector<8x140xf32>
    %115 = arith.truncf %114 : vector<8x140xf32> to vector<8x140xbf16>
    %c15_104 = arith.constant 15 : index
    %c0_105 = arith.constant 0 : index
    %c0_106 = arith.constant 0 : index
    %116 = vector.load %arg7[%c15_104, %c0_105, %c0_106] : memref<16x140x128xbf16, #tpu.memory_space<vmem>>, vector<1x140x128xbf16>
    %117 = vector.shape_cast %116 : vector<1x140x128xbf16> to vector<140x128xbf16>
    %cst_107 = arith.constant dense<0.000000e+00> : vector<8x128xf32>
    %118 = tpu.matmul %115, %117, %cst_107 {dimension_numbers = #tpu.dot_dimension_numbers<[1], [0], [0], [1], [0, 0, 1, 1], [], []>} : vector<8x140xbf16>, vector<140x128xbf16>, vector<8x128xf32> -> vector<8x128xf32>
    %119 = arith.addf %112, %118 : vector<8x128xf32>
    %c0_108 = arith.constant 0 : index
    %c0_109 = arith.constant 0 : index
    %120 = vector.load %arg8[%c0_108, %c0_109] : memref<1x128xf32, #tpu.memory_space<vmem>>, vector<1x128xf32>
    %121 = vector.broadcast %120 : vector<1x128xf32> to vector<8x128xf32>
    %122 = arith.addf %119, %121 : vector<8x128xf32>
    %cst_110 = arith.constant 0.000000e+00 : f32
    %123 = vector.broadcast %cst_110 : f32 to vector<8x128xf32>
    %124 = arith.maximumf %122, %123 : vector<8x128xf32>
    %125 = arith.truncf %124 : vector<8x128xf32> to vector<8x128xbf16>
    %c0_111 = arith.constant 0 : index
    %c0_112 = arith.constant 0 : index
    %126 = vector.load %arg9[%c0_111, %c0_112] : memref<128x128xbf16, #tpu.memory_space<vmem>>, vector<128x128xbf16>
    %cst_113 = arith.constant dense<0.000000e+00> : vector<8x128xf32>
    %127 = tpu.matmul %125, %126, %cst_113 {dimension_numbers = #tpu.dot_dimension_numbers<[1], [0], [0], [1], [0, 0, 1, 1], [], []>} : vector<8x128xbf16>, vector<128x128xbf16>, vector<8x128xf32> -> vector<8x128xf32>
    %c0_114 = arith.constant 0 : index
    %c0_115 = arith.constant 0 : index
    %128 = vector.load %arg10[%c0_114, %c0_115] : memref<1x128xf32, #tpu.memory_space<vmem>>, vector<1x128xf32>
    %129 = vector.broadcast %128 : vector<1x128xf32> to vector<8x128xf32>
    %130 = arith.addf %127, %129 : vector<8x128xf32>
    %cst_116 = arith.constant 0.000000e+00 : f32
    %131 = vector.broadcast %cst_116 : f32 to vector<8x128xf32>
    %132 = arith.maximumf %130, %131 : vector<8x128xf32>
    %133 = arith.truncf %132 : vector<8x128xf32> to vector<8x128xbf16>
    %c0_117 = arith.constant 0 : index
    %c0_118 = arith.constant 0 : index
    %134 = vector.load %arg11[%c0_117, %c0_118] : memref<128x128xbf16, #tpu.memory_space<vmem>>, vector<128x128xbf16>
    %cst_119 = arith.constant dense<0.000000e+00> : vector<8x128xf32>
    %135 = tpu.matmul %133, %134, %cst_119 {dimension_numbers = #tpu.dot_dimension_numbers<[1], [0], [0], [1], [0, 0, 1, 1], [], []>} : vector<8x128xbf16>, vector<128x128xbf16>, vector<8x128xf32> -> vector<8x128xf32>
    %c0_120 = arith.constant 0 : index
    %c0_121 = arith.constant 0 : index
    %136 = vector.load %arg12[%c0_120, %c0_121] : memref<1x128xf32, #tpu.memory_space<vmem>>, vector<1x128xf32>
    %137 = vector.broadcast %136 : vector<1x128xf32> to vector<8x128xf32>
    %138 = arith.addf %135, %137 : vector<8x128xf32>
    %c0_122 = arith.constant 0 : index
    %c0_123 = arith.constant 0 : index
    %139 = vector.load %arg13[%c0_122, %c0_123] : memref<8x128xf32, #tpu.memory_space<vmem>>, vector<8x128xf32>
    tpu.vector_store %arg13[%c0_122, %c0_123], %138 {strides = array<i32>} : memref<8x128xf32, #tpu.memory_space<vmem>>, vector<8x128xf32>,
    return
  }
  func.func @transform_0(%arg0: i32) -> (i32, i32) {
    %c0_i32 = arith.constant 0 : i32
    %c0_i32_0 = arith.constant 0 : i32
    return %arg0, %c0_i32 : i32, i32
  }
  func.func @transform_1(%arg0: i32) -> (i32, i32) {
    %c0_i32 = arith.constant 0 : i32
    %c0_i32_0 = arith.constant 0 : i32
    %c0_i32_1 = arith.constant 0 : i32
    return %c0_i32, %c0_i32_0 : i32, i32
  }
  func.func @transform_2(%arg0: i32) -> (i32, i32) {
    %c0_i32 = arith.constant 0 : i32
    %c0_i32_0 = arith.constant 0 : i32
    %c0_i32_1 = arith.constant 0 : i32
    return %c0_i32, %c0_i32_0 : i32, i32
  }
  func.func @transform_3(%arg0: i32) -> (i32, i32) {
    %c0_i32 = arith.constant 0 : i32
    %c0_i32_0 = arith.constant 0 : i32
    %c0_i32_1 = arith.constant 0 : i32
    return %c0_i32, %c0_i32_0 : i32, i32
  }
  func.func @transform_4(%arg0: i32) -> (i32, i32) {
    %c0_i32 = arith.constant 0 : i32
    %c0_i32_0 = arith.constant 0 : i32
    %c0_i32_1 = arith.constant 0 : i32
    return %c0_i32, %c0_i32_0 : i32, i32
  }
  func.func @transform_5(%arg0: i32) -> (i32, i32) {
    %c0_i32 = arith.constant 0 : i32
    %c0_i32_0 = arith.constant 0 : i32
    %c0_i32_1 = arith.constant 0 : i32
    return %c0_i32, %c0_i32_0 : i32, i32
  }
  func.func @transform_6(%arg0: i32) -> (i32, i32, i32) {
    %c0_i32 = arith.constant 0 : i32
    %c0_i32_0 = arith.constant 0 : i32
    %c0_i32_1 = arith.constant 0 : i32
    %c0_i32_2 = arith.constant 0 : i32
    return %c0_i32, %c0_i32_0, %c0_i32_1 : i32, i32, i32
  }
  func.func @transform_7(%arg0: i32) -> (i32, i32) {
    %c0_i32 = arith.constant 0 : i32
    %c0_i32_0 = arith.constant 0 : i32
    %c0_i32_1 = arith.constant 0 : i32
    return %c0_i32, %c0_i32_0 : i32, i32
  }
  func.func @transform_8(%arg0: i32) -> (i32, i32) {
    %c0_i32 = arith.constant 0 : i32
    %c0_i32_0 = arith.constant 0 : i32
    %c0_i32_1 = arith.constant 0 : i32
    return %c0_i32, %c0_i32_0 : i32, i32
  }
  func.func @transform_9(%arg0: i32) -> (i32, i32) {
    %c0_i32 = arith.constant 0 : i32
    %c0_i32_0 = arith.constant 0 : i32
    %c0_i32_1 = arith.constant 0 : i32
    return %c0_i32, %c0_i32_0 : i32, i32
  }
  func.func @transform_10(%arg0: i32) -> (i32, i32) {
    %c0_i32 = arith.constant 0 : i32
    %c0_i32_0 = arith.constant 0 : i32
    %c0_i32_1 = arith.constant 0 : i32
    return %c0_i32, %c0_i32_0 : i32, i32
  }
  func.func @transform_11(%arg0: i32) -> (i32, i32) {
    %c0_i32 = arith.constant 0 : i32
    %c0_i32_0 = arith.constant 0 : i32
    %c0_i32_1 = arith.constant 0 : i32
    return %c0_i32, %c0_i32_0 : i32, i32
  }
  func.func @transform_12(%arg0: i32) -> (i32, i32) {
    %c0_i32 = arith.constant 0 : i32
    %c0_i32_0 = arith.constant 0 : i32
    return %arg0, %c0_i32 : i32, i32
  }
}

</mosaic_0001>

<llo_original>
// kernel: tpu_custom_call.1
$region0: #{tpu_custom_call.1}
  #allocation0 [shape = 'u32[]', space=smem, size = 0x4, offset = 0x4, fixed_abs, tag = 'smem constant byte address 0x4 - core index']
  #allocation1 [shape = 'u32[144,128]{1,0:T(1,128)}', space=vmem, size = 0x12000, scoped, tag = 'internal scratch']
  #allocation2 [shape = 'f32[64,892]{1,0:T(8,128)}', space=vmem, size = 0x38000, scoped, tag = 'scratch operand']
  #allocation3 [shape = 'f32[64,256]{1,0:T(8,128)}', space=vmem, size = 0x10000, scoped, tag = 'scratch operand']
  #allocation4 [shape = 'f32[8,16,140]{2,1,0:T(8,128)}', space=vmem, size = 0x20000, scoped, tag = 'scratch operand']
  %s0 = inlined_call_operand.vmem [shape: f32[16,1024], index: 0, kind: input, shape index: {}]
  %s1 = inlined_call_operand.vmem [shape: bf16[8,25], index: 1, kind: input, shape index: {}]
  %s2 = inlined_call_operand.vmem [shape: f32[8,1], index: 2, kind: input, shape index: {}]
  %s3 = inlined_call_operand.vmem [shape: bf16[892,256], index: 3, kind: input, shape index: {}]
  %s4 = inlined_call_operand.vmem [shape: bf16[16,200], index: 4, kind: input, shape index: {}]
  %s5 = inlined_call_operand.vmem [shape: f32[16,1], index: 5, kind: input, shape index: {}]
  %s6 = inlined_call_operand.vmem [shape: bf16[16,140,128], index: 6, kind: input, shape index: {}]
  %s7 = inlined_call_operand.vmem [shape: f32[1,128], index: 7, kind: input, shape index: {}]
  %s8 = inlined_call_operand.vmem [shape: bf16[128,128], index: 8, kind: input, shape index: {}]
  %s9 = inlined_call_operand.vmem [shape: f32[1,128], index: 9, kind: input, shape index: {}]
  %s10 = inlined_call_operand.vmem [shape: bf16[128,128], index: 10, kind: input, shape index: {}]
  %s11 = inlined_call_operand.vmem [shape: f32[1,128], index: 11, kind: input, shape index: {}]
  %s12 = inlined_call_operand.hbm [shape: f32[16,128], index: 12, kind: output, shape index: {}]
  %s13 = sld [smem:[#allocation0]]
  $region95: #{tpu_custom_call.1} parent=0
    _
  %s15 = ssub.s32 1, %s13
  %s16 = scalar_select 0, %s15, %s13
  $region1: #{tpu_custom_call.1} parent=0
    #allocation5 [shape = 'u8[8192]{0}', space=vmem, size = 0x2000, scoped, tag = 'output window, operand 0']
    #allocation6 [shape = 's32[2]{0}', space=sflag, size = 0x8, scoped, tag = 'scoped memory for tpu_custom_call.1']
    %17 = vsyncpa [#allocation6], 0
    %s18 = scalar_lea.sflag [#allocation6], 1
    %19 = vsyncpa %s18, 0
    loop: start=0, step=1, limit=4
    $region2: #{tpu_custom_call.1} parent=1 // loop_pre_header
      _
    $region3: #{tpu_custom_call.1} parent=1 // loop_header
      %s21 = sphi 0, %s25
      %p22 = scmp.ge.s32.totalorder %s21, 4
      %s31 = sphi 0, %s33
      %s34 = sphi 0, %s31
      %s35 = sphi 0, %s34
      %s51 = sphi 0, %s35
      %s55 = sphi 0, %s55
      %s57 = sphi 0, %s55
      %s58 = sphi 0, %s57
      %s72 = sphi 0, %s58
      %s76 = sphi 0, %s76
      %s78 = sphi 0, %s76
      %s79 = sphi 0, %s78
      %s93 = sphi 0, %s79
      %s97 = sphi 0, %s97
      %s99 = sphi 0, %s97
      %s100 = sphi 0, %s99
      %s114 = sphi 0, %s100
      %s118 = sphi 0, %s118
      %s120 = sphi 0, %s118
      %s121 = sphi 0, %s120
      %s135 = sphi 0, %s121
      %s139 = sphi 0, %s139
      %s141 = sphi 0, %s139
      %s142 = sphi 0, %s141
      %s156 = sphi 0, %s142
      %s160 = sphi 0, %s160
      %s162 = sphi 0, %s160
      %s163 = sphi 0, %s162
      %s177 = sphi 0, %s163
      %s181 = sphi 0, %s181
      %s183 = sphi 0, %s181
      %s184 = sphi 0, %s183
      %s198 = sphi 0, %s184
      %s202 = sphi 0, %s202
      %s204 = sphi 0, %s202
      %s205 = sphi 0, %s204
      %s219 = sphi 0, %s205
      %s223 = sphi 0, %s223
      %s225 = sphi 0, %s223
      %s226 = sphi 0, %s225
      %s240 = sphi 0, %s226
      %s244 = sphi 0, %s244
      %s246 = sphi 0, %s244
      %s247 = sphi 0, %s246
      %s261 = sphi 0, %s247
      %s265 = sphi 0, %s265
      %s267 = sphi 0, %s265
      %s268 = sphi 0, %s267
      %s282 = sphi 0, %s268
      %s288 = sphi 0, %s290
      %s291 = sphi 0, %s288
      %s292 = sphi 0, %s291
      %s308 = sphi 0, %s292
    $region4: #{tpu_custom_call.1} parent=1 // loop_header_branch
      %24 = sbr.rel (%p22) target = $region8
    $region5: #{tpu_custom_call.1} parent=1 // loop_body
      %s26 = ssub.s32 %s21, 1
      %s27 = ssub.s32 %s21, 2
      %s28 = sadd.s32 %s21, 1
      %s29 = ssub.s32 %s21, %s28
      %p30 = scmp.eq.s32.totalorder %s29, 0
      %s32 = sadd.s32 %s31, 1
      %s33 = scalar_select %p30, %s31, %s32
      %p36 = pneg %p30
      %p37 = scmp.eq.s32.totalorder %s21, 1
      %p38 = por %p36, %p37
      %p39 = scmp.ne.s32.totalorder %s31, %s34
      %p40 = scmp.eq.s32.totalorder %s21, 0
      %p41 = por %p39, %p40
      %p42 = scmp.ne.s32.totalorder %s31, %s34
      %p43 = scmp.eq.s32.totalorder %s26, 1
      %p44 = por %p42, %p43
      %p45 = scmp.ne.s32.totalorder %s34, %s35
      %p46 = scmp.eq.s32.totalorder %s26, 0
      %p47 = por %p45, %p46
      %p48 = scmp.ne.s32.totalorder %s34, %s35
      %p49 = scmp.eq.s32.totalorder %s27, 1
      %p50 = por %p48, %p49
      %p52 = scmp.ne.s32.totalorder %s35, %s51
      %p53 = scmp.eq.s32.totalorder %s27, 0
      %p54 = por %p52, %p53
      %s56 = sadd.s32 %s55, 1
      %p59 = scmp.eq.s32.totalorder %s21, 1
      %p60 = scmp.ne.s32.totalorder %s55, %s57
      %p61 = scmp.eq.s32.totalorder %s21, 0
      %p62 = por %p60, %p61
      %p63 = scmp.ne.s32.totalorder %s55, %s57
      %p64 = scmp.eq.s32.totalorder %s26, 1
      %p65 = por %p63, %p64
      %p66 = scmp.ne.s32.totalorder %s57, %s58
      %p67 = scmp.eq.s32.totalorder %s26, 0
      %p68 = por %p66, %p67
      %p69 = scmp.ne.s32.totalorder %s57, %s58
      %p70 = scmp.eq.s32.totalorder %s27, 1
      %p71 = por %p69, %p70
      %p73 = scmp.ne.s32.totalorder %s58, %s72
      %p74 = scmp.eq.s32.totalorder %s27, 0
      %p75 = por %p73, %p74
      %s77 = sadd.s32 %s76, 1
      %p80 = scmp.eq.s32.totalorder %s21, 1
      %p81 = scmp.ne.s32.totalorder %s76, %s78
      %p82 = scmp.eq.s32.totalorder %s21, 0
      %p83 = por %p81, %p82
      %p84 = scmp.ne.s32.totalorder %s76, %s78
      %p85 = scmp.eq.s32.totalorder %s26, 1
      %p86 = por %p84, %p85
      %p87 = scmp.ne.s32.totalorder %s78, %s79
      %p88 = scmp.eq.s32.totalorder %s26, 0
      %p89 = por %p87, %p88
      %p90 = scmp.ne.s32.totalorder %s78, %s79
      %p91 = scmp.eq.s32.totalorder %s27, 1
      %p92 = por %p90, %p91
      %p94 = scmp.ne.s32.totalorder %s79, %s93
      %p95 = scmp.eq.s32.totalorder %s27, 0
      %p96 = por %p94, %p95
      %s98 = sadd.s32 %s97, 1
      %p101 = scmp.eq.s32.totalorder %s21, 1
      %p102 = scmp.ne.s32.totalorder %s97, %s99
      %p103 = scmp.eq.s32.totalorder %s21, 0
      %p104 = por %p102, %p103
      %p105 = scmp.ne.s32.totalorder %s97, %s99
      %p106 = scmp.eq.s32.totalorder %s26, 1
      %p107 = por %p105, %p106
      %p108 = scmp.ne.s32.totalorder %s99, %s100
      %p109 = scmp.eq.s32.totalorder %s26, 0
      %p110 = por %p108, %p109
      %p111 = scmp.ne.s32.totalorder %s99, %s100
      %p112 = scmp.eq.s32.totalorder %s27, 1
      %p113 = por %p111, %p112
      %p115 = scmp.ne.s32.totalorder %s100, %s114
      %p116 = scmp.eq.s32.totalorder %s27, 0
      %p117 = por %p115, %p116
      %s119 = sadd.s32 %s118, 1
      %p122 = scmp.eq.s32.totalorder %s21, 1
      %p123 = scmp.ne.s32.totalorder %s118, %s120
      %p124 = scmp.eq.s32.totalorder %s21, 0
      %p125 = por %p123, %p124
      %p126 = scmp.ne.s32.totalorder %s118, %s120
      %p127 = scmp.eq.s32.totalorder %s26, 1
      %p128 = por %p126, %p127
      %p129 = scmp.ne.s32.totalorder %s120, %s121
      %p130 = scmp.eq.s32.totalorder %s26, 0
      %p131 = por %p129, %p130
      %p132 = scmp.ne.s32.totalorder %s120, %s121
      %p133 = scmp.eq.s32.totalorder %s27, 1
      %p134 = por %p132, %p133
      %p136 = scmp.ne.s32.totalorder %s121, %s135
      %p137 = scmp.eq.s32.totalorder %s27, 0
      %p138 = por %p136, %p137
      %s140 = sadd.s32 %s139, 1
      %p143 = scmp.eq.s32.totalorder %s21, 1
      %p144 = scmp.ne.s32.totalorder %s139, %s141
      %p145 = scmp.eq.s32.totalorder %s21, 0
      %p146 = por %p144, %p145
      %p147 = scmp.ne.s32.totalorder %s139, %s141
      %p148 = scmp.eq.s32.totalorder %s26, 1
      %p149 = por %p147, %p148
      %p150 = scmp.ne.s32.totalorder %s141, %s142
      %p151 = scmp.eq.s32.totalorder %s26, 0
      %p152 = por %p150, %p151
      %p153 = scmp.ne.s32.totalorder %s141, %s142
      %p154 = scmp.eq.s32.totalorder %s27, 1
      %p155 = por %p153, %p154
      %p157 = scmp.ne.s32.totalorder %s142, %s156
      %p158 = scmp.eq.s32.totalorder %s27, 0
      %p159 = por %p157, %p158
      %s161 = sadd.s32 %s160, 1
      %p164 = scmp.eq.s32.totalorder %s21, 1
      %p165 = scmp.ne.s32.totalorder %s160, %s162
      %p166 = scmp.eq.s32.totalorder %s21, 0
      %p167 = por %p165, %p166
      %p168 = scmp.ne.s32.totalorder %s160, %s162
      %p169 = scmp.eq.s32.totalorder %s26, 1
      %p170 = por %p168, %p169
      %p171 = scmp.ne.s32.totalorder %s162, %s163
      %p172 = scmp.eq.s32.totalorder %s26, 0
      %p173 = por %p171, %p172
      %p174 = scmp.ne.s32.totalorder %s162, %s163
      %p175 = scmp.eq.s32.totalorder %s27, 1
      %p176 = por %p174, %p175
      %p178 = scmp.ne.s32.totalorder %s163, %s177
      %p179 = scmp.eq.s32.totalorder %s27, 0
      %p180 = por %p178, %p179
      %s182 = sadd.s32 %s181, 1
      %p185 = scmp.eq.s32.totalorder %s21, 1
      %p186 = scmp.ne.s32.totalorder %s181, %s183
      %p187 = scmp.eq.s32.totalorder %s21, 0
      %p188 = por %p186, %p187
      %p189 = scmp.ne.s32.totalorder %s181, %s183
      %p190 = scmp.eq.s32.totalorder %s26, 1
      %p191 = por %p189, %p190
      %p192 = scmp.ne.s32.totalorder %s183, %s184
      %p193 = scmp.eq.s32.totalorder %s26, 0
      %p194 = por %p192, %p193
      %p195 = scmp.ne.s32.totalorder %s183, %s184
      %p196 = scmp.eq.s32.totalorder %s27, 1
      %p197 = por %p195, %p196
      %p199 = scmp.ne.s32.totalorder %s184, %s198
      %p200 = scmp.eq.s32.totalorder %s27, 0
      %p201 = por %p199, %p200
      %s203 = sadd.s32 %s202, 1
      %p206 = scmp.eq.s32.totalorder %s21, 1
      %p207 = scmp.ne.s32.totalorder %s202, %s204
      %p208 = scmp.eq.s32.totalorder %s21, 0
      %p209 = por %p207, %p208
      %p210 = scmp.ne.s32.totalorder %s202, %s204
      %p211 = scmp.eq.s32.totalorder %s26, 1
      %p212 = por %p210, %p211
      %p213 = scmp.ne.s32.totalorder %s204, %s205
      %p214 = scmp.eq.s32.totalorder %s26, 0
      %p215 = por %p213, %p214
      %p216 = scmp.ne.s32.totalorder %s204, %s205
      %p217 = scmp.eq.s32.totalorder %s27, 1
      %p218 = por %p216, %p217
      %p220 = scmp.ne.s32.totalorder %s205, %s219
      %p221 = scmp.eq.s32.totalorder %s27, 0
      %p222 = por %p220, %p221
      %s224 = sadd.s32 %s223, 1
      %p227 = scmp.eq.s32.totalorder %s21, 1
      %p228 = scmp.ne.s32.totalorder %s223, %s225
      %p229 = scmp.eq.s32.totalorder %s21, 0
      %p230 = por %p228, %p229
      %p231 = scmp.ne.s32.totalorder %s223, %s225
      %p232 = scmp.eq.s32.totalorder %s26, 1
      %p233 = por %p231, %p232
      %p234 = scmp.ne.s32.totalorder %s225, %s226
      %p235 = scmp.eq.s32.totalorder %s26, 0
      %p236 = por %p234, %p235
      %p237 = scmp.ne.s32.totalorder %s225, %s226
      %p238 = scmp.eq.s32.totalorder %s27, 1
      %p239 = por %p237, %p238
      %p241 = scmp.ne.s32.totalorder %s226, %s240
      %p242 = scmp.eq.s32.totalorder %s27, 0
      %p243 = por %p241, %p242
      %s245 = sadd.s32 %s244, 1
      %p248 = scmp.eq.s32.totalorder %s21, 1
      %p249 = scmp.ne.s32.totalorder %s244, %s246
      %p250 = scmp.eq.s32.totalorder %s21, 0
      %p251 = por %p249, %p250
      %p252 = scmp.ne.s32.totalorder %s244, %s246
      %p253 = scmp.eq.s32.totalorder %s26, 1
      %p254 = por %p252, %p253
      %p255 = scmp.ne.s32.totalorder %s246, %s247
      %p256 = scmp.eq.s32.totalorder %s26, 0
      %p257 = por %p255, %p256
      %p258 = scmp.ne.s32.totalorder %s246, %s247
      %p259 = scmp.eq.s32.totalorder %s27, 1
      %p260 = por %p258, %p259
      %p262 = scmp.ne.s32.totalorder %s247, %s261
      %p263 = scmp.eq.s32.totalorder %s27, 0
      %p264 = por %p262, %p263
      %s266 = sadd.s32 %s265, 1
      %p269 = scmp.eq.s32.totalorder %s21, 1
      %p270 = scmp.ne.s32.totalorder %s265, %s267
      %p271 = scmp.eq.s32.totalorder %s21, 0
      %p272 = por %p270, %p271
      %p273 = scmp.ne.s32.totalorder %s265, %s267
      %p274 = scmp.eq.s32.totalorder %s26, 1
      %p275 = por %p273, %p274
      %p276 = scmp.ne.s32.totalorder %s267, %s268
      %p277 = scmp.eq.s32.totalorder %s26, 0
      %p278 = por %p276, %p277
      %p279 = scmp.ne.s32.totalorder %s267, %s268
      %p280 = scmp.eq.s32.totalorder %s27, 1
      %p281 = por %p279, %p280
      %p283 = scmp.ne.s32.totalorder %s268, %s282
      %p284 = scmp.eq.s32.totalorder %s27, 0
      %p285 = por %p283, %p284
      %s286 = ssub.s32 %s21, %s28
      %p287 = scmp.eq.s32.totalorder %s286, 0
      %s289 = sadd.s32 %s288, 1
      %s290 = scalar_select %p287, %s288, %s289
      %p293 = pneg %p287
      %p294 = scmp.eq.s32.totalorder %s21, 1
      %p295 = por %p293, %p294
      %p296 = scmp.ne.s32.totalorder %s288, %s291
      %p297 = scmp.eq.s32.totalorder %s21, 0
      %p298 = por %p296, %p297
      %p299 = scmp.ne.s32.totalorder %s288, %s291
      %p300 = scmp.eq.s32.totalorder %s26, 1
      %p301 = por %p299, %p300
      %p302 = scmp.ne.s32.totalorder %s291, %s292
      %p303 = scmp.eq.s32.totalorder %s26, 0
      %p304 = por %p302, %p303
      %p305 = scmp.ne.s32.totalorder %s291, %s292
      %p306 = scmp.eq.s32.totalorder %s27, 1
      %p307 = por %p305, %p306
      %p309 = scmp.ne.s32.totalorder %s292, %s308
      %p310 = scmp.eq.s32.totalorder %s27, 0
      %p311 = por %p309, %p310
      %p312 = scmp.le.s32.totalorder 1, %s21
      %p313 = scmp.lt.s32.totalorder %s21, 3
      %p314 = pnand %p312, %p313
      %p315 = pneg %p314
      // Predicated region
      $region9: #{tpu_custom_call.1} parent=5 // pred_check
        _
      $region10: #{tpu_custom_call.1} parent=5 // pred_check_branch
        %317 = sbr.rel (%p314) target = $region12
      $region11: #{tpu_custom_call.1} parent=5 // pred_region
        %s318 = ssub.s32 %s21, 1
        // Predicated region
        $region13: #{tpu_custom_call.1} parent=11 // pred_check
          %p319 = pneg %p68
        $region14: #{tpu_custom_call.1} parent=11 // pred_check_branch
          %321 = sbr.rel (%p319) target = $region16
        $region15: #{tpu_custom_call.1} parent=11 // pred_region
          _
        $region16: #{tpu_custom_call.1} parent=11 // pred_fallthru
          _
        // Predicated region
        $region17: #{tpu_custom_call.1} parent=11 // pred_check
          %p322 = pneg %p89
        $region18: #{tpu_custom_call.1} parent=11 // pred_check_branch
          %324 = sbr.rel (%p322) target = $region20
        $region19: #{tpu_custom_call.1} parent=11 // pred_region
          _
        $region20: #{tpu_custom_call.1} parent=11 // pred_fallthru
          _
        // Predicated region
        $region21: #{tpu_custom_call.1} parent=11 // pred_check
          %p325 = pneg %p110
        $region22: #{tpu_custom_call.1} parent=11 // pred_check_branch
          %327 = sbr.rel (%p325) target = $region24
        $region23: #{tpu_custom_call.1} parent=11 // pred_region
          _
        $region24: #{tpu_custom_call.1} parent=11 // pred_fallthru
          _
        // Predicated region
        $region25: #{tpu_custom_call.1} parent=11 // pred_check
          %p328 = pneg %p131
        $region26: #{tpu_custom_call.1} parent=11 // pred_check_branch
          %330 = sbr.rel (%p328) target = $region28
        $region27: #{tpu_custom_call.1} parent=11 // pred_region
          _
        $region28: #{tpu_custom_call.1} parent=11 // pred_fallthru
          _
        // Predicated region
        $region29: #{tpu_custom_call.1} parent=11 // pred_check
          %p331 = pneg %p152
        $region30: #{tpu_custom_call.1} parent=11 // pred_check_branch
          %333 = sbr.rel (%p331) target = $region32
        $region31: #{tpu_custom_call.1} parent=11 // pred_region
          _
        $region32: #{tpu_custom_call.1} parent=11 // pred_fallthru
          _
        // Predicated region
        $region33: #{tpu_custom_call.1} parent=11 // pred_check
          %p334 = pneg %p173
        $region34: #{tpu_custom_call.1} parent=11 // pred_check_branch
          %336 = sbr.rel (%p334) target = $region36
        $region35: #{tpu_custom_call.1} parent=11 // pred_region
          _
        $region36: #{tpu_custom_call.1} parent=11 // pred_fallthru
          _
        // Predicated region
        $region37: #{tpu_custom_call.1} parent=11 // pred_check
          %p337 = pneg %p194
        $region38: #{tpu_custom_call.1} parent=11 // pred_check_branch
          %339 = sbr.rel (%p337) target = $region40
        $region39: #{tpu_custom_call.1} parent=11 // pred_region
          _
        $region40: #{tpu_custom_call.1} parent=11 // pred_fallthru
          _
        // Predicated region
        $region41: #{tpu_custom_call.1} parent=11 // pred_check
          %p340 = pneg %p215
        $region42: #{tpu_custom_call.1} parent=11 // pred_check_branch
          %342 = sbr.rel (%p340) target = $region44
        $region43: #{tpu_custom_call.1} parent=11 // pred_region
          _
        $region44: #{tpu_custom_call.1} parent=11 // pred_fallthru
          _
        // Predicated region
        $region45: #{tpu_custom_call.1} parent=11 // pred_check
          %p343 = pneg %p236
        $region46: #{tpu_custom_call.1} parent=11 // pred_check_branch
          %345 = sbr.rel (%p343) target = $region48
        $region47: #{tpu_custom_call.1} parent=11 // pred_region
          _
        $region48: #{tpu_custom_call.1} parent=11 // pred_fallthru
          _
        // Predicated region
        $region49: #{tpu_custom_call.1} parent=11 // pred_check
          %p346 = pneg %p257
        $region50: #{tpu_custom_call.1} parent=11 // pred_check_branch
          %348 = sbr.rel (%p346) target = $region52
        $region51: #{tpu_custom_call.1} parent=11 // pred_region
          _
        $region52: #{tpu_custom_call.1} parent=11 // pred_fallthru
          _
        // Predicated region
        $region53: #{tpu_custom_call.1} parent=11 // pred_check
          %p349 = pneg %p278
        $region54: #{tpu_custom_call.1} parent=11 // pred_check_branch
          %351 = sbr.rel (%p349) target = $region56
        $region55: #{tpu_custom_call.1} parent=11 // pred_region
          _
        $region56: #{tpu_custom_call.1} parent=11 // pred_fallthru
          _
      $region12: #{tpu_custom_call.1} parent=5 // pred_fallthru
        _
      %p352 = scmp.lt.s32.totalorder %s21, 2
      // Predicated region
      $region57: #{tpu_custom_call.1} parent=5 // pred_check
        %p353 = pneg %p352
      $region58: #{tpu_custom_call.1} parent=5 // pred_check_branch
        %355 = sbr.rel (%p353) target = $region60
      $region59: #{tpu_custom_call.1} parent=5 // pred_region
        // Predicated region
        $region61: #{tpu_custom_call.1} parent=59 // pred_check
          %p356 = pneg %p41
        $region62: #{tpu_custom_call.1} parent=59 // pred_check_branch
          %358 = sbr.rel (%p356) target = $region64
        $region63: #{tpu_custom_call.1} parent=59 // pred_region
          %p359 = scmp.lt.s32.totalorder %s21, 1
          %s360 = scalar_select %p359, %s21, 1
          %s361 = smul.addr %s360, 8
          %s362 = smul.addr %s361, 8
          %s363 = scalar_lea.vmem %s0, %s362
        $region64: #{tpu_custom_call.1} parent=59 // pred_fallthru
          _
      $region60: #{tpu_custom_call.1} parent=5 // pred_fallthru
        _
      %p364 = scmp.le.s32.totalorder 1, %s21
      %p365 = scmp.lt.s32.totalorder %s21, 3
      %p366 = pnand %p364, %p365
      %p367 = pneg %p366
      // Predicated region
      $region65: #{tpu_custom_call.1} parent=5 // pred_check
        _
      $region66: #{tpu_custom_call.1} parent=5 // pred_check_branch
        %369 = sbr.rel (%p366) target = $region68
      $region67: #{tpu_custom_call.1} parent=5 // pred_region
        %s370 = ssub.s32 %s21, 1
        %p371 = scmp.lt.s32.totalorder %s26, 1
        %s372 = scalar_select %p371, %s26, 1
        %s373 = smul.addr %s372, 8
        %s374 = smul.addr %s373, 8
        %s375 = scalar_lea.vmem %s0, %s374
        %p376 = pneg %p47
        %p377 = pneg %p44
        %p378 = pneg %p68
        %p379 = pneg %p65
        %p380 = pneg %p89
        %p381 = pneg %p86
        %p382 = pneg %p110
        %p383 = pneg %p107
        %p384 = pneg %p131
        %p385 = pneg %p128
        %p386 = pneg %p152
        %p387 = pneg %p149
        %p388 = pneg %p173
        %p389 = pneg %p170
        %p390 = pneg %p194
        %p391 = pneg %p191
        %p392 = pneg %p215
        %p393 = pneg %p212
        %p394 = pneg %p236
        %p395 = pneg %p233
        %p396 = pneg %p257
        %p397 = pneg %p254
        %p398 = pneg %p278
        %p399 = pneg %p275
        %p400 = pneg %p304
        %p401 = pneg %p301
        %s402 = sand.u32 %s291, 1
        %s403 = scalar_lea.sflag [#allocation6], %s402
        %s404 = sand.u32 %s291, 1
        %s405 = smul.addr %s404, 8
        %s406 = scalar_lea.vmem [#allocation5], %s405
        %p407 = scmp.lt.s32.totalorder %s26, 1
        %s408 = scalar_select %p407, %s26, 1
        %s409 = smul.addr %s408, 8
        %s410 = smul.addr %s409, 8
        %s411 = scalar_lea.vmem %s0, %s410
        loop: start=0, step=1, limit=8
        $region69: #{tpu_custom_call.1} parent=67 // loop_pre_header
          _
        $region70: #{tpu_custom_call.1} parent=67 // loop_header
          %s414 = sphi 0, %s418
          %p415 = scmp.ge.s32.totalorder %s414, 8
        $region71: #{tpu_custom_call.1} parent=67 // loop_header_branch
          %417 = sbr.rel (%p415) target = $region75
        $region72: #{tpu_custom_call.1} parent=67 // loop_body
          %s419 = sshra.s32 %s414, 3
          %s420 = sand.u32 %s414, 7
          %s421 = sshra.s32 %s414, 3
          %s422 = sand.u32 %s414, 7
          %s423 = smul.u32 %s419, 8
          %s424 = smul.u32 %s423, 8
          %s425 = sadd.s32 %s424, %s422
          %s426 = scalar_lea.vmem %s411, %s425
          %v427 = vld [vmem:[%s426] ss:$8 sm:$0xf]
          %v428 = vld [vmem:[%s426] ss:$8 sm:$0xf0]
          %v429 = vor.u32 %v427, %v428
          %v431 = vlaneseq
          %v432 = vshrl.u32 %v431, 7
          %v433 = vsub.s32 0, %v432
          %v434 = vrot.slane %v429, %v433
          %v435 = vlaneseq
          %v436 = vshrl.u32 %v435, 7
          %v437 = vsub.s32 1, %v436
          %v438 = vrot.slane %v429, %v437
          %v439 = vlaneseq
          %v440 = vshrl.u32 %v439, 7
          %v441 = vsub.s32 2, %v440
          %v442 = vrot.slane %v429, %v441
          %v443 = vlaneseq
          %v444 = vshrl.u32 %v443, 7
          %v445 = vsub.s32 3, %v444
          %v446 = vrot.slane %v429, %v445
          %v447 = vlaneseq
          %v448 = vshrl.u32 %v447, 7
          %v449 = vsub.s32 4, %v448
          %v450 = vrot.slane %v429, %v449
          %v451 = vlaneseq
          %v452 = vshrl.u32 %v451, 7
          %v453 = vsub.s32 5, %v452
          %v454 = vrot.slane %v429, %v453
          %v455 = vlaneseq
          %v456 = vshrl.u32 %v455, 7
          %v457 = vsub.s32 6, %v456
          %v458 = vrot.slane %v429, %v457
          %v466 = vlaneseq
          %v467 = vshrl.u32 %v466, 7
          %v468 = vsub.s32 7, %v467
          %v469 = vrot.slane %v429, %v468
          %470 = vrot.lane.b32.xlu0 %v434, 96
          %v471 = vpop.permute.xlu0 %470
          %472 = vrot.lane.b32.xlu0 %v438, 96
          %v473 = vpop.permute.xlu0 %472
          %474 = vrot.lane.b32.xlu0 %v442, 96
          %v475 = vpop.permute.xlu0 %474
          %476 = vrot.lane.b32.xlu0 %v446, 96
          %v477 = vpop.permute.xlu0 %476
          %478 = vrot.lane.b32.xlu0 %v450, 96
          %v479 = vpop.permute.xlu0 %478
          %480 = vrot.lane.b32.xlu0 %v454, 96
          %v481 = vpop.permute.xlu0 %480
          %482 = vrot.lane.b32.xlu0 %v458, 96
          %v483 = vpop.permute.xlu0 %482
          %484 = vrot.lane.b32.xlu0 %v469, 96
          %v485 = vpop.permute.xlu0 %484
          %vm486 = vcmask 785408
          %v487 = vsel %vm486, %v471, %v473
          %v488 = vsel %vm486, %v473, %v475
          %v489 = vsel %vm486, %v475, %v477
          %v490 = vsel %vm486, %v477, %v479
          %v491 = vsel %vm486, %v479, %v481
          %v492 = vsel %vm486, %v481, %v483
          %v493 = vsel %vm486, %v483, %v485
          %501 = vrot.lane.b32.xlu0 %v434, 64
          %v502 = vpop.permute.xlu0 %501
          %503 = vrot.lane.b32.xlu0 %v438, 64
          %v504 = vpop.permute.xlu0 %503
          %505 = vrot.lane.b32.xlu0 %v442, 64
          %v506 = vpop.permute.xlu0 %505
          %507 = vrot.lane.b32.xlu0 %v446, 64
          %v508 = vpop.permute.xlu0 %507
          %509 = vrot.lane.b32.xlu0 %v450, 64
          %v510 = vpop.permute.xlu0 %509
          %511 = vrot.lane.b32.xlu0 %v454, 64
          %v512 = vpop.permute.xlu0 %511
          %513 = vrot.lane.b32.xlu0 %v458, 64
          %v514 = vpop.permute.xlu0 %513
          %515 = vrot.lane.b32.xlu0 %v469, 64
          %v516 = vpop.permute.xlu0 %515
          %vm517 = vcmask 523264
          %v518 = vsel %vm517, %v502, %v504
          %v519 = vsel %vm517, %v504, %v506
          %v520 = vsel %vm517, %v506, %v508
          %v521 = vsel %vm517, %v508, %v510
          %v522 = vsel %vm517, %v510, %v512
          %v523 = vsel %vm517, %v512, %v514
          %v524 = vsel %vm517, %v514, %v516
          %532 = vrot.lane.b32.xlu0 %v434, 32
          %v533 = vpop.permute.xlu0 %532
          %534 = vrot.lane.b32.xlu0 %v438, 32
          %v535 = vpop.permute.xlu0 %534
          %536 = vrot.lane.b32.xlu0 %v442, 32
          %v537 = vpop.permute.xlu0 %536
          %538 = vrot.lane.b32.xlu0 %v446, 32
          %v539 = vpop.permute.xlu0 %538
          %540 = vrot.lane.b32.xlu0 %v450, 32
          %v541 = vpop.permute.xlu0 %540
          %542 = vrot.lane.b32.xlu0 %v454, 32
          %v543 = vpop.permute.xlu0 %542
          %544 = vrot.lane.b32.xlu0 %v458, 32
          %v545 = vpop.permute.xlu0 %544
          %546 = vrot.lane.b32.xlu0 %v469, 32
          %v547 = vpop.permute.xlu0 %546
          %vm548 = vcmask 261120
          %v549 = vsel %vm548, %v533, %v535
          %v550 = vsel %vm548, %v535, %v537
          %v551 = vsel %vm548, %v537, %v539
          %v552 = vsel %vm548, %v539, %v541
          %v553 = vsel %vm548, %v541, %v543
          %v554 = vsel %vm548, %v543, %v545
          %v555 = vsel %vm548, %v545, %v547
          %vm564 = vcmask 1040384
          %v565 = vsel %vm564, %v434, %v487
          %v566 = vsel %vm564, %v438, %v488
          %v567 = vsel %vm564, %v442, %v489
          %v568 = vsel %vm564, %v446, %v490
          %v569 = vsel %vm564, %v450, %v491
          %v570 = vsel %vm564, %v454, %v492
          %v571 = vsel %vm564, %v458, %v493
          %vm572 = vcmask 1041408
          %v573 = vsel %vm572, %v565, %v518
          %v574 = vsel %vm572, %v566, %v519
          %v575 = vsel %vm572, %v567, %v520
          %v576 = vsel %vm572, %v568, %v521
          %v577 = vsel %vm572, %v569, %v522
          %v578 = vsel %vm572, %v570, %v523
          %v579 = vsel %vm572, %v571, %v524
          %vm580 = vcmask 1042432
          %v581 = vsel %vm580, %v573, %v549
          %v582 = vsel %vm580, %v574, %v550
          %v583 = vsel %vm580, %v575, %v551
          %v584 = vsel %vm580, %v576, %v552
          %v585 = vsel %vm580, %v577, %v553
          %v586 = vsel %vm580, %v578, %v554
          %v587 = vsel %vm580, %v579, %v555
          %vm588 = vcmask 1043456
          %v589 = vsel %vm588, %v581, %v438
          %v590 = vsel %vm588, %v582, %v442
          %v591 = vsel %vm588, %v583, %v446
          %v592 = vsel %vm588, %v584, %v450
          %v593 = vsel %vm588, %v585, %v454
          %v594 = vsel %vm588, %v586, %v458
          %v595 = vsel %vm588, %v587, %v469
          %v603 = vrot.slane %v589, 3
          %v604 = vrot.slane %v590, 3
          %v605 = vrot.slane %v591, 3
          %v606 = vrot.slane %v592, 3
          %v607 = vrot.slane %v593, 3
          %v608 = vrot.slane %v594, 3
          %v609 = vrot.slane %v595, 3
          %610 = vrot.lane.b32.xlu0 %v603, 127
          %v611 = vpop.permute.xlu0 %610
          %612 = vrot.lane.b32.xlu0 %v604, 127
          %v613 = vpop.permute.xlu0 %612
          %614 = vrot.lane.b32.xlu0 %v605, 127
          %v615 = vpop.permute.xlu0 %614
          %616 = vrot.lane.b32.xlu0 %v606, 127
          %v617 = vpop.permute.xlu0 %616
          %618 = vrot.lane.b32.xlu0 %v607, 127
          %v619 = vpop.permute.xlu0 %618
          %620 = vrot.lane.b32.xlu0 %v608, 127
          %v621 = vpop.permute.xlu0 %620
          %622 = vrot.lane.b32.xlu0 %v609, 127
          %v623 = vpop.permute.xlu0 %622
          %vm624 = vcmask 1039360
          %v625 = vsel %vm624, %v611, %v613
          %v626 = vsel %vm624, %v613, %v615
          %v627 = vsel %vm624, %v615, %v617
          %v628 = vsel %vm624, %v617, %v619
          %v629 = vsel %vm624, %v619, %v621
          %v630 = vsel %vm624, %v621, %v623
          %v638 = vrot.slane %v589, 6
          %v639 = vrot.slane %v590, 6
          %v640 = vrot.slane %v591, 6
          %v641 = vrot.slane %v592, 6
          %v642 = vrot.slane %v593, 6
          %v643 = vrot.slane %v594, 6
          %v644 = vrot.slane %v595, 6
          %645 = vrot.lane.b32.xlu0 %v638, 126
          %v646 = vpop.permute.xlu0 %645
          %647 = vrot.lane.b32.xlu0 %v639, 126
          %v648 = vpop.permute.xlu0 %647
          %649 = vrot.lane.b32.xlu0 %v640, 126
          %v650 = vpop.permute.xlu0 %649
          %651 = vrot.lane.b32.xlu0 %v641, 126
          %v652 = vpop.permute.xlu0 %651
          %653 = vrot.lane.b32.xlu0 %v642, 126
          %v654 = vpop.permute.xlu0 %653
          %655 = vrot.lane.b32.xlu0 %v643, 126
          %v656 = vpop.permute.xlu0 %655
          %657 = vrot.lane.b32.xlu0 %v644, 126
          %v658 = vpop.permute.xlu0 %657
          %vm659 = vcmask 1031168
          %v660 = vsel %vm659, %v646, %v648
          %v661 = vsel %vm659, %v648, %v650
          %v662 = vsel %vm659, %v650, %v652
          %v663 = vsel %vm659, %v652, %v654
          %v664 = vsel %vm659, %v654, %v656
          %v665 = vsel %vm659, %v656, %v658
          %v673 = vrot.slane %v589, 1
          %v674 = vrot.slane %v590, 1
          %v675 = vrot.slane %v591, 1
          %v676 = vrot.slane %v592, 1
          %v677 = vrot.slane %v593, 1
          %v678 = vrot.slane %v594, 1
          %v679 = vrot.slane %v595, 1
          %680 = vrot.lane.b32.xlu0 %v673, 125
          %v681 = vpop.permute.xlu0 %680
          %682 = vrot.lane.b32.xlu0 %v674, 125
          %v683 = vpop.permute.xlu0 %682
          %684 = vrot.lane.b32.xlu0 %v675, 125
          %v685 = vpop.permute.xlu0 %684
          %686 = vrot.lane.b32.xlu0 %v676, 125
          %v687 = vpop.permute.xlu0 %686
          %688 = vrot.lane.b32.xlu0 %v677, 125
          %v689 = vpop.permute.xlu0 %688
          %690 = vrot.lane.b32.xlu0 %v678, 125
          %v691 = vpop.permute.xlu0 %690
          %692 = vrot.lane.b32.xlu0 %v679, 125
          %v693 = vpop.permute.xlu0 %692
          %vm694 = vcmask 1022976
          %v695 = vsel %vm694, %v681, %v683
          %v696 = vsel %vm694, %v683, %v685
          %v697 = vsel %vm694, %v685, %v687
          %v698 = vsel %vm694, %v687, %v689
          %v699 = vsel %vm694, %v689, %v691
          %v700 = vsel %vm694, %v691, %v693
          %v708 = vrot.slane %v589, 4
          %v709 = vrot.slane %v590, 4
          %v710 = vrot.slane %v591, 4
          %v711 = vrot.slane %v592, 4
          %v712 = vrot.slane %v593, 4
          %v713 = vrot.slane %v594, 4
          %v714 = vrot.slane %v595, 4
          %715 = vrot.lane.b32.xlu0 %v708, 124
          %v716 = vpop.permute.xlu0 %715
          %717 = vrot.lane.b32.xlu0 %v709, 124
          %v718 = vpop.permute.xlu0 %717
          %719 = vrot.lane.b32.xlu0 %v710, 124
          %v720 = vpop.permute.xlu0 %719
          %721 = vrot.lane.b32.xlu0 %v711, 124
          %v722 = vpop.permute.xlu0 %721
          %723 = vrot.lane.b32.xlu0 %v712, 124
          %v724 = vpop.permute.xlu0 %723
          %725 = vrot.lane.b32.xlu0 %v713, 124
          %v726 = vpop.permute.xlu0 %725
          %727 = vrot.lane.b32.xlu0 %v714, 124
          %v728 = vpop.permute.xlu0 %727
          %vm729 = vcmask 1014784
          %v730 = vsel %vm729, %v716, %v718
          %v731 = vsel %vm729, %v718, %v720
          %v732 = vsel %vm729, %v720, %v722
          %v733 = vsel %vm729, %v722, %v724
          %v734 = vsel %vm729, %v724, %v726
          %v735 = vsel %vm729, %v726, %v728
          %vm743 = vcmask 1044480
          %v744 = vsel %vm743, %v589, %v625
          %v745 = vsel %vm743, %v590, %v626
          %v746 = vsel %vm743, %v591, %v627
          %v747 = vsel %vm743, %v592, %v628
          %v748 = vsel %vm743, %v593, %v629
          %v749 = vsel %vm743, %v594, %v630
          %v750 = vsel %vm743, %v595, %v623
          %v751 = vsel %vm572, %v625, %v660
          %v752 = vsel %vm572, %v626, %v661
          %v753 = vsel %vm572, %v627, %v662
          %v754 = vsel %vm572, %v628, %v663
          %v755 = vsel %vm572, %v629, %v664
          %v756 = vsel %vm572, %v630, %v665
          %v757 = vsel %vm572, %v623, %v658
          %vm758 = vcmask 1046528
          %v759 = vsel %vm758, %v751, %v695
          %v760 = vsel %vm758, %v752, %v696
          %v761 = vsel %vm758, %v753, %v697
          %v762 = vsel %vm758, %v754, %v698
          %v763 = vsel %vm758, %v755, %v699
          %v764 = vsel %vm758, %v756, %v700
          %v765 = vsel %vm758, %v757, %v693
          %v766 = vsel %vm588, %v695, %v730
          %v767 = vsel %vm588, %v696, %v731
          %v768 = vsel %vm588, %v697, %v732
          %v769 = vsel %vm588, %v698, %v733
          %v770 = vsel %vm588, %v699, %v734
          %v771 = vsel %vm588, %v700, %v735
          %v772 = vsel %vm588, %v693, %v728
          %v773 = vld [vmem:[%s1] sm:$0xf]
          %v774 = vpack.c.bf16 %v759, %v744
          %v775 = vpack.c.bf16 %v760, %v745
          %v776 = vpack.c.bf16 %v761, %v746
          %v777 = vpack.c.bf16 %v762, %v747
          %v778 = vpack.c.bf16 %v763, %v748
          %v779 = vpack.c.bf16 %v764, %v749
          %v780 = vpack.c.bf16 %v765, %v750
          %v781 = vpack.c.bf16 %v730, %v766
          %v782 = vpack.c.bf16 %v731, %v767
          %v783 = vpack.c.bf16 %v732, %v768
          %v784 = vpack.c.bf16 %v733, %v769
          %v785 = vpack.c.bf16 %v734, %v770
          %v786 = vpack.c.bf16 %v735, %v771
          %v787 = vpack.c.bf16 %v728, %v772
          %v788 = vld [vmem:[%s2] sm:$0xff]
          %790 = vset.pattern.permute.xlu0 0
          %791 = vperm.xlu0 %790, %v788
          %v792 = vpop.permute.xlu0 %791
          %vm794 = vcmask 203776
          %v796 = vsel %vm794, %v773, 0
          %v798 = vsel %vm588, 4294967295, 65535
          %v799 = vsel %vm743, %v798, 0
          %v801 = vand.u32 %v781, %v799
          %v804 = vand.u32 %v782, %v799
          %v807 = vand.u32 %v783, %v799
          %v810 = vand.u32 %v784, %v799
          %v813 = vand.u32 %v785, %v799
          %v816 = vand.u32 %v786, %v799
          %v819 = vand.u32 %v787, %v799
          %821 = vmatprep.subr.bf16.mxu0 %v775
          %822 = vmatpush1.bf16.msra.mxu0 %v774
          %823 = vmatprep.subr.bf16.mxu0 %v804
          %824 = vmatpush1.bf16.msra.mxu0 %v801
          %825 = vmatprep.subr.bf16.mxu0 0
          %826 = vmatpush1.bf16.msra.mxu0 0
          %827 = vmatprep.subr.bf16.mxu0 0
          %828 = vmatpush1.bf16.msra.mxu0 0
          %829 = vmatprep.subr.bf16.mxu0 0
          %830 = vmatpush1.bf16.msra.mxu0 0
          %831 = vmatprep.subr.bf16.mxu0 0
          %832 = vmatpush1.bf16.msra.mxu0 0
          %833 = vmatprep.subr.bf16.mxu0 0
          %834 = vmatpush1.bf16.msra.mxu0 0
          %835 = vmatprep.subr.bf16.mxu0 0
          %836 = vmatpush1.bf16.msra.mxu0 0
          %837 = vmatprep.subr.bf16.mxu0 0
          %838 = vmatpush1.bf16.msra.mxu0 0
          %839 = vmatprep.subr.bf16.mxu0 0
          %840 = vmatpush1.bf16.msra.mxu0 0
          %841 = vmatprep.subr.bf16.mxu0 0
          %842 = vmatpush1.bf16.msra.mxu0 0
          %843 = vmatprep.subr.bf16.mxu0 0
          %844 = vmatpush1.bf16.msra.mxu0 0
          %845 = vmatprep.subr.bf16.mxu0 0
          %846 = vmatpush1.bf16.msra.mxu0 0
          %847 = vmatprep.subr.bf16.mxu0 0
          %848 = vmatpush1.bf16.msra.mxu0 0
          %849 = vmatprep.subr.bf16.mxu0 0
          %850 = vmatpush1.bf16.msra.mxu0 0
          %851 = vmatprep.subr.bf16.mxu0 0
          %852 = vmatpush1.bf16.msra.mxu0 0
          %853 = vmatprep.mubr.bf16.mxu0 0
          %854 = vmatmul.mubr.bf16.gmra.mrb[0].mxu0 %v796
          %v855 = vpop.f32.mrb[0].mxu0
          %v856 = vadd.f32 %v792, %v855
          %v857 = vpop.f32.mrb[0].mxu0
          %v858 = vadd.f32 %v792, %v857
          %v859 = vpop.f32.mrb[0].mxu0
          %v860 = vpop.f32.mrb[0].mxu0
          %861 = vdwg.mxu0
          %862 = vmatprep.subr.bf16.mxu0 %v777
          %863 = vmatpush1.bf16.msra.mxu0 %v776
          %864 = vmatprep.subr.bf16.mxu0 %v810
          %865 = vmatpush1.bf16.msra.mxu0 %v807
          %866 = vmatprep.subr.bf16.mxu0 0
          %867 = vmatpush1.bf16.msra.mxu0 0
          %868 = vmatprep.subr.bf16.mxu0 0
          %869 = vmatpush1.bf16.msra.mxu0 0
          %870 = vmatprep.subr.bf16.mxu0 0
          %871 = vmatpush1.bf16.msra.mxu0 0
          %872 = vmatprep.subr.bf16.mxu0 0
          %873 = vmatpush1.bf16.msra.mxu0 0
          %874 = vmatprep.subr.bf16.mxu0 0
          %875 = vmatpush1.bf16.msra.mxu0 0
          %876 = vmatprep.subr.bf16.mxu0 0
          %877 = vmatpush1.bf16.msra.mxu0 0
          %878 = vmatprep.subr.bf16.mxu0 0
          %879 = vmatpush1.bf16.msra.mxu0 0
          %880 = vmatprep.subr.bf16.mxu0 0
          %881 = vmatpush1.bf16.msra.mxu0 0
          %882 = vmatprep.subr.bf16.mxu0 0
          %883 = vmatpush1.bf16.msra.mxu0 0
          %884 = vmatprep.subr.bf16.mxu0 0
          %885 = vmatpush1.bf16.msra.mxu0 0
          %886 = vmatprep.subr.bf16.mxu0 0
          %887 = vmatpush1.bf16.msra.mxu0 0
          %888 = vmatprep.subr.bf16.mxu0 0
          %889 = vmatpush1.bf16.msra.mxu0 0
          %890 = vmatprep.subr.bf16.mxu0 0
          %891 = vmatpush1.bf16.msra.mxu0 0
          %892 = vmatprep.subr.bf16.mxu0 0
          %893 = vmatpush1.bf16.msra.mxu0 0
          %894 = vmatprep.mubr.bf16.mxu0 0
          %895 = vmatmul.mubr.bf16.gmra.mrb[0].mxu0 %v796
          %v896 = vpop.f32.mrb[0].mxu0
          %v897 = vadd.f32 %v792, %v896
          %v898 = vpop.f32.mrb[0].mxu0
          %v899 = vadd.f32 %v792, %v898
          %v900 = vpop.f32.mrb[0].mxu0
          %v901 = vpop.f32.mrb[0].mxu0
          %902 = vdwg.mxu0
          %903 = vmatprep.subr.bf16.mxu0 %v779
          %904 = vmatpush1.bf16.msra.mxu0 %v778
          %905 = vmatprep.subr.bf16.mxu0 %v816
          %906 = vmatpush1.bf16.msra.mxu0 %v813
          %907 = vmatprep.subr.bf16.mxu0 0
          %908 = vmatpush1.bf16.msra.mxu0 0
          %909 = vmatprep.subr.bf16.mxu0 0
          %910 = vmatpush1.bf16.msra.mxu0 0
          %911 = vmatprep.subr.bf16.mxu0 0
          %912 = vmatpush1.bf16.msra.mxu0 0
          %913 = vmatprep.subr.bf16.mxu0 0
          %914 = vmatpush1.bf16.msra.mxu0 0
          %915 = vmatprep.subr.bf16.mxu0 0
          %916 = vmatpush1.bf16.msra.mxu0 0
          %917 = vmatprep.subr.bf16.mxu0 0
          %918 = vmatpush1.bf16.msra.mxu0 0
          %919 = vmatprep.subr.bf16.mxu0 0
          %920 = vmatpush1.bf16.msra.mxu0 0
          %921 = vmatprep.subr.bf16.mxu0 0
          %922 = vmatpush1.bf16.msra.mxu0 0
          %923 = vmatprep.subr.bf16.mxu0 0
          %924 = vmatpush1.bf16.msra.mxu0 0
          %925 = vmatprep.subr.bf16.mxu0 0
          %926 = vmatpush1.bf16.msra.mxu0 0
          %927 = vmatprep.subr.bf16.mxu0 0
          %928 = vmatpush1.bf16.msra.mxu0 0
          %929 = vmatprep.subr.bf16.mxu0 0
          %930 = vmatpush1.bf16.msra.mxu0 0
          %931 = vmatprep.subr.bf16.mxu0 0
          %932 = vmatpush1.bf16.msra.mxu0 0
          %933 = vmatprep.subr.bf16.mxu0 0
          %934 = vmatpush1.bf16.msra.mxu0 0
          %935 = vmatprep.mubr.bf16.mxu0 0
          %936 = vmatmul.mubr.bf16.gmra.mrb[0].mxu0 %v796
          %v937 = vpop.f32.mrb[0].mxu0
          %v938 = vadd.f32 %v792, %v937
          %v939 = vpop.f32.mrb[0].mxu0
          %v940 = vadd.f32 %v792, %v939
          %v941 = vpop.f32.mrb[0].mxu0
          %v942 = vpop.f32.mrb[0].mxu0
          %943 = vdwg.mxu0
          %944 = vmatprep.subr.bf16.mxu0 0
          %945 = vmatpush1.bf16.msra.mxu0 %v780
          %946 = vmatprep.subr.bf16.mxu0 0
          %947 = vmatpush1.bf16.msra.mxu0 %v819
          %948 = vmatprep.subr.bf16.mxu0 0
          %949 = vmatpush1.bf16.msra.mxu0 0
          %950 = vmatprep.subr.bf16.mxu0 0
          %951 = vmatpush1.bf16.msra.mxu0 0
          %952 = vmatprep.subr.bf16.mxu0 0
          %953 = vmatpush1.bf16.msra.mxu0 0
          %954 = vmatprep.subr.bf16.mxu0 0
          %955 = vmatpush1.bf16.msra.mxu0 0
          %956 = vmatprep.subr.bf16.mxu0 0
          %957 = vmatpush1.bf16.msra.mxu0 0
          %958 = vmatprep.subr.bf16.mxu0 0
          %959 = vmatpush1.bf16.msra.mxu0 0
          %960 = vmatprep.subr.bf16.mxu0 0
          %961 = vmatpush1.bf16.msra.mxu0 0
          %962 = vmatprep.subr.bf16.mxu0 0
          %963 = vmatpush1.bf16.msra.mxu0 0
          %964 = vmatprep.subr.bf16.mxu0 0
          %965 = vmatpush1.bf16.msra.mxu0 0
          %966 = vmatprep.subr.bf16.mxu0 0
          %967 = vmatpush1.bf16.msra.mxu0 0
          %968 = vmatprep.subr.bf16.mxu0 0
          %969 = vmatpush1.bf16.msra.mxu0 0
          %970 = vmatprep.subr.bf16.mxu0 0
          %971 = vmatpush1.bf16.msra.mxu0 0
          %972 = vmatprep.subr.bf16.mxu0 0
          %973 = vmatpush1.bf16.msra.mxu0 0
          %974 = vmatprep.subr.bf16.mxu0 0
          %975 = vmatpush1.bf16.msra.mxu0 0
          %976 = vmatprep.mubr.bf16.mxu0 0
          %977 = vmatmul.mubr.bf16.gmra.mrb[0].mxu0 %v796
          %v978 = vpop.f32.mrb[0].mxu0
          %v979 = vadd.f32 %v792, %v978
          %v980 = vpop.f32.mrb[0].mxu0
          %v981 = vpop.f32.mrb[0].mxu0
          %v982 = vpop.f32.mrb[0].mxu0
          %983 = vdwg.mxu0
          %v984 = vmax.f32 %v856, 0.0
          %v985 = vmax.f32 %v858, 0.0
          %v986 = vmax.f32 %v897, 0.0
          %v987 = vmax.f32 %v899, 0.0
          %v988 = vmax.f32 %v938, 0.0
          %v989 = vmax.f32 %v940, 0.0
          %v990 = vmax.f32 %v979, 0.0
          %s991 = smul.u32 %s414, 8
          %s992 = sshra.s32 %s991, 3
          %s993 = sand.u32 %s991, 7
          %s994 = smul.u32 %s992, 7
          %s995 = smul.addr %s994, 8
          %s996 = scalar_lea.vmem [#allocation2], %s995
          %997 = vst [vmem:[%s996] sm:$0xff] %v984
          %998 = vst [vmem:[%s996 + $0x8] sm:$0xff] %v985
          %999 = vst [vmem:[%s996 + $0x10] sm:$0xff] %v986
          %1000 = vst [vmem:[%s996 + $0x18] sm:$0xff] %v987
          %1001 = vst [vmem:[%s996 + $0x20] sm:$0xff] %v988
          %1002 = vst [vmem:[%s996 + $0x28] sm:$0xff] %v989
          %1003 = vst.msk [vmem:[%s996 + $0x30] sm:$0xff] %vm729, %v990
        $region73: #{tpu_custom_call.1} parent=67 // loop_footer
          %s418 = sadd.s32 1, %s414
        $region74: #{tpu_custom_call.1} parent=67 // loop_footer_branch
          %413 = sbr.rel target = $region70
        $region75: #{tpu_custom_call.1} parent=67 // loop_exit
          _
        %v1004 = vld [vmem:[#allocation2] sm:$0xff]
        %v1005 = vld [vmem:[#allocation2 + $0x8] sm:$0xff]
        %v1006 = vld [vmem:[#allocation2 + $0x10] sm:$0xff]
        %v1007 = vld [vmem:[#allocation2 + $0x18] sm:$0xff]
        %v1008 = vld [vmem:[#allocation2 + $0x20] sm:$0xff]
        %v1009 = vld [vmem:[#allocation2 + $0x28] sm:$0xff]
        %v1010 = vld [vmem:[#allocation2 + $0x30] sm:$0xff]
        %v1011 = vld [vmem:[#allocation2 + $0x38] sm:$0xff]
        %v1012 = vld [vmem:[#allocation2 + $0x40] sm:$0xff]
        %v1013 = vld [vmem:[#allocation2 + $0x48] sm:$0xff]
        %v1014 = vld [vmem:[#allocation2 + $0x50] sm:$0xff]
        %v1015 = vld [vmem:[#allocation2 + $0x58] sm:$0xff]
        %v1016 = vld [vmem:[#allocation2 + $0x60] sm:$0xff]
        %v1017 = vld [vmem:[#allocation2 + $0x68] sm:$0xff]
        %v1018 = vld [vmem:[#allocation2 + $0x70] sm:$0xff]
        %v1019 = vld [vmem:[#allocation2 + $0x78] sm:$0xff]
        %v1020 = vld [vmem:[#allocation2 + $0x80] sm:$0xff]
        %v1021 = vld [vmem:[#allocation2 + $0x88] sm:$0xff]
        %v1022 = vld [vmem:[#allocation2 + $0x90] sm:$0xff]
        %v1023 = vld [vmem:[#allocation2 + $0x98] sm:$0xff]
        %v1024 = vld [vmem:[#allocation2 + $0xa0] sm:$0xff]
        %v1025 = vld [vmem:[#allocation2 + $0xa8] sm:$0xff]
        %v1026 = vld [vmem:[#allocation2 + $0xb0] sm:$0xff]
        %v1027 = vld [vmem:[#allocation2 + $0xb8] sm:$0xff]
        %v1028 = vld [vmem:[#allocation2 + $0xc0] sm:$0xff]
        %v1029 = vld [vmem:[#allocation2 + $0xc8] sm:$0xff]
        %v1030 = vld [vmem:[#allocation2 + $0xd0] sm:$0xff]
        %v1031 = vld [vmem:[#allocation2 + $0xd8] sm:$0xff]
        %v1032 = vld [vmem:[#allocation2 + $0xe0] sm:$0xff]
        %v1033 = vld [vmem:[#allocation2 + $0xe8] sm:$0xff]
        %v1034 = vld [vmem:[#allocation2 + $0xf0] sm:$0xff]
        %v1035 = vld [vmem:[#allocation2 + $0xf8] sm:$0xff]
        %v1036 = vld [vmem:[#allocation2 + $0x100] sm:$0xff]
        %v1037 = vld [vmem:[#allocation2 + $0x108] sm:$0xff]
        %v1038 = vld [vmem:[#allocation2 + $0x110] sm:$0xff]
        %v1039 = vld [vmem:[#allocation2 + $0x118] sm:$0xff]
        %v1040 = vld [vmem:[#allocation2 + $0x120] sm:$0xff]
        %v1041 = vld [vmem:[#allocation2 + $0x128] sm:$0xff]
        %v1042 = vld [vmem:[#allocation2 + $0x130] sm:$0xff]
        %v1043 = vld [vmem:[#allocation2 + $0x138] sm:$0xff]
        %v1044 = vld [vmem:[#allocation2 + $0x140] sm:$0xff]
        %v1045 = vld [vmem:[#allocation2 + $0x148] sm:$0xff]
        %v1046 = vld [vmem:[#allocation2 + $0x150] sm:$0xff]
        %v1047 = vld [vmem:[#allocation2 + $0x158] sm:$0xff]
        %v1048 = vld [vmem:[#allocation2 + $0x160] sm:$0xff]
        %v1049 = vld [vmem:[#allocation2 + $0x168] sm:$0xff]
        %v1050 = vld [vmem:[#allocation2 + $0x170] sm:$0xff]
        %v1051 = vld [vmem:[#allocation2 + $0x178] sm:$0xff]
        %v1052 = vld [vmem:[#allocation2 + $0x180] sm:$0xff]
        %v1053 = vld [vmem:[#allocation2 + $0x188] sm:$0xff]
        %v1054 = vld [vmem:[#allocation2 + $0x190] sm:$0xff]
        %v1055 = vld [vmem:[#allocation2 + $0x198] sm:$0xff]
        %v1056 = vld [vmem:[#allocation2 + $0x1a0] sm:$0xff]
        %v1057 = vld [vmem:[#allocation2 + $0x1a8] sm:$0xff]
        %v1058 = vld [vmem:[#allocation2 + $0x1b0] sm:$0xff]
        %v1059 = vld [vmem:[#allocation2 + $0x1b8] sm:$0xff]
        %v1060 = vpack.c.bf16 %v1011, %v1004
        %v1061 = vpack.c.bf16 %v1012, %v1005
        %v1062 = vpack.c.bf16 %v1013, %v1006
        %v1063 = vpack.c.bf16 %v1014, %v1007
        %v1064 = vpack.c.bf16 %v1015, %v1008
        %v1065 = vpack.c.bf16 %v1016, %v1009
        %v1066 = vpack.c.bf16 %v1017, %v1010
        %v1067 = vpack.c.bf16 %v1025, %v1018
        %v1068 = vpack.c.bf16 %v1026, %v1019
        %v1069 = vpack.c.bf16 %v1027, %v1020
        %v1070 = vpack.c.bf16 %v1028, %v1021
        %v1071 = vpack.c.bf16 %v1029, %v1022
        %v1072 = vpack.c.bf16 %v1030, %v1023
        %v1073 = vpack.c.bf16 %v1031, %v1024
        %v1074 = vpack.c.bf16 %v1039, %v1032
        %v1075 = vpack.c.bf16 %v1040, %v1033
        %v1076 = vpack.c.bf16 %v1041, %v1034
        %v1077 = vpack.c.bf16 %v1042, %v1035
        %v1078 = vpack.c.bf16 %v1043, %v1036
        %v1079 = vpack.c.bf16 %v1044, %v1037
        %v1080 = vpack.c.bf16 %v1045, %v1038
        %v1081 = vpack.c.bf16 %v1053, %v1046
        %v1082 = vpack.c.bf16 %v1054, %v1047
        %v1083 = vpack.c.bf16 %v1055, %v1048
        %v1084 = vpack.c.bf16 %v1056, %v1049
        %v1085 = vpack.c.bf16 %v1057, %v1050
        %v1086 = vpack.c.bf16 %v1058, %v1051
        %v1087 = vpack.c.bf16 %v1059, %v1052
        %v1088 = vld [vmem:[%s3] sm:$0xff]
        %v1089 = vld [vmem:[%s3 + $0x8] sm:$0xff]
        %v1090 = vld [vmem:[%s3 + $0x10] sm:$0xff]
        %v1091 = vld [vmem:[%s3 + $0x18] sm:$0xff]
        %v1092 = vld [vmem:[%s3 + $0x20] sm:$0xff]
        %v1093 = vld [vmem:[%s3 + $0x28] sm:$0xff]
        %v1094 = vld [vmem:[%s3 + $0x30] sm:$0xff]
        %v1095 = vld [vmem:[%s3 + $0x38] sm:$0xff]
        %v1096 = vld [vmem:[%s3 + $0x40] sm:$0xff]
        %v1097 = vld [vmem:[%s3 + $0x48] sm:$0xff]
        %v1098 = vld [vmem:[%s3 + $0x50] sm:$0xff]
        %v1099 = vld [vmem:[%s3 + $0x58] sm:$0xff]
        %v1100 = vld [vmem:[%s3 + $0x60] sm:$0xff]
        %v1101 = vld [vmem:[%s3 + $0x68] sm:$0xff]
        %v1102 = vld [vmem:[%s3 + $0x70] sm:$0xff]
        %v1103 = vld [vmem:[%s3 + $0x78] sm:$0xff]
        %v1104 = vld [vmem:[%s3 + $0x80] sm:$0xff]
        %v1105 = vld [vmem:[%s3 + $0x88] sm:$0xff]
        %v1106 = vld [vmem:[%s3 + $0x90] sm:$0xff]
        %v1107 = vld [vmem:[%s3 + $0x98] sm:$0xff]
        %v1108 = vld [vmem:[%s3 + $0xa0] sm:$0xff]
        %v1109 = vld [vmem:[%s3 + $0xa8] sm:$0xff]
        %v1110 = vld [vmem:[%s3 + $0xb0] sm:$0xff]
        %v1111 = vld [vmem:[%s3 + $0xb8] sm:$0xff]
        %v1112 = vld [vmem:[%s3 + $0xc0] sm:$0xff]
        %v1113 = vld [vmem:[%s3 + $0xc8] sm:$0xff]
        %v1114 = vld [vmem:[%s3 + $0xd0] sm:$0xff]
        %v1115 = vld [vmem:[%s3 + $0xd8] sm:$0xff]
        %v1116 = vld [vmem:[%s3 + $0xe0] sm:$0xff]
        %v1117 = vld [vmem:[%s3 + $0xe8] sm:$0xff]
        %v1118 = vld [vmem:[%s3 + $0xf0] sm:$0xff]
        %v1119 = vld [vmem:[%s3 + $0xf8] sm:$0xff]
        %v1120 = vld [vmem:[%s3 + $0x100] sm:$0xff]
        %v1121 = vld [vmem:[%s3 + $0x108] sm:$0xff]
        %v1122 = vld [vmem:[%s3 + $0x110] sm:$0xff]
        %v1123 = vld [vmem:[%s3 + $0x118] sm:$0xff]
        %v1124 = vld [vmem:[%s3 + $0x120] sm:$0xff]
        %v1125 = vld [vmem:[%s3 + $0x128] sm:$0xff]
        %v1126 = vld [vmem:[%s3 + $0x130] sm:$0xff]
        %v1127 = vld [vmem:[%s3 + $0x138] sm:$0xff]
        %v1128 = vld [vmem:[%s3 + $0x140] sm:$0xff]
        %v1129 = vld [vmem:[%s3 + $0x148] sm:$0xff]
        %v1130 = vld [vmem:[%s3 + $0x150] sm:$0xff]
        %v1131 = vld [vmem:[%s3 + $0x158] sm:$0xff]
        %v1132 = vld [vmem:[%s3 + $0x160] sm:$0xff]
        %v1133 = vld [vmem:[%s3 + $0x168] sm:$0xff]
        %v1134 = vld [vmem:[%s3 + $0x170] sm:$0xff]
        %v1135 = vld [vmem:[%s3 + $0x178] sm:$0xff]
        %v1136 = vld [vmem:[%s3 + $0x180] sm:$0xff]
        %v1137 = vld [vmem:[%s3 + $0x188] sm:$0xff]
        %v1138 = vld [vmem:[%s3 + $0x190] sm:$0xff]
        %v1139 = vld [vmem:[%s3 + $0x198] sm:$0xff]
        %v1140 = vld [vmem:[%s3 + $0x1a0] sm:$0xff]
        %v1141 = vld [vmem:[%s3 + $0x1a8] sm:$0xff]
        %v1142 = vld [vmem:[%s3 + $0x1b0] sm:$0xff]
        %v1143 = vld [vmem:[%s3 + $0x1b8] sm:$0xff]
        %v1144 = vld [vmem:[%s3 + $0x1c0] sm:$0xff]
        %v1145 = vld [vmem:[%s3 + $0x1c8] sm:$0xff]
        %v1146 = vld [vmem:[%s3 + $0x1d0] sm:$0xff]
        %v1147 = vld [vmem:[%s3 + $0x1d8] sm:$0xff]
        %v1148 = vld [vmem:[%s3 + $0x1e0] sm:$0xff]
        %v1149 = vld [vmem:[%s3 + $0x1e8] sm:$0xff]
        %v1150 = vld [vmem:[%s3 + $0x1f0] sm:$0xff]
        %v1151 = vld [vmem:[%s3 + $0x1f8] sm:$0xff]
        %v1152 = vld [vmem:[%s3 + $0x200] sm:$0xff]
        %v1153 = vld [vmem:[%s3 + $0x208] sm:$0xff]
        %v1154 = vld [vmem:[%s3 + $0x210] sm:$0xff]
        %v1155 = vld [vmem:[%s3 + $0x218] sm:$0xff]
        %v1156 = vld [vmem:[%s3 + $0x220] sm:$0xff]
        %v1157 = vld [vmem:[%s3 + $0x228] sm:$0xff]
        %v1158 = vld [vmem:[%s3 + $0x230] sm:$0xff]
        %v1159 = vld [vmem:[%s3 + $0x238] sm:$0xff]
        %v1160 = vld [vmem:[%s3 + $0x240] sm:$0xff]
        %v1161 = vld [vmem:[%s3 + $0x248] sm:$0xff]
        %v1162 = vld [vmem:[%s3 + $0x250] sm:$0xff]
        %v1163 = vld [vmem:[%s3 + $0x258] sm:$0xff]
        %v1164 = vld [vmem:[%s3 + $0x260] sm:$0xff]
        %v1165 = vld [vmem:[%s3 + $0x268] sm:$0xff]
        %v1166 = vld [vmem:[%s3 + $0x270] sm:$0xff]
        %v1167 = vld [vmem:[%s3 + $0x278] sm:$0xff]
        %v1168 = vld [vmem:[%s3 + $0x280] sm:$0xff]
        %v1169 = vld [vmem:[%s3 + $0x288] sm:$0xff]
        %v1170 = vld [vmem:[%s3 + $0x290] sm:$0xff]
        %v1171 = vld [vmem:[%s3 + $0x298] sm:$0xff]
        %v1172 = vld [vmem:[%s3 + $0x2a0] sm:$0xff]
        %v1173 = vld [vmem:[%s3 + $0x2a8] sm:$0xff]
        %v1174 = vld [vmem:[%s3 + $0x2b0] sm:$0xff]
        %v1175 = vld [vmem:[%s3 + $0x2b8] sm:$0xff]
        %v1176 = vld [vmem:[%s3 + $0x2c0] sm:$0xff]
        %v1177 = vld [vmem:[%s3 + $0x2c8] sm:$0xff]
        %v1178 = vld [vmem:[%s3 + $0x2d0] sm:$0xff]
        %v1179 = vld [vmem:[%s3 + $0x2d8] sm:$0xff]
        %v1180 = vld [vmem:[%s3 + $0x2e0] sm:$0xff]
        %v1181 = vld [vmem:[%s3 + $0x2e8] sm:$0xff]
        %v1182 = vld [vmem:[%s3 + $0x2f0] sm:$0xff]
        %v1183 = vld [vmem:[%s3 + $0x2f8] sm:$0xff]
        %v1184 = vld [vmem:[%s3 + $0x300] sm:$0xff]
        %v1185 = vld [vmem:[%s3 + $0x308] sm:$0xff]
        %v1186 = vld [vmem:[%s3 + $0x310] sm:$0xff]
        %v1187 = vld [vmem:[%s3 + $0x318] sm:$0xff]
        %v1188 = vld [vmem:[%s3 + $0x320] sm:$0xff]
        %v1189 = vld [vmem:[%s3 + $0x328] sm:$0xff]
        %v1190 = vld [vmem:[%s3 + $0x330] sm:$0xff]
        %v1191 = vld [vmem:[%s3 + $0x338] sm:$0xff]
        %v1192 = vld [vmem:[%s3 + $0x340] sm:$0xff]
        %v1193 = vld [vmem:[%s3 + $0x348] sm:$0xff]
        %v1194 = vld [vmem:[%s3 + $0x350] sm:$0xff]
        %v1195 = vld [vmem:[%s3 + $0x358] sm:$0xff]
        %v1196 = vld [vmem:[%s3 + $0x360] sm:$0xff]
        %v1197 = vld [vmem:[%s3 + $0x368] sm:$0xff]
        %v1198 = vld [vmem:[%s3 + $0x370] sm:$0xff]
        %v1199 = vld [vmem:[%s3 + $0x378] sm:$0x33]
        %v1312 = vunpack.c.l.b16 %v1088
        %v1313 = vunpack.c.h.b16 %v1088
        %v1314 = vunpack.c.l.b16 %v1089
        %v1315 = vunpack.c.h.b16 %v1089
        %v1316 = vunpack.c.l.b16 %v1090
        %v1317 = vunpack.c.h.b16 %v1090
        %v1318 = vunpack.c.l.b16 %v1091
        %v1319 = vunpack.c.h.b16 %v1091
        %v1320 = vunpack.c.l.b16 %v1092
        %v1321 = vunpack.c.h.b16 %v1092
        %v1322 = vunpack.c.l.b16 %v1093
        %v1323 = vunpack.c.h.b16 %v1093
        %v1324 = vunpack.c.l.b16 %v1094
        %v1325 = vunpack.c.h.b16 %v1094
        %v1326 = vunpack.c.l.b16 %v1095
        %v1327 = vunpack.c.h.b16 %v1095
        %v1328 = vunpack.c.l.b16 %v1096
        %v1329 = vunpack.c.h.b16 %v1096
        %v1330 = vunpack.c.l.b16 %v1097
        %v1331 = vunpack.c.h.b16 %v1097
        %v1332 = vunpack.c.l.b16 %v1098
        %v1333 = vunpack.c.h.b16 %v1098
        %v1334 = vunpack.c.l.b16 %v1099
        %v1335 = vunpack.c.h.b16 %v1099
        %v1336 = vunpack.c.l.b16 %v1100
        %v1337 = vunpack.c.h.b16 %v1100
        %v1338 = vunpack.c.l.b16 %v1101
        %v1339 = vunpack.c.h.b16 %v1101
        %v1340 = vunpack.c.l.b16 %v1102
        %v1341 = vunpack.c.h.b16 %v1102
        %v1342 = vunpack.c.l.b16 %v1103
        %v1343 = vunpack.c.h.b16 %v1103
        %v1344 = vunpack.c.l.b16 %v1104
        %v1345 = vunpack.c.h.b16 %v1104
        %v1346 = vunpack.c.l.b16 %v1105
        %v1347 = vunpack.c.h.b16 %v1105
        %v1348 = vunpack.c.l.b16 %v1106
        %v1349 = vunpack.c.h.b16 %v1106
        %v1350 = vunpack.c.l.b16 %v1107
        %v1351 = vunpack.c.h.b16 %v1107
        %v1352 = vunpack.c.l.b16 %v1108
        %v1353 = vunpack.c.h.b16 %v1108
        %v1354 = vunpack.c.l.b16 %v1109
        %v1355 = vunpack.c.h.b16 %v1109
        %v1356 = vunpack.c.l.b16 %v1110
        %v1357 = vunpack.c.h.b16 %v1110
        %v1358 = vunpack.c.l.b16 %v1111
        %v1359 = vunpack.c.h.b16 %v1111
        %v1360 = vunpack.c.l.b16 %v1112
        %v1361 = vunpack.c.h.b16 %v1112
        %v1362 = vunpack.c.l.b16 %v1113
        %v1363 = vunpack.c.h.b16 %v1113
        %v1364 = vunpack.c.l.b16 %v1114
        %v1365 = vunpack.c.h.b16 %v1114
        %v1366 = vunpack.c.l.b16 %v1115
        %v1367 = vunpack.c.h.b16 %v1115
        %v1368 = vunpack.c.l.b16 %v1116
        %v1369 = vunpack.c.h.b16 %v1116
        %v1370 = vunpack.c.l.b16 %v1117
        %v1371 = vunpack.c.h.b16 %v1117
        %v1372 = vunpack.c.l.b16 %v1118
        %v1373 = vunpack.c.h.b16 %v1118
        %v1374 = vunpack.c.l.b16 %v1119
        %v1375 = vunpack.c.h.b16 %v1119
        %v1376 = vunpack.c.l.b16 %v1120
        %v1377 = vunpack.c.h.b16 %v1120
        %v1378 = vunpack.c.l.b16 %v1121
        %v1379 = vunpack.c.h.b16 %v1121
        %v1380 = vunpack.c.l.b16 %v1122
        %v1381 = vunpack.c.h.b16 %v1122
        %v1382 = vunpack.c.l.b16 %v1123
        %v1383 = vunpack.c.h.b16 %v1123
        %v1384 = vunpack.c.l.b16 %v1124
        %v1385 = vunpack.c.h.b16 %v1124
        %v1386 = vunpack.c.l.b16 %v1125
        %v1387 = vunpack.c.h.b16 %v1125
        %v1388 = vunpack.c.l.b16 %v1126
        %v1389 = vunpack.c.h.b16 %v1126
        %v1390 = vunpack.c.l.b16 %v1127
        %v1391 = vunpack.c.h.b16 %v1127
        %v1392 = vunpack.c.l.b16 %v1128
        %v1393 = vunpack.c.h.b16 %v1128
        %v1394 = vunpack.c.l.b16 %v1129
        %v1395 = vunpack.c.h.b16 %v1129
        %v1396 = vunpack.c.l.b16 %v1130
        %v1397 = vunpack.c.h.b16 %v1130
        %v1398 = vunpack.c.l.b16 %v1131
        %v1399 = vunpack.c.h.b16 %v1131
        %v1400 = vunpack.c.l.b16 %v1132
        %v1401 = vunpack.c.h.b16 %v1132
        %v1402 = vunpack.c.l.b16 %v1133
        %v1403 = vunpack.c.h.b16 %v1133
        %v1404 = vunpack.c.l.b16 %v1134
        %v1405 = vunpack.c.h.b16 %v1134
        %v1406 = vunpack.c.l.b16 %v1135
        %v1407 = vunpack.c.h.b16 %v1135
        %v1408 = vunpack.c.l.b16 %v1136
        %v1409 = vunpack.c.h.b16 %v1136
        %v1410 = vunpack.c.l.b16 %v1137
        %v1411 = vunpack.c.h.b16 %v1137
        %v1412 = vunpack.c.l.b16 %v1138
        %v1413 = vunpack.c.h.b16 %v1138
        %v1414 = vunpack.c.l.b16 %v1139
        %v1415 = vunpack.c.h.b16 %v1139
        %v1416 = vunpack.c.l.b16 %v1140
        %v1417 = vunpack.c.h.b16 %v1140
        %v1418 = vunpack.c.l.b16 %v1141
        %v1419 = vunpack.c.h.b16 %v1141
        %v1420 = vunpack.c.l.b16 %v1142
        %v1421 = vunpack.c.h.b16 %v1142
        %v1422 = vunpack.c.l.b16 %v1143
        %v1423 = vunpack.c.h.b16 %v1143
        %v1424 = vunpack.c.l.b16 %v1144
        %v1425 = vunpack.c.h.b16 %v1144
        %v1426 = vunpack.c.l.b16 %v1145
        %v1427 = vunpack.c.h.b16 %v1145
        %v1428 = vunpack.c.l.b16 %v1146
        %v1429 = vunpack.c.h.b16 %v1146
        %v1430 = vunpack.c.l.b16 %v1147
        %v1431 = vunpack.c.h.b16 %v1147
        %v1432 = vunpack.c.l.b16 %v1148
        %v1433 = vunpack.c.h.b16 %v1148
        %v1434 = vunpack.c.l.b16 %v1149
        %v1435 = vunpack.c.h.b16 %v1149
        %v1436 = vunpack.c.l.b16 %v1150
        %v1437 = vunpack.c.h.b16 %v1150
        %v1438 = vunpack.c.l.b16 %v1151
        %v1439 = vunpack.c.h.b16 %v1151
        %v1440 = vunpack.c.l.b16 %v1152
        %v1441 = vunpack.c.h.b16 %v1152
        %v1442 = vunpack.c.l.b16 %v1153
        %v1443 = vunpack.c.h.b16 %v1153
        %v1444 = vunpack.c.l.b16 %v1154
        %v1445 = vunpack.c.h.b16 %v1154
        %v1446 = vunpack.c.l.b16 %v1155
        %v1447 = vunpack.c.h.b16 %v1155
        %v1448 = vunpack.c.l.b16 %v1156
        %v1449 = vunpack.c.h.b16 %v1156
        %v1450 = vunpack.c.l.b16 %v1157
        %v1451 = vunpack.c.h.b16 %v1157
        %v1452 = vunpack.c.l.b16 %v1158
        %v1453 = vunpack.c.h.b16 %v1158
        %v1454 = vunpack.c.l.b16 %v1159
        %v1455 = vunpack.c.h.b16 %v1159
        %v1456 = vunpack.c.l.b16 %v1160
        %v1457 = vunpack.c.h.b16 %v1160
        %v1458 = vunpack.c.l.b16 %v1161
        %v1459 = vunpack.c.h.b16 %v1161
        %v1460 = vunpack.c.l.b16 %v1162
        %v1461 = vunpack.c.h.b16 %v1162
        %v1462 = vunpack.c.l.b16 %v1163
        %v1463 = vunpack.c.h.b16 %v1163
        %v1464 = vunpack.c.l.b16 %v1164
        %v1465 = vunpack.c.h.b16 %v1164
        %v1466 = vunpack.c.l.b16 %v1165
        %v1467 = vunpack.c.h.b16 %v1165
        %v1468 = vunpack.c.l.b16 %v1166
        %v1469 = vunpack.c.h.b16 %v1166
        %v1470 = vunpack.c.l.b16 %v1167
        %v1471 = vunpack.c.h.b16 %v1167
        %v1472 = vunpack.c.l.b16 %v1168
        %v1473 = vunpack.c.h.b16 %v1168
        %v1474 = vunpack.c.l.b16 %v1169
        %v1475 = vunpack.c.h.b16 %v1169
        %v1476 = vunpack.c.l.b16 %v1170
        %v1477 = vunpack.c.h.b16 %v1170
        %v1478 = vunpack.c.l.b16 %v1171
        %v1479 = vunpack.c.h.b16 %v1171
        %v1480 = vunpack.c.l.b16 %v1172
        %v1481 = vunpack.c.h.b16 %v1172
        %v1482 = vunpack.c.l.b16 %v1173
        %v1483 = vunpack.c.h.b16 %v1173
        %v1484 = vunpack.c.l.b16 %v1174
        %v1485 = vunpack.c.h.b16 %v1174
        %v1486 = vunpack.c.l.b16 %v1175
        %v1487 = vunpack.c.h.b16 %v1175
        %v1488 = vunpack.c.l.b16 %v1176
        %v1489 = vunpack.c.h.b16 %v1176
        %v1490 = vunpack.c.l.b16 %v1177
        %v1491 = vunpack.c.h.b16 %v1177
        %v1492 = vunpack.c.l.b16 %v1178
        %v1493 = vunpack.c.h.b16 %v1178
        %v1494 = vunpack.c.l.b16 %v1179
        %v1495 = vunpack.c.h.b16 %v1179
        %v1496 = vunpack.c.l.b16 %v1180
        %v1497 = vunpack.c.h.b16 %v1180
        %v1498 = vunpack.c.l.b16 %v1181
        %v1499 = vunpack.c.h.b16 %v1181
        %v1500 = vunpack.c.l.b16 %v1182
        %v1501 = vunpack.c.h.b16 %v1182
        %v1502 = vunpack.c.l.b16 %v1183
        %v1503 = vunpack.c.h.b16 %v1183
        %v1504 = vunpack.c.l.b16 %v1184
        %v1505 = vunpack.c.h.b16 %v1184
        %v1506 = vunpack.c.l.b16 %v1185
        %v1507 = vunpack.c.h.b16 %v1185
        %v1508 = vunpack.c.l.b16 %v1186
        %v1509 = vunpack.c.h.b16 %v1186
        %v1510 = vunpack.c.l.b16 %v1187
        %v1511 = vunpack.c.h.b16 %v1187
        %v1512 = vunpack.c.l.b16 %v1188
        %v1513 = vunpack.c.h.b16 %v1188
        %v1514 = vunpack.c.l.b16 %v1189
        %v1515 = vunpack.c.h.b16 %v1189
        %v1516 = vunpack.c.l.b16 %v1190
        %v1517 = vunpack.c.h.b16 %v1190
        %v1518 = vunpack.c.l.b16 %v1191
        %v1519 = vunpack.c.h.b16 %v1191
        %v1520 = vunpack.c.l.b16 %v1192
        %v1521 = vunpack.c.h.b16 %v1192
        %v1522 = vunpack.c.l.b16 %v1193
        %v1523 = vunpack.c.h.b16 %v1193
        %v1524 = vunpack.c.l.b16 %v1194
        %v1525 = vunpack.c.h.b16 %v1194
        %v1526 = vunpack.c.l.b16 %v1195
        %v1527 = vunpack.c.h.b16 %v1195
        %v1528 = vunpack.c.l.b16 %v1196
        %v1529 = vunpack.c.h.b16 %v1196
        %v1530 = vunpack.c.l.b16 %v1197
        %v1531 = vunpack.c.h.b16 %v1197
        %v1532 = vunpack.c.l.b16 %v1198
        %v1533 = vunpack.c.h.b16 %v1198
        %v1534 = vunpack.c.l.b16 %v1199
        %v1535 = vunpack.c.h.b16 %v1199
        %v1536 = vpack.c.b16 %v1314, %v1312
        %v1537 = vpack.c.b16 %v1315, %v1313
        %v1538 = vpack.c.b16 %v1318, %v1316
        %v1539 = vpack.c.b16 %v1319, %v1317
        %v1540 = vpack.c.b16 %v1322, %v1320
        %v1541 = vpack.c.b16 %v1323, %v1321
        %v1542 = vpack.c.b16 %v1326, %v1324
        %v1543 = vpack.c.b16 %v1327, %v1325
        %v1544 = vpack.c.b16 %v1330, %v1328
        %v1545 = vpack.c.b16 %v1331, %v1329
        %v1546 = vpack.c.b16 %v1334, %v1332
        %v1547 = vpack.c.b16 %v1335, %v1333
        %v1548 = vpack.c.b16 %v1338, %v1336
        %v1549 = vpack.c.b16 %v1339, %v1337
        %v1550 = vpack.c.b16 %v1342, %v1340
        %v1551 = vpack.c.b16 %v1343, %v1341
        %v1552 = vpack.c.b16 %v1346, %v1344
        %v1553 = vpack.c.b16 %v1347, %v1345
        %v1554 = vpack.c.b16 %v1350, %v1348
        %v1555 = vpack.c.b16 %v1351, %v1349
        %v1556 = vpack.c.b16 %v1354, %v1352
        %v1557 = vpack.c.b16 %v1355, %v1353
        %v1558 = vpack.c.b16 %v1358, %v1356
        %v1559 = vpack.c.b16 %v1359, %v1357
        %v1560 = vpack.c.b16 %v1362, %v1360
        %v1561 = vpack.c.b16 %v1363, %v1361
        %v1562 = vpack.c.b16 %v1366, %v1364
        %v1563 = vpack.c.b16 %v1367, %v1365
        %v1564 = vpack.c.b16 %v1370, %v1368
        %v1565 = vpack.c.b16 %v1371, %v1369
        %v1566 = vpack.c.b16 %v1374, %v1372
        %v1567 = vpack.c.b16 %v1375, %v1373
        %v1568 = vpack.c.b16 %v1378, %v1376
        %v1569 = vpack.c.b16 %v1379, %v1377
        %v1570 = vpack.c.b16 %v1382, %v1380
        %v1571 = vpack.c.b16 %v1383, %v1381
        %v1572 = vpack.c.b16 %v1386, %v1384
        %v1573 = vpack.c.b16 %v1387, %v1385
        %v1574 = vpack.c.b16 %v1390, %v1388
        %v1575 = vpack.c.b16 %v1391, %v1389
        %v1576 = vpack.c.b16 %v1394, %v1392
        %v1577 = vpack.c.b16 %v1395, %v1393
        %v1578 = vpack.c.b16 %v1398, %v1396
        %v1579 = vpack.c.b16 %v1399, %v1397
        %v1580 = vpack.c.b16 %v1402, %v1400
        %v1581 = vpack.c.b16 %v1403, %v1401
        %v1582 = vpack.c.b16 %v1406, %v1404
        %v1583 = vpack.c.b16 %v1407, %v1405
        %v1584 = vpack.c.b16 %v1410, %v1408
        %v1585 = vpack.c.b16 %v1411, %v1409
        %v1586 = vpack.c.b16 %v1414, %v1412
        %v1587 = vpack.c.b16 %v1415, %v1413
        %v1588 = vpack.c.b16 %v1418, %v1416
        %v1589 = vpack.c.b16 %v1419, %v1417
        %v1590 = vpack.c.b16 %v1422, %v1420
        %v1591 = vpack.c.b16 %v1423, %v1421
        %v1592 = vpack.c.b16 %v1426, %v1424
        %v1593 = vpack.c.b16 %v1427, %v1425
        %v1594 = vpack.c.b16 %v1430, %v1428
        %v1595 = vpack.c.b16 %v1431, %v1429
        %v1596 = vpack.c.b16 %v1434, %v1432
        %v1597 = vpack.c.b16 %v1435, %v1433
        %v1598 = vpack.c.b16 %v1438, %v1436
        %v1599 = vpack.c.b16 %v1439, %v1437
        %v1600 = vpack.c.b16 %v1442, %v1440
        %v1601 = vpack.c.b16 %v1443, %v1441
        %v1602 = vpack.c.b16 %v1446, %v1444
        %v1603 = vpack.c.b16 %v1447, %v1445
        %v1604 = vpack.c.b16 %v1450, %v1448
        %v1605 = vpack.c.b16 %v1451, %v1449
        %v1606 = vpack.c.b16 %v1454, %v1452
        %v1607 = vpack.c.b16 %v1455, %v1453
        %v1608 = vpack.c.b16 %v1458, %v1456
        %v1609 = vpack.c.b16 %v1459, %v1457
        %v1610 = vpack.c.b16 %v1462, %v1460
        %v1611 = vpack.c.b16 %v1463, %v1461
        %v1612 = vpack.c.b16 %v1466, %v1464
        %v1613 = vpack.c.b16 %v1467, %v1465
        %v1614 = vpack.c.b16 %v1470, %v1468
        %v1615 = vpack.c.b16 %v1471, %v1469
        %v1616 = vpack.c.b16 %v1474, %v1472
        %v1617 = vpack.c.b16 %v1475, %v1473
        %v1618 = vpack.c.b16 %v1478, %v1476
        %v1619 = vpack.c.b16 %v1479, %v1477
        %v1620 = vpack.c.b16 %v1482, %v1480
        %v1621 = vpack.c.b16 %v1483, %v1481
        %v1622 = vpack.c.b16 %v1486, %v1484
        %v1623 = vpack.c.b16 %v1487, %v1485
        %v1624 = vpack.c.b16 %v1490, %v1488
        %v1625 = vpack.c.b16 %v1491, %v1489
        %v1626 = vpack.c.b16 %v1494, %v1492
        %v1627 = vpack.c.b16 %v1495, %v1493
        %v1628 = vpack.c.b16 %v1498, %v1496
        %v1629 = vpack.c.b16 %v1499, %v1497
        %v1630 = vpack.c.b16 %v1502, %v1500
        %v1631 = vpack.c.b16 %v1503, %v1501
        %v1632 = vpack.c.b16 %v1506, %v1504
        %v1633 = vpack.c.b16 %v1507, %v1505
        %v1634 = vpack.c.b16 %v1510, %v1508
        %v1635 = vpack.c.b16 %v1511, %v1509
        %v1636 = vpack.c.b16 %v1514, %v1512
        %v1637 = vpack.c.b16 %v1515, %v1513
        %v1638 = vpack.c.b16 %v1518, %v1516
        %v1639 = vpack.c.b16 %v1519, %v1517
        %v1640 = vpack.c.b16 %v1522, %v1520
        %v1641 = vpack.c.b16 %v1523, %v1521
        %v1642 = vpack.c.b16 %v1526, %v1524
        %v1643 = vpack.c.b16 %v1527, %v1525
        %v1644 = vpack.c.b16 %v1530, %v1528
        %v1645 = vpack.c.b16 %v1531, %v1529
        %v1646 = vpack.c.b16 %v1534, %v1532
        %v1647 = vpack.c.b16 %v1535, %v1533
        %vm1758 = vcmask 1014784
        %v1760 = vsel %vm1758, %v1066, 0
        %v1763 = vsel %vm1758, %v1073, 0
        %v1766 = vsel %vm1758, %v1080, 0
        %v1769 = vsel %vm1758, %v1087, 0
        %vm1771 = vcmask 1045504
        %v1773 = vsel %vm1771, %v1646, 0
        %v1776 = vsel %vm1771, %v1647, 0
        %1778 = vmatprep.subr.bf16.mxu0 %v1537
        %1779 = vmatpush1.bf16.msra.mxu0 %v1536
        %1780 = vmatprep.subr.bf16.mxu0 %v1539
        %1781 = vmatpush1.bf16.msra.mxu0 %v1538
        %1782 = vmatprep.subr.bf16.mxu0 %v1541
        %1783 = vmatpush1.bf16.msra.mxu0 %v1540
        %1784 = vmatprep.subr.bf16.mxu0 %v1543
        %1785 = vmatpush1.bf16.msra.mxu0 %v1542
        %1786 = vmatprep.subr.bf16.mxu0 %v1545
        %1787 = vmatpush1.bf16.msra.mxu0 %v1544
        %1788 = vmatprep.subr.bf16.mxu0 %v1547
        %1789 = vmatpush1.bf16.msra.mxu0 %v1546
        %1790 = vmatprep.subr.bf16.mxu0 %v1549
        %1791 = vmatpush1.bf16.msra.mxu0 %v1548
        %1792 = vmatprep.subr.bf16.mxu0 %v1551
        %1793 = vmatpush1.bf16.msra.mxu0 %v1550
        %1794 = vmatprep.subr.bf16.mxu0 %v1553
        %1795 = vmatpush1.bf16.msra.mxu0 %v1552
        %1796 = vmatprep.subr.bf16.mxu0 %v1555
        %1797 = vmatpush1.bf16.msra.mxu0 %v1554
        %1798 = vmatprep.subr.bf16.mxu0 %v1557
        %1799 = vmatpush1.bf16.msra.mxu0 %v1556
        %1800 = vmatprep.subr.bf16.mxu0 %v1559
        %1801 = vmatpush1.bf16.msra.mxu0 %v1558
        %1802 = vmatprep.subr.bf16.mxu0 %v1561
        %1803 = vmatpush1.bf16.msra.mxu0 %v1560
        %1804 = vmatprep.subr.bf16.mxu0 %v1563
        %1805 = vmatpush1.bf16.msra.mxu0 %v1562
        %1806 = vmatprep.subr.bf16.mxu0 %v1565
        %1807 = vmatpush1.bf16.msra.mxu0 %v1564
        %1808 = vmatprep.subr.bf16.mxu0 %v1567
        %1809 = vmatpush1.bf16.msra.mxu0 %v1566
        %1810 = vmatprep.mubr.bf16.mxu0 %v1061
        %1811 = vmatmul.mubr.bf16.gmra.mrb[0].mxu0 %v1060
        %v1812 = vpop.f32.mrb[0].mxu0
        %v1813 = vadd.f32 0.0, %v1812
        %v1814 = vpop.f32.mrb[0].mxu0
        %v1815 = vadd.f32 0.0, %v1814
        %v1816 = vpop.f32.mrb[0].mxu0
        %v1817 = vadd.f32 0.0, %v1816
        %v1818 = vpop.f32.mrb[0].mxu0
        %v1819 = vadd.f32 0.0, %v1818
        %1820 = vmatprep.mubr.bf16.mxu0 %v1068
        %1821 = vmatmul.mubr.bf16.gmra.mrb[0].mxu0 %v1067
        %v1822 = vpop.f32.mrb[0].mxu0
        %v1823 = vadd.f32 0.0, %v1822
        %v1824 = vpop.f32.mrb[0].mxu0
        %v1825 = vadd.f32 0.0, %v1824
        %v1826 = vpop.f32.mrb[0].mxu0
        %v1827 = vadd.f32 0.0, %v1826
        %v1828 = vpop.f32.mrb[0].mxu0
        %v1829 = vadd.f32 0.0, %v1828
        %1830 = vmatprep.mubr.bf16.mxu0 %v1075
        %1831 = vmatmul.mubr.bf16.gmra.mrb[0].mxu0 %v1074
        %v1832 = vpop.f32.mrb[0].mxu0
        %v1833 = vadd.f32 0.0, %v1832
        %v1834 = vpop.f32.mrb[0].mxu0
        %v1835 = vadd.f32 0.0, %v1834
        %v1836 = vpop.f32.mrb[0].mxu0
        %v1837 = vadd.f32 0.0, %v1836
        %v1838 = vpop.f32.mrb[0].mxu0
        %v1839 = vadd.f32 0.0, %v1838
        %1840 = vmatprep.mubr.bf16.mxu0 %v1082
        %1841 = vmatmul.mubr.bf16.gmra.mrb[0].mxu0 %v1081
        %v1842 = vpop.f32.mrb[0].mxu0
        %v1843 = vadd.f32 0.0, %v1842
        %v1844 = vpop.f32.mrb[0].mxu0
        %v1845 = vadd.f32 0.0, %v1844
        %v1846 = vpop.f32.mrb[0].mxu0
        %v1847 = vadd.f32 0.0, %v1846
        %v1848 = vpop.f32.mrb[0].mxu0
        %v1849 = vadd.f32 0.0, %v1848
        %1850 = vdwg.mxu0
        %1851 = vmatprep.subr.bf16.mxu0 %v1569
        %1852 = vmatpush1.bf16.msra.mxu0 %v1568
        %1853 = vmatprep.subr.bf16.mxu0 %v1571
        %1854 = vmatpush1.bf16.msra.mxu0 %v1570
        %1855 = vmatprep.subr.bf16.mxu0 %v1573
        %1856 = vmatpush1.bf16.msra.mxu0 %v1572
        %1857 = vmatprep.subr.bf16.mxu0 %v1575
        %1858 = vmatpush1.bf16.msra.mxu0 %v1574
        %1859 = vmatprep.subr.bf16.mxu0 %v1577
        %1860 = vmatpush1.bf16.msra.mxu0 %v1576
        %1861 = vmatprep.subr.bf16.mxu0 %v1579
        %1862 = vmatpush1.bf16.msra.mxu0 %v1578
        %1863 = vmatprep.subr.bf16.mxu0 %v1581
        %1864 = vmatpush1.bf16.msra.mxu0 %v1580
        %1865 = vmatprep.subr.bf16.mxu0 %v1583
        %1866 = vmatpush1.bf16.msra.mxu0 %v1582
        %1867 = vmatprep.subr.bf16.mxu0 %v1585
        %1868 = vmatpush1.bf16.msra.mxu0 %v1584
        %1869 = vmatprep.subr.bf16.mxu0 %v1587
        %1870 = vmatpush1.bf16.msra.mxu0 %v1586
        %1871 = vmatprep.subr.bf16.mxu0 %v1589
        %1872 = vmatpush1.bf16.msra.mxu0 %v1588
        %1873 = vmatprep.subr.bf16.mxu0 %v1591
        %1874 = vmatpush1.bf16.msra.mxu0 %v1590
        %1875 = vmatprep.subr.bf16.mxu0 %v1593
        %1876 = vmatpush1.bf16.msra.mxu0 %v1592
        %1877 = vmatprep.subr.bf16.mxu0 %v1595
        %1878 = vmatpush1.bf16.msra.mxu0 %v1594
        %1879 = vmatprep.subr.bf16.mxu0 %v1597
        %1880 = vmatpush1.bf16.msra.mxu0 %v1596
        %1881 = vmatprep.subr.bf16.mxu0 %v1599
        %1882 = vmatpush1.bf16.msra.mxu0 %v1598
        %1883 = vmatprep.mubr.bf16.mxu0 %v1063
        %1884 = vmatmul.mubr.bf16.gmra.mrb[0].mxu0 %v1062
        %v1885 = vpop.f32.mrb[0].mxu0
        %v1886 = vadd.f32 %v1813, %v1885
        %v1887 = vpop.f32.mrb[0].mxu0
        %v1888 = vadd.f32 %v1815, %v1887
        %v1889 = vpop.f32.mrb[0].mxu0
        %v1890 = vadd.f32 %v1817, %v1889
        %v1891 = vpop.f32.mrb[0].mxu0
        %v1892 = vadd.f32 %v1819, %v1891
        %1893 = vmatprep.mubr.bf16.mxu0 %v1070
        %1894 = vmatmul.mubr.bf16.gmra.mrb[0].mxu0 %v1069
        %v1895 = vpop.f32.mrb[0].mxu0
        %v1896 = vadd.f32 %v1823, %v1895
        %v1897 = vpop.f32.mrb[0].mxu0
        %v1898 = vadd.f32 %v1825, %v1897
        %v1899 = vpop.f32.mrb[0].mxu0
        %v1900 = vadd.f32 %v1827, %v1899
        %v1901 = vpop.f32.mrb[0].mxu0
        %v1902 = vadd.f32 %v1829, %v1901
        %1903 = vmatprep.mubr.bf16.mxu0 %v1077
        %1904 = vmatmul.mubr.bf16.gmra.mrb[0].mxu0 %v1076
        %v1905 = vpop.f32.mrb[0].mxu0
        %v1906 = vadd.f32 %v1833, %v1905
        %v1907 = vpop.f32.mrb[0].mxu0
        %v1908 = vadd.f32 %v1835, %v1907
        %v1909 = vpop.f32.mrb[0].mxu0
        %v1910 = vadd.f32 %v1837, %v1909
        %v1911 = vpop.f32.mrb[0].mxu0
        %v1912 = vadd.f32 %v1839, %v1911
        %1913 = vmatprep.mubr.bf16.mxu0 %v1084
        %1914 = vmatmul.mubr.bf16.gmra.mrb[0].mxu0 %v1083
        %v1915 = vpop.f32.mrb[0].mxu0
        %v1916 = vadd.f32 %v1843, %v1915
        %v1917 = vpop.f32.mrb[0].mxu0
        %v1918 = vadd.f32 %v1845, %v1917
        %v1919 = vpop.f32.mrb[0].mxu0
        %v1920 = vadd.f32 %v1847, %v1919
        %v1921 = vpop.f32.mrb[0].mxu0
        %v1922 = vadd.f32 %v1849, %v1921
        %1923 = vdwg.mxu0
        %1924 = vmatprep.subr.bf16.mxu0 %v1601
        %1925 = vmatpush1.bf16.msra.mxu0 %v1600
        %1926 = vmatprep.subr.bf16.mxu0 %v1603
        %1927 = vmatpush1.bf16.msra.mxu0 %v1602
        %1928 = vmatprep.subr.bf16.mxu0 %v1605
        %1929 = vmatpush1.bf16.msra.mxu0 %v1604
        %1930 = vmatprep.subr.bf16.mxu0 %v1607
        %1931 = vmatpush1.bf16.msra.mxu0 %v1606
        %1932 = vmatprep.subr.bf16.mxu0 %v1609
        %1933 = vmatpush1.bf16.msra.mxu0 %v1608
        %1934 = vmatprep.subr.bf16.mxu0 %v1611
        %1935 = vmatpush1.bf16.msra.mxu0 %v1610
        %1936 = vmatprep.subr.bf16.mxu0 %v1613
        %1937 = vmatpush1.bf16.msra.mxu0 %v1612
        %1938 = vmatprep.subr.bf16.mxu0 %v1615
        %1939 = vmatpush1.bf16.msra.mxu0 %v1614
        %1940 = vmatprep.subr.bf16.mxu0 %v1617
        %1941 = vmatpush1.bf16.msra.mxu0 %v1616
        %1942 = vmatprep.subr.bf16.mxu0 %v1619
        %1943 = vmatpush1.bf16.msra.mxu0 %v1618
        %1944 = vmatprep.subr.bf16.mxu0 %v1621
        %1945 = vmatpush1.bf16.msra.mxu0 %v1620
        %1946 = vmatprep.subr.bf16.mxu0 %v1623
        %1947 = vmatpush1.bf16.msra.mxu0 %v1622
        %1948 = vmatprep.subr.bf16.mxu0 %v1625
        %1949 = vmatpush1.bf16.msra.mxu0 %v1624
        %1950 = vmatprep.subr.bf16.mxu0 %v1627
        %1951 = vmatpush1.bf16.msra.mxu0 %v1626
        %1952 = vmatprep.subr.bf16.mxu0 %v1629
        %1953 = vmatpush1.bf16.msra.mxu0 %v1628
        %1954 = vmatprep.subr.bf16.mxu0 %v1631
        %1955 = vmatpush1.bf16.msra.mxu0 %v1630
        %1956 = vmatprep.mubr.bf16.mxu0 %v1065
        %1957 = vmatmul.mubr.bf16.gmra.mrb[0].mxu0 %v1064
        %v1958 = vpop.f32.mrb[0].mxu0
        %v1959 = vadd.f32 %v1886, %v1958
        %v1960 = vpop.f32.mrb[0].mxu0
        %v1961 = vadd.f32 %v1888, %v1960
        %v1962 = vpop.f32.mrb[0].mxu0
        %v1963 = vadd.f32 %v1890, %v1962
        %v1964 = vpop.f32.mrb[0].mxu0
        %v1965 = vadd.f32 %v1892, %v1964
        %1966 = vmatprep.mubr.bf16.mxu0 %v1072
        %1967 = vmatmul.mubr.bf16.gmra.mrb[0].mxu0 %v1071
        %v1968 = vpop.f32.mrb[0].mxu0
        %v1969 = vadd.f32 %v1896, %v1968
        %v1970 = vpop.f32.mrb[0].mxu0
        %v1971 = vadd.f32 %v1898, %v1970
        %v1972 = vpop.f32.mrb[0].mxu0
        %v1973 = vadd.f32 %v1900, %v1972
        %v1974 = vpop.f32.mrb[0].mxu0
        %v1975 = vadd.f32 %v1902, %v1974
        %1976 = vmatprep.mubr.bf16.mxu0 %v1079
        %1977 = vmatmul.mubr.bf16.gmra.mrb[0].mxu0 %v1078
        %v1978 = vpop.f32.mrb[0].mxu0
        %v1979 = vadd.f32 %v1906, %v1978
        %v1980 = vpop.f32.mrb[0].mxu0
        %v1981 = vadd.f32 %v1908, %v1980
        %v1982 = vpop.f32.mrb[0].mxu0
        %v1983 = vadd.f32 %v1910, %v1982
        %v1984 = vpop.f32.mrb[0].mxu0
        %v1985 = vadd.f32 %v1912, %v1984
        %1986 = vmatprep.mubr.bf16.mxu0 %v1086
        %1987 = vmatmul.mubr.bf16.gmra.mrb[0].mxu0 %v1085
        %v1988 = vpop.f32.mrb[0].mxu0
        %v1989 = vadd.f32 %v1916, %v1988
        %v1990 = vpop.f32.mrb[0].mxu0
        %v1991 = vadd.f32 %v1918, %v1990
        %v1992 = vpop.f32.mrb[0].mxu0
        %v1993 = vadd.f32 %v1920, %v1992
        %v1994 = vpop.f32.mrb[0].mxu0
        %v1995 = vadd.f32 %v1922, %v1994
        %1996 = vdwg.mxu0
        %1997 = vmatprep.subr.bf16.mxu0 %v1633
        %1998 = vmatpush1.bf16.msra.mxu0 %v1632
        %1999 = vmatprep.subr.bf16.mxu0 %v1635
        %2000 = vmatpush1.bf16.msra.mxu0 %v1634
        %2001 = vmatprep.subr.bf16.mxu0 %v1637
        %2002 = vmatpush1.bf16.msra.mxu0 %v1636
        %2003 = vmatprep.subr.bf16.mxu0 %v1639
        %2004 = vmatpush1.bf16.msra.mxu0 %v1638
        %2005 = vmatprep.subr.bf16.mxu0 %v1641
        %2006 = vmatpush1.bf16.msra.mxu0 %v1640
        %2007 = vmatprep.subr.bf16.mxu0 %v1643
        %2008 = vmatpush1.bf16.msra.mxu0 %v1642
        %2009 = vmatprep.subr.bf16.mxu0 %v1645
        %2010 = vmatpush1.bf16.msra.mxu0 %v1644
        %2011 = vmatprep.subr.bf16.mxu0 %v1776
        %2012 = vmatpush1.bf16.msra.mxu0 %v1773
        %2013 = vmatprep.subr.bf16.mxu0 0
        %2014 = vmatpush1.bf16.msra.mxu0 0
        %2015 = vmatprep.subr.bf16.mxu0 0
        %2016 = vmatpush1.bf16.msra.mxu0 0
        %2017 = vmatprep.subr.bf16.mxu0 0
        %2018 = vmatpush1.bf16.msra.mxu0 0
        %2019 = vmatprep.subr.bf16.mxu0 0
        %2020 = vmatpush1.bf16.msra.mxu0 0
        %2021 = vmatprep.subr.bf16.mxu0 0
        %2022 = vmatpush1.bf16.msra.mxu0 0
        %2023 = vmatprep.subr.bf16.mxu0 0
        %2024 = vmatpush1.bf16.msra.mxu0 0
        %2025 = vmatprep.subr.bf16.mxu0 0
        %2026 = vmatpush1.bf16.msra.mxu0 0
        %2027 = vmatprep.subr.bf16.mxu0 0
        %2028 = vmatpush1.bf16.msra.mxu0 0
        %2029 = vmatprep.mubr.bf16.mxu0 0
        %2030 = vmatmul.mubr.bf16.gmra.mrb[0].mxu0 %v1760
        %v2031 = vpop.f32.mrb[0].mxu0
        %v2032 = vadd.f32 %v1959, %v2031
        %v2033 = vpop.f32.mrb[0].mxu0
        %v2034 = vadd.f32 %v1961, %v2033
        %v2035 = vpop.f32.mrb[0].mxu0
        %v2036 = vadd.f32 %v1963, %v2035
        %v2037 = vpop.f32.mrb[0].mxu0
        %v2038 = vadd.f32 %v1965, %v2037
        %2039 = vmatprep.mubr.bf16.mxu0 0
        %2040 = vmatmul.mubr.bf16.gmra.mrb[0].mxu0 %v1763
        %v2041 = vpop.f32.mrb[0].mxu0
        %v2042 = vadd.f32 %v1969, %v2041
        %v2043 = vpop.f32.mrb[0].mxu0
        %v2044 = vadd.f32 %v1971, %v2043
        %v2045 = vpop.f32.mrb[0].mxu0
        %v2046 = vadd.f32 %v1973, %v2045
        %v2047 = vpop.f32.mrb[0].mxu0
        %v2048 = vadd.f32 %v1975, %v2047
        %2049 = vmatprep.mubr.bf16.mxu0 0
        %2050 = vmatmul.mubr.bf16.gmra.mrb[0].mxu0 %v1766
        %v2051 = vpop.f32.mrb[0].mxu0
        %v2052 = vadd.f32 %v1979, %v2051
        %v2053 = vpop.f32.mrb[0].mxu0
        %v2054 = vadd.f32 %v1981, %v2053
        %v2055 = vpop.f32.mrb[0].mxu0
        %v2056 = vadd.f32 %v1983, %v2055
        %v2057 = vpop.f32.mrb[0].mxu0
        %v2058 = vadd.f32 %v1985, %v2057
        %2059 = vmatprep.mubr.bf16.mxu0 0
        %2060 = vmatmul.mubr.bf16.gmra.mrb[0].mxu0 %v1769
        %v2061 = vpop.f32.mrb[0].mxu0
        %v2062 = vadd.f32 %v1989, %v2061
        %v2063 = vpop.f32.mrb[0].mxu0
        %v2064 = vadd.f32 %v1991, %v2063
        %v2065 = vpop.f32.mrb[0].mxu0
        %v2066 = vadd.f32 %v1993, %v2065
        %v2067 = vpop.f32.mrb[0].mxu0
        %v2068 = vadd.f32 %v1995, %v2067
        %2069 = vdwg.mxu0
        %2070 = vst [vmem:[#allocation3] sm:$0xff] %v2032
        %2071 = vst [vmem:[#allocation3 + $0x8] sm:$0xff] %v2034
        %2072 = vst [vmem:[#allocation3 + $0x10] sm:$0xff] %v2036
        %2073 = vst [vmem:[#allocation3 + $0x18] sm:$0xff] %v2038
        %2074 = vst [vmem:[#allocation3 + $0x20] sm:$0xff] %v2042
        %2075 = vst [vmem:[#allocation3 + $0x28] sm:$0xff] %v2044
        %2076 = vst [vmem:[#allocation3 + $0x30] sm:$0xff] %v2046
        %2077 = vst [vmem:[#allocation3 + $0x38] sm:$0xff] %v2048
        %2078 = vst [vmem:[#allocation3 + $0x40] sm:$0xff] %v2052
        %2079 = vst [vmem:[#allocation3 + $0x48] sm:$0xff] %v2054
        %2080 = vst [vmem:[#allocation3 + $0x50] sm:$0xff] %v2056
        %2081 = vst [vmem:[#allocation3 + $0x58] sm:$0xff] %v2058
        %2082 = vst [vmem:[#allocation3 + $0x60] sm:$0xff] %v2062
        %2083 = vst [vmem:[#allocation3 + $0x68] sm:$0xff] %v2064
        %2084 = vst [vmem:[#allocation3 + $0x70] sm:$0xff] %v2066
        %2085 = vst [vmem:[#allocation3 + $0x78] sm:$0xff] %v2068
        loop: start=0, step=1, limit=8
        $region76: #{tpu_custom_call.1} parent=67 // loop_pre_header
          _
        $region77: #{tpu_custom_call.1} parent=67 // loop_header
          %s2087 = sphi 0, %s2091
          %p2088 = scmp.ge.s32.totalorder %s2087, 8
        $region78: #{tpu_custom_call.1} parent=67 // loop_header_branch
          %2090 = sbr.rel (%p2088) target = $region82
        $region79: #{tpu_custom_call.1} parent=67 // loop_body
          %s2092 = smul.u32 %s2087, 8
          %s2093 = sshra.s32 %s2092, 3
          %s2094 = sand.u32 %s2092, 7
          %s2095 = smul.u32 %s2093, 2
          %s2096 = smul.addr %s2095, 8
          %s2097 = scalar_lea.vmem [#allocation3], %s2096
          %v2098 = vld [vmem:[%s2097] sm:$0xff]
          %v2099 = vld [vmem:[%s2097 + $0x8] sm:$0xff]
          %2102 = vrot.lane.b32.xlu0 %v2098, 114
          %v2103 = vpop.permute.xlu0 %2102
          %2104 = vrot.lane.b32.xlu0 %v2099, 114
          %v2105 = vpop.permute.xlu0 %2104
          %vm2106 = vcmask 932864
          %v2107 = vsel %vm2106, %v2103, %v2105
          %2110 = vrot.lane.b32.xlu0 %v2098, 100
          %v2111 = vpop.permute.xlu0 %2110
          %2112 = vrot.lane.b32.xlu0 %v2099, 100
          %v2113 = vpop.permute.xlu0 %2112
          %vm2114 = vcmask 818176
          %v2115 = vsel %vm2114, %v2111, %v2113
          %2118 = vrot.lane.b32.xlu0 %v2098, 86
          %v2119 = vpop.permute.xlu0 %2118
          %2120 = vrot.lane.b32.xlu0 %v2099, 86
          %v2121 = vpop.permute.xlu0 %2120
          %vm2122 = vcmask 703488
          %v2123 = vsel %vm2122, %v2119, %v2121
          %2126 = vrot.lane.b32.xlu0 %v2098, 72
          %v2127 = vpop.permute.xlu0 %2126
          %2128 = vrot.lane.b32.xlu0 %v2099, 72
          %v2129 = vpop.permute.xlu0 %2128
          %vm2130 = vcmask 588800
          %v2131 = vsel %vm2130, %v2127, %v2129
          %2134 = vrot.lane.b32.xlu0 %v2098, 127
          %v2135 = vpop.permute.xlu0 %2134
          %2136 = vrot.lane.b32.xlu0 %v2099, 127
          %v2137 = vpop.permute.xlu0 %2136
          %2138 = vrot.lane.b32.xlu0 %v2107, 127
          %v2139 = vpop.permute.xlu0 %2138
          %2140 = vrot.lane.b32.xlu0 %v2105, 127
          %v2141 = vpop.permute.xlu0 %2140
          %2142 = vrot.lane.b32.xlu0 %v2115, 127
          %v2143 = vpop.permute.xlu0 %2142
          %2144 = vrot.lane.b32.xlu0 %v2113, 127
          %v2145 = vpop.permute.xlu0 %2144
          %2146 = vrot.lane.b32.xlu0 %v2123, 127
          %v2147 = vpop.permute.xlu0 %2146
          %2148 = vrot.lane.b32.xlu0 %v2121, 127
          %v2149 = vpop.permute.xlu0 %2148
          %2150 = vrot.lane.b32.xlu0 %v2131, 127
          %v2151 = vpop.permute.xlu0 %2150
          %2152 = vrot.lane.b32.xlu0 %v2129, 127
          %v2153 = vpop.permute.xlu0 %2152
          %vm2154 = vcmask 1039360
          %v2155 = vsel %vm2154, %v2135, %v2137
          %v2156 = vsel %vm2154, %v2139, %v2141
          %v2157 = vsel %vm2154, %v2143, %v2145
          %v2158 = vsel %vm2154, %v2147, %v2149
          %v2159 = vsel %vm2154, %v2151, %v2153
          %2170 = vrot.lane.b32.xlu0 %v2098, 126
          %v2171 = vpop.permute.xlu0 %2170
          %2172 = vrot.lane.b32.xlu0 %v2099, 126
          %v2173 = vpop.permute.xlu0 %2172
          %2174 = vrot.lane.b32.xlu0 %v2107, 126
          %v2175 = vpop.permute.xlu0 %2174
          %2176 = vrot.lane.b32.xlu0 %v2105, 126
          %v2177 = vpop.permute.xlu0 %2176
          %2178 = vrot.lane.b32.xlu0 %v2115, 126
          %v2179 = vpop.permute.xlu0 %2178
          %2180 = vrot.lane.b32.xlu0 %v2113, 126
          %v2181 = vpop.permute.xlu0 %2180
          %2182 = vrot.lane.b32.xlu0 %v2123, 126
          %v2183 = vpop.permute.xlu0 %2182
          %2184 = vrot.lane.b32.xlu0 %v2121, 126
          %v2185 = vpop.permute.xlu0 %2184
          %2186 = vrot.lane.b32.xlu0 %v2131, 126
          %v2187 = vpop.permute.xlu0 %2186
          %2188 = vrot.lane.b32.xlu0 %v2129, 126
          %v2189 = vpop.permute.xlu0 %2188
          %vm2190 = vcmask 1031168
          %v2191 = vsel %vm2190, %v2171, %v2173
          %v2192 = vsel %vm2190, %v2175, %v2177
          %v2193 = vsel %vm2190, %v2179, %v2181
          %v2194 = vsel %vm2190, %v2183, %v2185
          %v2195 = vsel %vm2190, %v2187, %v2189
          %2206 = vrot.lane.b32.xlu0 %v2098, 125
          %v2207 = vpop.permute.xlu0 %2206
          %2208 = vrot.lane.b32.xlu0 %v2099, 125
          %v2209 = vpop.permute.xlu0 %2208
          %2210 = vrot.lane.b32.xlu0 %v2107, 125
          %v2211 = vpop.permute.xlu0 %2210
          %2212 = vrot.lane.b32.xlu0 %v2105, 125
          %v2213 = vpop.permute.xlu0 %2212
          %2214 = vrot.lane.b32.xlu0 %v2115, 125
          %v2215 = vpop.permute.xlu0 %2214
          %2216 = vrot.lane.b32.xlu0 %v2113, 125
          %v2217 = vpop.permute.xlu0 %2216
          %2218 = vrot.lane.b32.xlu0 %v2123, 125
          %v2219 = vpop.permute.xlu0 %2218
          %2220 = vrot.lane.b32.xlu0 %v2121, 125
          %v2221 = vpop.permute.xlu0 %2220
          %2222 = vrot.lane.b32.xlu0 %v2131, 125
          %v2223 = vpop.permute.xlu0 %2222
          %2224 = vrot.lane.b32.xlu0 %v2129, 125
          %v2225 = vpop.permute.xlu0 %2224
          %vm2226 = vcmask 1022976
          %v2227 = vsel %vm2226, %v2207, %v2209
          %v2228 = vsel %vm2226, %v2211, %v2213
          %v2229 = vsel %vm2226, %v2215, %v2217
          %v2230 = vsel %vm2226, %v2219, %v2221
          %v2231 = vsel %vm2226, %v2223, %v2225
          %2242 = vrot.lane.b32.xlu0 %v2098, 124
          %v2243 = vpop.permute.xlu0 %2242
          %2244 = vrot.lane.b32.xlu0 %v2099, 124
          %v2245 = vpop.permute.xlu0 %2244
          %2246 = vrot.lane.b32.xlu0 %v2107, 124
          %v2247 = vpop.permute.xlu0 %2246
          %2248 = vrot.lane.b32.xlu0 %v2105, 124
          %v2249 = vpop.permute.xlu0 %2248
          %2250 = vrot.lane.b32.xlu0 %v2115, 124
          %v2251 = vpop.permute.xlu0 %2250
          %2252 = vrot.lane.b32.xlu0 %v2113, 124
          %v2253 = vpop.permute.xlu0 %2252
          %2254 = vrot.lane.b32.xlu0 %v2123, 124
          %v2255 = vpop.permute.xlu0 %2254
          %2256 = vrot.lane.b32.xlu0 %v2121, 124
          %v2257 = vpop.permute.xlu0 %2256
          %2258 = vrot.lane.b32.xlu0 %v2131, 124
          %v2259 = vpop.permute.xlu0 %2258
          %2260 = vrot.lane.b32.xlu0 %v2129, 124
          %v2261 = vpop.permute.xlu0 %2260
          %v2262 = vsel %vm1758, %v2243, %v2245
          %v2263 = vsel %vm1758, %v2247, %v2249
          %v2264 = vsel %vm1758, %v2251, %v2253
          %v2265 = vsel %vm1758, %v2255, %v2257
          %v2266 = vsel %vm1758, %v2259, %v2261
          %v2277 = vld [vmem:[%s4] sm:$0xff]
          %v2278 = vld [vmem:[%s4 + $0x8] sm:$0xff]
          %v2279 = vpack.c.bf16 %v2107, %v2098
          %v2280 = vpack.c.bf16 %v2105, %v2099
          %v2281 = vpack.c.bf16 %v2123, %v2115
          %v2282 = vpack.c.bf16 %v2121, %v2113
          %v2283 = vpack.c.bf16 %v2155, %v2131
          %v2284 = vpack.c.bf16 %v2137, %v2129
          %v2285 = vpack.c.bf16 %v2157, %v2156
          %v2286 = vpack.c.bf16 %v2145, %v2141
          %v2287 = vpack.c.bf16 %v2159, %v2158
          %v2288 = vpack.c.bf16 %v2153, %v2149
          %v2289 = vpack.c.bf16 %v2192, %v2191
          %v2290 = vpack.c.bf16 %v2177, %v2173
          %v2291 = vpack.c.bf16 %v2194, %v2193
          %v2292 = vpack.c.bf16 %v2185, %v2181
          %v2293 = vpack.c.bf16 %v2227, %v2195
          %v2294 = vpack.c.bf16 %v2209, %v2189
          %v2295 = vpack.c.bf16 %v2229, %v2228
          %v2296 = vpack.c.bf16 %v2217, %v2213
          %v2297 = vpack.c.bf16 %v2231, %v2230
          %v2298 = vpack.c.bf16 %v2225, %v2221
          %v2299 = vpack.c.bf16 %v2263, %v2262
          %v2300 = vpack.c.bf16 %v2249, %v2245
          %v2301 = vpack.c.bf16 %v2265, %v2264
          %v2302 = vpack.c.bf16 %v2257, %v2253
          %v2303 = vpack.c.bf16 %v2266, %v2266
          %v2304 = vpack.c.bf16 %v2261, %v2261
          %v2305 = vld [vmem:[%s5] sm:$0xff]
          %v2306 = vld [vmem:[%s5 + $0x8] sm:$0xff]
          %2308 = vset.pattern.permute.xlu0 0
          %2309 = vperm.xlu0 %2308, %v2305
          %v2310 = vpop.permute.xlu0 %2309
          %2313 = vset.pattern.permute.xlu0 0
          %2314 = vperm.xlu0 %2313, %v2306
          %v2315 = vpop.permute.xlu0 %2314
          %v2319 = vunpack.c.l.b16 %v2277
          %v2320 = vunpack.c.h.b16 %v2277
          %v2321 = vunpack.c.l.b16 %v2278
          %v2322 = vunpack.c.h.b16 %v2278
          %v2323 = vpack.c.b16 %v2321, %v2319
          %v2324 = vpack.c.b16 %v2322, %v2320
          %v2327 = vsel %vm2130, %v2324, 0
          %vm2329 = vcmask 1043456
          %v2331 = vsel %vm2329, %v2303, 0
          %v2334 = vsel %vm2329, %v2304, 0
          %2336 = vmatprep.subr.bf16.mxu0 %v2280
          %2337 = vmatpush1.bf16.msra.mxu0 %v2279
          %2338 = vmatprep.subr.bf16.mxu0 %v2282
          %2339 = vmatpush1.bf16.msra.mxu0 %v2281
          %2340 = vmatprep.subr.bf16.mxu0 %v2284
          %2341 = vmatpush1.bf16.msra.mxu0 %v2283
          %2342 = vmatprep.subr.bf16.mxu0 %v2286
          %2343 = vmatpush1.bf16.msra.mxu0 %v2285
          %2344 = vmatprep.subr.bf16.mxu0 %v2288
          %2345 = vmatpush1.bf16.msra.mxu0 %v2287
          %2346 = vmatprep.subr.bf16.mxu0 %v2290
          %2347 = vmatpush1.bf16.msra.mxu0 %v2289
          %2348 = vmatprep.subr.bf16.mxu0 %v2292
          %2349 = vmatpush1.bf16.msra.mxu0 %v2291
          %2350 = vmatprep.subr.bf16.mxu0 %v2294
          %2351 = vmatpush1.bf16.msra.mxu0 %v2293
          %2352 = vmatprep.subr.bf16.mxu0 %v2296
          %2353 = vmatpush1.bf16.msra.mxu0 %v2295
          %2354 = vmatprep.subr.bf16.mxu0 %v2298
          %2355 = vmatpush1.bf16.msra.mxu0 %v2297
          %2356 = vmatprep.subr.bf16.mxu0 %v2300
          %2357 = vmatpush1.bf16.msra.mxu0 %v2299
          %2358 = vmatprep.subr.bf16.mxu0 %v2302
          %2359 = vmatpush1.bf16.msra.mxu0 %v2301
          %2360 = vmatprep.subr.bf16.mxu0 %v2334
          %2361 = vmatpush1.bf16.msra.mxu0 %v2331
          %2362 = vmatprep.subr.bf16.mxu0 0
          %2363 = vmatpush1.bf16.msra.mxu0 0
          %2364 = vmatprep.subr.bf16.mxu0 0
          %2365 = vmatpush1.bf16.msra.mxu0 0
          %2366 = vmatprep.subr.bf16.mxu0 0
          %2367 = vmatpush1.bf16.msra.mxu0 0
          %2368 = vmatprep.mubr.bf16.mxu0 %v2327
          %2369 = vmatmul.mubr.bf16.gmra.mrb[0].mxu0 %v2323
          %v2370 = vpop.f32.mrb[0].mxu0
          %v2371 = vadd.f32 %v2310, %v2370
          %v2372 = vpop.f32.mrb[0].mxu0
          %v2373 = vadd.f32 %v2310, %v2372
          %v2374 = vpop.f32.mrb[0].mxu0
          %v2375 = vadd.f32 %v2315, %v2374
          %v2376 = vpop.f32.mrb[0].mxu0
          %v2377 = vadd.f32 %v2315, %v2376
          %2378 = vdwg.mxu0
          %v2379 = vmax.f32 %v2371, 0.0
          %v2380 = vmax.f32 %v2373, 0.0
          %v2381 = vmax.f32 %v2375, 0.0
          %v2382 = vmax.f32 %v2377, 0.0
          %s2383 = smul.u32 %s2087, 4
          %s2384 = smul.addr %s2383, 8
          %s2385 = scalar_lea.vmem [#allocation4], %s2384
          %2386 = vst [vmem:[%s2385] sm:$0xff] %v2379
          %vm2387 = vcmask 97280
          %2388 = vst.msk [vmem:[%s2385 + $0x8] sm:$0xff] %vm2387, %v2380
          %2389 = vst [vmem:[%s2385 + $0x10] sm:$0xff] %v2381
          %2390 = vst.msk [vmem:[%s2385 + $0x18] sm:$0xff] %vm2387, %v2382
        $region80: #{tpu_custom_call.1} parent=67 // loop_footer
          %s2091 = sadd.s32 1, %s2087
        $region81: #{tpu_custom_call.1} parent=67 // loop_footer_branch
          %2086 = sbr.rel target = $region77
        $region82: #{tpu_custom_call.1} parent=67 // loop_exit
          _
        %v2391 = vld [vmem:[#allocation4] ss:$8 sm:$0x3]
        %s2392 = scalar_lea.vmem [#allocation4], 32
        %v2393 = vld [vmem:[%s2392] ss:$8 sm:$0x3]
        %s2394 = scalar_lea.vmem [#allocation4], 64
        %v2395 = vld [vmem:[%s2394] ss:$8 sm:$0x3]
        %s2396 = scalar_lea.vmem [#allocation4], 96
        %v2397 = vld [vmem:[%s2396] ss:$8 sm:$0x3]
        %s2398 = scalar_lea.vmem [#allocation4], 128
        %v2399 = vld [vmem:[%s2398] ss:$8 sm:$0x3]
        %s2400 = scalar_lea.vmem [#allocation4], 160
        %v2401 = vld [vmem:[%s2400] ss:$8 sm:$0x3]
        %s2402 = scalar_lea.vmem [#allocation4], 192
        %v2403 = vld [vmem:[%s2402] ss:$8 sm:$0x3]
        %s2404 = scalar_lea.vmem [#allocation4], 224
        %v2405 = vld [vmem:[%s2404] ss:$8 sm:$0x3]
        %v2414 = vlaneseq
        %v2415 = vshrl.u32 %v2414, 7
        %v2416 = vsub.s32 0, %v2415
        %v2417 = vrot.slane %v2391, %v2416
        %v2418 = vlaneseq
        %v2419 = vshrl.u32 %v2418, 7
        %v2420 = vsub.s32 1, %v2419
        %v2421 = vrot.slane %v2391, %v2420
        %v2422 = vlaneseq
        %v2423 = vshrl.u32 %v2422, 7
        %v2424 = vsub.s32 0, %v2423
        %v2425 = vrot.slane %v2393, %v2424
        %v2426 = vlaneseq
        %v2427 = vshrl.u32 %v2426, 7
        %v2428 = vsub.s32 1, %v2427
        %v2429 = vrot.slane %v2393, %v2428
        %v2430 = vlaneseq
        %v2431 = vshrl.u32 %v2430, 7
        %v2432 = vsub.s32 0, %v2431
        %v2433 = vrot.slane %v2395, %v2432
        %v2434 = vlaneseq
        %v2435 = vshrl.u32 %v2434, 7
        %v2436 = vsub.s32 1, %v2435
        %v2437 = vrot.slane %v2395, %v2436
        %v2438 = vlaneseq
        %v2439 = vshrl.u32 %v2438, 7
        %v2440 = vsub.s32 0, %v2439
        %v2441 = vrot.slane %v2397, %v2440
        %v2442 = vlaneseq
        %v2443 = vshrl.u32 %v2442, 7
        %v2444 = vsub.s32 1, %v2443
        %v2445 = vrot.slane %v2397, %v2444
        %v2446 = vlaneseq
        %v2447 = vshrl.u32 %v2446, 7
        %v2448 = vsub.s32 0, %v2447
        %v2449 = vrot.slane %v2399, %v2448
        %v2450 = vlaneseq
        %v2451 = vshrl.u32 %v2450, 7
        %v2452 = vsub.s32 1, %v2451
        %v2453 = vrot.slane %v2399, %v2452
        %v2454 = vlaneseq
        %v2455 = vshrl.u32 %v2454, 7
        %v2456 = vsub.s32 0, %v2455
        %v2457 = vrot.slane %v2401, %v2456
        %v2458 = vlaneseq
        %v2459 = vshrl.u32 %v2458, 7
        %v2460 = vsub.s32 1, %v2459
        %v2461 = vrot.slane %v2401, %v2460
        %v2462 = vlaneseq
        %v2463 = vshrl.u32 %v2462, 7
        %v2464 = vsub.s32 0, %v2463
        %v2465 = vrot.slane %v2403, %v2464
        %v2466 = vlaneseq
        %v2467 = vshrl.u32 %v2466, 7
        %v2468 = vsub.s32 1, %v2467
        %v2469 = vrot.slane %v2403, %v2468
        %v2470 = vlaneseq
        %v2471 = vshrl.u32 %v2470, 7
        %v2472 = vsub.s32 0, %v2471
        %v2473 = vrot.slane %v2405, %v2472
        %v2474 = vlaneseq
        %v2475 = vshrl.u32 %v2474, 7
        %v2476 = vsub.s32 1, %v2475
        %v2477 = vrot.slane %v2405, %v2476
        %v2494 = vpack.c.bf16 %v2417, %v2417
        %v2495 = vpack.c.bf16 %v2421, %v2421
        %v2496 = vpack.c.bf16 %v2425, %v2425
        %v2497 = vpack.c.bf16 %v2429, %v2429
        %v2498 = vpack.c.bf16 %v2433, %v2433
        %v2499 = vpack.c.bf16 %v2437, %v2437
        %v2500 = vpack.c.bf16 %v2441, %v2441
        %v2501 = vpack.c.bf16 %v2445, %v2445
        %v2502 = vpack.c.bf16 %v2449, %v2449
        %v2503 = vpack.c.bf16 %v2453, %v2453
        %v2504 = vpack.c.bf16 %v2457, %v2457
        %v2505 = vpack.c.bf16 %v2461, %v2461
        %v2506 = vpack.c.bf16 %v2465, %v2465
        %v2507 = vpack.c.bf16 %v2469, %v2469
        %v2508 = vpack.c.bf16 %v2473, %v2473
        %v2509 = vpack.c.bf16 %v2477, %v2477
        %v2510 = vld [vmem:[%s6] sm:$0xf]
        %v2511 = vld [vmem:[%s6 + $0x4] sm:$0xf]
        %v2512 = vld [vmem:[%s6 + $0x8] sm:$0xf]
        %v2513 = vld [vmem:[%s6 + $0xc] sm:$0xf]
        %v2514 = vld [vmem:[%s6 + $0x10] sm:$0xf]
        %v2515 = vld [vmem:[%s6 + $0x14] sm:$0xf]
        %v2516 = vld [vmem:[%s6 + $0x18] sm:$0xf]
        %v2517 = vld [vmem:[%s6 + $0x1c] sm:$0xf]
        %v2518 = vld [vmem:[%s6 + $0x20] sm:$0xf]
        %v2519 = vld [vmem:[%s6 + $0x24] sm:$0xf]
        %v2520 = vld [vmem:[%s6 + $0x28] sm:$0xf]
        %v2521 = vld [vmem:[%s6 + $0x2c] sm:$0xf]
        %v2522 = vld [vmem:[%s6 + $0x30] sm:$0xf]
        %v2523 = vld [vmem:[%s6 + $0x34] sm:$0xf]
        %v2524 = vld [vmem:[%s6 + $0x38] sm:$0xf]
        %v2525 = vld [vmem:[%s6 + $0x3c] sm:$0xf]
        %v2526 = vld [vmem:[%s6 + $0x40] sm:$0xf]
        %v2527 = vld [vmem:[%s6 + $0x44] sm:$0x3]
        %s2528 = scalar_lea.vmem [#allocation4], 1
        %v2529 = vld [vmem:[%s2528] ss:$8 sm:$0x3]
        %s2530 = scalar_lea.vmem [#allocation4], 33
        %v2531 = vld [vmem:[%s2530] ss:$8 sm:$0x3]
        %s2532 = scalar_lea.vmem [#allocation4], 65
        %v2533 = vld [vmem:[%s2532] ss:$8 sm:$0x3]
        %s2534 = scalar_lea.vmem [#allocation4], 97
        %v2535 = vld [vmem:[%s2534] ss:$8 sm:$0x3]
        %s2536 = scalar_lea.vmem [#allocation4], 129
        %v2537 = vld [vmem:[%s2536] ss:$8 sm:$0x3]
        %s2538 = scalar_lea.vmem [#allocation4], 161
        %v2539 = vld [vmem:[%s2538] ss:$8 sm:$0x3]
        %s2540 = scalar_lea.vmem [#allocation4], 193
        %v2541 = vld [vmem:[%s2540] ss:$8 sm:$0x3]
        %s2542 = scalar_lea.vmem [#allocation4], 225
        %v2543 = vld [vmem:[%s2542] ss:$8 sm:$0x3]
        %v2552 = vlaneseq
        %v2553 = vshrl.u32 %v2552, 7
        %v2554 = vsub.s32 0, %v2553
        %v2555 = vrot.slane %v2529, %v2554
        %v2556 = vlaneseq
        %v2557 = vshrl.u32 %v2556, 7
        %v2558 = vsub.s32 1, %v2557
        %v2559 = vrot.slane %v2529, %v2558
        %v2560 = vlaneseq
        %v2561 = vshrl.u32 %v2560, 7
        %v2562 = vsub.s32 0, %v2561
        %v2563 = vrot.slane %v2531, %v2562
        %v2564 = vlaneseq
        %v2565 = vshrl.u32 %v2564, 7
        %v2566 = vsub.s32 1, %v2565
        %v2567 = vrot.slane %v2531, %v2566
        %v2568 = vlaneseq
        %v2569 = vshrl.u32 %v2568, 7
        %v2570 = vsub.s32 0, %v2569
        %v2571 = vrot.slane %v2533, %v2570
        %v2572 = vlaneseq
        %v2573 = vshrl.u32 %v2572, 7
        %v2574 = vsub.s32 1, %v2573
        %v2575 = vrot.slane %v2533, %v2574
        %v2576 = vlaneseq
        %v2577 = vshrl.u32 %v2576, 7
        %v2578 = vsub.s32 0, %v2577
        %v2579 = vrot.slane %v2535, %v2578
        %v2580 = vlaneseq
        %v2581 = vshrl.u32 %v2580, 7
        %v2582 = vsub.s32 1, %v2581
        %v2583 = vrot.slane %v2535, %v2582
        %v2584 = vlaneseq
        %v2585 = vshrl.u32 %v2584, 7
        %v2586 = vsub.s32 0, %v2585
        %v2587 = vrot.slane %v2537, %v2586
        %v2588 = vlaneseq
        %v2589 = vshrl.u32 %v2588, 7
        %v2590 = vsub.s32 1, %v2589
        %v2591 = vrot.slane %v2537, %v2590
        %v2592 = vlaneseq
        %v2593 = vshrl.u32 %v2592, 7
        %v2594 = vsub.s32 0, %v2593
        %v2595 = vrot.slane %v2539, %v2594
        %v2596 = vlaneseq
        %v2597 = vshrl.u32 %v2596, 7
        %v2598 = vsub.s32 1, %v2597
        %v2599 = vrot.slane %v2539, %v2598
        %v2600 = vlaneseq
        %v2601 = vshrl.u32 %v2600, 7
        %v2602 = vsub.s32 0, %v2601
        %v2603 = vrot.slane %v2541, %v2602
        %v2604 = vlaneseq
        %v2605 = vshrl.u32 %v2604, 7
        %v2606 = vsub.s32 1, %v2605
        %v2607 = vrot.slane %v2541, %v2606
        %v2608 = vlaneseq
        %v2609 = vshrl.u32 %v2608, 7
        %v2610 = vsub.s32 0, %v2609
        %v2611 = vrot.slane %v2543, %v2610
        %v2612 = vlaneseq
        %v2613 = vshrl.u32 %v2612, 7
        %v2614 = vsub.s32 1, %v2613
        %v2615 = vrot.slane %v2543, %v2614
        %v2632 = vpack.c.bf16 %v2555, %v2555
        %v2633 = vpack.c.bf16 %v2559, %v2559
        %v2634 = vpack.c.bf16 %v2563, %v2563
        %v2635 = vpack.c.bf16 %v2567, %v2567
        %v2636 = vpack.c.bf16 %v2571, %v2571
        %v2637 = vpack.c.bf16 %v2575, %v2575
        %v2638 = vpack.c.bf16 %v2579, %v2579
        %v2639 = vpack.c.bf16 %v2583, %v2583
        %v2640 = vpack.c.bf16 %v2587, %v2587
        %v2641 = vpack.c.bf16 %v2591, %v2591
        %v2642 = vpack.c.bf16 %v2595, %v2595
        %v2643 = vpack.c.bf16 %v2599, %v2599
        %v2644 = vpack.c.bf16 %v2603, %v2603
        %v2645 = vpack.c.bf16 %v2607, %v2607
        %v2646 = vpack.c.bf16 %v2611, %v2611
        %v2647 = vpack.c.bf16 %v2615, %v2615
        %s2648 = scalar_lea.vmem %s6, 72
        %v2649 = vld [vmem:[%s2648] sm:$0xf]
        %v2650 = vld [vmem:[%s2648 + $0x4] sm:$0xf]
        %v2651 = vld [vmem:[%s2648 + $0x8] sm:$0xf]
        %v2652 = vld [vmem:[%s2648 + $0xc] sm:$0xf]
        %v2653 = vld [vmem:[%s2648 + $0x10] sm:$0xf]
        %v2654 = vld [vmem:[%s2648 + $0x14] sm:$0xf]
        %v2655 = vld [vmem:[%s2648 + $0x18] sm:$0xf]
        %v2656 = vld [vmem:[%s2648 + $0x1c] sm:$0xf]
        %v2657 = vld [vmem:[%s2648 + $0x20] sm:$0xf]
        %v2658 = vld [vmem:[%s2648 + $0x24] sm:$0xf]
        %v2659 = vld [vmem:[%s2648 + $0x28] sm:$0xf]
        %v2660 = vld [vmem:[%s2648 + $0x2c] sm:$0xf]
        %v2661 = vld [vmem:[%s2648 + $0x30] sm:$0xf]
        %v2662 = vld [vmem:[%s2648 + $0x34] sm:$0xf]
        %v2663 = vld [vmem:[%s2648 + $0x38] sm:$0xf]
        %v2664 = vld [vmem:[%s2648 + $0x3c] sm:$0xf]
        %v2665 = vld [vmem:[%s2648 + $0x40] sm:$0xf]
        %v2666 = vld [vmem:[%s2648 + $0x44] sm:$0x3]
        %v2683 = vunpack.c.l.b16 %v2632
        %v2684 = vunpack.c.l.b16 %v2633
        %v2685 = vunpack.c.l.b16 %v2634
        %v2686 = vunpack.c.l.b16 %v2635
        %v2687 = vunpack.c.l.b16 %v2636
        %v2688 = vunpack.c.l.b16 %v2637
        %v2689 = vunpack.c.l.b16 %v2638
        %v2690 = vunpack.c.l.b16 %v2639
        %v2691 = vunpack.c.l.b16 %v2640
        %v2692 = vunpack.c.l.b16 %v2641
        %v2693 = vunpack.c.l.b16 %v2642
        %v2694 = vunpack.c.l.b16 %v2643
        %v2695 = vunpack.c.l.b16 %v2644
        %v2696 = vunpack.c.l.b16 %v2645
        %v2697 = vunpack.c.l.b16 %v2646
        %v2698 = vunpack.c.l.b16 %v2647
        %v2699 = vrot.slane %v2685, 7
        %vm2700 = vcmask 1041409
        %v2701 = vsel %vm2700, %v2699, %v2683
        %v2702 = vrot.slane %v2687, 6
        %vm2703 = vcmask 1042434
        %v2704 = vsel %vm2703, %v2702, %v2701
        %v2705 = vrot.slane %v2689, 5
        %vm2706 = vcmask 1043459
        %v2707 = vsel %vm2706, %v2705, %v2704
        %v2708 = vrot.slane %v2691, 4
        %vm2709 = vcmask 1044484
        %v2710 = vsel %vm2709, %v2708, %v2707
        %v2711 = vrot.slane %v2693, 3
        %vm2712 = vcmask 1045509
        %v2713 = vsel %vm2712, %v2711, %v2710
        %v2714 = vrot.slane %v2695, 2
        %vm2715 = vcmask 1046534
        %v2716 = vsel %vm2715, %v2714, %v2713
        %v2717 = vrot.slane %v2697, 1
        %vm2718 = vcmask 1047559
        %v2719 = vsel %vm2718, %v2717, %v2716
        %v2720 = vrot.slane %v2686, 7
        %v2721 = vsel %vm2700, %v2720, %v2684
        %v2722 = vrot.slane %v2688, 6
        %v2723 = vsel %vm2703, %v2722, %v2721
        %v2724 = vrot.slane %v2690, 5
        %v2725 = vsel %vm2706, %v2724, %v2723
        %v2726 = vrot.slane %v2692, 4
        %v2727 = vsel %vm2709, %v2726, %v2725
        %v2728 = vrot.slane %v2694, 3
        %v2729 = vsel %vm2712, %v2728, %v2727
        %v2730 = vrot.slane %v2696, 2
        %v2731 = vsel %vm2715, %v2730, %v2729
        %v2732 = vrot.slane %v2698, 1
        %v2733 = vsel %vm2718, %v2732, %v2731
        %v2734 = vpack.c.b16 %v2719, %v2719
        %v2735 = vpack.c.b16 %v2733, %v2733
        %v2755 = vunpack.c.l.b16 %v2649
        %v2756 = vunpack.c.l.b16 %v2650
        %v2757 = vunpack.c.l.b16 %v2651
        %v2758 = vunpack.c.l.b16 %v2652
        %v2759 = vunpack.c.l.b16 %v2653
        %v2760 = vunpack.c.l.b16 %v2654
        %v2761 = vunpack.c.l.b16 %v2655
        %v2762 = vunpack.c.l.b16 %v2656
        %v2763 = vunpack.c.l.b16 %v2657
        %v2764 = vunpack.c.l.b16 %v2658
        %v2765 = vunpack.c.l.b16 %v2659
        %v2766 = vunpack.c.l.b16 %v2660
        %v2767 = vunpack.c.l.b16 %v2661
        %v2768 = vunpack.c.l.b16 %v2662
        %v2769 = vunpack.c.l.b16 %v2663
        %v2770 = vunpack.c.l.b16 %v2664
        %v2771 = vunpack.c.l.b16 %v2665
        %v2772 = vunpack.c.l.b16 %v2666
        %v2773 = vpack.c.b16 %v2756, %v2755
        %v2774 = vpack.c.b16 %v2758, %v2757
        %v2775 = vpack.c.b16 %v2760, %v2759
        %v2776 = vpack.c.b16 %v2762, %v2761
        %v2777 = vpack.c.b16 %v2764, %v2763
        %v2778 = vpack.c.b16 %v2766, %v2765
        %v2779 = vpack.c.b16 %v2768, %v2767
        %v2780 = vpack.c.b16 %v2770, %v2769
        %v2781 = vpack.c.b16 %v2772, %v2771
        %vm2790 = vcmask 97280
        %v2792 = vsel %vm2790, %v2735, 0
        %v2795 = vsel %vm1771, %v2781, 0
        %2797 = vmatprep.subr.bf16.mxu0 0
        %2798 = vmatpush1.bf16.msra.mxu0 %v2773
        %2799 = vmatprep.subr.bf16.mxu0 0
        %2800 = vmatpush1.bf16.msra.mxu0 %v2774
        %2801 = vmatprep.subr.bf16.mxu0 0
        %2802 = vmatpush1.bf16.msra.mxu0 %v2775
        %2803 = vmatprep.subr.bf16.mxu0 0
        %2804 = vmatpush1.bf16.msra.mxu0 %v2776
        %2805 = vmatprep.subr.bf16.mxu0 0
        %2806 = vmatpush1.bf16.msra.mxu0 %v2777
        %2807 = vmatprep.subr.bf16.mxu0 0
        %2808 = vmatpush1.bf16.msra.mxu0 %v2778
        %2809 = vmatprep.subr.bf16.mxu0 0
        %2810 = vmatpush1.bf16.msra.mxu0 %v2779
        %2811 = vmatprep.subr.bf16.mxu0 0
        %2812 = vmatpush1.bf16.msra.mxu0 %v2780
        %2813 = vmatprep.subr.bf16.mxu0 0
        %2814 = vmatpush1.bf16.msra.mxu0 %v2795
        %2815 = vmatprep.subr.bf16.mxu0 0
        %2816 = vmatpush1.bf16.msra.mxu0 0
        %2817 = vmatprep.subr.bf16.mxu0 0
        %2818 = vmatpush1.bf16.msra.mxu0 0
        %2819 = vmatprep.subr.bf16.mxu0 0
        %2820 = vmatpush1.bf16.msra.mxu0 0
        %2821 = vmatprep.subr.bf16.mxu0 0
        %2822 = vmatpush1.bf16.msra.mxu0 0
        %2823 = vmatprep.subr.bf16.mxu0 0
        %2824 = vmatpush1.bf16.msra.mxu0 0
        %2825 = vmatprep.subr.bf16.mxu0 0
        %2826 = vmatpush1.bf16.msra.mxu0 0
        %2827 = vmatprep.subr.bf16.mxu0 0
        %2828 = vmatpush1.bf16.msra.mxu0 0
        %2829 = vmatprep.mubr.bf16.mxu0 %v2792
        %2830 = vmatmul.mubr.bf16.gmra.mrb[0].mxu0 %v2734
        %v2831 = vpop.f32.mrb[0].mxu0
        %v2832 = vadd.f32 0.0, %v2831
        %v2833 = vpop.f32.mrb[0].mxu0
        %v2834 = vpop.f32.mrb[0].mxu0
        %v2835 = vpop.f32.mrb[0].mxu0
        %2836 = vdwg.mxu0
        %v2853 = vunpack.c.l.b16 %v2494
        %v2854 = vunpack.c.l.b16 %v2495
        %v2855 = vunpack.c.l.b16 %v2496
        %v2856 = vunpack.c.l.b16 %v2497
        %v2857 = vunpack.c.l.b16 %v2498
        %v2858 = vunpack.c.l.b16 %v2499
        %v2859 = vunpack.c.l.b16 %v2500
        %v2860 = vunpack.c.l.b16 %v2501
        %v2861 = vunpack.c.l.b16 %v2502
        %v2862 = vunpack.c.l.b16 %v2503
        %v2863 = vunpack.c.l.b16 %v2504
        %v2864 = vunpack.c.l.b16 %v2505
        %v2865 = vunpack.c.l.b16 %v2506
        %v2866 = vunpack.c.l.b16 %v2507
        %v2867 = vunpack.c.l.b16 %v2508
        %v2868 = vunpack.c.l.b16 %v2509
        %v2869 = vrot.slane %v2855, 7
        %v2870 = vsel %vm2700, %v2869, %v2853
        %v2871 = vrot.slane %v2857, 6
        %v2872 = vsel %vm2703, %v2871, %v2870
        %v2873 = vrot.slane %v2859, 5
        %v2874 = vsel %vm2706, %v2873, %v2872
        %v2875 = vrot.slane %v2861, 4
        %v2876 = vsel %vm2709, %v2875, %v2874
        %v2877 = vrot.slane %v2863, 3
        %v2878 = vsel %vm2712, %v2877, %v2876
        %v2879 = vrot.slane %v2865, 2
        %v2880 = vsel %vm2715, %v2879, %v2878
        %v2881 = vrot.slane %v2867, 1
        %v2882 = vsel %vm2718, %v2881, %v2880
        %v2883 = vrot.slane %v2856, 7
        %v2884 = vsel %vm2700, %v2883, %v2854
        %v2885 = vrot.slane %v2858, 6
        %v2886 = vsel %vm2703, %v2885, %v2884
        %v2887 = vrot.slane %v2860, 5
        %v2888 = vsel %vm2706, %v2887, %v2886
        %v2889 = vrot.slane %v2862, 4
        %v2890 = vsel %vm2709, %v2889, %v2888
        %v2891 = vrot.slane %v2864, 3
        %v2892 = vsel %vm2712, %v2891, %v2890
        %v2893 = vrot.slane %v2866, 2
        %v2894 = vsel %vm2715, %v2893, %v2892
        %v2895 = vrot.slane %v2868, 1
        %v2896 = vsel %vm2718, %v2895, %v2894
        %v2897 = vpack.c.b16 %v2882, %v2882
        %v2898 = vpack.c.b16 %v2896, %v2896
        %v2918 = vunpack.c.l.b16 %v2510
        %v2919 = vunpack.c.l.b16 %v2511
        %v2920 = vunpack.c.l.b16 %v2512
        %v2921 = vunpack.c.l.b16 %v2513
        %v2922 = vunpack.c.l.b16 %v2514
        %v2923 = vunpack.c.l.b16 %v2515
        %v2924 = vunpack.c.l.b16 %v2516
        %v2925 = vunpack.c.l.b16 %v2517
        %v2926 = vunpack.c.l.b16 %v2518
        %v2927 = vunpack.c.l.b16 %v2519
        %v2928 = vunpack.c.l.b16 %v2520
        %v2929 = vunpack.c.l.b16 %v2521
        %v2930 = vunpack.c.l.b16 %v2522
        %v2931 = vunpack.c.l.b16 %v2523
        %v2932 = vunpack.c.l.b16 %v2524
        %v2933 = vunpack.c.l.b16 %v2525
        %v2934 = vunpack.c.l.b16 %v2526
        %v2935 = vunpack.c.l.b16 %v2527
        %v2936 = vpack.c.b16 %v2919, %v2918
        %v2937 = vpack.c.b16 %v2921, %v2920
        %v2938 = vpack.c.b16 %v2923, %v2922
        %v2939 = vpack.c.b16 %v2925, %v2924
        %v2940 = vpack.c.b16 %v2927, %v2926
        %v2941 = vpack.c.b16 %v2929, %v2928
        %v2942 = vpack.c.b16 %v2931, %v2930
        %v2943 = vpack.c.b16 %v2933, %v2932
        %v2944 = vpack.c.b16 %v2935, %v2934
        %v2954 = vsel %vm2790, %v2898, 0
        %v2957 = vsel %vm1771, %v2944, 0
        %2959 = vmatprep.subr.bf16.mxu0 0
        %2960 = vmatpush1.bf16.msra.mxu0 %v2936
        %2961 = vmatprep.subr.bf16.mxu0 0
        %2962 = vmatpush1.bf16.msra.mxu0 %v2937
        %2963 = vmatprep.subr.bf16.mxu0 0
        %2964 = vmatpush1.bf16.msra.mxu0 %v2938
        %2965 = vmatprep.subr.bf16.mxu0 0
        %2966 = vmatpush1.bf16.msra.mxu0 %v2939
        %2967 = vmatprep.subr.bf16.mxu0 0
        %2968 = vmatpush1.bf16.msra.mxu0 %v2940
        %2969 = vmatprep.subr.bf16.mxu0 0
        %2970 = vmatpush1.bf16.msra.mxu0 %v2941
        %2971 = vmatprep.subr.bf16.mxu0 0
        %2972 = vmatpush1.bf16.msra.mxu0 %v2942
        %2973 = vmatprep.subr.bf16.mxu0 0
        %2974 = vmatpush1.bf16.msra.mxu0 %v2943
        %2975 = vmatprep.subr.bf16.mxu0 0
        %2976 = vmatpush1.bf16.msra.mxu0 %v2957
        %2977 = vmatprep.subr.bf16.mxu0 0
        %2978 = vmatpush1.bf16.msra.mxu0 0
        %2979 = vmatprep.subr.bf16.mxu0 0
        %2980 = vmatpush1.bf16.msra.mxu0 0
        %2981 = vmatprep.subr.bf16.mxu0 0
        %2982 = vmatpush1.bf16.msra.mxu0 0
        %2983 = vmatprep.subr.bf16.mxu0 0
        %2984 = vmatpush1.bf16.msra.mxu0 0
        %2985 = vmatprep.subr.bf16.mxu0 0
        %2986 = vmatpush1.bf16.msra.mxu0 0
        %2987 = vmatprep.subr.bf16.mxu0 0
        %2988 = vmatpush1.bf16.msra.mxu0 0
        %2989 = vmatprep.subr.bf16.mxu0 0
        %2990 = vmatpush1.bf16.msra.mxu0 0
        %2991 = vmatprep.mubr.bf16.mxu0 %v2954
        %2992 = vmatmul.mubr.bf16.gmra.mrb[0].mxu0 %v2897
        %v2993 = vpop.f32.mrb[0].mxu0
        %v2994 = vadd.f32 %v2832, %v2993
        %v2995 = vpop.f32.mrb[0].mxu0
        %v2996 = vpop.f32.mrb[0].mxu0
        %v2997 = vpop.f32.mrb[0].mxu0
        %2998 = vdwg.mxu0
        %s2999 = scalar_lea.vmem [#allocation4], 2
        %v3000 = vld [vmem:[%s2999] ss:$8 sm:$0x3]
        %s3001 = scalar_lea.vmem [#allocation4], 34
        %v3002 = vld [vmem:[%s3001] ss:$8 sm:$0x3]
        %s3003 = scalar_lea.vmem [#allocation4], 66
        %v3004 = vld [vmem:[%s3003] ss:$8 sm:$0x3]
        %s3005 = scalar_lea.vmem [#allocation4], 98
        %v3006 = vld [vmem:[%s3005] ss:$8 sm:$0x3]
        %s3007 = scalar_lea.vmem [#allocation4], 130
        %v3008 = vld [vmem:[%s3007] ss:$8 sm:$0x3]
        %s3009 = scalar_lea.vmem [#allocation4], 162
        %v3010 = vld [vmem:[%s3009] ss:$8 sm:$0x3]
        %s3011 = scalar_lea.vmem [#allocation4], 194
        %v3012 = vld [vmem:[%s3011] ss:$8 sm:$0x3]
        %s3013 = scalar_lea.vmem [#allocation4], 226
        %v3014 = vld [vmem:[%s3013] ss:$8 sm:$0x3]
        %v3023 = vlaneseq
        %v3024 = vshrl.u32 %v3023, 7
        %v3025 = vsub.s32 0, %v3024
        %v3026 = vrot.slane %v3000, %v3025
        %v3027 = vlaneseq
        %v3028 = vshrl.u32 %v3027, 7
        %v3029 = vsub.s32 1, %v3028
        %v3030 = vrot.slane %v3000, %v3029
        %v3031 = vlaneseq
        %v3032 = vshrl.u32 %v3031, 7
        %v3033 = vsub.s32 0, %v3032
        %v3034 = vrot.slane %v3002, %v3033
        %v3035 = vlaneseq
        %v3036 = vshrl.u32 %v3035, 7
        %v3037 = vsub.s32 1, %v3036
        %v3038 = vrot.slane %v3002, %v3037
        %v3039 = vlaneseq
        %v3040 = vshrl.u32 %v3039, 7
        %v3041 = vsub.s32 0, %v3040
        %v3042 = vrot.slane %v3004, %v3041
        %v3043 = vlaneseq
        %v3044 = vshrl.u32 %v3043, 7
        %v3045 = vsub.s32 1, %v3044
        %v3046 = vrot.slane %v3004, %v3045
        %v3047 = vlaneseq
        %v3048 = vshrl.u32 %v3047, 7
        %v3049 = vsub.s32 0, %v3048
        %v3050 = vrot.slane %v3006, %v3049
        %v3051 = vlaneseq
        %v3052 = vshrl.u32 %v3051, 7
        %v3053 = vsub.s32 1, %v3052
        %v3054 = vrot.slane %v3006, %v3053
        %v3055 = vlaneseq
        %v3056 = vshrl.u32 %v3055, 7
        %v3057 = vsub.s32 0, %v3056
        %v3058 = vrot.slane %v3008, %v3057
        %v3059 = vlaneseq
        %v3060 = vshrl.u32 %v3059, 7
        %v3061 = vsub.s32 1, %v3060
        %v3062 = vrot.slane %v3008, %v3061
        %v3063 = vlaneseq
        %v3064 = vshrl.u32 %v3063, 7
        %v3065 = vsub.s32 0, %v3064
        %v3066 = vrot.slane %v3010, %v3065
        %v3067 = vlaneseq
        %v3068 = vshrl.u32 %v3067, 7
        %v3069 = vsub.s32 1, %v3068
        %v3070 = vrot.slane %v3010, %v3069
        %v3071 = vlaneseq
        %v3072 = vshrl.u32 %v3071, 7
        %v3073 = vsub.s32 0, %v3072
        %v3074 = vrot.slane %v3012, %v3073
        %v3075 = vlaneseq
        %v3076 = vshrl.u32 %v3075, 7
        %v3077 = vsub.s32 1, %v3076
        %v3078 = vrot.slane %v3012, %v3077
        %v3079 = vlaneseq
        %v3080 = vshrl.u32 %v3079, 7
        %v3081 = vsub.s32 0, %v3080
        %v3082 = vrot.slane %v3014, %v3081
        %v3083 = vlaneseq
        %v3084 = vshrl.u32 %v3083, 7
        %v3085 = vsub.s32 1, %v3084
        %v3086 = vrot.slane %v3014, %v3085
        %v3103 = vpack.c.bf16 %v3026, %v3026
        %v3104 = vpack.c.bf16 %v3030, %v3030
        %v3105 = vpack.c.bf16 %v3034, %v3034
        %v3106 = vpack.c.bf16 %v3038, %v3038
        %v3107 = vpack.c.bf16 %v3042, %v3042
        %v3108 = vpack.c.bf16 %v3046, %v3046
        %v3109 = vpack.c.bf16 %v3050, %v3050
        %v3110 = vpack.c.bf16 %v3054, %v3054
        %v3111 = vpack.c.bf16 %v3058, %v3058
        %v3112 = vpack.c.bf16 %v3062, %v3062
        %v3113 = vpack.c.bf16 %v3066, %v3066
        %v3114 = vpack.c.bf16 %v3070, %v3070
        %v3115 = vpack.c.bf16 %v3074, %v3074
        %v3116 = vpack.c.bf16 %v3078, %v3078
        %v3117 = vpack.c.bf16 %v3082, %v3082
        %v3118 = vpack.c.bf16 %v3086, %v3086
        %s3119 = scalar_lea.vmem %s6, 144
        %v3120 = vld [vmem:[%s3119] sm:$0xf]
        %v3121 = vld [vmem:[%s3119 + $0x4] sm:$0xf]
        %v3122 = vld [vmem:[%s3119 + $0x8] sm:$0xf]
        %v3123 = vld [vmem:[%s3119 + $0xc] sm:$0xf]
        %v3124 = vld [vmem:[%s3119 + $0x10] sm:$0xf]
        %v3125 = vld [vmem:[%s3119 + $0x14] sm:$0xf]
        %v3126 = vld [vmem:[%s3119 + $0x18] sm:$0xf]
        %v3127 = vld [vmem:[%s3119 + $0x1c] sm:$0xf]
        %v3128 = vld [vmem:[%s3119 + $0x20] sm:$0xf]
        %v3129 = vld [vmem:[%s3119 + $0x24] sm:$0xf]
        %v3130 = vld [vmem:[%s3119 + $0x28] sm:$0xf]
        %v3131 = vld [vmem:[%s3119 + $0x2c] sm:$0xf]
        %v3132 = vld [vmem:[%s3119 + $0x30] sm:$0xf]
        %v3133 = vld [vmem:[%s3119 + $0x34] sm:$0xf]
        %v3134 = vld [vmem:[%s3119 + $0x38] sm:$0xf]
        %v3135 = vld [vmem:[%s3119 + $0x3c] sm:$0xf]
        %v3136 = vld [vmem:[%s3119 + $0x40] sm:$0xf]
        %v3137 = vld [vmem:[%s3119 + $0x44] sm:$0x3]
        %v3154 = vunpack.c.l.b16 %v3103
        %v3155 = vunpack.c.l.b16 %v3104
        %v3156 = vunpack.c.l.b16 %v3105
        %v3157 = vunpack.c.l.b16 %v3106
        %v3158 = vunpack.c.l.b16 %v3107
        %v3159 = vunpack.c.l.b16 %v3108
        %v3160 = vunpack.c.l.b16 %v3109
        %v3161 = vunpack.c.l.b16 %v3110
        %v3162 = vunpack.c.l.b16 %v3111
        %v3163 = vunpack.c.l.b16 %v3112
        %v3164 = vunpack.c.l.b16 %v3113
        %v3165 = vunpack.c.l.b16 %v3114
        %v3166 = vunpack.c.l.b16 %v3115
        %v3167 = vunpack.c.l.b16 %v3116
        %v3168 = vunpack.c.l.b16 %v3117
        %v3169 = vunpack.c.l.b16 %v3118
        %v3170 = vrot.slane %v3156, 7
        %v3171 = vsel %vm2700, %v3170, %v3154
        %v3172 = vrot.slane %v3158, 6
        %v3173 = vsel %vm2703, %v3172, %v3171
        %v3174 = vrot.slane %v3160, 5
        %v3175 = vsel %vm2706, %v3174, %v3173
        %v3176 = vrot.slane %v3162, 4
        %v3177 = vsel %vm2709, %v3176, %v3175
        %v3178 = vrot.slane %v3164, 3
        %v3179 = vsel %vm2712, %v3178, %v3177
        %v3180 = vrot.slane %v3166, 2
        %v3181 = vsel %vm2715, %v3180, %v3179
        %v3182 = vrot.slane %v3168, 1
        %v3183 = vsel %vm2718, %v3182, %v3181
        %v3184 = vrot.slane %v3157, 7
        %v3185 = vsel %vm2700, %v3184, %v3155
        %v3186 = vrot.slane %v3159, 6
        %v3187 = vsel %vm2703, %v3186, %v3185
        %v3188 = vrot.slane %v3161, 5
        %v3189 = vsel %vm2706, %v3188, %v3187
        %v3190 = vrot.slane %v3163, 4
        %v3191 = vsel %vm2709, %v3190, %v3189
        %v3192 = vrot.slane %v3165, 3
        %v3193 = vsel %vm2712, %v3192, %v3191
        %v3194 = vrot.slane %v3167, 2
        %v3195 = vsel %vm2715, %v3194, %v3193
        %v3196 = vrot.slane %v3169, 1
        %v3197 = vsel %vm2718, %v3196, %v3195
        %v3198 = vpack.c.b16 %v3183, %v3183
        %v3199 = vpack.c.b16 %v3197, %v3197
        %v3219 = vunpack.c.l.b16 %v3120
        %v3220 = vunpack.c.l.b16 %v3121
        %v3221 = vunpack.c.l.b16 %v3122
        %v3222 = vunpack.c.l.b16 %v3123
        %v3223 = vunpack.c.l.b16 %v3124
        %v3224 = vunpack.c.l.b16 %v3125
        %v3225 = vunpack.c.l.b16 %v3126
        %v3226 = vunpack.c.l.b16 %v3127
        %v3227 = vunpack.c.l.b16 %v3128
        %v3228 = vunpack.c.l.b16 %v3129
        %v3229 = vunpack.c.l.b16 %v3130
        %v3230 = vunpack.c.l.b16 %v3131
        %v3231 = vunpack.c.l.b16 %v3132
        %v3232 = vunpack.c.l.b16 %v3133
        %v3233 = vunpack.c.l.b16 %v3134
        %v3234 = vunpack.c.l.b16 %v3135
        %v3235 = vunpack.c.l.b16 %v3136
        %v3236 = vunpack.c.l.b16 %v3137
        %v3237 = vpack.c.b16 %v3220, %v3219
        %v3238 = vpack.c.b16 %v3222, %v3221
        %v3239 = vpack.c.b16 %v3224, %v3223
        %v3240 = vpack.c.b16 %v3226, %v3225
        %v3241 = vpack.c.b16 %v3228, %v3227
        %v3242 = vpack.c.b16 %v3230, %v3229
        %v3243 = vpack.c.b16 %v3232, %v3231
        %v3244 = vpack.c.b16 %v3234, %v3233
        %v3245 = vpack.c.b16 %v3236, %v3235
        %v3255 = vsel %vm2790, %v3199, 0
        %v3258 = vsel %vm1771, %v3245, 0
        %3260 = vmatprep.subr.bf16.mxu0 0
        %3261 = vmatpush1.bf16.msra.mxu0 %v3237
        %3262 = vmatprep.subr.bf16.mxu0 0
        %3263 = vmatpush1.bf16.msra.mxu0 %v3238
        %3264 = vmatprep.subr.bf16.mxu0 0
        %3265 = vmatpush1.bf16.msra.mxu0 %v3239
        %3266 = vmatprep.subr.bf16.mxu0 0
        %3267 = vmatpush1.bf16.msra.mxu0 %v3240
        %3268 = vmatprep.subr.bf16.mxu0 0
        %3269 = vmatpush1.bf16.msra.mxu0 %v3241
        %3270 = vmatprep.subr.bf16.mxu0 0
        %3271 = vmatpush1.bf16.msra.mxu0 %v3242
        %3272 = vmatprep.subr.bf16.mxu0 0
        %3273 = vmatpush1.bf16.msra.mxu0 %v3243
        %3274 = vmatprep.subr.bf16.mxu0 0
        %3275 = vmatpush1.bf16.msra.mxu0 %v3244
        %3276 = vmatprep.subr.bf16.mxu0 0
        %3277 = vmatpush1.bf16.msra.mxu0 %v3258
        %3278 = vmatprep.subr.bf16.mxu0 0
        %3279 = vmatpush1.bf16.msra.mxu0 0
        %3280 = vmatprep.subr.bf16.mxu0 0
        %3281 = vmatpush1.bf16.msra.mxu0 0
        %3282 = vmatprep.subr.bf16.mxu0 0
        %3283 = vmatpush1.bf16.msra.mxu0 0
        %3284 = vmatprep.subr.bf16.mxu0 0
        %3285 = vmatpush1.bf16.msra.mxu0 0
        %3286 = vmatprep.subr.bf16.mxu0 0
        %3287 = vmatpush1.bf16.msra.mxu0 0
        %3288 = vmatprep.subr.bf16.mxu0 0
        %3289 = vmatpush1.bf16.msra.mxu0 0
        %3290 = vmatprep.subr.bf16.mxu0 0
        %3291 = vmatpush1.bf16.msra.mxu0 0
        %3292 = vmatprep.mubr.bf16.mxu0 %v3255
        %3293 = vmatmul.mubr.bf16.gmra.mrb[0].mxu0 %v3198
        %v3294 = vpop.f32.mrb[0].mxu0
        %v3295 = vadd.f32 0.0, %v3294
        %v3296 = vpop.f32.mrb[0].mxu0
        %v3297 = vpop.f32.mrb[0].mxu0
        %v3298 = vpop.f32.mrb[0].mxu0
        %3299 = vdwg.mxu0
        %v3300 = vadd.f32 %v2994, %v3295
        %s3301 = scalar_lea.vmem [#allocation4], 3
        %v3302 = vld [vmem:[%s3301] ss:$8 sm:$0x3]
        %s3303 = scalar_lea.vmem [#allocation4], 35
        %v3304 = vld [vmem:[%s3303] ss:$8 sm:$0x3]
        %s3305 = scalar_lea.vmem [#allocation4], 67
        %v3306 = vld [vmem:[%s3305] ss:$8 sm:$0x3]
        %s3307 = scalar_lea.vmem [#allocation4], 99
        %v3308 = vld [vmem:[%s3307] ss:$8 sm:$0x3]
        %s3309 = scalar_lea.vmem [#allocation4], 131
        %v3310 = vld [vmem:[%s3309] ss:$8 sm:$0x3]
        %s3311 = scalar_lea.vmem [#allocation4], 163
        %v3312 = vld [vmem:[%s3311] ss:$8 sm:$0x3]
        %s3313 = scalar_lea.vmem [#allocation4], 195
        %v3314 = vld [vmem:[%s3313] ss:$8 sm:$0x3]
        %s3315 = scalar_lea.vmem [#allocation4], 227
        %v3316 = vld [vmem:[%s3315] ss:$8 sm:$0x3]
        %v3325 = vlaneseq
        %v3326 = vshrl.u32 %v3325, 7
        %v3327 = vsub.s32 0, %v3326
        %v3328 = vrot.slane %v3302, %v3327
        %v3329 = vlaneseq
        %v3330 = vshrl.u32 %v3329, 7
        %v3331 = vsub.s32 1, %v3330
        %v3332 = vrot.slane %v3302, %v3331
        %v3333 = vlaneseq
        %v3334 = vshrl.u32 %v3333, 7
        %v3335 = vsub.s32 0, %v3334
        %v3336 = vrot.slane %v3304, %v3335
        %v3337 = vlaneseq
        %v3338 = vshrl.u32 %v3337, 7
        %v3339 = vsub.s32 1, %v3338
        %v3340 = vrot.slane %v3304, %v3339
        %v3341 = vlaneseq
        %v3342 = vshrl.u32 %v3341, 7
        %v3343 = vsub.s32 0, %v3342
        %v3344 = vrot.slane %v3306, %v3343
        %v3345 = vlaneseq
        %v3346 = vshrl.u32 %v3345, 7
        %v3347 = vsub.s32 1, %v3346
        %v3348 = vrot.slane %v3306, %v3347
        %v3349 = vlaneseq
        %v3350 = vshrl.u32 %v3349, 7
        %v3351 = vsub.s32 0, %v3350
        %v3352 = vrot.slane %v3308, %v3351
        %v3353 = vlaneseq
        %v3354 = vshrl.u32 %v3353, 7
        %v3355 = vsub.s32 1, %v3354
        %v3356 = vrot.slane %v3308, %v3355
        %v3357 = vlaneseq
        %v3358 = vshrl.u32 %v3357, 7
        %v3359 = vsub.s32 0, %v3358
        %v3360 = vrot.slane %v3310, %v3359
        %v3361 = vlaneseq
        %v3362 = vshrl.u32 %v3361, 7
        %v3363 = vsub.s32 1, %v3362
        %v3364 = vrot.slane %v3310, %v3363
        %v3365 = vlaneseq
        %v3366 = vshrl.u32 %v3365, 7
        %v3367 = vsub.s32 0, %v3366
        %v3368 = vrot.slane %v3312, %v3367
        %v3369 = vlaneseq
        %v3370 = vshrl.u32 %v3369, 7
        %v3371 = vsub.s32 1, %v3370
        %v3372 = vrot.slane %v3312, %v3371
        %v3373 = vlaneseq
        %v3374 = vshrl.u32 %v3373, 7
        %v3375 = vsub.s32 0, %v3374
        %v3376 = vrot.slane %v3314, %v3375
        %v3377 = vlaneseq
        %v3378 = vshrl.u32 %v3377, 7
        %v3379 = vsub.s32 1, %v3378
        %v3380 = vrot.slane %v3314, %v3379
        %v3381 = vlaneseq
        %v3382 = vshrl.u32 %v3381, 7
        %v3383 = vsub.s32 0, %v3382
        %v3384 = vrot.slane %v3316, %v3383
        %v3385 = vlaneseq
        %v3386 = vshrl.u32 %v3385, 7
        %v3387 = vsub.s32 1, %v3386
        %v3388 = vrot.slane %v3316, %v3387
        %v3405 = vpack.c.bf16 %v3328, %v3328
        %v3406 = vpack.c.bf16 %v3332, %v3332
        %v3407 = vpack.c.bf16 %v3336, %v3336
        %v3408 = vpack.c.bf16 %v3340, %v3340
        %v3409 = vpack.c.bf16 %v3344, %v3344
        %v3410 = vpack.c.bf16 %v3348, %v3348
        %v3411 = vpack.c.bf16 %v3352, %v3352
        %v3412 = vpack.c.bf16 %v3356, %v3356
        %v3413 = vpack.c.bf16 %v3360, %v3360
        %v3414 = vpack.c.bf16 %v3364, %v3364
        %v3415 = vpack.c.bf16 %v3368, %v3368
        %v3416 = vpack.c.bf16 %v3372, %v3372
        %v3417 = vpack.c.bf16 %v3376, %v3376
        %v3418 = vpack.c.bf16 %v3380, %v3380
        %v3419 = vpack.c.bf16 %v3384, %v3384
        %v3420 = vpack.c.bf16 %v3388, %v3388
        %s3421 = scalar_lea.vmem %s6, 216
        %v3422 = vld [vmem:[%s3421] sm:$0xf]
        %v3423 = vld [vmem:[%s3421 + $0x4] sm:$0xf]
        %v3424 = vld [vmem:[%s3421 + $0x8] sm:$0xf]
        %v3425 = vld [vmem:[%s3421 + $0xc] sm:$0xf]
        %v3426 = vld [vmem:[%s3421 + $0x10] sm:$0xf]
        %v3427 = vld [vmem:[%s3421 + $0x14] sm:$0xf]
        %v3428 = vld [vmem:[%s3421 + $0x18] sm:$0xf]
        %v3429 = vld [vmem:[%s3421 + $0x1c] sm:$0xf]
        %v3430 = vld [vmem:[%s3421 + $0x20] sm:$0xf]
        %v3431 = vld [vmem:[%s3421 + $0x24] sm:$0xf]
        %v3432 = vld [vmem:[%s3421 + $0x28] sm:$0xf]
        %v3433 = vld [vmem:[%s3421 + $0x2c] sm:$0xf]
        %v3434 = vld [vmem:[%s3421 + $0x30] sm:$0xf]
        %v3435 = vld [vmem:[%s3421 + $0x34] sm:$0xf]
        %v3436 = vld [vmem:[%s3421 + $0x38] sm:$0xf]
        %v3437 = vld [vmem:[%s3421 + $0x3c] sm:$0xf]
        %v3438 = vld [vmem:[%s3421 + $0x40] sm:$0xf]
        %v3439 = vld [vmem:[%s3421 + $0x44] sm:$0x3]
        %v3456 = vunpack.c.l.b16 %v3405
        %v3457 = vunpack.c.l.b16 %v3406
        %v3458 = vunpack.c.l.b16 %v3407
        %v3459 = vunpack.c.l.b16 %v3408
        %v3460 = vunpack.c.l.b16 %v3409
        %v3461 = vunpack.c.l.b16 %v3410
        %v3462 = vunpack.c.l.b16 %v3411
        %v3463 = vunpack.c.l.b16 %v3412
        %v3464 = vunpack.c.l.b16 %v3413
        %v3465 = vunpack.c.l.b16 %v3414
        %v3466 = vunpack.c.l.b16 %v3415
        %v3467 = vunpack.c.l.b16 %v3416
        %v3468 = vunpack.c.l.b16 %v3417
        %v3469 = vunpack.c.l.b16 %v3418
        %v3470 = vunpack.c.l.b16 %v3419
        %v3471 = vunpack.c.l.b16 %v3420
        %v3472 = vrot.slane %v3458, 7
        %v3473 = vsel %vm2700, %v3472, %v3456
        %v3474 = vrot.slane %v3460, 6
        %v3475 = vsel %vm2703, %v3474, %v3473
        %v3476 = vrot.slane %v3462, 5
        %v3477 = vsel %vm2706, %v3476, %v3475
        %v3478 = vrot.slane %v3464, 4
        %v3479 = vsel %vm2709, %v3478, %v3477
        %v3480 = vrot.slane %v3466, 3
        %v3481 = vsel %vm2712, %v3480, %v3479
        %v3482 = vrot.slane %v3468, 2
        %v3483 = vsel %vm2715, %v3482, %v3481
        %v3484 = vrot.slane %v3470, 1
        %v3485 = vsel %vm2718, %v3484, %v3483
        %v3486 = vrot.slane %v3459, 7
        %v3487 = vsel %vm2700, %v3486, %v3457
        %v3488 = vrot.slane %v3461, 6
        %v3489 = vsel %vm2703, %v3488, %v3487
        %v3490 = vrot.slane %v3463, 5
        %v3491 = vsel %vm2706, %v3490, %v3489
        %v3492 = vrot.slane %v3465, 4
        %v3493 = vsel %vm2709, %v3492, %v3491
        %v3494 = vrot.slane %v3467, 3
        %v3495 = vsel %vm2712, %v3494, %v3493
        %v3496 = vrot.slane %v3469, 2
        %v3497 = vsel %vm2715, %v3496, %v3495
        %v3498 = vrot.slane %v3471, 1
        %v3499 = vsel %vm2718, %v3498, %v3497
        %v3500 = vpack.c.b16 %v3485, %v3485
        %v3501 = vpack.c.b16 %v3499, %v3499
        %v3521 = vunpack.c.l.b16 %v3422
        %v3522 = vunpack.c.l.b16 %v3423
        %v3523 = vunpack.c.l.b16 %v3424
        %v3524 = vunpack.c.l.b16 %v3425
        %v3525 = vunpack.c.l.b16 %v3426
        %v3526 = vunpack.c.l.b16 %v3427
        %v3527 = vunpack.c.l.b16 %v3428
        %v3528 = vunpack.c.l.b16 %v3429
        %v3529 = vunpack.c.l.b16 %v3430
        %v3530 = vunpack.c.l.b16 %v3431
        %v3531 = vunpack.c.l.b16 %v3432
        %v3532 = vunpack.c.l.b16 %v3433
        %v3533 = vunpack.c.l.b16 %v3434
        %v3534 = vunpack.c.l.b16 %v3435
        %v3535 = vunpack.c.l.b16 %v3436
        %v3536 = vunpack.c.l.b16 %v3437
        %v3537 = vunpack.c.l.b16 %v3438
        %v3538 = vunpack.c.l.b16 %v3439
        %v3539 = vpack.c.b16 %v3522, %v3521
        %v3540 = vpack.c.b16 %v3524, %v3523
        %v3541 = vpack.c.b16 %v3526, %v3525
        %v3542 = vpack.c.b16 %v3528, %v3527
        %v3543 = vpack.c.b16 %v3530, %v3529
        %v3544 = vpack.c.b16 %v3532, %v3531
        %v3545 = vpack.c.b16 %v3534, %v3533
        %v3546 = vpack.c.b16 %v3536, %v3535
        %v3547 = vpack.c.b16 %v3538, %v3537
        %v3557 = vsel %vm2790, %v3501, 0
        %v3560 = vsel %vm1771, %v3547, 0
        %3562 = vmatprep.subr.bf16.mxu0 0
        %3563 = vmatpush1.bf16.msra.mxu0 %v3539
        %3564 = vmatprep.subr.bf16.mxu0 0
        %3565 = vmatpush1.bf16.msra.mxu0 %v3540
        %3566 = vmatprep.subr.bf16.mxu0 0
        %3567 = vmatpush1.bf16.msra.mxu0 %v3541
        %3568 = vmatprep.subr.bf16.mxu0 0
        %3569 = vmatpush1.bf16.msra.mxu0 %v3542
        %3570 = vmatprep.subr.bf16.mxu0 0
        %3571 = vmatpush1.bf16.msra.mxu0 %v3543
        %3572 = vmatprep.subr.bf16.mxu0 0
        %3573 = vmatpush1.bf16.msra.mxu0 %v3544
        %3574 = vmatprep.subr.bf16.mxu0 0
        %3575 = vmatpush1.bf16.msra.mxu0 %v3545
        %3576 = vmatprep.subr.bf16.mxu0 0
        %3577 = vmatpush1.bf16.msra.mxu0 %v3546
        %3578 = vmatprep.subr.bf16.mxu0 0
        %3579 = vmatpush1.bf16.msra.mxu0 %v3560
        %3580 = vmatprep.subr.bf16.mxu0 0
        %3581 = vmatpush1.bf16.msra.mxu0 0
        %3582 = vmatprep.subr.bf16.mxu0 0
        %3583 = vmatpush1.bf16.msra.mxu0 0
        %3584 = vmatprep.subr.bf16.mxu0 0
        %3585 = vmatpush1.bf16.msra.mxu0 0
        %3586 = vmatprep.subr.bf16.mxu0 0
        %3587 = vmatpush1.bf16.msra.mxu0 0
        %3588 = vmatprep.subr.bf16.mxu0 0
        %3589 = vmatpush1.bf16.msra.mxu0 0
        %3590 = vmatprep.subr.bf16.mxu0 0
        %3591 = vmatpush1.bf16.msra.mxu0 0
        %3592 = vmatprep.subr.bf16.mxu0 0
        %3593 = vmatpush1.bf16.msra.mxu0 0
        %3594 = vmatprep.mubr.bf16.mxu0 %v3557
        %3595 = vmatmul.mubr.bf16.gmra.mrb[0].mxu0 %v3500
        %v3596 = vpop.f32.mrb[0].mxu0
        %v3597 = vadd.f32 0.0, %v3596
        %v3598 = vpop.f32.mrb[0].mxu0
        %v3599 = vpop.f32.mrb[0].mxu0
        %v3600 = vpop.f32.mrb[0].mxu0
        %3601 = vdwg.mxu0
        %v3602 = vadd.f32 %v3300, %v3597
        %s3603 = scalar_lea.vmem [#allocation4], 4
        %v3604 = vld [vmem:[%s3603] ss:$8 sm:$0x3]
        %s3605 = scalar_lea.vmem [#allocation4], 36
        %v3606 = vld [vmem:[%s3605] ss:$8 sm:$0x3]
        %s3607 = scalar_lea.vmem [#allocation4], 68
        %v3608 = vld [vmem:[%s3607] ss:$8 sm:$0x3]
        %s3609 = scalar_lea.vmem [#allocation4], 100
        %v3610 = vld [vmem:[%s3609] ss:$8 sm:$0x3]
        %s3611 = scalar_lea.vmem [#allocation4], 132
        %v3612 = vld [vmem:[%s3611] ss:$8 sm:$0x3]
        %s3613 = scalar_lea.vmem [#allocation4], 164
        %v3614 = vld [vmem:[%s3613] ss:$8 sm:$0x3]
        %s3615 = scalar_lea.vmem [#allocation4], 196
        %v3616 = vld [vmem:[%s3615] ss:$8 sm:$0x3]
        %s3617 = scalar_lea.vmem [#allocation4], 228
        %v3618 = vld [vmem:[%s3617] ss:$8 sm:$0x3]
        %v3627 = vlaneseq
        %v3628 = vshrl.u32 %v3627, 7
        %v3629 = vsub.s32 0, %v3628
        %v3630 = vrot.slane %v3604, %v3629
        %v3631 = vlaneseq
        %v3632 = vshrl.u32 %v3631, 7
        %v3633 = vsub.s32 1, %v3632
        %v3634 = vrot.slane %v3604, %v3633
        %v3635 = vlaneseq
        %v3636 = vshrl.u32 %v3635, 7
        %v3637 = vsub.s32 0, %v3636
        %v3638 = vrot.slane %v3606, %v3637
        %v3639 = vlaneseq
        %v3640 = vshrl.u32 %v3639, 7
        %v3641 = vsub.s32 1, %v3640
        %v3642 = vrot.slane %v3606, %v3641
        %v3643 = vlaneseq
        %v3644 = vshrl.u32 %v3643, 7
        %v3645 = vsub.s32 0, %v3644
        %v3646 = vrot.slane %v3608, %v3645
        %v3647 = vlaneseq
        %v3648 = vshrl.u32 %v3647, 7
        %v3649 = vsub.s32 1, %v3648
        %v3650 = vrot.slane %v3608, %v3649
        %v3651 = vlaneseq
        %v3652 = vshrl.u32 %v3651, 7
        %v3653 = vsub.s32 0, %v3652
        %v3654 = vrot.slane %v3610, %v3653
        %v3655 = vlaneseq
        %v3656 = vshrl.u32 %v3655, 7
        %v3657 = vsub.s32 1, %v3656
        %v3658 = vrot.slane %v3610, %v3657
        %v3659 = vlaneseq
        %v3660 = vshrl.u32 %v3659, 7
        %v3661 = vsub.s32 0, %v3660
        %v3662 = vrot.slane %v3612, %v3661
        %v3663 = vlaneseq
        %v3664 = vshrl.u32 %v3663, 7
        %v3665 = vsub.s32 1, %v3664
        %v3666 = vrot.slane %v3612, %v3665
        %v3667 = vlaneseq
        %v3668 = vshrl.u32 %v3667, 7
        %v3669 = vsub.s32 0, %v3668
        %v3670 = vrot.slane %v3614, %v3669
        %v3671 = vlaneseq
        %v3672 = vshrl.u32 %v3671, 7
        %v3673 = vsub.s32 1, %v3672
        %v3674 = vrot.slane %v3614, %v3673
        %v3675 = vlaneseq
        %v3676 = vshrl.u32 %v3675, 7
        %v3677 = vsub.s32 0, %v3676
        %v3678 = vrot.slane %v3616, %v3677
        %v3679 = vlaneseq
        %v3680 = vshrl.u32 %v3679, 7
        %v3681 = vsub.s32 1, %v3680
        %v3682 = vrot.slane %v3616, %v3681
        %v3683 = vlaneseq
        %v3684 = vshrl.u32 %v3683, 7
        %v3685 = vsub.s32 0, %v3684
        %v3686 = vrot.slane %v3618, %v3685
        %v3687 = vlaneseq
        %v3688 = vshrl.u32 %v3687, 7
        %v3689 = vsub.s32 1, %v3688
        %v3690 = vrot.slane %v3618, %v3689
        %v3707 = vpack.c.bf16 %v3630, %v3630
        %v3708 = vpack.c.bf16 %v3634, %v3634
        %v3709 = vpack.c.bf16 %v3638, %v3638
        %v3710 = vpack.c.bf16 %v3642, %v3642
        %v3711 = vpack.c.bf16 %v3646, %v3646
        %v3712 = vpack.c.bf16 %v3650, %v3650
        %v3713 = vpack.c.bf16 %v3654, %v3654
        %v3714 = vpack.c.bf16 %v3658, %v3658
        %v3715 = vpack.c.bf16 %v3662, %v3662
        %v3716 = vpack.c.bf16 %v3666, %v3666
        %v3717 = vpack.c.bf16 %v3670, %v3670
        %v3718 = vpack.c.bf16 %v3674, %v3674
        %v3719 = vpack.c.bf16 %v3678, %v3678
        %v3720 = vpack.c.bf16 %v3682, %v3682
        %v3721 = vpack.c.bf16 %v3686, %v3686
        %v3722 = vpack.c.bf16 %v3690, %v3690
        %s3723 = scalar_lea.vmem %s6, 288
        %v3724 = vld [vmem:[%s3723] sm:$0xf]
        %v3725 = vld [vmem:[%s3723 + $0x4] sm:$0xf]
        %v3726 = vld [vmem:[%s3723 + $0x8] sm:$0xf]
        %v3727 = vld [vmem:[%s3723 + $0xc] sm:$0xf]
        %v3728 = vld [vmem:[%s3723 + $0x10] sm:$0xf]
        %v3729 = vld [vmem:[%s3723 + $0x14] sm:$0xf]
        %v3730 = vld [vmem:[%s3723 + $0x18] sm:$0xf]
        %v3731 = vld [vmem:[%s3723 + $0x1c] sm:$0xf]
        %v3732 = vld [vmem:[%s3723 + $0x20] sm:$0xf]
        %v3733 = vld [vmem:[%s3723 + $0x24] sm:$0xf]
        %v3734 = vld [vmem:[%s3723 + $0x28] sm:$0xf]
        %v3735 = vld [vmem:[%s3723 + $0x2c] sm:$0xf]
        %v3736 = vld [vmem:[%s3723 + $0x30] sm:$0xf]
        %v3737 = vld [vmem:[%s3723 + $0x34] sm:$0xf]
        %v3738 = vld [vmem:[%s3723 + $0x38] sm:$0xf]
        %v3739 = vld [vmem:[%s3723 + $0x3c] sm:$0xf]
        %v3740 = vld [vmem:[%s3723 + $0x40] sm:$0xf]
        %v3741 = vld [vmem:[%s3723 + $0x44] sm:$0x3]
        %v3758 = vunpack.c.l.b16 %v3707
        %v3759 = vunpack.c.l.b16 %v3708
        %v3760 = vunpack.c.l.b16 %v3709
        %v3761 = vunpack.c.l.b16 %v3710
        %v3762 = vunpack.c.l.b16 %v3711
        %v3763 = vunpack.c.l.b16 %v3712
        %v3764 = vunpack.c.l.b16 %v3713
        %v3765 = vunpack.c.l.b16 %v3714
        %v3766 = vunpack.c.l.b16 %v3715
        %v3767 = vunpack.c.l.b16 %v3716
        %v3768 = vunpack.c.l.b16 %v3717
        %v3769 = vunpack.c.l.b16 %v3718
        %v3770 = vunpack.c.l.b16 %v3719
        %v3771 = vunpack.c.l.b16 %v3720
        %v3772 = vunpack.c.l.b16 %v3721
        %v3773 = vunpack.c.l.b16 %v3722
        %v3774 = vrot.slane %v3760, 7
        %v3775 = vsel %vm2700, %v3774, %v3758
        %v3776 = vrot.slane %v3762, 6
        %v3777 = vsel %vm2703, %v3776, %v3775
        %v3778 = vrot.slane %v3764, 5
        %v3779 = vsel %vm2706, %v3778, %v3777
        %v3780 = vrot.slane %v3766, 4
        %v3781 = vsel %vm2709, %v3780, %v3779
        %v3782 = vrot.slane %v3768, 3
        %v3783 = vsel %vm2712, %v3782, %v3781
        %v3784 = vrot.slane %v3770, 2
        %v3785 = vsel %vm2715, %v3784, %v3783
        %v3786 = vrot.slane %v3772, 1
        %v3787 = vsel %vm2718, %v3786, %v3785
        %v3788 = vrot.slane %v3761, 7
        %v3789 = vsel %vm2700, %v3788, %v3759
        %v3790 = vrot.slane %v3763, 6
        %v3791 = vsel %vm2703, %v3790, %v3789
        %v3792 = vrot.slane %v3765, 5
        %v3793 = vsel %vm2706, %v3792, %v3791
        %v3794 = vrot.slane %v3767, 4
        %v3795 = vsel %vm2709, %v3794, %v3793
        %v3796 = vrot.slane %v3769, 3
        %v3797 = vsel %vm2712, %v3796, %v3795
        %v3798 = vrot.slane %v3771, 2
        %v3799 = vsel %vm2715, %v3798, %v3797
        %v3800 = vrot.slane %v3773, 1
        %v3801 = vsel %vm2718, %v3800, %v3799
        %v3802 = vpack.c.b16 %v3787, %v3787
        %v3803 = vpack.c.b16 %v3801, %v3801
        %v3823 = vunpack.c.l.b16 %v3724
        %v3824 = vunpack.c.l.b16 %v3725
        %v3825 = vunpack.c.l.b16 %v3726
        %v3826 = vunpack.c.l.b16 %v3727
        %v3827 = vunpack.c.l.b16 %v3728
        %v3828 = vunpack.c.l.b16 %v3729
        %v3829 = vunpack.c.l.b16 %v3730
        %v3830 = vunpack.c.l.b16 %v3731
        %v3831 = vunpack.c.l.b16 %v3732
        %v3832 = vunpack.c.l.b16 %v3733
        %v3833 = vunpack.c.l.b16 %v3734
        %v3834 = vunpack.c.l.b16 %v3735
        %v3835 = vunpack.c.l.b16 %v3736
        %v3836 = vunpack.c.l.b16 %v3737
        %v3837 = vunpack.c.l.b16 %v3738
        %v3838 = vunpack.c.l.b16 %v3739
        %v3839 = vunpack.c.l.b16 %v3740
        %v3840 = vunpack.c.l.b16 %v3741
        %v3841 = vpack.c.b16 %v3824, %v3823
        %v3842 = vpack.c.b16 %v3826, %v3825
        %v3843 = vpack.c.b16 %v3828, %v3827
        %v3844 = vpack.c.b16 %v3830, %v3829
        %v3845 = vpack.c.b16 %v3832, %v3831
        %v3846 = vpack.c.b16 %v3834, %v3833
        %v3847 = vpack.c.b16 %v3836, %v3835
        %v3848 = vpack.c.b16 %v3838, %v3837
        %v3849 = vpack.c.b16 %v3840, %v3839
        %v3859 = vsel %vm2790, %v3803, 0
        %v3862 = vsel %vm1771, %v3849, 0
        %3864 = vmatprep.subr.bf16.mxu0 0
        %3865 = vmatpush1.bf16.msra.mxu0 %v3841
        %3866 = vmatprep.subr.bf16.mxu0 0
        %3867 = vmatpush1.bf16.msra.mxu0 %v3842
        %3868 = vmatprep.subr.bf16.mxu0 0
        %3869 = vmatpush1.bf16.msra.mxu0 %v3843
        %3870 = vmatprep.subr.bf16.mxu0 0
        %3871 = vmatpush1.bf16.msra.mxu0 %v3844
        %3872 = vmatprep.subr.bf16.mxu0 0
        %3873 = vmatpush1.bf16.msra.mxu0 %v3845
        %3874 = vmatprep.subr.bf16.mxu0 0
        %3875 = vmatpush1.bf16.msra.mxu0 %v3846
        %3876 = vmatprep.subr.bf16.mxu0 0
        %3877 = vmatpush1.bf16.msra.mxu0 %v3847
        %3878 = vmatprep.subr.bf16.mxu0 0
        %3879 = vmatpush1.bf16.msra.mxu0 %v3848
        %3880 = vmatprep.subr.bf16.mxu0 0
        %3881 = vmatpush1.bf16.msra.mxu0 %v3862
        %3882 = vmatprep.subr.bf16.mxu0 0
        %3883 = vmatpush1.bf16.msra.mxu0 0
        %3884 = vmatprep.subr.bf16.mxu0 0
        %3885 = vmatpush1.bf16.msra.mxu0 0
        %3886 = vmatprep.subr.bf16.mxu0 0
        %3887 = vmatpush1.bf16.msra.mxu0 0
        %3888 = vmatprep.subr.bf16.mxu0 0
        %3889 = vmatpush1.bf16.msra.mxu0 0
        %3890 = vmatprep.subr.bf16.mxu0 0
        %3891 = vmatpush1.bf16.msra.mxu0 0
        %3892 = vmatprep.subr.bf16.mxu0 0
        %3893 = vmatpush1.bf16.msra.mxu0 0
        %3894 = vmatprep.subr.bf16.mxu0 0
        %3895 = vmatpush1.bf16.msra.mxu0 0
        %3896 = vmatprep.mubr.bf16.mxu0 %v3859
        %3897 = vmatmul.mubr.bf16.gmra.mrb[0].mxu0 %v3802
        %v3898 = vpop.f32.mrb[0].mxu0
        %v3899 = vadd.f32 0.0, %v3898
        %v3900 = vpop.f32.mrb[0].mxu0
        %v3901 = vpop.f32.mrb[0].mxu0
        %v3902 = vpop.f32.mrb[0].mxu0
        %3903 = vdwg.mxu0
        %v3904 = vadd.f32 %v3602, %v3899
        %s3905 = scalar_lea.vmem [#allocation4], 5
        %v3906 = vld [vmem:[%s3905] ss:$8 sm:$0x3]
        %s3907 = scalar_lea.vmem [#allocation4], 37
        %v3908 = vld [vmem:[%s3907] ss:$8 sm:$0x3]
        %s3909 = scalar_lea.vmem [#allocation4], 69
        %v3910 = vld [vmem:[%s3909] ss:$8 sm:$0x3]
        %s3911 = scalar_lea.vmem [#allocation4], 101
        %v3912 = vld [vmem:[%s3911] ss:$8 sm:$0x3]
        %s3913 = scalar_lea.vmem [#allocation4], 133
        %v3914 = vld [vmem:[%s3913] ss:$8 sm:$0x3]
        %s3915 = scalar_lea.vmem [#allocation4], 165
        %v3916 = vld [vmem:[%s3915] ss:$8 sm:$0x3]
        %s3917 = scalar_lea.vmem [#allocation4], 197
        %v3918 = vld [vmem:[%s3917] ss:$8 sm:$0x3]
        %s3919 = scalar_lea.vmem [#allocation4], 229
        %v3920 = vld [vmem:[%s3919] ss:$8 sm:$0x3]
        %v3929 = vlaneseq
        %v3930 = vshrl.u32 %v3929, 7
        %v3931 = vsub.s32 0, %v3930
        %v3932 = vrot.slane %v3906, %v3931
        %v3933 = vlaneseq
        %v3934 = vshrl.u32 %v3933, 7
        %v3935 = vsub.s32 1, %v3934
        %v3936 = vrot.slane %v3906, %v3935
        %v3937 = vlaneseq
        %v3938 = vshrl.u32 %v3937, 7
        %v3939 = vsub.s32 0, %v3938
        %v3940 = vrot.slane %v3908, %v3939
        %v3941 = vlaneseq
        %v3942 = vshrl.u32 %v3941, 7
        %v3943 = vsub.s32 1, %v3942
        %v3944 = vrot.slane %v3908, %v3943
        %v3945 = vlaneseq
        %v3946 = vshrl.u32 %v3945, 7
        %v3947 = vsub.s32 0, %v3946
        %v3948 = vrot.slane %v3910, %v3947
        %v3949 = vlaneseq
        %v3950 = vshrl.u32 %v3949, 7
        %v3951 = vsub.s32 1, %v3950
        %v3952 = vrot.slane %v3910, %v3951
        %v3953 = vlaneseq
        %v3954 = vshrl.u32 %v3953, 7
        %v3955 = vsub.s32 0, %v3954
        %v3956 = vrot.slane %v3912, %v3955
        %v3957 = vlaneseq
        %v3958 = vshrl.u32 %v3957, 7
        %v3959 = vsub.s32 1, %v3958
        %v3960 = vrot.slane %v3912, %v3959
        %v3961 = vlaneseq
        %v3962 = vshrl.u32 %v3961, 7
        %v3963 = vsub.s32 0, %v3962
        %v3964 = vrot.slane %v3914, %v3963
        %v3965 = vlaneseq
        %v3966 = vshrl.u32 %v3965, 7
        %v3967 = vsub.s32 1, %v3966
        %v3968 = vrot.slane %v3914, %v3967
        %v3969 = vlaneseq
        %v3970 = vshrl.u32 %v3969, 7
        %v3971 = vsub.s32 0, %v3970
        %v3972 = vrot.slane %v3916, %v3971
        %v3973 = vlaneseq
        %v3974 = vshrl.u32 %v3973, 7
        %v3975 = vsub.s32 1, %v3974
        %v3976 = vrot.slane %v3916, %v3975
        %v3977 = vlaneseq
        %v3978 = vshrl.u32 %v3977, 7
        %v3979 = vsub.s32 0, %v3978
        %v3980 = vrot.slane %v3918, %v3979
        %v3981 = vlaneseq
        %v3982 = vshrl.u32 %v3981, 7
        %v3983 = vsub.s32 1, %v3982
        %v3984 = vrot.slane %v3918, %v3983
        %v3985 = vlaneseq
        %v3986 = vshrl.u32 %v3985, 7
        %v3987 = vsub.s32 0, %v3986
        %v3988 = vrot.slane %v3920, %v3987
        %v3989 = vlaneseq
        %v3990 = vshrl.u32 %v3989, 7
        %v3991 = vsub.s32 1, %v3990
        %v3992 = vrot.slane %v3920, %v3991
        %v4009 = vpack.c.bf16 %v3932, %v3932
        %v4010 = vpack.c.bf16 %v3936, %v3936
        %v4011 = vpack.c.bf16 %v3940, %v3940
        %v4012 = vpack.c.bf16 %v3944, %v3944
        %v4013 = vpack.c.bf16 %v3948, %v3948
        %v4014 = vpack.c.bf16 %v3952, %v3952
        %v4015 = vpack.c.bf16 %v3956, %v3956
        %v4016 = vpack.c.bf16 %v3960, %v3960
        %v4017 = vpack.c.bf16 %v3964, %v3964
        %v4018 = vpack.c.bf16 %v3968, %v3968
        %v4019 = vpack.c.bf16 %v3972, %v3972
        %v4020 = vpack.c.bf16 %v3976, %v3976
        %v4021 = vpack.c.bf16 %v3980, %v3980
        %v4022 = vpack.c.bf16 %v3984, %v3984
        %v4023 = vpack.c.bf16 %v3988, %v3988
        %v4024 = vpack.c.bf16 %v3992, %v3992
        %s4025 = scalar_lea.vmem %s6, 360
        %v4026 = vld [vmem:[%s4025] sm:$0xf]
        %v4027 = vld [vmem:[%s4025 + $0x4] sm:$0xf]
        %v4028 = vld [vmem:[%s4025 + $0x8] sm:$0xf]
        %v4029 = vld [vmem:[%s4025 + $0xc] sm:$0xf]
        %v4030 = vld [vmem:[%s4025 + $0x10] sm:$0xf]
        %v4031 = vld [vmem:[%s4025 + $0x14] sm:$0xf]
        %v4032 = vld [vmem:[%s4025 + $0x18] sm:$0xf]
        %v4033 = vld [vmem:[%s4025 + $0x1c] sm:$0xf]
        %v4034 = vld [vmem:[%s4025 + $0x20] sm:$0xf]
        %v4035 = vld [vmem:[%s4025 + $0x24] sm:$0xf]
        %v4036 = vld [vmem:[%s4025 + $0x28] sm:$0xf]
        %v4037 = vld [vmem:[%s4025 + $0x2c] sm:$0xf]
        %v4038 = vld [vmem:[%s4025 + $0x30] sm:$0xf]
        %v4039 = vld [vmem:[%s4025 + $0x34] sm:$0xf]
        %v4040 = vld [vmem:[%s4025 + $0x38] sm:$0xf]
        %v4041 = vld [vmem:[%s4025 + $0x3c] sm:$0xf]
        %v4042 = vld [vmem:[%s4025 + $0x40] sm:$0xf]
        %v4043 = vld [vmem:[%s4025 + $0x44] sm:$0x3]
        %v4060 = vunpack.c.l.b16 %v4009
        %v4061 = vunpack.c.l.b16 %v4010
        %v4062 = vunpack.c.l.b16 %v4011
        %v4063 = vunpack.c.l.b16 %v4012
        %v4064 = vunpack.c.l.b16 %v4013
        %v4065 = vunpack.c.l.b16 %v4014
        %v4066 = vunpack.c.l.b16 %v4015
        %v4067 = vunpack.c.l.b16 %v4016
        %v4068 = vunpack.c.l.b16 %v4017
        %v4069 = vunpack.c.l.b16 %v4018
        %v4070 = vunpack.c.l.b16 %v4019
        %v4071 = vunpack.c.l.b16 %v4020
        %v4072 = vunpack.c.l.b16 %v4021
        %v4073 = vunpack.c.l.b16 %v4022
        %v4074 = vunpack.c.l.b16 %v4023
        %v4075 = vunpack.c.l.b16 %v4024
        %v4076 = vrot.slane %v4062, 7
        %v4077 = vsel %vm2700, %v4076, %v4060
        %v4078 = vrot.slane %v4064, 6
        %v4079 = vsel %vm2703, %v4078, %v4077
        %v4080 = vrot.slane %v4066, 5
        %v4081 = vsel %vm2706, %v4080, %v4079
        %v4082 = vrot.slane %v4068, 4
        %v4083 = vsel %vm2709, %v4082, %v4081
        %v4084 = vrot.slane %v4070, 3
        %v4085 = vsel %vm2712, %v4084, %v4083
        %v4086 = vrot.slane %v4072, 2
        %v4087 = vsel %vm2715, %v4086, %v4085
        %v4088 = vrot.slane %v4074, 1
        %v4089 = vsel %vm2718, %v4088, %v4087
        %v4090 = vrot.slane %v4063, 7
        %v4091 = vsel %vm2700, %v4090, %v4061
        %v4092 = vrot.slane %v4065, 6
        %v4093 = vsel %vm2703, %v4092, %v4091
        %v4094 = vrot.slane %v4067, 5
        %v4095 = vsel %vm2706, %v4094, %v4093
        %v4096 = vrot.slane %v4069, 4
        %v4097 = vsel %vm2709, %v4096, %v4095
        %v4098 = vrot.slane %v4071, 3
        %v4099 = vsel %vm2712, %v4098, %v4097
        %v4100 = vrot.slane %v4073, 2
        %v4101 = vsel %vm2715, %v4100, %v4099
        %v4102 = vrot.slane %v4075, 1
        %v4103 = vsel %vm2718, %v4102, %v4101
        %v4104 = vpack.c.b16 %v4089, %v4089
        %v4105 = vpack.c.b16 %v4103, %v4103
        %v4125 = vunpack.c.l.b16 %v4026
        %v4126 = vunpack.c.l.b16 %v4027
        %v4127 = vunpack.c.l.b16 %v4028
        %v4128 = vunpack.c.l.b16 %v4029
        %v4129 = vunpack.c.l.b16 %v4030
        %v4130 = vunpack.c.l.b16 %v4031
        %v4131 = vunpack.c.l.b16 %v4032
        %v4132 = vunpack.c.l.b16 %v4033
        %v4133 = vunpack.c.l.b16 %v4034
        %v4134 = vunpack.c.l.b16 %v4035
        %v4135 = vunpack.c.l.b16 %v4036
        %v4136 = vunpack.c.l.b16 %v4037
        %v4137 = vunpack.c.l.b16 %v4038
        %v4138 = vunpack.c.l.b16 %v4039
        %v4139 = vunpack.c.l.b16 %v4040
        %v4140 = vunpack.c.l.b16 %v4041
        %v4141 = vunpack.c.l.b16 %v4042
        %v4142 = vunpack.c.l.b16 %v4043
        %v4143 = vpack.c.b16 %v4126, %v4125
        %v4144 = vpack.c.b16 %v4128, %v4127
        %v4145 = vpack.c.b16 %v4130, %v4129
        %v4146 = vpack.c.b16 %v4132, %v4131
        %v4147 = vpack.c.b16 %v4134, %v4133
        %v4148 = vpack.c.b16 %v4136, %v4135
        %v4149 = vpack.c.b16 %v4138, %v4137
        %v4150 = vpack.c.b16 %v4140, %v4139
        %v4151 = vpack.c.b16 %v4142, %v4141
        %v4161 = vsel %vm2790, %v4105, 0
        %v4164 = vsel %vm1771, %v4151, 0
        %4166 = vmatprep.subr.bf16.mxu0 0
        %4167 = vmatpush1.bf16.msra.mxu0 %v4143
        %4168 = vmatprep.subr.bf16.mxu0 0
        %4169 = vmatpush1.bf16.msra.mxu0 %v4144
        %4170 = vmatprep.subr.bf16.mxu0 0
        %4171 = vmatpush1.bf16.msra.mxu0 %v4145
        %4172 = vmatprep.subr.bf16.mxu0 0
        %4173 = vmatpush1.bf16.msra.mxu0 %v4146
        %4174 = vmatprep.subr.bf16.mxu0 0
        %4175 = vmatpush1.bf16.msra.mxu0 %v4147
        %4176 = vmatprep.subr.bf16.mxu0 0
        %4177 = vmatpush1.bf16.msra.mxu0 %v4148
        %4178 = vmatprep.subr.bf16.mxu0 0
        %4179 = vmatpush1.bf16.msra.mxu0 %v4149
        %4180 = vmatprep.subr.bf16.mxu0 0
        %4181 = vmatpush1.bf16.msra.mxu0 %v4150
        %4182 = vmatprep.subr.bf16.mxu0 0
        %4183 = vmatpush1.bf16.msra.mxu0 %v4164
        %4184 = vmatprep.subr.bf16.mxu0 0
        %4185 = vmatpush1.bf16.msra.mxu0 0
        %4186 = vmatprep.subr.bf16.mxu0 0
        %4187 = vmatpush1.bf16.msra.mxu0 0
        %4188 = vmatprep.subr.bf16.mxu0 0
        %4189 = vmatpush1.bf16.msra.mxu0 0
        %4190 = vmatprep.subr.bf16.mxu0 0
        %4191 = vmatpush1.bf16.msra.mxu0 0
        %4192 = vmatprep.subr.bf16.mxu0 0
        %4193 = vmatpush1.bf16.msra.mxu0 0
        %4194 = vmatprep.subr.bf16.mxu0 0
        %4195 = vmatpush1.bf16.msra.mxu0 0
        %4196 = vmatprep.subr.bf16.mxu0 0
        %4197 = vmatpush1.bf16.msra.mxu0 0
        %4198 = vmatprep.mubr.bf16.mxu0 %v4161
        %4199 = vmatmul.mubr.bf16.gmra.mrb[0].mxu0 %v4104
        %v4200 = vpop.f32.mrb[0].mxu0
        %v4201 = vadd.f32 0.0, %v4200
        %v4202 = vpop.f32.mrb[0].mxu0
        %v4203 = vpop.f32.mrb[0].mxu0
        %v4204 = vpop.f32.mrb[0].mxu0
        %4205 = vdwg.mxu0
        %v4206 = vadd.f32 %v3904, %v4201
        %s4207 = scalar_lea.vmem [#allocation4], 6
        %v4208 = vld [vmem:[%s4207] ss:$8 sm:$0x3]
        %s4209 = scalar_lea.vmem [#allocation4], 38
        %v4210 = vld [vmem:[%s4209] ss:$8 sm:$0x3]
        %s4211 = scalar_lea.vmem [#allocation4], 70
        %v4212 = vld [vmem:[%s4211] ss:$8 sm:$0x3]
        %s4213 = scalar_lea.vmem [#allocation4], 102
        %v4214 = vld [vmem:[%s4213] ss:$8 sm:$0x3]
        %s4215 = scalar_lea.vmem [#allocation4], 134
        %v4216 = vld [vmem:[%s4215] ss:$8 sm:$0x3]
        %s4217 = scalar_lea.vmem [#allocation4], 166
        %v4218 = vld [vmem:[%s4217] ss:$8 sm:$0x3]
        %s4219 = scalar_lea.vmem [#allocation4], 198
        %v4220 = vld [vmem:[%s4219] ss:$8 sm:$0x3]
        %s4221 = scalar_lea.vmem [#allocation4], 230
        %v4222 = vld [vmem:[%s4221] ss:$8 sm:$0x3]
        %v4231 = vlaneseq
        %v4232 = vshrl.u32 %v4231, 7
        %v4233 = vsub.s32 0, %v4232
        %v4234 = vrot.slane %v4208, %v4233
        %v4235 = vlaneseq
        %v4236 = vshrl.u32 %v4235, 7
        %v4237 = vsub.s32 1, %v4236
        %v4238 = vrot.slane %v4208, %v4237
        %v4239 = vlaneseq
        %v4240 = vshrl.u32 %v4239, 7
        %v4241 = vsub.s32 0, %v4240
        %v4242 = vrot.slane %v4210, %v4241
        %v4243 = vlaneseq
        %v4244 = vshrl.u32 %v4243, 7
        %v4245 = vsub.s32 1, %v4244
        %v4246 = vrot.slane %v4210, %v4245
        %v4247 = vlaneseq
        %v4248 = vshrl.u32 %v4247, 7
        %v4249 = vsub.s32 0, %v4248
        %v4250 = vrot.slane %v4212, %v4249
        %v4251 = vlaneseq
        %v4252 = vshrl.u32 %v4251, 7
        %v4253 = vsub.s32 1, %v4252
        %v4254 = vrot.slane %v4212, %v4253
        %v4255 = vlaneseq
        %v4256 = vshrl.u32 %v4255, 7
        %v4257 = vsub.s32 0, %v4256
        %v4258 = vrot.slane %v4214, %v4257
        %v4259 = vlaneseq
        %v4260 = vshrl.u32 %v4259, 7
        %v4261 = vsub.s32 1, %v4260
        %v4262 = vrot.slane %v4214, %v4261
        %v4263 = vlaneseq
        %v4264 = vshrl.u32 %v4263, 7
        %v4265 = vsub.s32 0, %v4264
        %v4266 = vrot.slane %v4216, %v4265
        %v4267 = vlaneseq
        %v4268 = vshrl.u32 %v4267, 7
        %v4269 = vsub.s32 1, %v4268
        %v4270 = vrot.slane %v4216, %v4269
        %v4271 = vlaneseq
        %v4272 = vshrl.u32 %v4271, 7
        %v4273 = vsub.s32 0, %v4272
        %v4274 = vrot.slane %v4218, %v4273
        %v4275 = vlaneseq
        %v4276 = vshrl.u32 %v4275, 7
        %v4277 = vsub.s32 1, %v4276
        %v4278 = vrot.slane %v4218, %v4277
        %v4279 = vlaneseq
        %v4280 = vshrl.u32 %v4279, 7
        %v4281 = vsub.s32 0, %v4280
        %v4282 = vrot.slane %v4220, %v4281
        %v4283 = vlaneseq
        %v4284 = vshrl.u32 %v4283, 7
        %v4285 = vsub.s32 1, %v4284
        %v4286 = vrot.slane %v4220, %v4285
        %v4287 = vlaneseq
        %v4288 = vshrl.u32 %v4287, 7
        %v4289 = vsub.s32 0, %v4288
        %v4290 = vrot.slane %v4222, %v4289
        %v4291 = vlaneseq
        %v4292 = vshrl.u32 %v4291, 7
        %v4293 = vsub.s32 1, %v4292
        %v4294 = vrot.slane %v4222, %v4293
        %v4311 = vpack.c.bf16 %v4234, %v4234
        %v4312 = vpack.c.bf16 %v4238, %v4238
        %v4313 = vpack.c.bf16 %v4242, %v4242
        %v4314 = vpack.c.bf16 %v4246, %v4246
        %v4315 = vpack.c.bf16 %v4250, %v4250
        %v4316 = vpack.c.bf16 %v4254, %v4254
        %v4317 = vpack.c.bf16 %v4258, %v4258
        %v4318 = vpack.c.bf16 %v4262, %v4262
        %v4319 = vpack.c.bf16 %v4266, %v4266
        %v4320 = vpack.c.bf16 %v4270, %v4270
        %v4321 = vpack.c.bf16 %v4274, %v4274
        %v4322 = vpack.c.bf16 %v4278, %v4278
        %v4323 = vpack.c.bf16 %v4282, %v4282
        %v4324 = vpack.c.bf16 %v4286, %v4286
        %v4325 = vpack.c.bf16 %v4290, %v4290
        %v4326 = vpack.c.bf16 %v4294, %v4294
        %s4327 = scalar_lea.vmem %s6, 432
        %v4328 = vld [vmem:[%s4327] sm:$0xf]
        %v4329 = vld [vmem:[%s4327 + $0x4] sm:$0xf]
        %v4330 = vld [vmem:[%s4327 + $0x8] sm:$0xf]
        %v4331 = vld [vmem:[%s4327 + $0xc] sm:$0xf]
        %v4332 = vld [vmem:[%s4327 + $0x10] sm:$0xf]
        %v4333 = vld [vmem:[%s4327 + $0x14] sm:$0xf]
        %v4334 = vld [vmem:[%s4327 + $0x18] sm:$0xf]
        %v4335 = vld [vmem:[%s4327 + $0x1c] sm:$0xf]
        %v4336 = vld [vmem:[%s4327 + $0x20] sm:$0xf]
        %v4337 = vld [vmem:[%s4327 + $0x24] sm:$0xf]
        %v4338 = vld [vmem:[%s4327 + $0x28] sm:$0xf]
        %v4339 = vld [vmem:[%s4327 + $0x2c] sm:$0xf]
        %v4340 = vld [vmem:[%s4327 + $0x30] sm:$0xf]
        %v4341 = vld [vmem:[%s4327 + $0x34] sm:$0xf]
        %v4342 = vld [vmem:[%s4327 + $0x38] sm:$0xf]
        %v4343 = vld [vmem:[%s4327 + $0x3c] sm:$0xf]
        %v4344 = vld [vmem:[%s4327 + $0x40] sm:$0xf]
        %v4345 = vld [vmem:[%s4327 + $0x44] sm:$0x3]
        %v4362 = vunpack.c.l.b16 %v4311
        %v4363 = vunpack.c.l.b16 %v4312
        %v4364 = vunpack.c.l.b16 %v4313
        %v4365 = vunpack.c.l.b16 %v4314
        %v4366 = vunpack.c.l.b16 %v4315
        %v4367 = vunpack.c.l.b16 %v4316
        %v4368 = vunpack.c.l.b16 %v4317
        %v4369 = vunpack.c.l.b16 %v4318
        %v4370 = vunpack.c.l.b16 %v4319
        %v4371 = vunpack.c.l.b16 %v4320
        %v4372 = vunpack.c.l.b16 %v4321
        %v4373 = vunpack.c.l.b16 %v4322
        %v4374 = vunpack.c.l.b16 %v4323
        %v4375 = vunpack.c.l.b16 %v4324
        %v4376 = vunpack.c.l.b16 %v4325
        %v4377 = vunpack.c.l.b16 %v4326
        %v4378 = vrot.slane %v4364, 7
        %v4379 = vsel %vm2700, %v4378, %v4362
        %v4380 = vrot.slane %v4366, 6
        %v4381 = vsel %vm2703, %v4380, %v4379
        %v4382 = vrot.slane %v4368, 5
        %v4383 = vsel %vm2706, %v4382, %v4381
        %v4384 = vrot.slane %v4370, 4
        %v4385 = vsel %vm2709, %v4384, %v4383
        %v4386 = vrot.slane %v4372, 3
        %v4387 = vsel %vm2712, %v4386, %v4385
        %v4388 = vrot.slane %v4374, 2
        %v4389 = vsel %vm2715, %v4388, %v4387
        %v4390 = vrot.slane %v4376, 1
        %v4391 = vsel %vm2718, %v4390, %v4389
        %v4392 = vrot.slane %v4365, 7
        %v4393 = vsel %vm2700, %v4392, %v4363
        %v4394 = vrot.slane %v4367, 6
        %v4395 = vsel %vm2703, %v4394, %v4393
        %v4396 = vrot.slane %v4369, 5
        %v4397 = vsel %vm2706, %v4396, %v4395
        %v4398 = vrot.slane %v4371, 4
        %v4399 = vsel %vm2709, %v4398, %v4397
        %v4400 = vrot.slane %v4373, 3
        %v4401 = vsel %vm2712, %v4400, %v4399
        %v4402 = vrot.slane %v4375, 2
        %v4403 = vsel %vm2715, %v4402, %v4401
        %v4404 = vrot.slane %v4377, 1
        %v4405 = vsel %vm2718, %v4404, %v4403
        %v4406 = vpack.c.b16 %v4391, %v4391
        %v4407 = vpack.c.b16 %v4405, %v4405
        %v4427 = vunpack.c.l.b16 %v4328
        %v4428 = vunpack.c.l.b16 %v4329
        %v4429 = vunpack.c.l.b16 %v4330
        %v4430 = vunpack.c.l.b16 %v4331
        %v4431 = vunpack.c.l.b16 %v4332
        %v4432 = vunpack.c.l.b16 %v4333
        %v4433 = vunpack.c.l.b16 %v4334
        %v4434 = vunpack.c.l.b16 %v4335
        %v4435 = vunpack.c.l.b16 %v4336
        %v4436 = vunpack.c.l.b16 %v4337
        %v4437 = vunpack.c.l.b16 %v4338
        %v4438 = vunpack.c.l.b16 %v4339
        %v4439 = vunpack.c.l.b16 %v4340
        %v4440 = vunpack.c.l.b16 %v4341
        %v4441 = vunpack.c.l.b16 %v4342
        %v4442 = vunpack.c.l.b16 %v4343
        %v4443 = vunpack.c.l.b16 %v4344
        %v4444 = vunpack.c.l.b16 %v4345
        %v4445 = vpack.c.b16 %v4428, %v4427
        %v4446 = vpack.c.b16 %v4430, %v4429
        %v4447 = vpack.c.b16 %v4432, %v4431
        %v4448 = vpack.c.b16 %v4434, %v4433
        %v4449 = vpack.c.b16 %v4436, %v4435
        %v4450 = vpack.c.b16 %v4438, %v4437
        %v4451 = vpack.c.b16 %v4440, %v4439
        %v4452 = vpack.c.b16 %v4442, %v4441
        %v4453 = vpack.c.b16 %v4444, %v4443
        %v4463 = vsel %vm2790, %v4407, 0
        %v4466 = vsel %vm1771, %v4453, 0
        %4468 = vmatprep.subr.bf16.mxu0 0
        %4469 = vmatpush1.bf16.msra.mxu0 %v4445
        %4470 = vmatprep.subr.bf16.mxu0 0
        %4471 = vmatpush1.bf16.msra.mxu0 %v4446
        %4472 = vmatprep.subr.bf16.mxu0 0
        %4473 = vmatpush1.bf16.msra.mxu0 %v4447
        %4474 = vmatprep.subr.bf16.mxu0 0
        %4475 = vmatpush1.bf16.msra.mxu0 %v4448
        %4476 = vmatprep.subr.bf16.mxu0 0
        %4477 = vmatpush1.bf16.msra.mxu0 %v4449
        %4478 = vmatprep.subr.bf16.mxu0 0
        %4479 = vmatpush1.bf16.msra.mxu0 %v4450
        %4480 = vmatprep.subr.bf16.mxu0 0
        %4481 = vmatpush1.bf16.msra.mxu0 %v4451
        %4482 = vmatprep.subr.bf16.mxu0 0
        %4483 = vmatpush1.bf16.msra.mxu0 %v4452
        %4484 = vmatprep.subr.bf16.mxu0 0
        %4485 = vmatpush1.bf16.msra.mxu0 %v4466
        %4486 = vmatprep.subr.bf16.mxu0 0
        %4487 = vmatpush1.bf16.msra.mxu0 0
        %4488 = vmatprep.subr.bf16.mxu0 0
        %4489 = vmatpush1.bf16.msra.mxu0 0
        %4490 = vmatprep.subr.bf16.mxu0 0
        %4491 = vmatpush1.bf16.msra.mxu0 0
        %4492 = vmatprep.subr.bf16.mxu0 0
        %4493 = vmatpush1.bf16.msra.mxu0 0
        %4494 = vmatprep.subr.bf16.mxu0 0
        %4495 = vmatpush1.bf16.msra.mxu0 0
        %4496 = vmatprep.subr.bf16.mxu0 0
        %4497 = vmatpush1.bf16.msra.mxu0 0
        %4498 = vmatprep.subr.bf16.mxu0 0
        %4499 = vmatpush1.bf16.msra.mxu0 0
        %4500 = vmatprep.mubr.bf16.mxu0 %v4463
        %4501 = vmatmul.mubr.bf16.gmra.mrb[0].mxu0 %v4406
        %v4502 = vpop.f32.mrb[0].mxu0
        %v4503 = vadd.f32 0.0, %v4502
        %v4504 = vpop.f32.mrb[0].mxu0
        %v4505 = vpop.f32.mrb[0].mxu0
        %v4506 = vpop.f32.mrb[0].mxu0
        %4507 = vdwg.mxu0
        %v4508 = vadd.f32 %v4206, %v4503
        %s4509 = scalar_lea.vmem [#allocation4], 7
        %v4510 = vld [vmem:[%s4509] ss:$8 sm:$0x3]
        %s4511 = scalar_lea.vmem [#allocation4], 39
        %v4512 = vld [vmem:[%s4511] ss:$8 sm:$0x3]
        %s4513 = scalar_lea.vmem [#allocation4], 71
        %v4514 = vld [vmem:[%s4513] ss:$8 sm:$0x3]
        %s4515 = scalar_lea.vmem [#allocation4], 103
        %v4516 = vld [vmem:[%s4515] ss:$8 sm:$0x3]
        %s4517 = scalar_lea.vmem [#allocation4], 135
        %v4518 = vld [vmem:[%s4517] ss:$8 sm:$0x3]
        %s4519 = scalar_lea.vmem [#allocation4], 167
        %v4520 = vld [vmem:[%s4519] ss:$8 sm:$0x3]
        %s4521 = scalar_lea.vmem [#allocation4], 199
        %v4522 = vld [vmem:[%s4521] ss:$8 sm:$0x3]
        %s4523 = scalar_lea.vmem [#allocation4], 231
        %v4524 = vld [vmem:[%s4523] ss:$8 sm:$0x3]
        %v4533 = vlaneseq
        %v4534 = vshrl.u32 %v4533, 7
        %v4535 = vsub.s32 0, %v4534
        %v4536 = vrot.slane %v4510, %v4535
        %v4537 = vlaneseq
        %v4538 = vshrl.u32 %v4537, 7
        %v4539 = vsub.s32 1, %v4538
        %v4540 = vrot.slane %v4510, %v4539
        %v4541 = vlaneseq
        %v4542 = vshrl.u32 %v4541, 7
        %v4543 = vsub.s32 0, %v4542
        %v4544 = vrot.slane %v4512, %v4543
        %v4545 = vlaneseq
        %v4546 = vshrl.u32 %v4545, 7
        %v4547 = vsub.s32 1, %v4546
        %v4548 = vrot.slane %v4512, %v4547
        %v4549 = vlaneseq
        %v4550 = vshrl.u32 %v4549, 7
        %v4551 = vsub.s32 0, %v4550
        %v4552 = vrot.slane %v4514, %v4551
        %v4553 = vlaneseq
        %v4554 = vshrl.u32 %v4553, 7
        %v4555 = vsub.s32 1, %v4554
        %v4556 = vrot.slane %v4514, %v4555
        %v4557 = vlaneseq
        %v4558 = vshrl.u32 %v4557, 7
        %v4559 = vsub.s32 0, %v4558
        %v4560 = vrot.slane %v4516, %v4559
        %v4561 = vlaneseq
        %v4562 = vshrl.u32 %v4561, 7
        %v4563 = vsub.s32 1, %v4562
        %v4564 = vrot.slane %v4516, %v4563
        %v4565 = vlaneseq
        %v4566 = vshrl.u32 %v4565, 7
        %v4567 = vsub.s32 0, %v4566
        %v4568 = vrot.slane %v4518, %v4567
        %v4569 = vlaneseq
        %v4570 = vshrl.u32 %v4569, 7
        %v4571 = vsub.s32 1, %v4570
        %v4572 = vrot.slane %v4518, %v4571
        %v4573 = vlaneseq
        %v4574 = vshrl.u32 %v4573, 7
        %v4575 = vsub.s32 0, %v4574
        %v4576 = vrot.slane %v4520, %v4575
        %v4577 = vlaneseq
        %v4578 = vshrl.u32 %v4577, 7
        %v4579 = vsub.s32 1, %v4578
        %v4580 = vrot.slane %v4520, %v4579
        %v4581 = vlaneseq
        %v4582 = vshrl.u32 %v4581, 7
        %v4583 = vsub.s32 0, %v4582
        %v4584 = vrot.slane %v4522, %v4583
        %v4585 = vlaneseq
        %v4586 = vshrl.u32 %v4585, 7
        %v4587 = vsub.s32 1, %v4586
        %v4588 = vrot.slane %v4522, %v4587
        %v4589 = vlaneseq
        %v4590 = vshrl.u32 %v4589, 7
        %v4591 = vsub.s32 0, %v4590
        %v4592 = vrot.slane %v4524, %v4591
        %v4593 = vlaneseq
        %v4594 = vshrl.u32 %v4593, 7
        %v4595 = vsub.s32 1, %v4594
        %v4596 = vrot.slane %v4524, %v4595
        %v4613 = vpack.c.bf16 %v4536, %v4536
        %v4614 = vpack.c.bf16 %v4540, %v4540
        %v4615 = vpack.c.bf16 %v4544, %v4544
        %v4616 = vpack.c.bf16 %v4548, %v4548
        %v4617 = vpack.c.bf16 %v4552, %v4552
        %v4618 = vpack.c.bf16 %v4556, %v4556
        %v4619 = vpack.c.bf16 %v4560, %v4560
        %v4620 = vpack.c.bf16 %v4564, %v4564
        %v4621 = vpack.c.bf16 %v4568, %v4568
        %v4622 = vpack.c.bf16 %v4572, %v4572
        %v4623 = vpack.c.bf16 %v4576, %v4576
        %v4624 = vpack.c.bf16 %v4580, %v4580
        %v4625 = vpack.c.bf16 %v4584, %v4584
        %v4626 = vpack.c.bf16 %v4588, %v4588
        %v4627 = vpack.c.bf16 %v4592, %v4592
        %v4628 = vpack.c.bf16 %v4596, %v4596
        %s4629 = scalar_lea.vmem %s6, 504
        %v4630 = vld [vmem:[%s4629] sm:$0xf]
        %v4631 = vld [vmem:[%s4629 + $0x4] sm:$0xf]
        %v4632 = vld [vmem:[%s4629 + $0x8] sm:$0xf]
        %v4633 = vld [vmem:[%s4629 + $0xc] sm:$0xf]
        %v4634 = vld [vmem:[%s4629 + $0x10] sm:$0xf]
        %v4635 = vld [vmem:[%s4629 + $0x14] sm:$0xf]
        %v4636 = vld [vmem:[%s4629 + $0x18] sm:$0xf]
        %v4637 = vld [vmem:[%s4629 + $0x1c] sm:$0xf]
        %v4638 = vld [vmem:[%s4629 + $0x20] sm:$0xf]
        %v4639 = vld [vmem:[%s4629 + $0x24] sm:$0xf]
        %v4640 = vld [vmem:[%s4629 + $0x28] sm:$0xf]
        %v4641 = vld [vmem:[%s4629 + $0x2c] sm:$0xf]
        %v4642 = vld [vmem:[%s4629 + $0x30] sm:$0xf]
        %v4643 = vld [vmem:[%s4629 + $0x34] sm:$0xf]
        %v4644 = vld [vmem:[%s4629 + $0x38] sm:$0xf]
        %v4645 = vld [vmem:[%s4629 + $0x3c] sm:$0xf]
        %v4646 = vld [vmem:[%s4629 + $0x40] sm:$0xf]
        %v4647 = vld [vmem:[%s4629 + $0x44] sm:$0x3]
        %v4664 = vunpack.c.l.b16 %v4613
        %v4665 = vunpack.c.l.b16 %v4614
        %v4666 = vunpack.c.l.b16 %v4615
        %v4667 = vunpack.c.l.b16 %v4616
        %v4668 = vunpack.c.l.b16 %v4617
        %v4669 = vunpack.c.l.b16 %v4618
        %v4670 = vunpack.c.l.b16 %v4619
        %v4671 = vunpack.c.l.b16 %v4620
        %v4672 = vunpack.c.l.b16 %v4621
        %v4673 = vunpack.c.l.b16 %v4622
        %v4674 = vunpack.c.l.b16 %v4623
        %v4675 = vunpack.c.l.b16 %v4624
        %v4676 = vunpack.c.l.b16 %v4625
        %v4677 = vunpack.c.l.b16 %v4626
        %v4678 = vunpack.c.l.b16 %v4627
        %v4679 = vunpack.c.l.b16 %v4628
        %v4680 = vrot.slane %v4666, 7
        %v4681 = vsel %vm2700, %v4680, %v4664
        %v4682 = vrot.slane %v4668, 6
        %v4683 = vsel %vm2703, %v4682, %v4681
        %v4684 = vrot.slane %v4670, 5
        %v4685 = vsel %vm2706, %v4684, %v4683
        %v4686 = vrot.slane %v4672, 4
        %v4687 = vsel %vm2709, %v4686, %v4685
        %v4688 = vrot.slane %v4674, 3
        %v4689 = vsel %vm2712, %v4688, %v4687
        %v4690 = vrot.slane %v4676, 2
        %v4691 = vsel %vm2715, %v4690, %v4689
        %v4692 = vrot.slane %v4678, 1
        %v4693 = vsel %vm2718, %v4692, %v4691
        %v4694 = vrot.slane %v4667, 7
        %v4695 = vsel %vm2700, %v4694, %v4665
        %v4696 = vrot.slane %v4669, 6
        %v4697 = vsel %vm2703, %v4696, %v4695
        %v4698 = vrot.slane %v4671, 5
        %v4699 = vsel %vm2706, %v4698, %v4697
        %v4700 = vrot.slane %v4673, 4
        %v4701 = vsel %vm2709, %v4700, %v4699
        %v4702 = vrot.slane %v4675, 3
        %v4703 = vsel %vm2712, %v4702, %v4701
        %v4704 = vrot.slane %v4677, 2
        %v4705 = vsel %vm2715, %v4704, %v4703
        %v4706 = vrot.slane %v4679, 1
        %v4707 = vsel %vm2718, %v4706, %v4705
        %v4708 = vpack.c.b16 %v4693, %v4693
        %v4709 = vpack.c.b16 %v4707, %v4707
        %v4729 = vunpack.c.l.b16 %v4630
        %v4730 = vunpack.c.l.b16 %v4631
        %v4731 = vunpack.c.l.b16 %v4632
        %v4732 = vunpack.c.l.b16 %v4633
        %v4733 = vunpack.c.l.b16 %v4634
        %v4734 = vunpack.c.l.b16 %v4635
        %v4735 = vunpack.c.l.b16 %v4636
        %v4736 = vunpack.c.l.b16 %v4637
        %v4737 = vunpack.c.l.b16 %v4638
        %v4738 = vunpack.c.l.b16 %v4639
        %v4739 = vunpack.c.l.b16 %v4640
        %v4740 = vunpack.c.l.b16 %v4641
        %v4741 = vunpack.c.l.b16 %v4642
        %v4742 = vunpack.c.l.b16 %v4643
        %v4743 = vunpack.c.l.b16 %v4644
        %v4744 = vunpack.c.l.b16 %v4645
        %v4745 = vunpack.c.l.b16 %v4646
        %v4746 = vunpack.c.l.b16 %v4647
        %v4747 = vpack.c.b16 %v4730, %v4729
        %v4748 = vpack.c.b16 %v4732, %v4731
        %v4749 = vpack.c.b16 %v4734, %v4733
        %v4750 = vpack.c.b16 %v4736, %v4735
        %v4751 = vpack.c.b16 %v4738, %v4737
        %v4752 = vpack.c.b16 %v4740, %v4739
        %v4753 = vpack.c.b16 %v4742, %v4741
        %v4754 = vpack.c.b16 %v4744, %v4743
        %v4755 = vpack.c.b16 %v4746, %v4745
        %v4765 = vsel %vm2790, %v4709, 0
        %v4768 = vsel %vm1771, %v4755, 0
        %4770 = vmatprep.subr.bf16.mxu0 0
        %4771 = vmatpush1.bf16.msra.mxu0 %v4747
        %4772 = vmatprep.subr.bf16.mxu0 0
        %4773 = vmatpush1.bf16.msra.mxu0 %v4748
        %4774 = vmatprep.subr.bf16.mxu0 0
        %4775 = vmatpush1.bf16.msra.mxu0 %v4749
        %4776 = vmatprep.subr.bf16.mxu0 0
        %4777 = vmatpush1.bf16.msra.mxu0 %v4750
        %4778 = vmatprep.subr.bf16.mxu0 0
        %4779 = vmatpush1.bf16.msra.mxu0 %v4751
        %4780 = vmatprep.subr.bf16.mxu0 0
        %4781 = vmatpush1.bf16.msra.mxu0 %v4752
        %4782 = vmatprep.subr.bf16.mxu0 0
        %4783 = vmatpush1.bf16.msra.mxu0 %v4753
        %4784 = vmatprep.subr.bf16.mxu0 0
        %4785 = vmatpush1.bf16.msra.mxu0 %v4754
        %4786 = vmatprep.subr.bf16.mxu0 0
        %4787 = vmatpush1.bf16.msra.mxu0 %v4768
        %4788 = vmatprep.subr.bf16.mxu0 0
        %4789 = vmatpush1.bf16.msra.mxu0 0
        %4790 = vmatprep.subr.bf16.mxu0 0
        %4791 = vmatpush1.bf16.msra.mxu0 0
        %4792 = vmatprep.subr.bf16.mxu0 0
        %4793 = vmatpush1.bf16.msra.mxu0 0
        %4794 = vmatprep.subr.bf16.mxu0 0
        %4795 = vmatpush1.bf16.msra.mxu0 0
        %4796 = vmatprep.subr.bf16.mxu0 0
        %4797 = vmatpush1.bf16.msra.mxu0 0
        %4798 = vmatprep.subr.bf16.mxu0 0
        %4799 = vmatpush1.bf16.msra.mxu0 0
        %4800 = vmatprep.subr.bf16.mxu0 0
        %4801 = vmatpush1.bf16.msra.mxu0 0
        %4802 = vmatprep.mubr.bf16.mxu0 %v4765
        %4803 = vmatmul.mubr.bf16.gmra.mrb[0].mxu0 %v4708
        %v4804 = vpop.f32.mrb[0].mxu0
        %v4805 = vadd.f32 0.0, %v4804
        %v4806 = vpop.f32.mrb[0].mxu0
        %v4807 = vpop.f32.mrb[0].mxu0
        %v4808 = vpop.f32.mrb[0].mxu0
        %4809 = vdwg.mxu0
        %v4810 = vadd.f32 %v4508, %v4805
        %s4811 = scalar_lea.vmem [#allocation4], 16
        %v4812 = vld [vmem:[%s4811] ss:$8 sm:$0x3]
        %s4813 = scalar_lea.vmem [#allocation4], 48
        %v4814 = vld [vmem:[%s4813] ss:$8 sm:$0x3]
        %s4815 = scalar_lea.vmem [#allocation4], 80
        %v4816 = vld [vmem:[%s4815] ss:$8 sm:$0x3]
        %s4817 = scalar_lea.vmem [#allocation4], 112
        %v4818 = vld [vmem:[%s4817] ss:$8 sm:$0x3]
        %s4819 = scalar_lea.vmem [#allocation4], 144
        %v4820 = vld [vmem:[%s4819] ss:$8 sm:$0x3]
        %s4821 = scalar_lea.vmem [#allocation4], 176
        %v4822 = vld [vmem:[%s4821] ss:$8 sm:$0x3]
        %s4823 = scalar_lea.vmem [#allocation4], 208
        %v4824 = vld [vmem:[%s4823] ss:$8 sm:$0x3]
        %s4825 = scalar_lea.vmem [#allocation4], 240
        %v4826 = vld [vmem:[%s4825] ss:$8 sm:$0x3]
        %v4835 = vlaneseq
        %v4836 = vshrl.u32 %v4835, 7
        %v4837 = vsub.s32 0, %v4836
        %v4838 = vrot.slane %v4812, %v4837
        %v4839 = vlaneseq
        %v4840 = vshrl.u32 %v4839, 7
        %v4841 = vsub.s32 1, %v4840
        %v4842 = vrot.slane %v4812, %v4841
        %v4843 = vlaneseq
        %v4844 = vshrl.u32 %v4843, 7
        %v4845 = vsub.s32 0, %v4844
        %v4846 = vrot.slane %v4814, %v4845
        %v4847 = vlaneseq
        %v4848 = vshrl.u32 %v4847, 7
        %v4849 = vsub.s32 1, %v4848
        %v4850 = vrot.slane %v4814, %v4849
        %v4851 = vlaneseq
        %v4852 = vshrl.u32 %v4851, 7
        %v4853 = vsub.s32 0, %v4852
        %v4854 = vrot.slane %v4816, %v4853
        %v4855 = vlaneseq
        %v4856 = vshrl.u32 %v4855, 7
        %v4857 = vsub.s32 1, %v4856
        %v4858 = vrot.slane %v4816, %v4857
        %v4859 = vlaneseq
        %v4860 = vshrl.u32 %v4859, 7
        %v4861 = vsub.s32 0, %v4860
        %v4862 = vrot.slane %v4818, %v4861
        %v4863 = vlaneseq
        %v4864 = vshrl.u32 %v4863, 7
        %v4865 = vsub.s32 1, %v4864
        %v4866 = vrot.slane %v4818, %v4865
        %v4867 = vlaneseq
        %v4868 = vshrl.u32 %v4867, 7
        %v4869 = vsub.s32 0, %v4868
        %v4870 = vrot.slane %v4820, %v4869
        %v4871 = vlaneseq
        %v4872 = vshrl.u32 %v4871, 7
        %v4873 = vsub.s32 1, %v4872
        %v4874 = vrot.slane %v4820, %v4873
        %v4875 = vlaneseq
        %v4876 = vshrl.u32 %v4875, 7
        %v4877 = vsub.s32 0, %v4876
        %v4878 = vrot.slane %v4822, %v4877
        %v4879 = vlaneseq
        %v4880 = vshrl.u32 %v4879, 7
        %v4881 = vsub.s32 1, %v4880
        %v4882 = vrot.slane %v4822, %v4881
        %v4883 = vlaneseq
        %v4884 = vshrl.u32 %v4883, 7
        %v4885 = vsub.s32 0, %v4884
        %v4886 = vrot.slane %v4824, %v4885
        %v4887 = vlaneseq
        %v4888 = vshrl.u32 %v4887, 7
        %v4889 = vsub.s32 1, %v4888
        %v4890 = vrot.slane %v4824, %v4889
        %v4891 = vlaneseq
        %v4892 = vshrl.u32 %v4891, 7
        %v4893 = vsub.s32 0, %v4892
        %v4894 = vrot.slane %v4826, %v4893
        %v4895 = vlaneseq
        %v4896 = vshrl.u32 %v4895, 7
        %v4897 = vsub.s32 1, %v4896
        %v4898 = vrot.slane %v4826, %v4897
        %v4915 = vpack.c.bf16 %v4838, %v4838
        %v4916 = vpack.c.bf16 %v4842, %v4842
        %v4917 = vpack.c.bf16 %v4846, %v4846
        %v4918 = vpack.c.bf16 %v4850, %v4850
        %v4919 = vpack.c.bf16 %v4854, %v4854
        %v4920 = vpack.c.bf16 %v4858, %v4858
        %v4921 = vpack.c.bf16 %v4862, %v4862
        %v4922 = vpack.c.bf16 %v4866, %v4866
        %v4923 = vpack.c.bf16 %v4870, %v4870
        %v4924 = vpack.c.bf16 %v4874, %v4874
        %v4925 = vpack.c.bf16 %v4878, %v4878
        %v4926 = vpack.c.bf16 %v4882, %v4882
        %v4927 = vpack.c.bf16 %v4886, %v4886
        %v4928 = vpack.c.bf16 %v4890, %v4890
        %v4929 = vpack.c.bf16 %v4894, %v4894
        %v4930 = vpack.c.bf16 %v4898, %v4898
        %s4931 = scalar_lea.vmem %s6, 576
        %v4932 = vld [vmem:[%s4931] sm:$0xf]
        %v4933 = vld [vmem:[%s4931 + $0x4] sm:$0xf]
        %v4934 = vld [vmem:[%s4931 + $0x8] sm:$0xf]
        %v4935 = vld [vmem:[%s4931 + $0xc] sm:$0xf]
        %v4936 = vld [vmem:[%s4931 + $0x10] sm:$0xf]
        %v4937 = vld [vmem:[%s4931 + $0x14] sm:$0xf]
        %v4938 = vld [vmem:[%s4931 + $0x18] sm:$0xf]
        %v4939 = vld [vmem:[%s4931 + $0x1c] sm:$0xf]
        %v4940 = vld [vmem:[%s4931 + $0x20] sm:$0xf]
        %v4941 = vld [vmem:[%s4931 + $0x24] sm:$0xf]
        %v4942 = vld [vmem:[%s4931 + $0x28] sm:$0xf]
        %v4943 = vld [vmem:[%s4931 + $0x2c] sm:$0xf]
        %v4944 = vld [vmem:[%s4931 + $0x30] sm:$0xf]
        %v4945 = vld [vmem:[%s4931 + $0x34] sm:$0xf]
        %v4946 = vld [vmem:[%s4931 + $0x38] sm:$0xf]
        %v4947 = vld [vmem:[%s4931 + $0x3c] sm:$0xf]
        %v4948 = vld [vmem:[%s4931 + $0x40] sm:$0xf]
        %v4949 = vld [vmem:[%s4931 + $0x44] sm:$0x3]
        %v4966 = vunpack.c.l.b16 %v4915
        %v4967 = vunpack.c.l.b16 %v4916
        %v4968 = vunpack.c.l.b16 %v4917
        %v4969 = vunpack.c.l.b16 %v4918
        %v4970 = vunpack.c.l.b16 %v4919
        %v4971 = vunpack.c.l.b16 %v4920
        %v4972 = vunpack.c.l.b16 %v4921
        %v4973 = vunpack.c.l.b16 %v4922
        %v4974 = vunpack.c.l.b16 %v4923
        %v4975 = vunpack.c.l.b16 %v4924
        %v4976 = vunpack.c.l.b16 %v4925
        %v4977 = vunpack.c.l.b16 %v4926
        %v4978 = vunpack.c.l.b16 %v4927
        %v4979 = vunpack.c.l.b16 %v4928
        %v4980 = vunpack.c.l.b16 %v4929
        %v4981 = vunpack.c.l.b16 %v4930
        %v4982 = vrot.slane %v4968, 7
        %v4983 = vsel %vm2700, %v4982, %v4966
        %v4984 = vrot.slane %v4970, 6
        %v4985 = vsel %vm2703, %v4984, %v4983
        %v4986 = vrot.slane %v4972, 5
        %v4987 = vsel %vm2706, %v4986, %v4985
        %v4988 = vrot.slane %v4974, 4
        %v4989 = vsel %vm2709, %v4988, %v4987
        %v4990 = vrot.slane %v4976, 3
        %v4991 = vsel %vm2712, %v4990, %v4989
        %v4992 = vrot.slane %v4978, 2
        %v4993 = vsel %vm2715, %v4992, %v4991
        %v4994 = vrot.slane %v4980, 1
        %v4995 = vsel %vm2718, %v4994, %v4993
        %v4996 = vrot.slane %v4969, 7
        %v4997 = vsel %vm2700, %v4996, %v4967
        %v4998 = vrot.slane %v4971, 6
        %v4999 = vsel %vm2703, %v4998, %v4997
        %v5000 = vrot.slane %v4973, 5
        %v5001 = vsel %vm2706, %v5000, %v4999
        %v5002 = vrot.slane %v4975, 4
        %v5003 = vsel %vm2709, %v5002, %v5001
        %v5004 = vrot.slane %v4977, 3
        %v5005 = vsel %vm2712, %v5004, %v5003
        %v5006 = vrot.slane %v4979, 2
        %v5007 = vsel %vm2715, %v5006, %v5005
        %v5008 = vrot.slane %v4981, 1
        %v5009 = vsel %vm2718, %v5008, %v5007
        %v5010 = vpack.c.b16 %v4995, %v4995
        %v5011 = vpack.c.b16 %v5009, %v5009
        %v5031 = vunpack.c.l.b16 %v4932
        %v5032 = vunpack.c.l.b16 %v4933
        %v5033 = vunpack.c.l.b16 %v4934
        %v5034 = vunpack.c.l.b16 %v4935
        %v5035 = vunpack.c.l.b16 %v4936
        %v5036 = vunpack.c.l.b16 %v4937
        %v5037 = vunpack.c.l.b16 %v4938
        %v5038 = vunpack.c.l.b16 %v4939
        %v5039 = vunpack.c.l.b16 %v4940
        %v5040 = vunpack.c.l.b16 %v4941
        %v5041 = vunpack.c.l.b16 %v4942
        %v5042 = vunpack.c.l.b16 %v4943
        %v5043 = vunpack.c.l.b16 %v4944
        %v5044 = vunpack.c.l.b16 %v4945
        %v5045 = vunpack.c.l.b16 %v4946
        %v5046 = vunpack.c.l.b16 %v4947
        %v5047 = vunpack.c.l.b16 %v4948
        %v5048 = vunpack.c.l.b16 %v4949
        %v5049 = vpack.c.b16 %v5032, %v5031
        %v5050 = vpack.c.b16 %v5034, %v5033
        %v5051 = vpack.c.b16 %v5036, %v5035
        %v5052 = vpack.c.b16 %v5038, %v5037
        %v5053 = vpack.c.b16 %v5040, %v5039
        %v5054 = vpack.c.b16 %v5042, %v5041
        %v5055 = vpack.c.b16 %v5044, %v5043
        %v5056 = vpack.c.b16 %v5046, %v5045
        %v5057 = vpack.c.b16 %v5048, %v5047
        %v5067 = vsel %vm2790, %v5011, 0
        %v5070 = vsel %vm1771, %v5057, 0
        %5072 = vmatprep.subr.bf16.mxu0 0
        %5073 = vmatpush1.bf16.msra.mxu0 %v5049
        %5074 = vmatprep.subr.bf16.mxu0 0
        %5075 = vmatpush1.bf16.msra.mxu0 %v5050
        %5076 = vmatprep.subr.bf16.mxu0 0
        %5077 = vmatpush1.bf16.msra.mxu0 %v5051
        %5078 = vmatprep.subr.bf16.mxu0 0
        %5079 = vmatpush1.bf16.msra.mxu0 %v5052
        %5080 = vmatprep.subr.bf16.mxu0 0
        %5081 = vmatpush1.bf16.msra.mxu0 %v5053
        %5082 = vmatprep.subr.bf16.mxu0 0
        %5083 = vmatpush1.bf16.msra.mxu0 %v5054
        %5084 = vmatprep.subr.bf16.mxu0 0
        %5085 = vmatpush1.bf16.msra.mxu0 %v5055
        %5086 = vmatprep.subr.bf16.mxu0 0
        %5087 = vmatpush1.bf16.msra.mxu0 %v5056
        %5088 = vmatprep.subr.bf16.mxu0 0
        %5089 = vmatpush1.bf16.msra.mxu0 %v5070
        %5090 = vmatprep.subr.bf16.mxu0 0
        %5091 = vmatpush1.bf16.msra.mxu0 0
        %5092 = vmatprep.subr.bf16.mxu0 0
        %5093 = vmatpush1.bf16.msra.mxu0 0
        %5094 = vmatprep.subr.bf16.mxu0 0
        %5095 = vmatpush1.bf16.msra.mxu0 0
        %5096 = vmatprep.subr.bf16.mxu0 0
        %5097 = vmatpush1.bf16.msra.mxu0 0
        %5098 = vmatprep.subr.bf16.mxu0 0
        %5099 = vmatpush1.bf16.msra.mxu0 0
        %5100 = vmatprep.subr.bf16.mxu0 0
        %5101 = vmatpush1.bf16.msra.mxu0 0
        %5102 = vmatprep.subr.bf16.mxu0 0
        %5103 = vmatpush1.bf16.msra.mxu0 0
        %5104 = vmatprep.mubr.bf16.mxu0 %v5067
        %5105 = vmatmul.mubr.bf16.gmra.mrb[0].mxu0 %v5010
        %v5106 = vpop.f32.mrb[0].mxu0
        %v5107 = vadd.f32 0.0, %v5106
        %v5108 = vpop.f32.mrb[0].mxu0
        %v5109 = vpop.f32.mrb[0].mxu0
        %v5110 = vpop.f32.mrb[0].mxu0
        %5111 = vdwg.mxu0
        %v5112 = vadd.f32 %v4810, %v5107
        %s5113 = scalar_lea.vmem [#allocation4], 17
        %v5114 = vld [vmem:[%s5113] ss:$8 sm:$0x3]
        %s5115 = scalar_lea.vmem [#allocation4], 49
        %v5116 = vld [vmem:[%s5115] ss:$8 sm:$0x3]
        %s5117 = scalar_lea.vmem [#allocation4], 81
        %v5118 = vld [vmem:[%s5117] ss:$8 sm:$0x3]
        %s5119 = scalar_lea.vmem [#allocation4], 113
        %v5120 = vld [vmem:[%s5119] ss:$8 sm:$0x3]
        %s5121 = scalar_lea.vmem [#allocation4], 145
        %v5122 = vld [vmem:[%s5121] ss:$8 sm:$0x3]
        %s5123 = scalar_lea.vmem [#allocation4], 177
        %v5124 = vld [vmem:[%s5123] ss:$8 sm:$0x3]
        %s5125 = scalar_lea.vmem [#allocation4], 209
        %v5126 = vld [vmem:[%s5125] ss:$8 sm:$0x3]
        %s5127 = scalar_lea.vmem [#allocation4], 241
        %v5128 = vld [vmem:[%s5127] ss:$8 sm:$0x3]
        %v5137 = vlaneseq
        %v5138 = vshrl.u32 %v5137, 7
        %v5139 = vsub.s32 0, %v5138
        %v5140 = vrot.slane %v5114, %v5139
        %v5141 = vlaneseq
        %v5142 = vshrl.u32 %v5141, 7
        %v5143 = vsub.s32 1, %v5142
        %v5144 = vrot.slane %v5114, %v5143
        %v5145 = vlaneseq
        %v5146 = vshrl.u32 %v5145, 7
        %v5147 = vsub.s32 0, %v5146
        %v5148 = vrot.slane %v5116, %v5147
        %v5149 = vlaneseq
        %v5150 = vshrl.u32 %v5149, 7
        %v5151 = vsub.s32 1, %v5150
        %v5152 = vrot.slane %v5116, %v5151
        %v5153 = vlaneseq
        %v5154 = vshrl.u32 %v5153, 7
        %v5155 = vsub.s32 0, %v5154
        %v5156 = vrot.slane %v5118, %v5155
        %v5157 = vlaneseq
        %v5158 = vshrl.u32 %v5157, 7
        %v5159 = vsub.s32 1, %v5158
        %v5160 = vrot.slane %v5118, %v5159
        %v5161 = vlaneseq
        %v5162 = vshrl.u32 %v5161, 7
        %v5163 = vsub.s32 0, %v5162
        %v5164 = vrot.slane %v5120, %v5163
        %v5165 = vlaneseq
        %v5166 = vshrl.u32 %v5165, 7
        %v5167 = vsub.s32 1, %v5166
        %v5168 = vrot.slane %v5120, %v5167
        %v5169 = vlaneseq
        %v5170 = vshrl.u32 %v5169, 7
        %v5171 = vsub.s32 0, %v5170
        %v5172 = vrot.slane %v5122, %v5171
        %v5173 = vlaneseq
        %v5174 = vshrl.u32 %v5173, 7
        %v5175 = vsub.s32 1, %v5174
        %v5176 = vrot.slane %v5122, %v5175
        %v5177 = vlaneseq
        %v5178 = vshrl.u32 %v5177, 7
        %v5179 = vsub.s32 0, %v5178
        %v5180 = vrot.slane %v5124, %v5179
        %v5181 = vlaneseq
        %v5182 = vshrl.u32 %v5181, 7
        %v5183 = vsub.s32 1, %v5182
        %v5184 = vrot.slane %v5124, %v5183
        %v5185 = vlaneseq
        %v5186 = vshrl.u32 %v5185, 7
        %v5187 = vsub.s32 0, %v5186
        %v5188 = vrot.slane %v5126, %v5187
        %v5189 = vlaneseq
        %v5190 = vshrl.u32 %v5189, 7
        %v5191 = vsub.s32 1, %v5190
        %v5192 = vrot.slane %v5126, %v5191
        %v5193 = vlaneseq
        %v5194 = vshrl.u32 %v5193, 7
        %v5195 = vsub.s32 0, %v5194
        %v5196 = vrot.slane %v5128, %v5195
        %v5197 = vlaneseq
        %v5198 = vshrl.u32 %v5197, 7
        %v5199 = vsub.s32 1, %v5198
        %v5200 = vrot.slane %v5128, %v5199
        %v5217 = vpack.c.bf16 %v5140, %v5140
        %v5218 = vpack.c.bf16 %v5144, %v5144
        %v5219 = vpack.c.bf16 %v5148, %v5148
        %v5220 = vpack.c.bf16 %v5152, %v5152
        %v5221 = vpack.c.bf16 %v5156, %v5156
        %v5222 = vpack.c.bf16 %v5160, %v5160
        %v5223 = vpack.c.bf16 %v5164, %v5164
        %v5224 = vpack.c.bf16 %v5168, %v5168
        %v5225 = vpack.c.bf16 %v5172, %v5172
        %v5226 = vpack.c.bf16 %v5176, %v5176
        %v5227 = vpack.c.bf16 %v5180, %v5180
        %v5228 = vpack.c.bf16 %v5184, %v5184
        %v5229 = vpack.c.bf16 %v5188, %v5188
        %v5230 = vpack.c.bf16 %v5192, %v5192
        %v5231 = vpack.c.bf16 %v5196, %v5196
        %v5232 = vpack.c.bf16 %v5200, %v5200
        %s5233 = scalar_lea.vmem %s6, 648
        %v5234 = vld [vmem:[%s5233] sm:$0xf]
        %v5235 = vld [vmem:[%s5233 + $0x4] sm:$0xf]
        %v5236 = vld [vmem:[%s5233 + $0x8] sm:$0xf]
        %v5237 = vld [vmem:[%s5233 + $0xc] sm:$0xf]
        %v5238 = vld [vmem:[%s5233 + $0x10] sm:$0xf]
        %v5239 = vld [vmem:[%s5233 + $0x14] sm:$0xf]
        %v5240 = vld [vmem:[%s5233 + $0x18] sm:$0xf]
        %v5241 = vld [vmem:[%s5233 + $0x1c] sm:$0xf]
        %v5242 = vld [vmem:[%s5233 + $0x20] sm:$0xf]
        %v5243 = vld [vmem:[%s5233 + $0x24] sm:$0xf]
        %v5244 = vld [vmem:[%s5233 + $0x28] sm:$0xf]
        %v5245 = vld [vmem:[%s5233 + $0x2c] sm:$0xf]
        %v5246 = vld [vmem:[%s5233 + $0x30] sm:$0xf]
        %v5247 = vld [vmem:[%s5233 + $0x34] sm:$0xf]
        %v5248 = vld [vmem:[%s5233 + $0x38] sm:$0xf]
        %v5249 = vld [vmem:[%s5233 + $0x3c] sm:$0xf]
        %v5250 = vld [vmem:[%s5233 + $0x40] sm:$0xf]
        %v5251 = vld [vmem:[%s5233 + $0x44] sm:$0x3]
        %v5268 = vunpack.c.l.b16 %v5217
        %v5269 = vunpack.c.l.b16 %v5218
        %v5270 = vunpack.c.l.b16 %v5219
        %v5271 = vunpack.c.l.b16 %v5220
        %v5272 = vunpack.c.l.b16 %v5221
        %v5273 = vunpack.c.l.b16 %v5222
        %v5274 = vunpack.c.l.b16 %v5223
        %v5275 = vunpack.c.l.b16 %v5224
        %v5276 = vunpack.c.l.b16 %v5225
        %v5277 = vunpack.c.l.b16 %v5226
        %v5278 = vunpack.c.l.b16 %v5227
        %v5279 = vunpack.c.l.b16 %v5228
        %v5280 = vunpack.c.l.b16 %v5229
        %v5281 = vunpack.c.l.b16 %v5230
        %v5282 = vunpack.c.l.b16 %v5231
        %v5283 = vunpack.c.l.b16 %v5232
        %v5284 = vrot.slane %v5270, 7
        %v5285 = vsel %vm2700, %v5284, %v5268
        %v5286 = vrot.slane %v5272, 6
        %v5287 = vsel %vm2703, %v5286, %v5285
        %v5288 = vrot.slane %v5274, 5
        %v5289 = vsel %vm2706, %v5288, %v5287
        %v5290 = vrot.slane %v5276, 4
        %v5291 = vsel %vm2709, %v5290, %v5289
        %v5292 = vrot.slane %v5278, 3
        %v5293 = vsel %vm2712, %v5292, %v5291
        %v5294 = vrot.slane %v5280, 2
        %v5295 = vsel %vm2715, %v5294, %v5293
        %v5296 = vrot.slane %v5282, 1
        %v5297 = vsel %vm2718, %v5296, %v5295
        %v5298 = vrot.slane %v5271, 7
        %v5299 = vsel %vm2700, %v5298, %v5269
        %v5300 = vrot.slane %v5273, 6
        %v5301 = vsel %vm2703, %v5300, %v5299
        %v5302 = vrot.slane %v5275, 5
        %v5303 = vsel %vm2706, %v5302, %v5301
        %v5304 = vrot.slane %v5277, 4
        %v5305 = vsel %vm2709, %v5304, %v5303
        %v5306 = vrot.slane %v5279, 3
        %v5307 = vsel %vm2712, %v5306, %v5305
        %v5308 = vrot.slane %v5281, 2
        %v5309 = vsel %vm2715, %v5308, %v5307
        %v5310 = vrot.slane %v5283, 1
        %v5311 = vsel %vm2718, %v5310, %v5309
        %v5312 = vpack.c.b16 %v5297, %v5297
        %v5313 = vpack.c.b16 %v5311, %v5311
        %v5333 = vunpack.c.l.b16 %v5234
        %v5334 = vunpack.c.l.b16 %v5235
        %v5335 = vunpack.c.l.b16 %v5236
        %v5336 = vunpack.c.l.b16 %v5237
        %v5337 = vunpack.c.l.b16 %v5238
        %v5338 = vunpack.c.l.b16 %v5239
        %v5339 = vunpack.c.l.b16 %v5240
        %v5340 = vunpack.c.l.b16 %v5241
        %v5341 = vunpack.c.l.b16 %v5242
        %v5342 = vunpack.c.l.b16 %v5243
        %v5343 = vunpack.c.l.b16 %v5244
        %v5344 = vunpack.c.l.b16 %v5245
        %v5345 = vunpack.c.l.b16 %v5246
        %v5346 = vunpack.c.l.b16 %v5247
        %v5347 = vunpack.c.l.b16 %v5248
        %v5348 = vunpack.c.l.b16 %v5249
        %v5349 = vunpack.c.l.b16 %v5250
        %v5350 = vunpack.c.l.b16 %v5251
        %v5351 = vpack.c.b16 %v5334, %v5333
        %v5352 = vpack.c.b16 %v5336, %v5335
        %v5353 = vpack.c.b16 %v5338, %v5337
        %v5354 = vpack.c.b16 %v5340, %v5339
        %v5355 = vpack.c.b16 %v5342, %v5341
        %v5356 = vpack.c.b16 %v5344, %v5343
        %v5357 = vpack.c.b16 %v5346, %v5345
        %v5358 = vpack.c.b16 %v5348, %v5347
        %v5359 = vpack.c.b16 %v5350, %v5349
        %v5369 = vsel %vm2790, %v5313, 0
        %v5372 = vsel %vm1771, %v5359, 0
        %5374 = vmatprep.subr.bf16.mxu0 0
        %5375 = vmatpush1.bf16.msra.mxu0 %v5351
        %5376 = vmatprep.subr.bf16.mxu0 0
        %5377 = vmatpush1.bf16.msra.mxu0 %v5352
        %5378 = vmatprep.subr.bf16.mxu0 0
        %5379 = vmatpush1.bf16.msra.mxu0 %v5353
        %5380 = vmatprep.subr.bf16.mxu0 0
        %5381 = vmatpush1.bf16.msra.mxu0 %v5354
        %5382 = vmatprep.subr.bf16.mxu0 0
        %5383 = vmatpush1.bf16.msra.mxu0 %v5355
        %5384 = vmatprep.subr.bf16.mxu0 0
        %5385 = vmatpush1.bf16.msra.mxu0 %v5356
        %5386 = vmatprep.subr.bf16.mxu0 0
        %5387 = vmatpush1.bf16.msra.mxu0 %v5357
        %5388 = vmatprep.subr.bf16.mxu0 0
        %5389 = vmatpush1.bf16.msra.mxu0 %v5358
        %5390 = vmatprep.subr.bf16.mxu0 0
        %5391 = vmatpush1.bf16.msra.mxu0 %v5372
        %5392 = vmatprep.subr.bf16.mxu0 0
        %5393 = vmatpush1.bf16.msra.mxu0 0
        %5394 = vmatprep.subr.bf16.mxu0 0
        %5395 = vmatpush1.bf16.msra.mxu0 0
        %5396 = vmatprep.subr.bf16.mxu0 0
        %5397 = vmatpush1.bf16.msra.mxu0 0
        %5398 = vmatprep.subr.bf16.mxu0 0
        %5399 = vmatpush1.bf16.msra.mxu0 0
        %5400 = vmatprep.subr.bf16.mxu0 0
        %5401 = vmatpush1.bf16.msra.mxu0 0
        %5402 = vmatprep.subr.bf16.mxu0 0
        %5403 = vmatpush1.bf16.msra.mxu0 0
        %5404 = vmatprep.subr.bf16.mxu0 0
        %5405 = vmatpush1.bf16.msra.mxu0 0
        %5406 = vmatprep.mubr.bf16.mxu0 %v5369
        %5407 = vmatmul.mubr.bf16.gmra.mrb[0].mxu0 %v5312
        %v5408 = vpop.f32.mrb[0].mxu0
        %v5409 = vadd.f32 0.0, %v5408
        %v5410 = vpop.f32.mrb[0].mxu0
        %v5411 = vpop.f32.mrb[0].mxu0
        %v5412 = vpop.f32.mrb[0].mxu0
        %5413 = vdwg.mxu0
        %v5414 = vadd.f32 %v5112, %v5409
        %s5415 = scalar_lea.vmem [#allocation4], 18
        %v5416 = vld [vmem:[%s5415] ss:$8 sm:$0x3]
        %s5417 = scalar_lea.vmem [#allocation4], 50
        %v5418 = vld [vmem:[%s5417] ss:$8 sm:$0x3]
        %s5419 = scalar_lea.vmem [#allocation4], 82
        %v5420 = vld [vmem:[%s5419] ss:$8 sm:$0x3]
        %s5421 = scalar_lea.vmem [#allocation4], 114
        %v5422 = vld [vmem:[%s5421] ss:$8 sm:$0x3]
        %s5423 = scalar_lea.vmem [#allocation4], 146
        %v5424 = vld [vmem:[%s5423] ss:$8 sm:$0x3]
        %s5425 = scalar_lea.vmem [#allocation4], 178
        %v5426 = vld [vmem:[%s5425] ss:$8 sm:$0x3]
        %s5427 = scalar_lea.vmem [#allocation4], 210
        %v5428 = vld [vmem:[%s5427] ss:$8 sm:$0x3]
        %s5429 = scalar_lea.vmem [#allocation4], 242
        %v5430 = vld [vmem:[%s5429] ss:$8 sm:$0x3]
        %v5439 = vlaneseq
        %v5440 = vshrl.u32 %v5439, 7
        %v5441 = vsub.s32 0, %v5440
        %v5442 = vrot.slane %v5416, %v5441
        %v5443 = vlaneseq
        %v5444 = vshrl.u32 %v5443, 7
        %v5445 = vsub.s32 1, %v5444
        %v5446 = vrot.slane %v5416, %v5445
        %v5447 = vlaneseq
        %v5448 = vshrl.u32 %v5447, 7
        %v5449 = vsub.s32 0, %v5448
        %v5450 = vrot.slane %v5418, %v5449
        %v5451 = vlaneseq
        %v5452 = vshrl.u32 %v5451, 7
        %v5453 = vsub.s32 1, %v5452
        %v5454 = vrot.slane %v5418, %v5453
        %v5455 = vlaneseq
        %v5456 = vshrl.u32 %v5455, 7
        %v5457 = vsub.s32 0, %v5456
        %v5458 = vrot.slane %v5420, %v5457
        %v5459 = vlaneseq
        %v5460 = vshrl.u32 %v5459, 7
        %v5461 = vsub.s32 1, %v5460
        %v5462 = vrot.slane %v5420, %v5461
        %v5463 = vlaneseq
        %v5464 = vshrl.u32 %v5463, 7
        %v5465 = vsub.s32 0, %v5464
        %v5466 = vrot.slane %v5422, %v5465
        %v5467 = vlaneseq
        %v5468 = vshrl.u32 %v5467, 7
        %v5469 = vsub.s32 1, %v5468
        %v5470 = vrot.slane %v5422, %v5469
        %v5471 = vlaneseq
        %v5472 = vshrl.u32 %v5471, 7
        %v5473 = vsub.s32 0, %v5472
        %v5474 = vrot.slane %v5424, %v5473
        %v5475 = vlaneseq
        %v5476 = vshrl.u32 %v5475, 7
        %v5477 = vsub.s32 1, %v5476
        %v5478 = vrot.slane %v5424, %v5477
        %v5479 = vlaneseq
        %v5480 = vshrl.u32 %v5479, 7
        %v5481 = vsub.s32 0, %v5480
        %v5482 = vrot.slane %v5426, %v5481
        %v5483 = vlaneseq
        %v5484 = vshrl.u32 %v5483, 7
        %v5485 = vsub.s32 1, %v5484
        %v5486 = vrot.slane %v5426, %v5485
        %v5487 = vlaneseq
        %v5488 = vshrl.u32 %v5487, 7
        %v5489 = vsub.s32 0, %v5488
        %v5490 = vrot.slane %v5428, %v5489
        %v5491 = vlaneseq
        %v5492 = vshrl.u32 %v5491, 7
        %v5493 = vsub.s32 1, %v5492
        %v5494 = vrot.slane %v5428, %v5493
        %v5495 = vlaneseq
        %v5496 = vshrl.u32 %v5495, 7
        %v5497 = vsub.s32 0, %v5496
        %v5498 = vrot.slane %v5430, %v5497
        %v5499 = vlaneseq
        %v5500 = vshrl.u32 %v5499, 7
        %v5501 = vsub.s32 1, %v5500
        %v5502 = vrot.slane %v5430, %v5501
        %v5519 = vpack.c.bf16 %v5442, %v5442
        %v5520 = vpack.c.bf16 %v5446, %v5446
        %v5521 = vpack.c.bf16 %v5450, %v5450
        %v5522 = vpack.c.bf16 %v5454, %v5454
        %v5523 = vpack.c.bf16 %v5458, %v5458
        %v5524 = vpack.c.bf16 %v5462, %v5462
        %v5525 = vpack.c.bf16 %v5466, %v5466
        %v5526 = vpack.c.bf16 %v5470, %v5470
        %v5527 = vpack.c.bf16 %v5474, %v5474
        %v5528 = vpack.c.bf16 %v5478, %v5478
        %v5529 = vpack.c.bf16 %v5482, %v5482
        %v5530 = vpack.c.bf16 %v5486, %v5486
        %v5531 = vpack.c.bf16 %v5490, %v5490
        %v5532 = vpack.c.bf16 %v5494, %v5494
        %v5533 = vpack.c.bf16 %v5498, %v5498
        %v5534 = vpack.c.bf16 %v5502, %v5502
        %s5535 = scalar_lea.vmem %s6, 720
        %v5536 = vld [vmem:[%s5535] sm:$0xf]
        %v5537 = vld [vmem:[%s5535 + $0x4] sm:$0xf]
        %v5538 = vld [vmem:[%s5535 + $0x8] sm:$0xf]
        %v5539 = vld [vmem:[%s5535 + $0xc] sm:$0xf]
        %v5540 = vld [vmem:[%s5535 + $0x10] sm:$0xf]
        %v5541 = vld [vmem:[%s5535 + $0x14] sm:$0xf]
        %v5542 = vld [vmem:[%s5535 + $0x18] sm:$0xf]
        %v5543 = vld [vmem:[%s5535 + $0x1c] sm:$0xf]
        %v5544 = vld [vmem:[%s5535 + $0x20] sm:$0xf]
        %v5545 = vld [vmem:[%s5535 + $0x24] sm:$0xf]
        %v5546 = vld [vmem:[%s5535 + $0x28] sm:$0xf]
        %v5547 = vld [vmem:[%s5535 + $0x2c] sm:$0xf]
        %v5548 = vld [vmem:[%s5535 + $0x30] sm:$0xf]
        %v5549 = vld [vmem:[%s5535 + $0x34] sm:$0xf]
        %v5550 = vld [vmem:[%s5535 + $0x38] sm:$0xf]
        %v5551 = vld [vmem:[%s5535 + $0x3c] sm:$0xf]
        %v5552 = vld [vmem:[%s5535 + $0x40] sm:$0xf]
        %v5553 = vld [vmem:[%s5535 + $0x44] sm:$0x3]
        %v5570 = vunpack.c.l.b16 %v5519
        %v5571 = vunpack.c.l.b16 %v5520
        %v5572 = vunpack.c.l.b16 %v5521
        %v5573 = vunpack.c.l.b16 %v5522
        %v5574 = vunpack.c.l.b16 %v5523
        %v5575 = vunpack.c.l.b16 %v5524
        %v5576 = vunpack.c.l.b16 %v5525
        %v5577 = vunpack.c.l.b16 %v5526
        %v5578 = vunpack.c.l.b16 %v5527
        %v5579 = vunpack.c.l.b16 %v5528
        %v5580 = vunpack.c.l.b16 %v5529
        %v5581 = vunpack.c.l.b16 %v5530
        %v5582 = vunpack.c.l.b16 %v5531
        %v5583 = vunpack.c.l.b16 %v5532
        %v5584 = vunpack.c.l.b16 %v5533
        %v5585 = vunpack.c.l.b16 %v5534
        %v5586 = vrot.slane %v5572, 7
        %v5587 = vsel %vm2700, %v5586, %v5570
        %v5588 = vrot.slane %v5574, 6
        %v5589 = vsel %vm2703, %v5588, %v5587
        %v5590 = vrot.slane %v5576, 5
        %v5591 = vsel %vm2706, %v5590, %v5589
        %v5592 = vrot.slane %v5578, 4
        %v5593 = vsel %vm2709, %v5592, %v5591
        %v5594 = vrot.slane %v5580, 3
        %v5595 = vsel %vm2712, %v5594, %v5593
        %v5596 = vrot.slane %v5582, 2
        %v5597 = vsel %vm2715, %v5596, %v5595
        %v5598 = vrot.slane %v5584, 1
        %v5599 = vsel %vm2718, %v5598, %v5597
        %v5600 = vrot.slane %v5573, 7
        %v5601 = vsel %vm2700, %v5600, %v5571
        %v5602 = vrot.slane %v5575, 6
        %v5603 = vsel %vm2703, %v5602, %v5601
        %v5604 = vrot.slane %v5577, 5
        %v5605 = vsel %vm2706, %v5604, %v5603
        %v5606 = vrot.slane %v5579, 4
        %v5607 = vsel %vm2709, %v5606, %v5605
        %v5608 = vrot.slane %v5581, 3
        %v5609 = vsel %vm2712, %v5608, %v5607
        %v5610 = vrot.slane %v5583, 2
        %v5611 = vsel %vm2715, %v5610, %v5609
        %v5612 = vrot.slane %v5585, 1
        %v5613 = vsel %vm2718, %v5612, %v5611
        %v5614 = vpack.c.b16 %v5599, %v5599
        %v5615 = vpack.c.b16 %v5613, %v5613
        %v5635 = vunpack.c.l.b16 %v5536
        %v5636 = vunpack.c.l.b16 %v5537
        %v5637 = vunpack.c.l.b16 %v5538
        %v5638 = vunpack.c.l.b16 %v5539
        %v5639 = vunpack.c.l.b16 %v5540
        %v5640 = vunpack.c.l.b16 %v5541
        %v5641 = vunpack.c.l.b16 %v5542
        %v5642 = vunpack.c.l.b16 %v5543
        %v5643 = vunpack.c.l.b16 %v5544
        %v5644 = vunpack.c.l.b16 %v5545
        %v5645 = vunpack.c.l.b16 %v5546
        %v5646 = vunpack.c.l.b16 %v5547
        %v5647 = vunpack.c.l.b16 %v5548
        %v5648 = vunpack.c.l.b16 %v5549
        %v5649 = vunpack.c.l.b16 %v5550
        %v5650 = vunpack.c.l.b16 %v5551
        %v5651 = vunpack.c.l.b16 %v5552
        %v5652 = vunpack.c.l.b16 %v5553
        %v5653 = vpack.c.b16 %v5636, %v5635
        %v5654 = vpack.c.b16 %v5638, %v5637
        %v5655 = vpack.c.b16 %v5640, %v5639
        %v5656 = vpack.c.b16 %v5642, %v5641
        %v5657 = vpack.c.b16 %v5644, %v5643
        %v5658 = vpack.c.b16 %v5646, %v5645
        %v5659 = vpack.c.b16 %v5648, %v5647
        %v5660 = vpack.c.b16 %v5650, %v5649
        %v5661 = vpack.c.b16 %v5652, %v5651
        %v5671 = vsel %vm2790, %v5615, 0
        %v5674 = vsel %vm1771, %v5661, 0
        %5676 = vmatprep.subr.bf16.mxu0 0
        %5677 = vmatpush1.bf16.msra.mxu0 %v5653
        %5678 = vmatprep.subr.bf16.mxu0 0
        %5679 = vmatpush1.bf16.msra.mxu0 %v5654
        %5680 = vmatprep.subr.bf16.mxu0 0
        %5681 = vmatpush1.bf16.msra.mxu0 %v5655
        %5682 = vmatprep.subr.bf16.mxu0 0
        %5683 = vmatpush1.bf16.msra.mxu0 %v5656
        %5684 = vmatprep.subr.bf16.mxu0 0
        %5685 = vmatpush1.bf16.msra.mxu0 %v5657
        %5686 = vmatprep.subr.bf16.mxu0 0
        %5687 = vmatpush1.bf16.msra.mxu0 %v5658
        %5688 = vmatprep.subr.bf16.mxu0 0
        %5689 = vmatpush1.bf16.msra.mxu0 %v5659
        %5690 = vmatprep.subr.bf16.mxu0 0
        %5691 = vmatpush1.bf16.msra.mxu0 %v5660
        %5692 = vmatprep.subr.bf16.mxu0 0
        %5693 = vmatpush1.bf16.msra.mxu0 %v5674
        %5694 = vmatprep.subr.bf16.mxu0 0
        %5695 = vmatpush1.bf16.msra.mxu0 0
        %5696 = vmatprep.subr.bf16.mxu0 0
        %5697 = vmatpush1.bf16.msra.mxu0 0
        %5698 = vmatprep.subr.bf16.mxu0 0
        %5699 = vmatpush1.bf16.msra.mxu0 0
        %5700 = vmatprep.subr.bf16.mxu0 0
        %5701 = vmatpush1.bf16.msra.mxu0 0
        %5702 = vmatprep.subr.bf16.mxu0 0
        %5703 = vmatpush1.bf16.msra.mxu0 0
        %5704 = vmatprep.subr.bf16.mxu0 0
        %5705 = vmatpush1.bf16.msra.mxu0 0
        %5706 = vmatprep.subr.bf16.mxu0 0
        %5707 = vmatpush1.bf16.msra.mxu0 0
        %5708 = vmatprep.mubr.bf16.mxu0 %v5671
        %5709 = vmatmul.mubr.bf16.gmra.mrb[0].mxu0 %v5614
        %v5710 = vpop.f32.mrb[0].mxu0
        %v5711 = vadd.f32 0.0, %v5710
        %v5712 = vpop.f32.mrb[0].mxu0
        %v5713 = vpop.f32.mrb[0].mxu0
        %v5714 = vpop.f32.mrb[0].mxu0
        %5715 = vdwg.mxu0
        %v5716 = vadd.f32 %v5414, %v5711
        %s5717 = scalar_lea.vmem [#allocation4], 19
        %v5718 = vld [vmem:[%s5717] ss:$8 sm:$0x3]
        %s5719 = scalar_lea.vmem [#allocation4], 51
        %v5720 = vld [vmem:[%s5719] ss:$8 sm:$0x3]
        %s5721 = scalar_lea.vmem [#allocation4], 83
        %v5722 = vld [vmem:[%s5721] ss:$8 sm:$0x3]
        %s5723 = scalar_lea.vmem [#allocation4], 115
        %v5724 = vld [vmem:[%s5723] ss:$8 sm:$0x3]
        %s5725 = scalar_lea.vmem [#allocation4], 147
        %v5726 = vld [vmem:[%s5725] ss:$8 sm:$0x3]
        %s5727 = scalar_lea.vmem [#allocation4], 179
        %v5728 = vld [vmem:[%s5727] ss:$8 sm:$0x3]
        %s5729 = scalar_lea.vmem [#allocation4], 211
        %v5730 = vld [vmem:[%s5729] ss:$8 sm:$0x3]
        %s5731 = scalar_lea.vmem [#allocation4], 243
        %v5732 = vld [vmem:[%s5731] ss:$8 sm:$0x3]
        %v5741 = vlaneseq
        %v5742 = vshrl.u32 %v5741, 7
        %v5743 = vsub.s32 0, %v5742
        %v5744 = vrot.slane %v5718, %v5743
        %v5745 = vlaneseq
        %v5746 = vshrl.u32 %v5745, 7
        %v5747 = vsub.s32 1, %v5746
        %v5748 = vrot.slane %v5718, %v5747
        %v5749 = vlaneseq
        %v5750 = vshrl.u32 %v5749, 7
        %v5751 = vsub.s32 0, %v5750
        %v5752 = vrot.slane %v5720, %v5751
        %v5753 = vlaneseq
        %v5754 = vshrl.u32 %v5753, 7
        %v5755 = vsub.s32 1, %v5754
        %v5756 = vrot.slane %v5720, %v5755
        %v5757 = vlaneseq
        %v5758 = vshrl.u32 %v5757, 7
        %v5759 = vsub.s32 0, %v5758
        %v5760 = vrot.slane %v5722, %v5759
        %v5761 = vlaneseq
        %v5762 = vshrl.u32 %v5761, 7
        %v5763 = vsub.s32 1, %v5762
        %v5764 = vrot.slane %v5722, %v5763
        %v5765 = vlaneseq
        %v5766 = vshrl.u32 %v5765, 7
        %v5767 = vsub.s32 0, %v5766
        %v5768 = vrot.slane %v5724, %v5767
        %v5769 = vlaneseq
        %v5770 = vshrl.u32 %v5769, 7
        %v5771 = vsub.s32 1, %v5770
        %v5772 = vrot.slane %v5724, %v5771
        %v5773 = vlaneseq
        %v5774 = vshrl.u32 %v5773, 7
        %v5775 = vsub.s32 0, %v5774
        %v5776 = vrot.slane %v5726, %v5775
        %v5777 = vlaneseq
        %v5778 = vshrl.u32 %v5777, 7
        %v5779 = vsub.s32 1, %v5778
        %v5780 = vrot.slane %v5726, %v5779
        %v5781 = vlaneseq
        %v5782 = vshrl.u32 %v5781, 7
        %v5783 = vsub.s32 0, %v5782
        %v5784 = vrot.slane %v5728, %v5783
        %v5785 = vlaneseq
        %v5786 = vshrl.u32 %v5785, 7
        %v5787 = vsub.s32 1, %v5786
        %v5788 = vrot.slane %v5728, %v5787
        %v5789 = vlaneseq
        %v5790 = vshrl.u32 %v5789, 7
        %v5791 = vsub.s32 0, %v5790
        %v5792 = vrot.slane %v5730, %v5791
        %v5793 = vlaneseq
        %v5794 = vshrl.u32 %v5793, 7
        %v5795 = vsub.s32 1, %v5794
        %v5796 = vrot.slane %v5730, %v5795
        %v5797 = vlaneseq
        %v5798 = vshrl.u32 %v5797, 7
        %v5799 = vsub.s32 0, %v5798
        %v5800 = vrot.slane %v5732, %v5799
        %v5801 = vlaneseq
        %v5802 = vshrl.u32 %v5801, 7
        %v5803 = vsub.s32 1, %v5802
        %v5804 = vrot.slane %v5732, %v5803
        %v5821 = vpack.c.bf16 %v5744, %v5744
        %v5822 = vpack.c.bf16 %v5748, %v5748
        %v5823 = vpack.c.bf16 %v5752, %v5752
        %v5824 = vpack.c.bf16 %v5756, %v5756
        %v5825 = vpack.c.bf16 %v5760, %v5760
        %v5826 = vpack.c.bf16 %v5764, %v5764
        %v5827 = vpack.c.bf16 %v5768, %v5768
        %v5828 = vpack.c.bf16 %v5772, %v5772
        %v5829 = vpack.c.bf16 %v5776, %v5776
        %v5830 = vpack.c.bf16 %v5780, %v5780
        %v5831 = vpack.c.bf16 %v5784, %v5784
        %v5832 = vpack.c.bf16 %v5788, %v5788
        %v5833 = vpack.c.bf16 %v5792, %v5792
        %v5834 = vpack.c.bf16 %v5796, %v5796
        %v5835 = vpack.c.bf16 %v5800, %v5800
        %v5836 = vpack.c.bf16 %v5804, %v5804
        %s5837 = scalar_lea.vmem %s6, 792
        %v5838 = vld [vmem:[%s5837] sm:$0xf]
        %v5839 = vld [vmem:[%s5837 + $0x4] sm:$0xf]
        %v5840 = vld [vmem:[%s5837 + $0x8] sm:$0xf]
        %v5841 = vld [vmem:[%s5837 + $0xc] sm:$0xf]
        %v5842 = vld [vmem:[%s5837 + $0x10] sm:$0xf]
        %v5843 = vld [vmem:[%s5837 + $0x14] sm:$0xf]
        %v5844 = vld [vmem:[%s5837 + $0x18] sm:$0xf]
        %v5845 = vld [vmem:[%s5837 + $0x1c] sm:$0xf]
        %v5846 = vld [vmem:[%s5837 + $0x20] sm:$0xf]
        %v5847 = vld [vmem:[%s5837 + $0x24] sm:$0xf]
        %v5848 = vld [vmem:[%s5837 + $0x28] sm:$0xf]
        %v5849 = vld [vmem:[%s5837 + $0x2c] sm:$0xf]
        %v5850 = vld [vmem:[%s5837 + $0x30] sm:$0xf]
        %v5851 = vld [vmem:[%s5837 + $0x34] sm:$0xf]
        %v5852 = vld [vmem:[%s5837 + $0x38] sm:$0xf]
        %v5853 = vld [vmem:[%s5837 + $0x3c] sm:$0xf]
        %v5854 = vld [vmem:[%s5837 + $0x40] sm:$0xf]
        %v5855 = vld [vmem:[%s5837 + $0x44] sm:$0x3]
        %v5872 = vunpack.c.l.b16 %v5821
        %v5873 = vunpack.c.l.b16 %v5822
        %v5874 = vunpack.c.l.b16 %v5823
        %v5875 = vunpack.c.l.b16 %v5824
        %v5876 = vunpack.c.l.b16 %v5825
        %v5877 = vunpack.c.l.b16 %v5826
        %v5878 = vunpack.c.l.b16 %v5827
        %v5879 = vunpack.c.l.b16 %v5828
        %v5880 = vunpack.c.l.b16 %v5829
        %v5881 = vunpack.c.l.b16 %v5830
        %v5882 = vunpack.c.l.b16 %v5831
        %v5883 = vunpack.c.l.b16 %v5832
        %v5884 = vunpack.c.l.b16 %v5833
        %v5885 = vunpack.c.l.b16 %v5834
        %v5886 = vunpack.c.l.b16 %v5835
        %v5887 = vunpack.c.l.b16 %v5836
        %v5888 = vrot.slane %v5874, 7
        %v5889 = vsel %vm2700, %v5888, %v5872
        %v5890 = vrot.slane %v5876, 6
        %v5891 = vsel %vm2703, %v5890, %v5889
        %v5892 = vrot.slane %v5878, 5
        %v5893 = vsel %vm2706, %v5892, %v5891
        %v5894 = vrot.slane %v5880, 4
        %v5895 = vsel %vm2709, %v5894, %v5893
        %v5896 = vrot.slane %v5882, 3
        %v5897 = vsel %vm2712, %v5896, %v5895
        %v5898 = vrot.slane %v5884, 2
        %v5899 = vsel %vm2715, %v5898, %v5897
        %v5900 = vrot.slane %v5886, 1
        %v5901 = vsel %vm2718, %v5900, %v5899
        %v5902 = vrot.slane %v5875, 7
        %v5903 = vsel %vm2700, %v5902, %v5873
        %v5904 = vrot.slane %v5877, 6
        %v5905 = vsel %vm2703, %v5904, %v5903
        %v5906 = vrot.slane %v5879, 5
        %v5907 = vsel %vm2706, %v5906, %v5905
        %v5908 = vrot.slane %v5881, 4
        %v5909 = vsel %vm2709, %v5908, %v5907
        %v5910 = vrot.slane %v5883, 3
        %v5911 = vsel %vm2712, %v5910, %v5909
        %v5912 = vrot.slane %v5885, 2
        %v5913 = vsel %vm2715, %v5912, %v5911
        %v5914 = vrot.slane %v5887, 1
        %v5915 = vsel %vm2718, %v5914, %v5913
        %v5916 = vpack.c.b16 %v5901, %v5901
        %v5917 = vpack.c.b16 %v5915, %v5915
        %v5937 = vunpack.c.l.b16 %v5838
        %v5938 = vunpack.c.l.b16 %v5839
        %v5939 = vunpack.c.l.b16 %v5840
        %v5940 = vunpack.c.l.b16 %v5841
        %v5941 = vunpack.c.l.b16 %v5842
        %v5942 = vunpack.c.l.b16 %v5843
        %v5943 = vunpack.c.l.b16 %v5844
        %v5944 = vunpack.c.l.b16 %v5845
        %v5945 = vunpack.c.l.b16 %v5846
        %v5946 = vunpack.c.l.b16 %v5847
        %v5947 = vunpack.c.l.b16 %v5848
        %v5948 = vunpack.c.l.b16 %v5849
        %v5949 = vunpack.c.l.b16 %v5850
        %v5950 = vunpack.c.l.b16 %v5851
        %v5951 = vunpack.c.l.b16 %v5852
        %v5952 = vunpack.c.l.b16 %v5853
        %v5953 = vunpack.c.l.b16 %v5854
        %v5954 = vunpack.c.l.b16 %v5855
        %v5955 = vpack.c.b16 %v5938, %v5937
        %v5956 = vpack.c.b16 %v5940, %v5939
        %v5957 = vpack.c.b16 %v5942, %v5941
        %v5958 = vpack.c.b16 %v5944, %v5943
        %v5959 = vpack.c.b16 %v5946, %v5945
        %v5960 = vpack.c.b16 %v5948, %v5947
        %v5961 = vpack.c.b16 %v5950, %v5949
        %v5962 = vpack.c.b16 %v5952, %v5951
        %v5963 = vpack.c.b16 %v5954, %v5953
        %v5973 = vsel %vm2790, %v5917, 0
        %v5976 = vsel %vm1771, %v5963, 0
        %5978 = vmatprep.subr.bf16.mxu0 0
        %5979 = vmatpush1.bf16.msra.mxu0 %v5955
        %5980 = vmatprep.subr.bf16.mxu0 0
        %5981 = vmatpush1.bf16.msra.mxu0 %v5956
        %5982 = vmatprep.subr.bf16.mxu0 0
        %5983 = vmatpush1.bf16.msra.mxu0 %v5957
        %5984 = vmatprep.subr.bf16.mxu0 0
        %5985 = vmatpush1.bf16.msra.mxu0 %v5958
        %5986 = vmatprep.subr.bf16.mxu0 0
        %5987 = vmatpush1.bf16.msra.mxu0 %v5959
        %5988 = vmatprep.subr.bf16.mxu0 0
        %5989 = vmatpush1.bf16.msra.mxu0 %v5960
        %5990 = vmatprep.subr.bf16.mxu0 0
        %5991 = vmatpush1.bf16.msra.mxu0 %v5961
        %5992 = vmatprep.subr.bf16.mxu0 0
        %5993 = vmatpush1.bf16.msra.mxu0 %v5962
        %5994 = vmatprep.subr.bf16.mxu0 0
        %5995 = vmatpush1.bf16.msra.mxu0 %v5976
        %5996 = vmatprep.subr.bf16.mxu0 0
        %5997 = vmatpush1.bf16.msra.mxu0 0
        %5998 = vmatprep.subr.bf16.mxu0 0
        %5999 = vmatpush1.bf16.msra.mxu0 0
        %6000 = vmatprep.subr.bf16.mxu0 0
        %6001 = vmatpush1.bf16.msra.mxu0 0
        %6002 = vmatprep.subr.bf16.mxu0 0
        %6003 = vmatpush1.bf16.msra.mxu0 0
        %6004 = vmatprep.subr.bf16.mxu0 0
        %6005 = vmatpush1.bf16.msra.mxu0 0
        %6006 = vmatprep.subr.bf16.mxu0 0
        %6007 = vmatpush1.bf16.msra.mxu0 0
        %6008 = vmatprep.subr.bf16.mxu0 0
        %6009 = vmatpush1.bf16.msra.mxu0 0
        %6010 = vmatprep.mubr.bf16.mxu0 %v5973
        %6011 = vmatmul.mubr.bf16.gmra.mrb[0].mxu0 %v5916
        %v6012 = vpop.f32.mrb[0].mxu0
        %v6013 = vadd.f32 0.0, %v6012
        %v6014 = vpop.f32.mrb[0].mxu0
        %v6015 = vpop.f32.mrb[0].mxu0
        %v6016 = vpop.f32.mrb[0].mxu0
        %6017 = vdwg.mxu0
        %v6018 = vadd.f32 %v5716, %v6013
        %s6019 = scalar_lea.vmem [#allocation4], 20
        %v6020 = vld [vmem:[%s6019] ss:$8 sm:$0x3]
        %s6021 = scalar_lea.vmem [#allocation4], 52
        %v6022 = vld [vmem:[%s6021] ss:$8 sm:$0x3]
        %s6023 = scalar_lea.vmem [#allocation4], 84
        %v6024 = vld [vmem:[%s6023] ss:$8 sm:$0x3]
        %s6025 = scalar_lea.vmem [#allocation4], 116
        %v6026 = vld [vmem:[%s6025] ss:$8 sm:$0x3]
        %s6027 = scalar_lea.vmem [#allocation4], 148
        %v6028 = vld [vmem:[%s6027] ss:$8 sm:$0x3]
        %s6029 = scalar_lea.vmem [#allocation4], 180
        %v6030 = vld [vmem:[%s6029] ss:$8 sm:$0x3]
        %s6031 = scalar_lea.vmem [#allocation4], 212
        %v6032 = vld [vmem:[%s6031] ss:$8 sm:$0x3]
        %s6033 = scalar_lea.vmem [#allocation4], 244
        %v6034 = vld [vmem:[%s6033] ss:$8 sm:$0x3]
        %v6043 = vlaneseq
        %v6044 = vshrl.u32 %v6043, 7
        %v6045 = vsub.s32 0, %v6044
        %v6046 = vrot.slane %v6020, %v6045
        %v6047 = vlaneseq
        %v6048 = vshrl.u32 %v6047, 7
        %v6049 = vsub.s32 1, %v6048
        %v6050 = vrot.slane %v6020, %v6049
        %v6051 = vlaneseq
        %v6052 = vshrl.u32 %v6051, 7
        %v6053 = vsub.s32 0, %v6052
        %v6054 = vrot.slane %v6022, %v6053
        %v6055 = vlaneseq
        %v6056 = vshrl.u32 %v6055, 7
        %v6057 = vsub.s32 1, %v6056
        %v6058 = vrot.slane %v6022, %v6057
        %v6059 = vlaneseq
        %v6060 = vshrl.u32 %v6059, 7
        %v6061 = vsub.s32 0, %v6060
        %v6062 = vrot.slane %v6024, %v6061
        %v6063 = vlaneseq
        %v6064 = vshrl.u32 %v6063, 7
        %v6065 = vsub.s32 1, %v6064
        %v6066 = vrot.slane %v6024, %v6065
        %v6067 = vlaneseq
        %v6068 = vshrl.u32 %v6067, 7
        %v6069 = vsub.s32 0, %v6068
        %v6070 = vrot.slane %v6026, %v6069
        %v6071 = vlaneseq
        %v6072 = vshrl.u32 %v6071, 7
        %v6073 = vsub.s32 1, %v6072
        %v6074 = vrot.slane %v6026, %v6073
        %v6075 = vlaneseq
        %v6076 = vshrl.u32 %v6075, 7
        %v6077 = vsub.s32 0, %v6076
        %v6078 = vrot.slane %v6028, %v6077
        %v6079 = vlaneseq
        %v6080 = vshrl.u32 %v6079, 7
        %v6081 = vsub.s32 1, %v6080
        %v6082 = vrot.slane %v6028, %v6081
        %v6083 = vlaneseq
        %v6084 = vshrl.u32 %v6083, 7
        %v6085 = vsub.s32 0, %v6084
        %v6086 = vrot.slane %v6030, %v6085
        %v6087 = vlaneseq
        %v6088 = vshrl.u32 %v6087, 7
        %v6089 = vsub.s32 1, %v6088
        %v6090 = vrot.slane %v6030, %v6089
        %v6091 = vlaneseq
        %v6092 = vshrl.u32 %v6091, 7
        %v6093 = vsub.s32 0, %v6092
        %v6094 = vrot.slane %v6032, %v6093
        %v6095 = vlaneseq
        %v6096 = vshrl.u32 %v6095, 7
        %v6097 = vsub.s32 1, %v6096
        %v6098 = vrot.slane %v6032, %v6097
        %v6099 = vlaneseq
        %v6100 = vshrl.u32 %v6099, 7
        %v6101 = vsub.s32 0, %v6100
        %v6102 = vrot.slane %v6034, %v6101
        %v6103 = vlaneseq
        %v6104 = vshrl.u32 %v6103, 7
        %v6105 = vsub.s32 1, %v6104
        %v6106 = vrot.slane %v6034, %v6105
        %v6123 = vpack.c.bf16 %v6046, %v6046
        %v6124 = vpack.c.bf16 %v6050, %v6050
        %v6125 = vpack.c.bf16 %v6054, %v6054
        %v6126 = vpack.c.bf16 %v6058, %v6058
        %v6127 = vpack.c.bf16 %v6062, %v6062
        %v6128 = vpack.c.bf16 %v6066, %v6066
        %v6129 = vpack.c.bf16 %v6070, %v6070
        %v6130 = vpack.c.bf16 %v6074, %v6074
        %v6131 = vpack.c.bf16 %v6078, %v6078
        %v6132 = vpack.c.bf16 %v6082, %v6082
        %v6133 = vpack.c.bf16 %v6086, %v6086
        %v6134 = vpack.c.bf16 %v6090, %v6090
        %v6135 = vpack.c.bf16 %v6094, %v6094
        %v6136 = vpack.c.bf16 %v6098, %v6098
        %v6137 = vpack.c.bf16 %v6102, %v6102
        %v6138 = vpack.c.bf16 %v6106, %v6106
        %s6139 = scalar_lea.vmem %s6, 864
        %v6140 = vld [vmem:[%s6139] sm:$0xf]
        %v6141 = vld [vmem:[%s6139 + $0x4] sm:$0xf]
        %v6142 = vld [vmem:[%s6139 + $0x8] sm:$0xf]
        %v6143 = vld [vmem:[%s6139 + $0xc] sm:$0xf]
        %v6144 = vld [vmem:[%s6139 + $0x10] sm:$0xf]
        %v6145 = vld [vmem:[%s6139 + $0x14] sm:$0xf]
        %v6146 = vld [vmem:[%s6139 + $0x18] sm:$0xf]
        %v6147 = vld [vmem:[%s6139 + $0x1c] sm:$0xf]
        %v6148 = vld [vmem:[%s6139 + $0x20] sm:$0xf]
        %v6149 = vld [vmem:[%s6139 + $0x24] sm:$0xf]
        %v6150 = vld [vmem:[%s6139 + $0x28] sm:$0xf]
        %v6151 = vld [vmem:[%s6139 + $0x2c] sm:$0xf]
        %v6152 = vld [vmem:[%s6139 + $0x30] sm:$0xf]
        %v6153 = vld [vmem:[%s6139 + $0x34] sm:$0xf]
        %v6154 = vld [vmem:[%s6139 + $0x38] sm:$0xf]
        %v6155 = vld [vmem:[%s6139 + $0x3c] sm:$0xf]
        %v6156 = vld [vmem:[%s6139 + $0x40] sm:$0xf]
        %v6157 = vld [vmem:[%s6139 + $0x44] sm:$0x3]
        %v6174 = vunpack.c.l.b16 %v6123
        %v6175 = vunpack.c.l.b16 %v6124
        %v6176 = vunpack.c.l.b16 %v6125
        %v6177 = vunpack.c.l.b16 %v6126
        %v6178 = vunpack.c.l.b16 %v6127
        %v6179 = vunpack.c.l.b16 %v6128
        %v6180 = vunpack.c.l.b16 %v6129
        %v6181 = vunpack.c.l.b16 %v6130
        %v6182 = vunpack.c.l.b16 %v6131
        %v6183 = vunpack.c.l.b16 %v6132
        %v6184 = vunpack.c.l.b16 %v6133
        %v6185 = vunpack.c.l.b16 %v6134
        %v6186 = vunpack.c.l.b16 %v6135
        %v6187 = vunpack.c.l.b16 %v6136
        %v6188 = vunpack.c.l.b16 %v6137
        %v6189 = vunpack.c.l.b16 %v6138
        %v6190 = vrot.slane %v6176, 7
        %v6191 = vsel %vm2700, %v6190, %v6174
        %v6192 = vrot.slane %v6178, 6
        %v6193 = vsel %vm2703, %v6192, %v6191
        %v6194 = vrot.slane %v6180, 5
        %v6195 = vsel %vm2706, %v6194, %v6193
        %v6196 = vrot.slane %v6182, 4
        %v6197 = vsel %vm2709, %v6196, %v6195
        %v6198 = vrot.slane %v6184, 3
        %v6199 = vsel %vm2712, %v6198, %v6197
        %v6200 = vrot.slane %v6186, 2
        %v6201 = vsel %vm2715, %v6200, %v6199
        %v6202 = vrot.slane %v6188, 1
        %v6203 = vsel %vm2718, %v6202, %v6201
        %v6204 = vrot.slane %v6177, 7
        %v6205 = vsel %vm2700, %v6204, %v6175
        %v6206 = vrot.slane %v6179, 6
        %v6207 = vsel %vm2703, %v6206, %v6205
        %v6208 = vrot.slane %v6181, 5
        %v6209 = vsel %vm2706, %v6208, %v6207
        %v6210 = vrot.slane %v6183, 4
        %v6211 = vsel %vm2709, %v6210, %v6209
        %v6212 = vrot.slane %v6185, 3
        %v6213 = vsel %vm2712, %v6212, %v6211
        %v6214 = vrot.slane %v6187, 2
        %v6215 = vsel %vm2715, %v6214, %v6213
        %v6216 = vrot.slane %v6189, 1
        %v6217 = vsel %vm2718, %v6216, %v6215
        %v6218 = vpack.c.b16 %v6203, %v6203
        %v6219 = vpack.c.b16 %v6217, %v6217
        %v6239 = vunpack.c.l.b16 %v6140
        %v6240 = vunpack.c.l.b16 %v6141
        %v6241 = vunpack.c.l.b16 %v6142
        %v6242 = vunpack.c.l.b16 %v6143
        %v6243 = vunpack.c.l.b16 %v6144
        %v6244 = vunpack.c.l.b16 %v6145
        %v6245 = vunpack.c.l.b16 %v6146
        %v6246 = vunpack.c.l.b16 %v6147
        %v6247 = vunpack.c.l.b16 %v6148
        %v6248 = vunpack.c.l.b16 %v6149
        %v6249 = vunpack.c.l.b16 %v6150
        %v6250 = vunpack.c.l.b16 %v6151
        %v6251 = vunpack.c.l.b16 %v6152
        %v6252 = vunpack.c.l.b16 %v6153
        %v6253 = vunpack.c.l.b16 %v6154
        %v6254 = vunpack.c.l.b16 %v6155
        %v6255 = vunpack.c.l.b16 %v6156
        %v6256 = vunpack.c.l.b16 %v6157
        %v6257 = vpack.c.b16 %v6240, %v6239
        %v6258 = vpack.c.b16 %v6242, %v6241
        %v6259 = vpack.c.b16 %v6244, %v6243
        %v6260 = vpack.c.b16 %v6246, %v6245
        %v6261 = vpack.c.b16 %v6248, %v6247
        %v6262 = vpack.c.b16 %v6250, %v6249
        %v6263 = vpack.c.b16 %v6252, %v6251
        %v6264 = vpack.c.b16 %v6254, %v6253
        %v6265 = vpack.c.b16 %v6256, %v6255
        %v6275 = vsel %vm2790, %v6219, 0
        %v6278 = vsel %vm1771, %v6265, 0
        %6280 = vmatprep.subr.bf16.mxu0 0
        %6281 = vmatpush1.bf16.msra.mxu0 %v6257
        %6282 = vmatprep.subr.bf16.mxu0 0
        %6283 = vmatpush1.bf16.msra.mxu0 %v6258
        %6284 = vmatprep.subr.bf16.mxu0 0
        %6285 = vmatpush1.bf16.msra.mxu0 %v6259
        %6286 = vmatprep.subr.bf16.mxu0 0
        %6287 = vmatpush1.bf16.msra.mxu0 %v6260
        %6288 = vmatprep.subr.bf16.mxu0 0
        %6289 = vmatpush1.bf16.msra.mxu0 %v6261
        %6290 = vmatprep.subr.bf16.mxu0 0
        %6291 = vmatpush1.bf16.msra.mxu0 %v6262
        %6292 = vmatprep.subr.bf16.mxu0 0
        %6293 = vmatpush1.bf16.msra.mxu0 %v6263
        %6294 = vmatprep.subr.bf16.mxu0 0
        %6295 = vmatpush1.bf16.msra.mxu0 %v6264
        %6296 = vmatprep.subr.bf16.mxu0 0
        %6297 = vmatpush1.bf16.msra.mxu0 %v6278
        %6298 = vmatprep.subr.bf16.mxu0 0
        %6299 = vmatpush1.bf16.msra.mxu0 0
        %6300 = vmatprep.subr.bf16.mxu0 0
        %6301 = vmatpush1.bf16.msra.mxu0 0
        %6302 = vmatprep.subr.bf16.mxu0 0
        %6303 = vmatpush1.bf16.msra.mxu0 0
        %6304 = vmatprep.subr.bf16.mxu0 0
        %6305 = vmatpush1.bf16.msra.mxu0 0
        %6306 = vmatprep.subr.bf16.mxu0 0
        %6307 = vmatpush1.bf16.msra.mxu0 0
        %6308 = vmatprep.subr.bf16.mxu0 0
        %6309 = vmatpush1.bf16.msra.mxu0 0
        %6310 = vmatprep.subr.bf16.mxu0 0
        %6311 = vmatpush1.bf16.msra.mxu0 0
        %6312 = vmatprep.mubr.bf16.mxu0 %v6275
        %6313 = vmatmul.mubr.bf16.gmra.mrb[0].mxu0 %v6218
        %v6314 = vpop.f32.mrb[0].mxu0
        %v6315 = vadd.f32 0.0, %v6314
        %v6316 = vpop.f32.mrb[0].mxu0
        %v6317 = vpop.f32.mrb[0].mxu0
        %v6318 = vpop.f32.mrb[0].mxu0
        %6319 = vdwg.mxu0
        %v6320 = vadd.f32 %v6018, %v6315
        %s6321 = scalar_lea.vmem [#allocation4], 21
        %v6322 = vld [vmem:[%s6321] ss:$8 sm:$0x3]
        %s6323 = scalar_lea.vmem [#allocation4], 53
        %v6324 = vld [vmem:[%s6323] ss:$8 sm:$0x3]
        %s6325 = scalar_lea.vmem [#allocation4], 85
        %v6326 = vld [vmem:[%s6325] ss:$8 sm:$0x3]
        %s6327 = scalar_lea.vmem [#allocation4], 117
        %v6328 = vld [vmem:[%s6327] ss:$8 sm:$0x3]
        %s6329 = scalar_lea.vmem [#allocation4], 149
        %v6330 = vld [vmem:[%s6329] ss:$8 sm:$0x3]
        %s6331 = scalar_lea.vmem [#allocation4], 181
        %v6332 = vld [vmem:[%s6331] ss:$8 sm:$0x3]
        %s6333 = scalar_lea.vmem [#allocation4], 213
        %v6334 = vld [vmem:[%s6333] ss:$8 sm:$0x3]
        %s6335 = scalar_lea.vmem [#allocation4], 245
        %v6336 = vld [vmem:[%s6335] ss:$8 sm:$0x3]
        %v6345 = vlaneseq
        %v6346 = vshrl.u32 %v6345, 7
        %v6347 = vsub.s32 0, %v6346
        %v6348 = vrot.slane %v6322, %v6347
        %v6349 = vlaneseq
        %v6350 = vshrl.u32 %v6349, 7
        %v6351 = vsub.s32 1, %v6350
        %v6352 = vrot.slane %v6322, %v6351
        %v6353 = vlaneseq
        %v6354 = vshrl.u32 %v6353, 7
        %v6355 = vsub.s32 0, %v6354
        %v6356 = vrot.slane %v6324, %v6355
        %v6357 = vlaneseq
        %v6358 = vshrl.u32 %v6357, 7
        %v6359 = vsub.s32 1, %v6358
        %v6360 = vrot.slane %v6324, %v6359
        %v6361 = vlaneseq
        %v6362 = vshrl.u32 %v6361, 7
        %v6363 = vsub.s32 0, %v6362
        %v6364 = vrot.slane %v6326, %v6363
        %v6365 = vlaneseq
        %v6366 = vshrl.u32 %v6365, 7
        %v6367 = vsub.s32 1, %v6366
        %v6368 = vrot.slane %v6326, %v6367
        %v6369 = vlaneseq
        %v6370 = vshrl.u32 %v6369, 7
        %v6371 = vsub.s32 0, %v6370
        %v6372 = vrot.slane %v6328, %v6371
        %v6373 = vlaneseq
        %v6374 = vshrl.u32 %v6373, 7
        %v6375 = vsub.s32 1, %v6374
        %v6376 = vrot.slane %v6328, %v6375
        %v6377 = vlaneseq
        %v6378 = vshrl.u32 %v6377, 7
        %v6379 = vsub.s32 0, %v6378
        %v6380 = vrot.slane %v6330, %v6379
        %v6381 = vlaneseq
        %v6382 = vshrl.u32 %v6381, 7
        %v6383 = vsub.s32 1, %v6382
        %v6384 = vrot.slane %v6330, %v6383
        %v6385 = vlaneseq
        %v6386 = vshrl.u32 %v6385, 7
        %v6387 = vsub.s32 0, %v6386
        %v6388 = vrot.slane %v6332, %v6387
        %v6389 = vlaneseq
        %v6390 = vshrl.u32 %v6389, 7
        %v6391 = vsub.s32 1, %v6390
        %v6392 = vrot.slane %v6332, %v6391
        %v6393 = vlaneseq
        %v6394 = vshrl.u32 %v6393, 7
        %v6395 = vsub.s32 0, %v6394
        %v6396 = vrot.slane %v6334, %v6395
        %v6397 = vlaneseq
        %v6398 = vshrl.u32 %v6397, 7
        %v6399 = vsub.s32 1, %v6398
        %v6400 = vrot.slane %v6334, %v6399
        %v6401 = vlaneseq
        %v6402 = vshrl.u32 %v6401, 7
        %v6403 = vsub.s32 0, %v6402
        %v6404 = vrot.slane %v6336, %v6403
        %v6405 = vlaneseq
        %v6406 = vshrl.u32 %v6405, 7
        %v6407 = vsub.s32 1, %v6406
        %v6408 = vrot.slane %v6336, %v6407
        %v6425 = vpack.c.bf16 %v6348, %v6348
        %v6426 = vpack.c.bf16 %v6352, %v6352
        %v6427 = vpack.c.bf16 %v6356, %v6356
        %v6428 = vpack.c.bf16 %v6360, %v6360
        %v6429 = vpack.c.bf16 %v6364, %v6364
        %v6430 = vpack.c.bf16 %v6368, %v6368
        %v6431 = vpack.c.bf16 %v6372, %v6372
        %v6432 = vpack.c.bf16 %v6376, %v6376
        %v6433 = vpack.c.bf16 %v6380, %v6380
        %v6434 = vpack.c.bf16 %v6384, %v6384
        %v6435 = vpack.c.bf16 %v6388, %v6388
        %v6436 = vpack.c.bf16 %v6392, %v6392
        %v6437 = vpack.c.bf16 %v6396, %v6396
        %v6438 = vpack.c.bf16 %v6400, %v6400
        %v6439 = vpack.c.bf16 %v6404, %v6404
        %v6440 = vpack.c.bf16 %v6408, %v6408
        %s6441 = scalar_lea.vmem %s6, 936
        %v6442 = vld [vmem:[%s6441] sm:$0xf]
        %v6443 = vld [vmem:[%s6441 + $0x4] sm:$0xf]
        %v6444 = vld [vmem:[%s6441 + $0x8] sm:$0xf]
        %v6445 = vld [vmem:[%s6441 + $0xc] sm:$0xf]
        %v6446 = vld [vmem:[%s6441 + $0x10] sm:$0xf]
        %v6447 = vld [vmem:[%s6441 + $0x14] sm:$0xf]
        %v6448 = vld [vmem:[%s6441 + $0x18] sm:$0xf]
        %v6449 = vld [vmem:[%s6441 + $0x1c] sm:$0xf]
        %v6450 = vld [vmem:[%s6441 + $0x20] sm:$0xf]
        %v6451 = vld [vmem:[%s6441 + $0x24] sm:$0xf]
        %v6452 = vld [vmem:[%s6441 + $0x28] sm:$0xf]
        %v6453 = vld [vmem:[%s6441 + $0x2c] sm:$0xf]
        %v6454 = vld [vmem:[%s6441 + $0x30] sm:$0xf]
        %v6455 = vld [vmem:[%s6441 + $0x34] sm:$0xf]
        %v6456 = vld [vmem:[%s6441 + $0x38] sm:$0xf]
        %v6457 = vld [vmem:[%s6441 + $0x3c] sm:$0xf]
        %v6458 = vld [vmem:[%s6441 + $0x40] sm:$0xf]
        %v6459 = vld [vmem:[%s6441 + $0x44] sm:$0x3]
        %v6476 = vunpack.c.l.b16 %v6425
        %v6477 = vunpack.c.l.b16 %v6426
        %v6478 = vunpack.c.l.b16 %v6427
        %v6479 = vunpack.c.l.b16 %v6428
        %v6480 = vunpack.c.l.b16 %v6429
        %v6481 = vunpack.c.l.b16 %v6430
        %v6482 = vunpack.c.l.b16 %v6431
        %v6483 = vunpack.c.l.b16 %v6432
        %v6484 = vunpack.c.l.b16 %v6433
        %v6485 = vunpack.c.l.b16 %v6434
        %v6486 = vunpack.c.l.b16 %v6435
        %v6487 = vunpack.c.l.b16 %v6436
        %v6488 = vunpack.c.l.b16 %v6437
        %v6489 = vunpack.c.l.b16 %v6438
        %v6490 = vunpack.c.l.b16 %v6439
        %v6491 = vunpack.c.l.b16 %v6440
        %v6492 = vrot.slane %v6478, 7
        %v6493 = vsel %vm2700, %v6492, %v6476
        %v6494 = vrot.slane %v6480, 6
        %v6495 = vsel %vm2703, %v6494, %v6493
        %v6496 = vrot.slane %v6482, 5
        %v6497 = vsel %vm2706, %v6496, %v6495
        %v6498 = vrot.slane %v6484, 4
        %v6499 = vsel %vm2709, %v6498, %v6497
        %v6500 = vrot.slane %v6486, 3
        %v6501 = vsel %vm2712, %v6500, %v6499
        %v6502 = vrot.slane %v6488, 2
        %v6503 = vsel %vm2715, %v6502, %v6501
        %v6504 = vrot.slane %v6490, 1
        %v6505 = vsel %vm2718, %v6504, %v6503
        %v6506 = vrot.slane %v6479, 7
        %v6507 = vsel %vm2700, %v6506, %v6477
        %v6508 = vrot.slane %v6481, 6
        %v6509 = vsel %vm2703, %v6508, %v6507
        %v6510 = vrot.slane %v6483, 5
        %v6511 = vsel %vm2706, %v6510, %v6509
        %v6512 = vrot.slane %v6485, 4
        %v6513 = vsel %vm2709, %v6512, %v6511
        %v6514 = vrot.slane %v6487, 3
        %v6515 = vsel %vm2712, %v6514, %v6513
        %v6516 = vrot.slane %v6489, 2
        %v6517 = vsel %vm2715, %v6516, %v6515
        %v6518 = vrot.slane %v6491, 1
        %v6519 = vsel %vm2718, %v6518, %v6517
        %v6520 = vpack.c.b16 %v6505, %v6505
        %v6521 = vpack.c.b16 %v6519, %v6519
        %v6541 = vunpack.c.l.b16 %v6442
        %v6542 = vunpack.c.l.b16 %v6443
        %v6543 = vunpack.c.l.b16 %v6444
        %v6544 = vunpack.c.l.b16 %v6445
        %v6545 = vunpack.c.l.b16 %v6446
        %v6546 = vunpack.c.l.b16 %v6447
        %v6547 = vunpack.c.l.b16 %v6448
        %v6548 = vunpack.c.l.b16 %v6449
        %v6549 = vunpack.c.l.b16 %v6450
        %v6550 = vunpack.c.l.b16 %v6451
        %v6551 = vunpack.c.l.b16 %v6452
        %v6552 = vunpack.c.l.b16 %v6453
        %v6553 = vunpack.c.l.b16 %v6454
        %v6554 = vunpack.c.l.b16 %v6455
        %v6555 = vunpack.c.l.b16 %v6456
        %v6556 = vunpack.c.l.b16 %v6457
        %v6557 = vunpack.c.l.b16 %v6458
        %v6558 = vunpack.c.l.b16 %v6459
        %v6559 = vpack.c.b16 %v6542, %v6541
        %v6560 = vpack.c.b16 %v6544, %v6543
        %v6561 = vpack.c.b16 %v6546, %v6545
        %v6562 = vpack.c.b16 %v6548, %v6547
        %v6563 = vpack.c.b16 %v6550, %v6549
        %v6564 = vpack.c.b16 %v6552, %v6551
        %v6565 = vpack.c.b16 %v6554, %v6553
        %v6566 = vpack.c.b16 %v6556, %v6555
        %v6567 = vpack.c.b16 %v6558, %v6557
        %v6577 = vsel %vm2790, %v6521, 0
        %v6580 = vsel %vm1771, %v6567, 0
        %6582 = vmatprep.subr.bf16.mxu0 0
        %6583 = vmatpush1.bf16.msra.mxu0 %v6559
        %6584 = vmatprep.subr.bf16.mxu0 0
        %6585 = vmatpush1.bf16.msra.mxu0 %v6560
        %6586 = vmatprep.subr.bf16.mxu0 0
        %6587 = vmatpush1.bf16.msra.mxu0 %v6561
        %6588 = vmatprep.subr.bf16.mxu0 0
        %6589 = vmatpush1.bf16.msra.mxu0 %v6562
        %6590 = vmatprep.subr.bf16.mxu0 0
        %6591 = vmatpush1.bf16.msra.mxu0 %v6563
        %6592 = vmatprep.subr.bf16.mxu0 0
        %6593 = vmatpush1.bf16.msra.mxu0 %v6564
        %6594 = vmatprep.subr.bf16.mxu0 0
        %6595 = vmatpush1.bf16.msra.mxu0 %v6565
        %6596 = vmatprep.subr.bf16.mxu0 0
        %6597 = vmatpush1.bf16.msra.mxu0 %v6566
        %6598 = vmatprep.subr.bf16.mxu0 0
        %6599 = vmatpush1.bf16.msra.mxu0 %v6580
        %6600 = vmatprep.subr.bf16.mxu0 0
        %6601 = vmatpush1.bf16.msra.mxu0 0
        %6602 = vmatprep.subr.bf16.mxu0 0
        %6603 = vmatpush1.bf16.msra.mxu0 0
        %6604 = vmatprep.subr.bf16.mxu0 0
        %6605 = vmatpush1.bf16.msra.mxu0 0
        %6606 = vmatprep.subr.bf16.mxu0 0
        %6607 = vmatpush1.bf16.msra.mxu0 0
        %6608 = vmatprep.subr.bf16.mxu0 0
        %6609 = vmatpush1.bf16.msra.mxu0 0
        %6610 = vmatprep.subr.bf16.mxu0 0
        %6611 = vmatpush1.bf16.msra.mxu0 0
        %6612 = vmatprep.subr.bf16.mxu0 0
        %6613 = vmatpush1.bf16.msra.mxu0 0
        %6614 = vmatprep.mubr.bf16.mxu0 %v6577
        %6615 = vmatmul.mubr.bf16.gmra.mrb[0].mxu0 %v6520
        %v6616 = vpop.f32.mrb[0].mxu0
        %v6617 = vadd.f32 0.0, %v6616
        %v6618 = vpop.f32.mrb[0].mxu0
        %v6619 = vpop.f32.mrb[0].mxu0
        %v6620 = vpop.f32.mrb[0].mxu0
        %6621 = vdwg.mxu0
        %v6622 = vadd.f32 %v6320, %v6617
        %s6623 = scalar_lea.vmem [#allocation4], 22
        %v6624 = vld [vmem:[%s6623] ss:$8 sm:$0x3]
        %s6625 = scalar_lea.vmem [#allocation4], 54
        %v6626 = vld [vmem:[%s6625] ss:$8 sm:$0x3]
        %s6627 = scalar_lea.vmem [#allocation4], 86
        %v6628 = vld [vmem:[%s6627] ss:$8 sm:$0x3]
        %s6629 = scalar_lea.vmem [#allocation4], 118
        %v6630 = vld [vmem:[%s6629] ss:$8 sm:$0x3]
        %s6631 = scalar_lea.vmem [#allocation4], 150
        %v6632 = vld [vmem:[%s6631] ss:$8 sm:$0x3]
        %s6633 = scalar_lea.vmem [#allocation4], 182
        %v6634 = vld [vmem:[%s6633] ss:$8 sm:$0x3]
        %s6635 = scalar_lea.vmem [#allocation4], 214
        %v6636 = vld [vmem:[%s6635] ss:$8 sm:$0x3]
        %s6637 = scalar_lea.vmem [#allocation4], 246
        %v6638 = vld [vmem:[%s6637] ss:$8 sm:$0x3]
        %v6647 = vlaneseq
        %v6648 = vshrl.u32 %v6647, 7
        %v6649 = vsub.s32 0, %v6648
        %v6650 = vrot.slane %v6624, %v6649
        %v6651 = vlaneseq
        %v6652 = vshrl.u32 %v6651, 7
        %v6653 = vsub.s32 1, %v6652
        %v6654 = vrot.slane %v6624, %v6653
        %v6655 = vlaneseq
        %v6656 = vshrl.u32 %v6655, 7
        %v6657 = vsub.s32 0, %v6656
        %v6658 = vrot.slane %v6626, %v6657
        %v6659 = vlaneseq
        %v6660 = vshrl.u32 %v6659, 7
        %v6661 = vsub.s32 1, %v6660
        %v6662 = vrot.slane %v6626, %v6661
        %v6663 = vlaneseq
        %v6664 = vshrl.u32 %v6663, 7
        %v6665 = vsub.s32 0, %v6664
        %v6666 = vrot.slane %v6628, %v6665
        %v6667 = vlaneseq
        %v6668 = vshrl.u32 %v6667, 7
        %v6669 = vsub.s32 1, %v6668
        %v6670 = vrot.slane %v6628, %v6669
        %v6671 = vlaneseq
        %v6672 = vshrl.u32 %v6671, 7
        %v6673 = vsub.s32 0, %v6672
        %v6674 = vrot.slane %v6630, %v6673
        %v6675 = vlaneseq
        %v6676 = vshrl.u32 %v6675, 7
        %v6677 = vsub.s32 1, %v6676
        %v6678 = vrot.slane %v6630, %v6677
        %v6679 = vlaneseq
        %v6680 = vshrl.u32 %v6679, 7
        %v6681 = vsub.s32 0, %v6680
        %v6682 = vrot.slane %v6632, %v6681
        %v6683 = vlaneseq
        %v6684 = vshrl.u32 %v6683, 7
        %v6685 = vsub.s32 1, %v6684
        %v6686 = vrot.slane %v6632, %v6685
        %v6687 = vlaneseq
        %v6688 = vshrl.u32 %v6687, 7
        %v6689 = vsub.s32 0, %v6688
        %v6690 = vrot.slane %v6634, %v6689
        %v6691 = vlaneseq
        %v6692 = vshrl.u32 %v6691, 7
        %v6693 = vsub.s32 1, %v6692
        %v6694 = vrot.slane %v6634, %v6693
        %v6695 = vlaneseq
        %v6696 = vshrl.u32 %v6695, 7
        %v6697 = vsub.s32 0, %v6696
        %v6698 = vrot.slane %v6636, %v6697
        %v6699 = vlaneseq
        %v6700 = vshrl.u32 %v6699, 7
        %v6701 = vsub.s32 1, %v6700
        %v6702 = vrot.slane %v6636, %v6701
        %v6703 = vlaneseq
        %v6704 = vshrl.u32 %v6703, 7
        %v6705 = vsub.s32 0, %v6704
        %v6706 = vrot.slane %v6638, %v6705
        %v6707 = vlaneseq
        %v6708 = vshrl.u32 %v6707, 7
        %v6709 = vsub.s32 1, %v6708
        %v6710 = vrot.slane %v6638, %v6709
        %v6727 = vpack.c.bf16 %v6650, %v6650
        %v6728 = vpack.c.bf16 %v6654, %v6654
        %v6729 = vpack.c.bf16 %v6658, %v6658
        %v6730 = vpack.c.bf16 %v6662, %v6662
        %v6731 = vpack.c.bf16 %v6666, %v6666
        %v6732 = vpack.c.bf16 %v6670, %v6670
        %v6733 = vpack.c.bf16 %v6674, %v6674
        %v6734 = vpack.c.bf16 %v6678, %v6678
        %v6735 = vpack.c.bf16 %v6682, %v6682
        %v6736 = vpack.c.bf16 %v6686, %v6686
        %v6737 = vpack.c.bf16 %v6690, %v6690
        %v6738 = vpack.c.bf16 %v6694, %v6694
        %v6739 = vpack.c.bf16 %v6698, %v6698
        %v6740 = vpack.c.bf16 %v6702, %v6702
        %v6741 = vpack.c.bf16 %v6706, %v6706
        %v6742 = vpack.c.bf16 %v6710, %v6710
        %s6743 = scalar_lea.vmem %s6, 1008
        %v6744 = vld [vmem:[%s6743] sm:$0xf]
        %v6745 = vld [vmem:[%s6743 + $0x4] sm:$0xf]
        %v6746 = vld [vmem:[%s6743 + $0x8] sm:$0xf]
        %v6747 = vld [vmem:[%s6743 + $0xc] sm:$0xf]
        %v6748 = vld [vmem:[%s6743 + $0x10] sm:$0xf]
        %v6749 = vld [vmem:[%s6743 + $0x14] sm:$0xf]
        %v6750 = vld [vmem:[%s6743 + $0x18] sm:$0xf]
        %v6751 = vld [vmem:[%s6743 + $0x1c] sm:$0xf]
        %v6752 = vld [vmem:[%s6743 + $0x20] sm:$0xf]
        %v6753 = vld [vmem:[%s6743 + $0x24] sm:$0xf]
        %v6754 = vld [vmem:[%s6743 + $0x28] sm:$0xf]
        %v6755 = vld [vmem:[%s6743 + $0x2c] sm:$0xf]
        %v6756 = vld [vmem:[%s6743 + $0x30] sm:$0xf]
        %v6757 = vld [vmem:[%s6743 + $0x34] sm:$0xf]
        %v6758 = vld [vmem:[%s6743 + $0x38] sm:$0xf]
        %v6759 = vld [vmem:[%s6743 + $0x3c] sm:$0xf]
        %v6760 = vld [vmem:[%s6743 + $0x40] sm:$0xf]
        %v6761 = vld [vmem:[%s6743 + $0x44] sm:$0x3]
        %v6778 = vunpack.c.l.b16 %v6727
        %v6779 = vunpack.c.l.b16 %v6728
        %v6780 = vunpack.c.l.b16 %v6729
        %v6781 = vunpack.c.l.b16 %v6730
        %v6782 = vunpack.c.l.b16 %v6731
        %v6783 = vunpack.c.l.b16 %v6732
        %v6784 = vunpack.c.l.b16 %v6733
        %v6785 = vunpack.c.l.b16 %v6734
        %v6786 = vunpack.c.l.b16 %v6735
        %v6787 = vunpack.c.l.b16 %v6736
        %v6788 = vunpack.c.l.b16 %v6737
        %v6789 = vunpack.c.l.b16 %v6738
        %v6790 = vunpack.c.l.b16 %v6739
        %v6791 = vunpack.c.l.b16 %v6740
        %v6792 = vunpack.c.l.b16 %v6741
        %v6793 = vunpack.c.l.b16 %v6742
        %v6794 = vrot.slane %v6780, 7
        %v6795 = vsel %vm2700, %v6794, %v6778
        %v6796 = vrot.slane %v6782, 6
        %v6797 = vsel %vm2703, %v6796, %v6795
        %v6798 = vrot.slane %v6784, 5
        %v6799 = vsel %vm2706, %v6798, %v6797
        %v6800 = vrot.slane %v6786, 4
        %v6801 = vsel %vm2709, %v6800, %v6799
        %v6802 = vrot.slane %v6788, 3
        %v6803 = vsel %vm2712, %v6802, %v6801
        %v6804 = vrot.slane %v6790, 2
        %v6805 = vsel %vm2715, %v6804, %v6803
        %v6806 = vrot.slane %v6792, 1
        %v6807 = vsel %vm2718, %v6806, %v6805
        %v6808 = vrot.slane %v6781, 7
        %v6809 = vsel %vm2700, %v6808, %v6779
        %v6810 = vrot.slane %v6783, 6
        %v6811 = vsel %vm2703, %v6810, %v6809
        %v6812 = vrot.slane %v6785, 5
        %v6813 = vsel %vm2706, %v6812, %v6811
        %v6814 = vrot.slane %v6787, 4
        %v6815 = vsel %vm2709, %v6814, %v6813
        %v6816 = vrot.slane %v6789, 3
        %v6817 = vsel %vm2712, %v6816, %v6815
        %v6818 = vrot.slane %v6791, 2
        %v6819 = vsel %vm2715, %v6818, %v6817
        %v6820 = vrot.slane %v6793, 1
        %v6821 = vsel %vm2718, %v6820, %v6819
        %v6822 = vpack.c.b16 %v6807, %v6807
        %v6823 = vpack.c.b16 %v6821, %v6821
        %v6843 = vunpack.c.l.b16 %v6744
        %v6844 = vunpack.c.l.b16 %v6745
        %v6845 = vunpack.c.l.b16 %v6746
        %v6846 = vunpack.c.l.b16 %v6747
        %v6847 = vunpack.c.l.b16 %v6748
        %v6848 = vunpack.c.l.b16 %v6749
        %v6849 = vunpack.c.l.b16 %v6750
        %v6850 = vunpack.c.l.b16 %v6751
        %v6851 = vunpack.c.l.b16 %v6752
        %v6852 = vunpack.c.l.b16 %v6753
        %v6853 = vunpack.c.l.b16 %v6754
        %v6854 = vunpack.c.l.b16 %v6755
        %v6855 = vunpack.c.l.b16 %v6756
        %v6856 = vunpack.c.l.b16 %v6757
        %v6857 = vunpack.c.l.b16 %v6758
        %v6858 = vunpack.c.l.b16 %v6759
        %v6859 = vunpack.c.l.b16 %v6760
        %v6860 = vunpack.c.l.b16 %v6761
        %v6861 = vpack.c.b16 %v6844, %v6843
        %v6862 = vpack.c.b16 %v6846, %v6845
        %v6863 = vpack.c.b16 %v6848, %v6847
        %v6864 = vpack.c.b16 %v6850, %v6849
        %v6865 = vpack.c.b16 %v6852, %v6851
        %v6866 = vpack.c.b16 %v6854, %v6853
        %v6867 = vpack.c.b16 %v6856, %v6855
        %v6868 = vpack.c.b16 %v6858, %v6857
        %v6869 = vpack.c.b16 %v6860, %v6859
        %v6879 = vsel %vm2790, %v6823, 0
        %v6882 = vsel %vm1771, %v6869, 0
        %6884 = vmatprep.subr.bf16.mxu0 0
        %6885 = vmatpush1.bf16.msra.mxu0 %v6861
        %6886 = vmatprep.subr.bf16.mxu0 0
        %6887 = vmatpush1.bf16.msra.mxu0 %v6862
        %6888 = vmatprep.subr.bf16.mxu0 0
        %6889 = vmatpush1.bf16.msra.mxu0 %v6863
        %6890 = vmatprep.subr.bf16.mxu0 0
        %6891 = vmatpush1.bf16.msra.mxu0 %v6864
        %6892 = vmatprep.subr.bf16.mxu0 0
        %6893 = vmatpush1.bf16.msra.mxu0 %v6865
        %6894 = vmatprep.subr.bf16.mxu0 0
        %6895 = vmatpush1.bf16.msra.mxu0 %v6866
        %6896 = vmatprep.subr.bf16.mxu0 0
        %6897 = vmatpush1.bf16.msra.mxu0 %v6867
        %6898 = vmatprep.subr.bf16.mxu0 0
        %6899 = vmatpush1.bf16.msra.mxu0 %v6868
        %6900 = vmatprep.subr.bf16.mxu0 0
        %6901 = vmatpush1.bf16.msra.mxu0 %v6882
        %6902 = vmatprep.subr.bf16.mxu0 0
        %6903 = vmatpush1.bf16.msra.mxu0 0
        %6904 = vmatprep.subr.bf16.mxu0 0
        %6905 = vmatpush1.bf16.msra.mxu0 0
        %6906 = vmatprep.subr.bf16.mxu0 0
        %6907 = vmatpush1.bf16.msra.mxu0 0
        %6908 = vmatprep.subr.bf16.mxu0 0
        %6909 = vmatpush1.bf16.msra.mxu0 0
        %6910 = vmatprep.subr.bf16.mxu0 0
        %6911 = vmatpush1.bf16.msra.mxu0 0
        %6912 = vmatprep.subr.bf16.mxu0 0
        %6913 = vmatpush1.bf16.msra.mxu0 0
        %6914 = vmatprep.subr.bf16.mxu0 0
        %6915 = vmatpush1.bf16.msra.mxu0 0
        %6916 = vmatprep.mubr.bf16.mxu0 %v6879
        %6917 = vmatmul.mubr.bf16.gmra.mrb[0].mxu0 %v6822
        %v6918 = vpop.f32.mrb[0].mxu0
        %v6919 = vadd.f32 0.0, %v6918
        %v6920 = vpop.f32.mrb[0].mxu0
        %v6921 = vpop.f32.mrb[0].mxu0
        %v6922 = vpop.f32.mrb[0].mxu0
        %6923 = vdwg.mxu0
        %v6924 = vadd.f32 %v6622, %v6919
        %s6925 = scalar_lea.vmem [#allocation4], 23
        %v6926 = vld [vmem:[%s6925] ss:$8 sm:$0x3]
        %s6927 = scalar_lea.vmem [#allocation4], 55
        %v6928 = vld [vmem:[%s6927] ss:$8 sm:$0x3]
        %s6929 = scalar_lea.vmem [#allocation4], 87
        %v6930 = vld [vmem:[%s6929] ss:$8 sm:$0x3]
        %s6931 = scalar_lea.vmem [#allocation4], 119
        %v6932 = vld [vmem:[%s6931] ss:$8 sm:$0x3]
        %s6933 = scalar_lea.vmem [#allocation4], 151
        %v6934 = vld [vmem:[%s6933] ss:$8 sm:$0x3]
        %s6935 = scalar_lea.vmem [#allocation4], 183
        %v6936 = vld [vmem:[%s6935] ss:$8 sm:$0x3]
        %s6937 = scalar_lea.vmem [#allocation4], 215
        %v6938 = vld [vmem:[%s6937] ss:$8 sm:$0x3]
        %s6939 = scalar_lea.vmem [#allocation4], 247
        %v6940 = vld [vmem:[%s6939] ss:$8 sm:$0x3]
        %v6949 = vlaneseq
        %v6950 = vshrl.u32 %v6949, 7
        %v6951 = vsub.s32 0, %v6950
        %v6952 = vrot.slane %v6926, %v6951
        %v6953 = vlaneseq
        %v6954 = vshrl.u32 %v6953, 7
        %v6955 = vsub.s32 1, %v6954
        %v6956 = vrot.slane %v6926, %v6955
        %v6957 = vlaneseq
        %v6958 = vshrl.u32 %v6957, 7
        %v6959 = vsub.s32 0, %v6958
        %v6960 = vrot.slane %v6928, %v6959
        %v6961 = vlaneseq
        %v6962 = vshrl.u32 %v6961, 7
        %v6963 = vsub.s32 1, %v6962
        %v6964 = vrot.slane %v6928, %v6963
        %v6965 = vlaneseq
        %v6966 = vshrl.u32 %v6965, 7
        %v6967 = vsub.s32 0, %v6966
        %v6968 = vrot.slane %v6930, %v6967
        %v6969 = vlaneseq
        %v6970 = vshrl.u32 %v6969, 7
        %v6971 = vsub.s32 1, %v6970
        %v6972 = vrot.slane %v6930, %v6971
        %v6973 = vlaneseq
        %v6974 = vshrl.u32 %v6973, 7
        %v6975 = vsub.s32 0, %v6974
        %v6976 = vrot.slane %v6932, %v6975
        %v6977 = vlaneseq
        %v6978 = vshrl.u32 %v6977, 7
        %v6979 = vsub.s32 1, %v6978
        %v6980 = vrot.slane %v6932, %v6979
        %v6981 = vlaneseq
        %v6982 = vshrl.u32 %v6981, 7
        %v6983 = vsub.s32 0, %v6982
        %v6984 = vrot.slane %v6934, %v6983
        %v6985 = vlaneseq
        %v6986 = vshrl.u32 %v6985, 7
        %v6987 = vsub.s32 1, %v6986
        %v6988 = vrot.slane %v6934, %v6987
        %v6989 = vlaneseq
        %v6990 = vshrl.u32 %v6989, 7
        %v6991 = vsub.s32 0, %v6990
        %v6992 = vrot.slane %v6936, %v6991
        %v6993 = vlaneseq
        %v6994 = vshrl.u32 %v6993, 7
        %v6995 = vsub.s32 1, %v6994
        %v6996 = vrot.slane %v6936, %v6995
        %v6997 = vlaneseq
        %v6998 = vshrl.u32 %v6997, 7
        %v6999 = vsub.s32 0, %v6998
        %v7000 = vrot.slane %v6938, %v6999
        %v7001 = vlaneseq
        %v7002 = vshrl.u32 %v7001, 7
        %v7003 = vsub.s32 1, %v7002
        %v7004 = vrot.slane %v6938, %v7003
        %v7005 = vlaneseq
        %v7006 = vshrl.u32 %v7005, 7
        %v7007 = vsub.s32 0, %v7006
        %v7008 = vrot.slane %v6940, %v7007
        %v7009 = vlaneseq
        %v7010 = vshrl.u32 %v7009, 7
        %v7011 = vsub.s32 1, %v7010
        %v7012 = vrot.slane %v6940, %v7011
        %v7029 = vpack.c.bf16 %v6952, %v6952
        %v7030 = vpack.c.bf16 %v6956, %v6956
        %v7031 = vpack.c.bf16 %v6960, %v6960
        %v7032 = vpack.c.bf16 %v6964, %v6964
        %v7033 = vpack.c.bf16 %v6968, %v6968
        %v7034 = vpack.c.bf16 %v6972, %v6972
        %v7035 = vpack.c.bf16 %v6976, %v6976
        %v7036 = vpack.c.bf16 %v6980, %v6980
        %v7037 = vpack.c.bf16 %v6984, %v6984
        %v7038 = vpack.c.bf16 %v6988, %v6988
        %v7039 = vpack.c.bf16 %v6992, %v6992
        %v7040 = vpack.c.bf16 %v6996, %v6996
        %v7041 = vpack.c.bf16 %v7000, %v7000
        %v7042 = vpack.c.bf16 %v7004, %v7004
        %v7043 = vpack.c.bf16 %v7008, %v7008
        %v7044 = vpack.c.bf16 %v7012, %v7012
        %s7045 = scalar_lea.vmem %s6, 1080
        %v7046 = vld [vmem:[%s7045] sm:$0xf]
        %v7047 = vld [vmem:[%s7045 + $0x4] sm:$0xf]
        %v7048 = vld [vmem:[%s7045 + $0x8] sm:$0xf]
        %v7049 = vld [vmem:[%s7045 + $0xc] sm:$0xf]
        %v7050 = vld [vmem:[%s7045 + $0x10] sm:$0xf]
        %v7051 = vld [vmem:[%s7045 + $0x14] sm:$0xf]
        %v7052 = vld [vmem:[%s7045 + $0x18] sm:$0xf]
        %v7053 = vld [vmem:[%s7045 + $0x1c] sm:$0xf]
        %v7054 = vld [vmem:[%s7045 + $0x20] sm:$0xf]
        %v7055 = vld [vmem:[%s7045 + $0x24] sm:$0xf]
        %v7056 = vld [vmem:[%s7045 + $0x28] sm:$0xf]
        %v7057 = vld [vmem:[%s7045 + $0x2c] sm:$0xf]
        %v7058 = vld [vmem:[%s7045 + $0x30] sm:$0xf]
        %v7059 = vld [vmem:[%s7045 + $0x34] sm:$0xf]
        %v7060 = vld [vmem:[%s7045 + $0x38] sm:$0xf]
        %v7061 = vld [vmem:[%s7045 + $0x3c] sm:$0xf]
        %v7062 = vld [vmem:[%s7045 + $0x40] sm:$0xf]
        %v7063 = vld [vmem:[%s7045 + $0x44] sm:$0x3]
        %v7080 = vunpack.c.l.b16 %v7029
        %v7081 = vunpack.c.l.b16 %v7030
        %v7082 = vunpack.c.l.b16 %v7031
        %v7083 = vunpack.c.l.b16 %v7032
        %v7084 = vunpack.c.l.b16 %v7033
        %v7085 = vunpack.c.l.b16 %v7034
        %v7086 = vunpack.c.l.b16 %v7035
        %v7087 = vunpack.c.l.b16 %v7036
        %v7088 = vunpack.c.l.b16 %v7037
        %v7089 = vunpack.c.l.b16 %v7038
        %v7090 = vunpack.c.l.b16 %v7039
        %v7091 = vunpack.c.l.b16 %v7040
        %v7092 = vunpack.c.l.b16 %v7041
        %v7093 = vunpack.c.l.b16 %v7042
        %v7094 = vunpack.c.l.b16 %v7043
        %v7095 = vunpack.c.l.b16 %v7044
        %v7096 = vrot.slane %v7082, 7
        %v7097 = vsel %vm2700, %v7096, %v7080
        %v7098 = vrot.slane %v7084, 6
        %v7099 = vsel %vm2703, %v7098, %v7097
        %v7100 = vrot.slane %v7086, 5
        %v7101 = vsel %vm2706, %v7100, %v7099
        %v7102 = vrot.slane %v7088, 4
        %v7103 = vsel %vm2709, %v7102, %v7101
        %v7104 = vrot.slane %v7090, 3
        %v7105 = vsel %vm2712, %v7104, %v7103
        %v7106 = vrot.slane %v7092, 2
        %v7107 = vsel %vm2715, %v7106, %v7105
        %v7108 = vrot.slane %v7094, 1
        %v7109 = vsel %vm2718, %v7108, %v7107
        %v7110 = vrot.slane %v7083, 7
        %v7111 = vsel %vm2700, %v7110, %v7081
        %v7112 = vrot.slane %v7085, 6
        %v7113 = vsel %vm2703, %v7112, %v7111
        %v7114 = vrot.slane %v7087, 5
        %v7115 = vsel %vm2706, %v7114, %v7113
        %v7116 = vrot.slane %v7089, 4
        %v7117 = vsel %vm2709, %v7116, %v7115
        %v7118 = vrot.slane %v7091, 3
        %v7119 = vsel %vm2712, %v7118, %v7117
        %v7120 = vrot.slane %v7093, 2
        %v7121 = vsel %vm2715, %v7120, %v7119
        %v7122 = vrot.slane %v7095, 1
        %v7123 = vsel %vm2718, %v7122, %v7121
        %v7124 = vpack.c.b16 %v7109, %v7109
        %v7125 = vpack.c.b16 %v7123, %v7123
        %v7145 = vunpack.c.l.b16 %v7046
        %v7146 = vunpack.c.l.b16 %v7047
        %v7147 = vunpack.c.l.b16 %v7048
        %v7148 = vunpack.c.l.b16 %v7049
        %v7149 = vunpack.c.l.b16 %v7050
        %v7150 = vunpack.c.l.b16 %v7051
        %v7151 = vunpack.c.l.b16 %v7052
        %v7152 = vunpack.c.l.b16 %v7053
        %v7153 = vunpack.c.l.b16 %v7054
        %v7154 = vunpack.c.l.b16 %v7055
        %v7155 = vunpack.c.l.b16 %v7056
        %v7156 = vunpack.c.l.b16 %v7057
        %v7157 = vunpack.c.l.b16 %v7058
        %v7158 = vunpack.c.l.b16 %v7059
        %v7159 = vunpack.c.l.b16 %v7060
        %v7160 = vunpack.c.l.b16 %v7061
        %v7161 = vunpack.c.l.b16 %v7062
        %v7162 = vunpack.c.l.b16 %v7063
        %v7163 = vpack.c.b16 %v7146, %v7145
        %v7164 = vpack.c.b16 %v7148, %v7147
        %v7165 = vpack.c.b16 %v7150, %v7149
        %v7166 = vpack.c.b16 %v7152, %v7151
        %v7167 = vpack.c.b16 %v7154, %v7153
        %v7168 = vpack.c.b16 %v7156, %v7155
        %v7169 = vpack.c.b16 %v7158, %v7157
        %v7170 = vpack.c.b16 %v7160, %v7159
        %v7171 = vpack.c.b16 %v7162, %v7161
        %v7181 = vsel %vm2790, %v7125, 0
        %v7184 = vsel %vm1771, %v7171, 0
        %7186 = vmatprep.subr.bf16.mxu0 0
        %7187 = vmatpush1.bf16.msra.mxu0 %v7163
        %7188 = vmatprep.subr.bf16.mxu0 0
        %7189 = vmatpush1.bf16.msra.mxu0 %v7164
        %7190 = vmatprep.subr.bf16.mxu0 0
        %7191 = vmatpush1.bf16.msra.mxu0 %v7165
        %7192 = vmatprep.subr.bf16.mxu0 0
        %7193 = vmatpush1.bf16.msra.mxu0 %v7166
        %7194 = vmatprep.subr.bf16.mxu0 0
        %7195 = vmatpush1.bf16.msra.mxu0 %v7167
        %7196 = vmatprep.subr.bf16.mxu0 0
        %7197 = vmatpush1.bf16.msra.mxu0 %v7168
        %7198 = vmatprep.subr.bf16.mxu0 0
        %7199 = vmatpush1.bf16.msra.mxu0 %v7169
        %7200 = vmatprep.subr.bf16.mxu0 0
        %7201 = vmatpush1.bf16.msra.mxu0 %v7170
        %7202 = vmatprep.subr.bf16.mxu0 0
        %7203 = vmatpush1.bf16.msra.mxu0 %v7184
        %7204 = vmatprep.subr.bf16.mxu0 0
        %7205 = vmatpush1.bf16.msra.mxu0 0
        %7206 = vmatprep.subr.bf16.mxu0 0
        %7207 = vmatpush1.bf16.msra.mxu0 0
        %7208 = vmatprep.subr.bf16.mxu0 0
        %7209 = vmatpush1.bf16.msra.mxu0 0
        %7210 = vmatprep.subr.bf16.mxu0 0
        %7211 = vmatpush1.bf16.msra.mxu0 0
        %7212 = vmatprep.subr.bf16.mxu0 0
        %7213 = vmatpush1.bf16.msra.mxu0 0
        %7214 = vmatprep.subr.bf16.mxu0 0
        %7215 = vmatpush1.bf16.msra.mxu0 0
        %7216 = vmatprep.subr.bf16.mxu0 0
        %7217 = vmatpush1.bf16.msra.mxu0 0
        %7218 = vmatprep.mubr.bf16.mxu0 %v7181
        %7219 = vmatmul.mubr.bf16.gmra.mrb[0].mxu0 %v7124
        %v7220 = vpop.f32.mrb[0].mxu0
        %v7221 = vadd.f32 0.0, %v7220
        %v7222 = vpop.f32.mrb[0].mxu0
        %v7223 = vpop.f32.mrb[0].mxu0
        %v7224 = vpop.f32.mrb[0].mxu0
        %7225 = vdwg.mxu0
        %v7226 = vadd.f32 %v6924, %v7221
        %v7227 = vld [vmem:[%s7] sm:$0x1]
        %v7229 = vlaneseq
        %v7230 = vshrl.u32 %v7229, 7
        %v7231 = vsub.s32 0, %v7230
        %v7232 = vrot.slane %v7227, %v7231
        %v7234 = vadd.f32 %v7226, %v7232
        %v7235 = vmax.f32 %v7234, 0.0
        %v7236 = vpack.c.bf16 %v7235, %v7235
        %v7237 = vld [vmem:[%s8] sm:$0xf]
        %v7238 = vld [vmem:[%s8 + $0x4] sm:$0xf]
        %v7239 = vld [vmem:[%s8 + $0x8] sm:$0xf]
        %v7240 = vld [vmem:[%s8 + $0xc] sm:$0xf]
        %v7241 = vld [vmem:[%s8 + $0x10] sm:$0xf]
        %v7242 = vld [vmem:[%s8 + $0x14] sm:$0xf]
        %v7243 = vld [vmem:[%s8 + $0x18] sm:$0xf]
        %v7244 = vld [vmem:[%s8 + $0x1c] sm:$0xf]
        %v7245 = vld [vmem:[%s8 + $0x20] sm:$0xf]
        %v7246 = vld [vmem:[%s8 + $0x24] sm:$0xf]
        %v7247 = vld [vmem:[%s8 + $0x28] sm:$0xf]
        %v7248 = vld [vmem:[%s8 + $0x2c] sm:$0xf]
        %v7249 = vld [vmem:[%s8 + $0x30] sm:$0xf]
        %v7250 = vld [vmem:[%s8 + $0x34] sm:$0xf]
        %v7251 = vld [vmem:[%s8 + $0x38] sm:$0xf]
        %v7252 = vld [vmem:[%s8 + $0x3c] sm:$0xf]
        %v7253 = vld [vmem:[%s9] sm:$0x1]
        %v7255 = vlaneseq
        %v7256 = vshrl.u32 %v7255, 7
        %v7257 = vsub.s32 0, %v7256
        %v7258 = vrot.slane %v7253, %v7257
        %v7276 = vunpack.c.l.b16 %v7237
        %v7277 = vunpack.c.l.b16 %v7238
        %v7278 = vunpack.c.l.b16 %v7239
        %v7279 = vunpack.c.l.b16 %v7240
        %v7280 = vunpack.c.l.b16 %v7241
        %v7281 = vunpack.c.l.b16 %v7242
        %v7282 = vunpack.c.l.b16 %v7243
        %v7283 = vunpack.c.l.b16 %v7244
        %v7284 = vunpack.c.l.b16 %v7245
        %v7285 = vunpack.c.l.b16 %v7246
        %v7286 = vunpack.c.l.b16 %v7247
        %v7287 = vunpack.c.l.b16 %v7248
        %v7288 = vunpack.c.l.b16 %v7249
        %v7289 = vunpack.c.l.b16 %v7250
        %v7290 = vunpack.c.l.b16 %v7251
        %v7291 = vunpack.c.l.b16 %v7252
        %v7292 = vpack.c.b16 %v7277, %v7276
        %v7293 = vpack.c.b16 %v7279, %v7278
        %v7294 = vpack.c.b16 %v7281, %v7280
        %v7295 = vpack.c.b16 %v7283, %v7282
        %v7296 = vpack.c.b16 %v7285, %v7284
        %v7297 = vpack.c.b16 %v7287, %v7286
        %v7298 = vpack.c.b16 %v7289, %v7288
        %v7299 = vpack.c.b16 %v7291, %v7290
        %7308 = vmatprep.subr.bf16.mxu0 0
        %7309 = vmatpush1.bf16.msra.mxu0 %v7292
        %7310 = vmatprep.subr.bf16.mxu0 0
        %7311 = vmatpush1.bf16.msra.mxu0 %v7293
        %7312 = vmatprep.subr.bf16.mxu0 0
        %7313 = vmatpush1.bf16.msra.mxu0 %v7294
        %7314 = vmatprep.subr.bf16.mxu0 0
        %7315 = vmatpush1.bf16.msra.mxu0 %v7295
        %7316 = vmatprep.subr.bf16.mxu0 0
        %7317 = vmatpush1.bf16.msra.mxu0 %v7296
        %7318 = vmatprep.subr.bf16.mxu0 0
        %7319 = vmatpush1.bf16.msra.mxu0 %v7297
        %7320 = vmatprep.subr.bf16.mxu0 0
        %7321 = vmatpush1.bf16.msra.mxu0 %v7298
        %7322 = vmatprep.subr.bf16.mxu0 0
        %7323 = vmatpush1.bf16.msra.mxu0 %v7299
        %7324 = vmatprep.subr.bf16.mxu0 0
        %7325 = vmatpush1.bf16.msra.mxu0 0
        %7326 = vmatprep.subr.bf16.mxu0 0
        %7327 = vmatpush1.bf16.msra.mxu0 0
        %7328 = vmatprep.subr.bf16.mxu0 0
        %7329 = vmatpush1.bf16.msra.mxu0 0
        %7330 = vmatprep.subr.bf16.mxu0 0
        %7331 = vmatpush1.bf16.msra.mxu0 0
        %7332 = vmatprep.subr.bf16.mxu0 0
        %7333 = vmatpush1.bf16.msra.mxu0 0
        %7334 = vmatprep.subr.bf16.mxu0 0
        %7335 = vmatpush1.bf16.msra.mxu0 0
        %7336 = vmatprep.subr.bf16.mxu0 0
        %7337 = vmatpush1.bf16.msra.mxu0 0
        %7338 = vmatprep.subr.bf16.mxu0 0
        %7339 = vmatpush1.bf16.msra.mxu0 0
        %7340 = vmatprep.mubr.bf16.mxu0 0
        %7341 = vmatmul.mubr.bf16.gmra.mrb[0].mxu0 %v7236
        %v7342 = vpop.f32.mrb[0].mxu0
        %v7343 = vadd.f32 %v7258, %v7342
        %v7344 = vpop.f32.mrb[0].mxu0
        %v7345 = vpop.f32.mrb[0].mxu0
        %v7346 = vpop.f32.mrb[0].mxu0
        %7347 = vdwg.mxu0
        %v7348 = vmax.f32 %v7343, 0.0
        %v7349 = vpack.c.bf16 %v7348, %v7348
        %v7350 = vld [vmem:[%s10] sm:$0xf]
        %v7351 = vld [vmem:[%s10 + $0x4] sm:$0xf]
        %v7352 = vld [vmem:[%s10 + $0x8] sm:$0xf]
        %v7353 = vld [vmem:[%s10 + $0xc] sm:$0xf]
        %v7354 = vld [vmem:[%s10 + $0x10] sm:$0xf]
        %v7355 = vld [vmem:[%s10 + $0x14] sm:$0xf]
        %v7356 = vld [vmem:[%s10 + $0x18] sm:$0xf]
        %v7357 = vld [vmem:[%s10 + $0x1c] sm:$0xf]
        %v7358 = vld [vmem:[%s10 + $0x20] sm:$0xf]
        %v7359 = vld [vmem:[%s10 + $0x24] sm:$0xf]
        %v7360 = vld [vmem:[%s10 + $0x28] sm:$0xf]
        %v7361 = vld [vmem:[%s10 + $0x2c] sm:$0xf]
        %v7362 = vld [vmem:[%s10 + $0x30] sm:$0xf]
        %v7363 = vld [vmem:[%s10 + $0x34] sm:$0xf]
        %v7364 = vld [vmem:[%s10 + $0x38] sm:$0xf]
        %v7365 = vld [vmem:[%s10 + $0x3c] sm:$0xf]
        %v7366 = vld [vmem:[%s11] sm:$0x1]
        %v7368 = vlaneseq
        %v7369 = vshrl.u32 %v7368, 7
        %v7370 = vsub.s32 0, %v7369
        %v7371 = vrot.slane %v7366, %v7370
        %v7389 = vunpack.c.l.b16 %v7350
        %v7390 = vunpack.c.l.b16 %v7351
        %v7391 = vunpack.c.l.b16 %v7352
        %v7392 = vunpack.c.l.b16 %v7353
        %v7393 = vunpack.c.l.b16 %v7354
        %v7394 = vunpack.c.l.b16 %v7355
        %v7395 = vunpack.c.l.b16 %v7356
        %v7396 = vunpack.c.l.b16 %v7357
        %v7397 = vunpack.c.l.b16 %v7358
        %v7398 = vunpack.c.l.b16 %v7359
        %v7399 = vunpack.c.l.b16 %v7360
        %v7400 = vunpack.c.l.b16 %v7361
        %v7401 = vunpack.c.l.b16 %v7362
        %v7402 = vunpack.c.l.b16 %v7363
        %v7403 = vunpack.c.l.b16 %v7364
        %v7404 = vunpack.c.l.b16 %v7365
        %v7405 = vpack.c.b16 %v7390, %v7389
        %v7406 = vpack.c.b16 %v7392, %v7391
        %v7407 = vpack.c.b16 %v7394, %v7393
        %v7408 = vpack.c.b16 %v7396, %v7395
        %v7409 = vpack.c.b16 %v7398, %v7397
        %v7410 = vpack.c.b16 %v7400, %v7399
        %v7411 = vpack.c.b16 %v7402, %v7401
        %v7412 = vpack.c.b16 %v7404, %v7403
        %7421 = vmatprep.subr.bf16.mxu0 0
        %7422 = vmatpush1.bf16.msra.mxu0 %v7405
        %7423 = vmatprep.subr.bf16.mxu0 0
        %7424 = vmatpush1.bf16.msra.mxu0 %v7406
        %7425 = vmatprep.subr.bf16.mxu0 0
        %7426 = vmatpush1.bf16.msra.mxu0 %v7407
        %7427 = vmatprep.subr.bf16.mxu0 0
        %7428 = vmatpush1.bf16.msra.mxu0 %v7408
        %7429 = vmatprep.subr.bf16.mxu0 0
        %7430 = vmatpush1.bf16.msra.mxu0 %v7409
        %7431 = vmatprep.subr.bf16.mxu0 0
        %7432 = vmatpush1.bf16.msra.mxu0 %v7410
        %7433 = vmatprep.subr.bf16.mxu0 0
        %7434 = vmatpush1.bf16.msra.mxu0 %v7411
        %7435 = vmatprep.subr.bf16.mxu0 0
        %7436 = vmatpush1.bf16.msra.mxu0 %v7412
        %7437 = vmatprep.subr.bf16.mxu0 0
        %7438 = vmatpush1.bf16.msra.mxu0 0
        %7439 = vmatprep.subr.bf16.mxu0 0
        %7440 = vmatpush1.bf16.msra.mxu0 0
        %7441 = vmatprep.subr.bf16.mxu0 0
        %7442 = vmatpush1.bf16.msra.mxu0 0
        %7443 = vmatprep.subr.bf16.mxu0 0
        %7444 = vmatpush1.bf16.msra.mxu0 0
        %7445 = vmatprep.subr.bf16.mxu0 0
        %7446 = vmatpush1.bf16.msra.mxu0 0
        %7447 = vmatprep.subr.bf16.mxu0 0
        %7448 = vmatpush1.bf16.msra.mxu0 0
        %7449 = vmatprep.subr.bf16.mxu0 0
        %7450 = vmatpush1.bf16.msra.mxu0 0
        %7451 = vmatprep.subr.bf16.mxu0 0
        %7452 = vmatpush1.bf16.msra.mxu0 0
        %7453 = vmatprep.mubr.bf16.mxu0 0
        %7454 = vmatmul.mubr.bf16.gmra.mrb[0].mxu0 %v7349
        %v7455 = vpop.f32.mrb[0].mxu0
        %v7456 = vadd.f32 %v7371, %v7455
        %v7457 = vpop.f32.mrb[0].mxu0
        %v7458 = vpop.f32.mrb[0].mxu0
        %v7459 = vpop.f32.mrb[0].mxu0
        %7460 = vdwg.mxu0
        %7461 = vst [vmem:[%s406] sm:$0xff] %v7456
        %s7462 = sand.u32 %s291, 1
        %s7463 = scalar_lea.sflag [#allocation6], %s7462
        %s7464 = sand.u32 %s291, 1
        %s7465 = smul.addr %s7464, 8
        %s7466 = scalar_lea.vmem [#allocation5], %s7465
        // Predicated region
        $region83: #{tpu_custom_call.1} parent=67 // pred_check
          %p7467 = pneg %p301
        $region84: #{tpu_custom_call.1} parent=67 // pred_check_branch
          %7469 = sbr.rel (%p7467) target = $region86
        $region85: #{tpu_custom_call.1} parent=67 // pred_region
          %s7471 = ssub.s32 128, 128
          %7472 = vsyncadd %s7463, %s7471
          %s7473 = smul.addr %s26, 128
          %s7474 = scalar_lea.hbm %s12, %s7473
          %s7476 = sshll.u32 %s7466, 4
          %s7477 = int_to_ptr.vmem [resolvable:$true] %s7476
          %7479 = dma.vmem_to_hbm [thread:$0]  %s7477, 128, %s7474, %s7463
        $region86: #{tpu_custom_call.1} parent=67 // pred_fallthru
          _
      $region68: #{tpu_custom_call.1} parent=5 // pred_fallthru
        _
      %p7480 = scmp.le.s32.totalorder 2, %s21
      // Predicated region
      $region87: #{tpu_custom_call.1} parent=5 // pred_check
        %p7481 = pneg %p7480
      $region88: #{tpu_custom_call.1} parent=5 // pred_check_branch
        %7483 = sbr.rel (%p7481) target = $region90
      $region89: #{tpu_custom_call.1} parent=5 // pred_region
        %s7484 = ssub.s32 %s21, 2
        // Predicated region
        $region91: #{tpu_custom_call.1} parent=89 // pred_check
          %p7485 = pneg %p307
        $region92: #{tpu_custom_call.1} parent=89 // pred_check_branch
          %7487 = sbr.rel (%p7485) target = $region94
        $region93: #{tpu_custom_call.1} parent=89 // pred_region
          %s7488 = sand.u32 %s292, 1
          %s7489 = scalar_lea.sflag [#allocation6], %s7488
          %s7490 = sand.u32 %s292, 1
          %s7491 = smul.addr %s7490, 8
          %s7492 = scalar_lea.vmem [#allocation5], %s7491
          %7493 = dma.done %s7489, 128
        $region94: #{tpu_custom_call.1} parent=89 // pred_fallthru
          _
      $region90: #{tpu_custom_call.1} parent=5 // pred_fallthru
        _
    $region6: #{tpu_custom_call.1} parent=1 // loop_footer
      %s25 = sadd.s32 1, %s21
    $region7: #{tpu_custom_call.1} parent=1 // loop_footer_branch
      %20 = sbr.rel target = $region3
    $region8: #{tpu_custom_call.1} parent=1 // loop_exit
      _
    %7494 = vsyncpa [#allocation6], 1
    %s7495 = scalar_lea.sflag [#allocation6], 1
    %7496 = vsyncpa %s7495, 1

</llo_original>
